<compile_context>
chip_gen: v7x
topology: tpu7x:2x2x1
jax: 0.10.0
libtpu: 0.0.40
codegen_flags: <defaults>
</compile_context>

<pallas_src>
import functools
import numpy as np
import jax
import jax.numpy as jnp
from jax import lax
from jax.experimental import pallas as pl
from jax.experimental.pallas import tpu as pltpu

# ----------------------- config (mirrors args in __init__) -----------------------
EMB_DIM = 32                       # args.dim
NODE_TYPE = ['a', 'p']             # args.node_type
NODE_DIM = {'a': 16, 'p': 16}      # args.node_dim
EDGE_TYPE = [['a', 'p'], ['p', 'p']]  # args.edge_type
CLOSEST_EDGE = 4                   # args.closest_edge
METAPATH_TYPE = 2                  # args.metapath_type
# args.node_similarity_method = True, args.metapath_influence_method = True

GROUP = 32       # examples per grid step (power of two; output sublane block)
R_MAX = 32       # padded rows (similarity evaluations) per example, power of two
OUT_LANES = 128  # lane-dense output width (column 0 holds the loss)
WCAT_LANES = 128 # lane width of the concatenated edge-type matrices


def side_offsets(KOR, C, M):
    """Lane layout of the (narrow) per-row side slab."""
    CM = C * M
    off_dm = KOR
    off_dt = KOR + CM
    F = ((KOR + CM + 5 + 7) // 8) * 8
    return off_dm, off_dt, F


# --------------------------------- Pallas kernel ---------------------------------
def mtne_kernel(w_ref, sproj_ref, s_ref, t_ref, side_ref, o_ref, *,
                G, R_MAX, P, KOR, CM, D):
    R = G * R_MAX
    GP = G * P
    g_log2 = G.bit_length() - 1
    rm_log2 = R_MAX.bit_length() - 1
    OFF_DT = KOR + CM
    OFF_DELTA, OFF_SIM, OFF_VALID, OFF_PAIR = OFF_DT + 1, OFF_DT + 2, OFF_DT + 3, OFF_DT + 4
    WATT = KOR * D                      # proj lane holding dis_att*mp_att for the row
    L = w_ref.shape[1]                  # 128

    S = s_ref[...]                      # [R, D]   left embeddings
    T = t_ref[...]                      # [R, D]   right embeddings
    side = side_ref[...]                # [R, F]   narrow per-row side data

    # two small-K MXU matmuls:
    #   SW  : S against the 128-lane concatenation of all oriented edge-type matrices
    #   proj: side against the wrapper-built projection (edge-type one-hot -> 32-lane
    #         block selector in lanes [0, KOR*D); dis×mp one-hot -> combined softmax
    #         attention weight in lane KOR*D)
    SW = jnp.dot(S, w_ref[...], preferred_element_type=jnp.float32)         # [R, 128]
    proj = jnp.dot(side, sproj_ref[...], preferred_element_type=jnp.float32)  # [R, 128]

    # select the per-row edge-type block of SW and fold the 4 blocks of D lanes
    # down to lanes [0, D) with XLU rolls (non-selected / padded blocks are zero)
    Z = SW * proj
    shift = L // 2
    while shift >= D:                   # static unroll: shifts 64, 32
        Z = Z + pltpu.roll(Z, shift, axis=1)
        shift //= 2
    bil = jnp.tanh(jnp.sum(Z[:, 0:D] * T, axis=-1, keepdims=True))          # [R, 1]

    w_att = proj[:, WATT:WATT + 1]                                           # dis*mp att
    decay = jnp.exp(-(side[:, OFF_DELTA:OFF_DELTA + 1] *
                      side[:, OFF_DT:OFF_DT + 1]))                           # exp(-(δs·δt·|Δt|))
    is_sim = side[:, OFF_SIM:OFF_SIM + 1]
    valid = side[:, OFF_VALID:OFF_VALID + 1]
    # pair-similarity rows use weight 1; metapath-edge rows use dis_att*mp_att*decay
    contrib = bil * decay * (is_sim + w_att) * valid                         # [R, 1]

    # in-kernel segment one-hot (no HBM traffic): column c <-> (pair = c >> log2(G),
    # example = c & (G-1)); row r belongs to example r >> log2(R_MAX)
    rr = lax.broadcasted_iota(jnp.int32, (R, GP), 0)
    cc = lax.broadcasted_iota(jnp.int32, (R, GP), 1)
    ex_match = jnp.right_shift(rr, rm_log2) == jnp.bitwise_and(cc, G - 1)
    pair_col = jnp.right_shift(cc, g_log2).astype(jnp.float32)
    pair_match = side[:, OFF_PAIR:OFF_PAIR + 1] == pair_col
    seg = jnp.where(jnp.logical_and(ex_match, pair_match), 1.0, 0.0)         # [R, GP]

    lam = jnp.sum(contrib * seg, axis=0, keepdims=True)                      # [1, GP]
    # a pair is real iff it owns exactly one similarity row; padded pairs -> 0
    pair_has = jnp.sum((is_sim * valid) * seg, axis=0, keepdims=True)        # [1, GP]

    # fused, numerically-stable log-sigmoid tail (exact reciprocal: tiny [1, GP])
    col = lax.broadcasted_iota(jnp.int32, (1, GP), 1)
    z = jnp.where(col < G, lam, -lam)        # positive pairs live in columns [0, G)
    ez = jnp.exp(-jnp.abs(z))
    inv = 1.0 / (1.0 + ez)
    sig = jnp.where(z >= 0, inv, ez * inv)   # sigmoid(z), overflow-safe
    term = pair_has * jnp.log(sig + 1e-6)                                    # [1, GP]

    # per-example sum over its P pair columns (example of column c = c & (G-1))
    er = lax.broadcasted_iota(jnp.int32, (G, GP), 0)
    ec = jnp.bitwise_and(lax.broadcasted_iota(jnp.int32, (G, GP), 1), G - 1)
    sel = jnp.where(er == ec, 1.0, 0.0)                                      # [G, GP]
    loss_g = -jnp.sum(sel * term, axis=1, keepdims=True)                     # [G, 1]

    # lane-dense unmasked output store; host reads back column 0
    o_ref[...] = jnp.broadcast_to(loss_g, o_ref.shape)


def mtne_loss_pallas(S_all, T_all, side_all, W_cat, dist_att, mp_att, *,
                     G, R_MAX, P, KOR, C, M):
    R_tot, D = S_all.shape
    F = side_all.shape[1]
    CM = C * M
    NG = R_tot // (G * R_MAX)
    assert G & (G - 1) == 0 and R_MAX & (R_MAX - 1) == 0
    assert R_tot == NG * G * R_MAX
    assert KOR * D + 1 <= WCAT_LANES and WCAT_LANES % D == 0
    nblk = WCAT_LANES // D
    assert nblk & (nblk - 1) == 0

    # side-projection matrix (tiny, resident): edge-type one-hot -> per-block lane
    # selector; combined dis×mp one-hot -> softmaxed attention product at lane KOR*D.
    att_dm = jnp.outer(jax.nn.softmax(dist_att), jax.nn.softmax(mp_att)).reshape(-1)
    sproj = jnp.zeros((F, WCAT_LANES), jnp.float32)
    for k in range(KOR):
        sproj = sproj.at[k, k * D:(k + 1) * D].set(1.0)
    sproj = sproj.at[KOR:KOR + CM, KOR * D].set(att_dm)

    kernel = functools.partial(mtne_kernel, G=G, R_MAX=R_MAX, P=P,
                               KOR=KOR, CM=CM, D=D)
    out = pl.pallas_call(
        kernel,
        out_shape=jax.ShapeDtypeStruct((NG * G, OUT_LANES), jnp.float32),
        grid=(NG,),
        in_specs=[
            pl.BlockSpec((D, WCAT_LANES), lambda g: (0, 0)),       # W_cat (resident)
            pl.BlockSpec((F, WCAT_LANES), lambda g: (0, 0)),       # side projection (resident)
            pl.BlockSpec((G * R_MAX, D), lambda g: (g, 0)),        # S rows of group g
            pl.BlockSpec((G * R_MAX, D), lambda g: (g, 0)),        # T rows of group g
            pl.BlockSpec((G * R_MAX, F), lambda g: (g, 0)),        # narrow side slab
        ],
        out_specs=pl.BlockSpec((G, OUT_LANES), lambda g: (g, 0)),
        compiler_params=pltpu.CompilerParams(
            dimension_semantics=("parallel",)),   # shards groups across TCs on v7x
    )(W_cat, sproj, S_all, T_all, side_all)
    return out[:, 0]                              # [NG*G] per-example losses


mtne_loss = jax.jit(mtne_loss_pallas,
                    static_argnames=("G", "R_MAX", "P", "KOR", "C", "M"))


# ----------------- host-side glue: literal port of the data plumbing -----------------
def single_metapath_influence(s_node, s_type, t_node, t_type, metapath, closest_edge):
    # Literal port of metapath_mtne.single_metapath_influence (including the fact
    # that the `else` branch never appends the s-side edge, as in the original).
    result_edge = []
    for index in range(len(metapath['edge']) - 1):
        if (metapath['edge'][index] == s_node and metapath['node_type'][index] == s_type) and \
           (metapath['edge'][index + 1] == t_node and metapath['node_type'][index + 1] == t_type):
            s_index = index
            t_index = s_index + 1
            if s_index < closest_edge / 2:
                for i in range(s_index):
                    result_edge.append([metapath['edge'][i], metapath['node_type'][i],
                                        metapath['edge'][i + 1], metapath['node_type'][i + 1],
                                        metapath['time'][i], s_index - i])
                for i in range(closest_edge - s_index):
                    result_edge.append([metapath['edge'][t_index + i], metapath['node_type'][t_index + i],
                                        metapath['edge'][t_index + i + 1], metapath['node_type'][t_index + i + 1],
                                        metapath['time'][t_index + i], i + 1])
            elif len(metapath['edge']) - t_index - 1 < closest_edge / 2:
                for i in range(len(metapath['edge']) - 1 - t_index):
                    result_edge.append([metapath['edge'][-2 - i], metapath['node_type'][-2 - i],
                                        metapath['edge'][-1 - i], metapath['node_type'][-1 - i],
                                        metapath['time'][-1], len(metapath['edge']) - 1 - t_index - i])
                for i in range(closest_edge - (len(metapath['edge']) - 1 - t_index)):
                    result_edge.append([metapath['edge'][s_index - 1 - i], metapath['node_type'][s_index - 1 - i],
                                        metapath['edge'][s_index - i], metapath['node_type'][s_index - i],
                                        metapath['time'][s_index - 1 - i], i + 1])
            else:
                for i in range(int(closest_edge / 2)):
                    result_edge.append([metapath['edge'][t_index + i], metapath['node_type'][t_index + i],
                                        metapath['edge'][t_index + i + 1], metapath['node_type'][t_index + i + 1],
                                        metapath['time'][t_index + i], i + 1])
                    # NOTE: original code builds the s-side edge here but never appends it.
    return result_edge


def build_rows(params_np, oriented_idx, s_node, t_node, s_t_time,
               metapath_s, neg_s_node, neg_s_metapath):
    rows = []

    def emb(node, ntype):
        return params_np[ntype + '_emb'][int(node) - 1]

    def add_sim_row(pair, a_node, a_type, b_node, b_type):
        rows.append(dict(pair=pair, s=emb(a_node, a_type), t=emb(b_node, b_type),
                         w=oriented_idx[(a_type, b_type)], dis=None, mp=None,
                         dtime=0.0, delta=0.0, is_sim=1.0))

    def add_edge_row(pair, edge_temp, mp_idx, dtime, delta):
        rows.append(dict(pair=pair, s=emb(edge_temp[0], edge_temp[1]),
                         t=emb(edge_temp[2], edge_temp[3]),
                         w=oriented_idx[(edge_temp[1], edge_temp[3])],
                         dis=int(edge_temp[5]) - 1, mp=mp_idx,
                         dtime=float(dtime), delta=float(delta), is_sim=0.0))

    # positive pair (segment 0)
    add_sim_row(0, s_node[0], s_node[1], t_node[0], t_node[1])
    delta_s = float(params_np[s_node[1] + '_delta'][int(s_node[0]) - 1])
    delta_t = float(params_np[t_node[1] + '_delta'][int(t_node[0]) - 1])
    for metapath_temp in metapath_s:
        mp_idx = int(metapath_temp['type'][0]) - 1
        for edge_temp in single_metapath_influence(s_node[0], s_node[1], t_node[0], t_node[1],
                                                   metapath_temp, CLOSEST_EDGE):
            dtime = abs(int(s_t_time) - int(edge_temp[4]))
            add_edge_row(0, edge_temp, mp_idx, dtime, delta_s * delta_t)

    # negatives (segments 1..)
    for p, (neg_node, neg_node_type) in enumerate(neg_s_node, start=1):
        add_sim_row(p, s_node[0], s_node[1], neg_node, neg_node_type)
        delta_neg = float(params_np[neg_node_type + '_delta'][int(neg_node) - 1])
        for mp_temp in neg_s_metapath[neg_node_type + neg_node]:
            mp_idx = int(mp_temp['type']) - 1
            for edge_temp in single_metapath_influence(s_node[0], s_node[1], neg_node[0],
                                                       neg_node_type[0], mp_temp, CLOSEST_EDGE):
                # faithful to the original: the negative branch uses s_t_time[0]
                dtime = abs(int(s_t_time[0]) - int(edge_temp[4]))
                add_edge_row(p, edge_temp, mp_idx, dtime, delta_s * delta_neg)
    return rows


def pack_batch(example_rows, G, R_MAX, D, KOR, C, M):
    """Pack B examples into lane-dense slabs for the grouped/batched kernel."""
    OFF_DM, OFF_DT, F = side_offsets(KOR, C, M)
    OFF_DELTA, OFF_SIM, OFF_VALID, OFF_PAIR = OFF_DT + 1, OFF_DT + 2, OFF_DT + 3, OFF_DT + 4
    B = len(example_rows)
    NG = int(np.ceil(B / float(G)))
    B_pad = NG * G
    R_tot = B_pad * R_MAX

    S = np.zeros((R_tot, D), np.float32)
    T = np.zeros((R_tot, D), np.float32)
    SIDE = np.zeros((R_tot, F), np.float32)
    for b, rows in enumerate(example_rows):
        assert len(rows) <= R_MAX, "increase R_MAX"
        for r, row in enumerate(rows):
            rr = b * R_MAX + r
            S[rr] = row['s']
            T[rr] = row['t']
            SIDE[rr, row['w']] = 1.0
            if row['dis'] is not None:
                SIDE[rr, OFF_DM + row['dis'] * M + row['mp']] = 1.0   # combined dis×mp one-hot
            SIDE[rr, OFF_DT] = row['dtime']
            SIDE[rr, OFF_DELTA] = row['delta']
            SIDE[rr, OFF_SIM] = row['is_sim']
            SIDE[rr, OFF_VALID] = 1.0
            SIDE[rr, OFF_PAIR] = float(row['pair'])
    return S, T, SIDE, NG, B_pad


# ----------------------------- pure-python reference -----------------------------
def _sigmoid(x):
    return 1.0 / (1.0 + np.exp(-x))


def _softmax(x):
    e = np.exp(x - np.max(x))
    return e / e.sum()


def nodes_similarity_ref(params_np, s_node, s_type, t_node, t_type):
    s_emb = params_np[s_type + '_emb'][int(s_node) - 1].astype(np.float64)
    t_emb = params_np[t_type + '_emb'][int(t_node) - 1].astype(np.float64)
    key = s_type + '_' + t_type
    if key in params_np:
        W = params_np[key].astype(np.float64)
    else:
        W = params_np[t_type + '_' + s_type].astype(np.float64).T
    return float(np.tanh(s_emb @ W @ t_emb))


def forward_ref(params_np, s_node, t_node, s_t_time, metapath_s, neg_s_node, neg_s_metapath):
    s_t_similarity = nodes_similarity_ref(params_np, s_node[0], s_node[1], t_node[0], t_node[1])
    dis_att = _softmax(params_np['distance_att'].astype(np.float64))
    mp_type_att = _softmax(params_np['metapath_att'].astype(np.float64))
    mp_influ = 0.0
    for metapath_temp in metapath_s:
        single_mp = 0.0
        train_edge = single_metapath_influence(s_node[0], s_node[1], t_node[0], t_node[1],
                                               metapath_temp, CLOSEST_EDGE)
        for edge_temp in train_edge:
            single_temp = nodes_similarity_ref(params_np, edge_temp[0], edge_temp[1],
                                               edge_temp[2], edge_temp[3])
            single_temp = single_temp * dis_att[int(edge_temp[5]) - 1]
            delta_time = abs(int(s_t_time) - int(edge_temp[4]))
            delta_s = float(params_np[s_node[1] + '_delta'][int(s_node[0]) - 1])
            delta_t = float(params_np[t_node[1] + '_delta'][int(t_node[0]) - 1])
            single_temp = single_temp * np.exp(-(delta_s * delta_t * delta_time))
            single_mp = single_mp + single_temp
        single_mp = single_mp * mp_type_att[int(metapath_temp['type'][0]) - 1]
        mp_influ = mp_influ + single_mp
    p_lambda = s_t_similarity + mp_influ
    n_lambda = 0.0
    for neg_node, neg_node_type in neg_s_node:
        s_neg_similarity = nodes_similarity_ref(params_np, s_node[0], s_node[1], neg_node, neg_node_type)
        mp_influ = 0.0
        for mp_temp in neg_s_metapath[neg_node_type + neg_node]:
            single_mp = 0.0
            train_edge = single_metapath_influence(s_node[0], s_node[1], neg_node[0],
                                                   neg_node_type[0], mp_temp, CLOSEST_EDGE)
            for edge_temp in train_edge:
                single_temp = nodes_similarity_ref(params_np, edge_temp[0], edge_temp[1],
                                                   edge_temp[2], edge_temp[3])
                single_temp = single_temp * dis_att[int(edge_temp[5]) - 1]
                delta_time = abs(int(s_t_time[0]) - int(edge_temp[4]))
                delta_s = float(params_np[s_node[1] + '_delta'][int(s_node[0]) - 1])
                delta_neg = float(params_np[neg_node_type + '_delta'][int(neg_node) - 1])
                single_temp = single_temp * np.exp(-(delta_s * delta_neg * delta_time))
                single_mp = single_mp + single_temp
            single_mp = single_mp * mp_type_att[int(mp_temp['type']) - 1]
            mp_influ = mp_influ + single_mp
        n_lambda = n_lambda + np.log(_sigmoid(-(s_neg_similarity + mp_influ)) + 1e-6)
    return -np.log(_sigmoid(p_lambda) + 1e-6) - n_lambda


# --------------------------------- parameters ---------------------------------
def init_params(key):
    ks = jax.random.split(key, 4)
    params = {}
    params['a_emb'] = jax.random.uniform(ks[0], (NODE_DIM['a'], EMB_DIM), jnp.float32,
                                         -1.0 / np.sqrt(NODE_DIM['a']), 1.0 / np.sqrt(NODE_DIM['a']))
    params['p_emb'] = jax.random.uniform(ks[1], (NODE_DIM['p'], EMB_DIM), jnp.float32,
                                         -1.0 / np.sqrt(NODE_DIM['p']), 1.0 / np.sqrt(NODE_DIM['p']))
    # module initializes deltas/attentions to ones; a tiny deterministic
    # perturbation makes the decay / attention paths non-trivially exercised
    params['a_delta'] = jnp.ones((NODE_DIM['a'],), jnp.float32) + \
        0.02 * jnp.arange(NODE_DIM['a'], dtype=jnp.float32)
    params['p_delta'] = jnp.ones((NODE_DIM['p'],), jnp.float32) + \
        0.01 * jnp.arange(NODE_DIM['p'], dtype=jnp.float32)
    params['a_p'] = jax.random.uniform(ks[2], (EMB_DIM, EMB_DIM), jnp.float32,
                                       -1.0 / EMB_DIM, 1.0 / EMB_DIM)
    params['p_p'] = jax.random.uniform(ks[3], (EMB_DIM, EMB_DIM), jnp.float32,
                                       -1.0 / EMB_DIM, 1.0 / EMB_DIM)
    params['distance_att'] = jnp.ones((CLOSEST_EDGE,), jnp.float32) + \
        0.1 * jnp.arange(CLOSEST_EDGE, dtype=jnp.float32)
    params['metapath_att'] = jnp.ones((METAPATH_TYPE,), jnp.float32) + \
        0.1 * jnp.arange(METAPATH_TYPE, dtype=jnp.float32)
    return params


if __name__ == "__main__":
    params = init_params(jax.random.PRNGKey(0))
    params_np = {k: np.asarray(v, np.float32) for k, v in params.items()}

    # oriented edge-type matrix stack (W or W.T, matching nodes_similarity dispatch)
    oriented_idx = {}
    W_list = []
    for et in EDGE_TYPE:
        W = params_np[et[0] + '_' + et[1]]
        oriented_idx[(et[0], et[1])] = len(W_list)
        W_list.append(W)
        if et[0] != et[1]:
            oriented_idx[(et[1], et[0])] = len(W_list)
            W_list.append(W.T.copy())
    KOR = len(W_list)
    assert KOR * EMB_DIM + 1 <= WCAT_LANES
    # concatenated + 128-lane padded matrix stack for the single fused MXU matmul
    W_cat = np.zeros((EMB_DIM, WCAT_LANES), np.float32)
    for k, Wk in enumerate(W_list):
        W_cat[:, k * EMB_DIM:(k + 1) * EMB_DIM] = Wk

    # ---- three distinct forward() input configurations (same structures the
    # torch module consumes); config 2 has only one negative to exercise the
    # padded-pair validity masking ----
    cfg0 = (('3', 'a'), ('5', 'p'), '10',
            [{'edge': ['1', '3', '5', '6', '2', '7'],
              'node_type': ['p', 'a', 'p', 'p', 'a', 'p'],
              'time': ['1', '2', '3', '4', '5'], 'type': '1'},
             {'edge': ['6', '2', '1', '3', '5', '7', '4', '1'],
              'node_type': ['p', 'a', 'p', 'a', 'p', 'p', 'a', 'p'],
              'time': ['1', '3', '5', '7', '9', '11', '13'], 'type': '2'}],
            [['7', 'p'], ['1', 'p']],
            {'p7': [{'edge': ['1', '3', '7', '5', '6', '2'],
                     'node_type': ['p', 'a', 'p', 'p', 'p', 'a'],
                     'time': ['2', '4', '6', '8', '10'], 'type': '1'}],
             'p1': [{'edge': ['5', '3', '1', '6', '7', '2'],
                     'node_type': ['p', 'a', 'p', 'p', 'p', 'a'],
                     'time': ['1', '2', '3', '4', '5'], 'type': '2'}]})
    cfg1 = (('2', 'a'), ('6', 'p'), '7',
            [{'edge': ['4', '2', '6', '1', '3', '8'],
              'node_type': ['p', 'a', 'p', 'p', 'a', 'p'],
              'time': ['1', '2', '3', '4', '5'], 'type': '2'}],
            [['9', 'p'], ['3', 'p']],
            {'p9': [{'edge': ['1', '2', '9', '5', '6', '3'],
                     'node_type': ['p', 'a', 'p', 'p', 'p', 'a'],
                     'time': ['2', '3', '4', '5', '6'], 'type': '1'}],
             'p3': [{'edge': ['5', '2', '3', '6', '7', '1'],
                     'node_type': ['p', 'a', 'p', 'p', 'p', 'a'],
                     'time': ['1', '4', '6', '8', '9'], 'type': '2'}]})
    cfg2 = (('4', 'a'), ('2', 'p'), '3',
            [{'edge': ['1', '4', '2', '5', '6', '3'],
              'node_type': ['p', 'a', 'p', 'p', 'a', 'p'],
              'time': ['1', '2', '3', '4', '5'], 'type': '1'}],
            [['8', 'p']],
            {'p8': [{'edge': ['2', '4', '8', '5', '6', '1'],
                     'node_type': ['p', 'a', 'p', 'p', 'p', 'a'],
                     'time': ['1', '2', '3', '4', '5'], 'type': '1'}]})
    configs = [cfg0, cfg1, cfg2]

    # ---- batch of B examples: B/GROUP = 8 grid steps so both v7x TCs get
    # several steps of the "parallel" axis and the pipeline can overlap ----
    B = 256
    batch_cfg = [configs[i % len(configs)] for i in range(B)]
    P = 1 + max(len(c[4]) for c in batch_cfg)          # pairs per example (1 pos + max negs)
    example_rows = [build_rows(params_np, oriented_idx, *c) for c in batch_cfg]
    S_all, T_all, SIDE_all, NG, B_pad = pack_batch(
        example_rows, GROUP, R_MAX, EMB_DIM, KOR, CLOSEST_EDGE, METAPATH_TYPE)

    losses = mtne_loss(jnp.asarray(S_all), jnp.asarray(T_all), jnp.asarray(SIDE_all),
                       jnp.asarray(W_cat),
                       jnp.asarray(params_np['distance_att']),
                       jnp.asarray(params_np['metapath_att']),
                       G=GROUP, R_MAX=R_MAX, P=P, KOR=KOR,
                       C=CLOSEST_EDGE, M=METAPATH_TYPE)
    losses = np.asarray(jax.block_until_ready(losses))[:B]

    refs = np.array([forward_ref(params_np, *c) for c in configs], np.float64)
    expected = np.array([refs[i % len(configs)] for i in range(B)], np.float32)
    np.testing.assert_allclose(losses, expected, rtol=1e-3, atol=2e-3)
    print("KERNEL_OK")
</pallas_src>

<mosaic_0001>
module attributes {stable_mosaic.version = 11 : i64} {
  func.func @mtne_kernel(%arg0: i32, %arg1: memref<32x128xf32, #tpu.memory_space<vmem>>, %arg2: memref<16x128xf32, #tpu.memory_space<vmem>>, %arg3: memref<1024x32xf32, #tpu.memory_space<vmem>>, %arg4: memref<1024x32xf32, #tpu.memory_space<vmem>>, %arg5: memref<1024x16xf32, #tpu.memory_space<vmem>>, %arg6: memref<32x128xf32, #tpu.memory_space<vmem>>) attributes {dimension_semantics = [#tpu.dimension_semantics<parallel>], iteration_bounds = array<i64: 8>, scalar_prefetch = 0 : i64, scratch_operands = 0 : i64, tpu.core_type = #tpu.core_type<tc>, window_params = [{pipeline_mode = #tpu.pipeline_mode<synchronous>, transform_indices = @transform_0, window_bounds = array<i64: 32, 128>}, {pipeline_mode = #tpu.pipeline_mode<synchronous>, transform_indices = @transform_1, window_bounds = array<i64: 16, 128>}, {transform_indices = @transform_2, window_bounds = array<i64: 1024, 32>}, {transform_indices = @transform_3, window_bounds = array<i64: 1024, 32>}, {transform_indices = @transform_4, window_bounds = array<i64: 1024, 16>}, {transform_indices = @transform_5, window_bounds = array<i64: 32, 128>}]} {
    %c0 = arith.constant 0 : index
    %c0_0 = arith.constant 0 : index
    %0 = vector.load %arg3[%c0, %c0_0] : memref<1024x32xf32, #tpu.memory_space<vmem>>, vector<1024x32xf32>
    %c0_1 = arith.constant 0 : index
    %c0_2 = arith.constant 0 : index
    %1 = vector.load %arg4[%c0_1, %c0_2] : memref<1024x32xf32, #tpu.memory_space<vmem>>, vector<1024x32xf32>
    %c0_3 = arith.constant 0 : index
    %c0_4 = arith.constant 0 : index
    %2 = vector.load %arg5[%c0_3, %c0_4] : memref<1024x16xf32, #tpu.memory_space<vmem>>, vector<1024x16xf32>
    %c0_5 = arith.constant 0 : index
    %c0_6 = arith.constant 0 : index
    %3 = vector.load %arg1[%c0_5, %c0_6] : memref<32x128xf32, #tpu.memory_space<vmem>>, vector<32x128xf32>
    %cst = arith.constant dense<0.000000e+00> : vector<1024x128xf32>
    %4 = tpu.matmul %0, %3, %cst {dimension_numbers = #tpu.dot_dimension_numbers<[1], [0], [0], [1], [0, 0, 1, 1], [], []>} : vector<1024x32xf32>, vector<32x128xf32>, vector<1024x128xf32> -> vector<1024x128xf32>
    %c0_7 = arith.constant 0 : index
    %c0_8 = arith.constant 0 : index
    %5 = vector.load %arg2[%c0_7, %c0_8] : memref<16x128xf32, #tpu.memory_space<vmem>>, vector<16x128xf32>
    %cst_9 = arith.constant dense<0.000000e+00> : vector<1024x128xf32>
    %6 = tpu.matmul %2, %5, %cst_9 {dimension_numbers = #tpu.dot_dimension_numbers<[1], [0], [0], [1], [0, 0, 1, 1], [], []>} : vector<1024x16xf32>, vector<16x128xf32>, vector<1024x128xf32> -> vector<1024x128xf32>
    %7 = arith.mulf %4, %6 : vector<1024x128xf32>
    %c64_i32 = arith.constant 64 : i32
    %8 = tpu.dynamic_rotate %7 by %c64_i32 dim 1 : vector<1024x128xf32>, i32 -> vector<1024x128xf32>
    %9 = arith.addf %7, %8 : vector<1024x128xf32>
    %c32_i32 = arith.constant 32 : i32
    %10 = tpu.dynamic_rotate %9 by %c32_i32 dim 1 : vector<1024x128xf32>, i32 -> vector<1024x128xf32>
    %11 = arith.addf %9, %10 : vector<1024x128xf32>
    %12 = vector.extract_strided_slice %11 {offsets = [0, 0], sizes = [1024, 32], strides = [1, 1]} : vector<1024x128xf32> to vector<1024x32xf32>
    %13 = arith.mulf %12, %1 : vector<1024x32xf32>
    %cst_10 = arith.constant dense<0.000000e+00> : vector<1024xf32>
    %14 = vector.multi_reduction <add>, %13, %cst_10 [1] : vector<1024x32xf32> to vector<1024xf32>
    %15 = vector.shape_cast %14 : vector<1024xf32> to vector<1024x1xf32>
    %16 = math.tanh %15 : vector<1024x1xf32>
    %17 = vector.extract_strided_slice %6 {offsets = [0, 96], sizes = [1024, 1], strides = [1, 1]} : vector<1024x128xf32> to vector<1024x1xf32>
    %18 = vector.extract_strided_slice %2 {offsets = [0, 12], sizes = [1024, 1], strides = [1, 1]} : vector<1024x16xf32> to vector<1024x1xf32>
    %19 = vector.extract_strided_slice %2 {offsets = [0, 11], sizes = [1024, 1], strides = [1, 1]} : vector<1024x16xf32> to vector<1024x1xf32>
    %20 = arith.mulf %18, %19 : vector<1024x1xf32>
    %cst_11 = arith.constant 0.000000e+00 : f32
    %21 = vector.broadcast %cst_11 : f32 to vector<1024x1xf32>
    %22 = arith.subf %21, %20 : vector<1024x1xf32>
    %23 = math.exp %22 : vector<1024x1xf32>
    %24 = vector.extract_strided_slice %2 {offsets = [0, 13], sizes = [1024, 1], strides = [1, 1]} : vector<1024x16xf32> to vector<1024x1xf32>
    %25 = vector.extract_strided_slice %2 {offsets = [0, 14], sizes = [1024, 1], strides = [1, 1]} : vector<1024x16xf32> to vector<1024x1xf32>
    %26 = arith.mulf %16, %23 : vector<1024x1xf32>
    %27 = arith.addf %24, %17 : vector<1024x1xf32>
    %28 = arith.mulf %26, %27 : vector<1024x1xf32>
    %29 = arith.mulf %28, %25 : vector<1024x1xf32>
    %30 = tpu.iota {dimensions = array<i32: 0>} : vector<1024x96xi32>
    %31 = tpu.iota {dimensions = array<i32: 1>} : vector<1024x96xi32>
    %c5_i32 = arith.constant 5 : i32
    %32 = vector.broadcast %c5_i32 : i32 to vector<1024x96xi32>
    %33 = arith.shrsi %30, %32 : vector<1024x96xi32>
    %c31_i32 = arith.constant 31 : i32
    %34 = vector.broadcast %c31_i32 : i32 to vector<1024x96xi32>
    %35 = arith.andi %31, %34 : vector<1024x96xi32>
    %36 = arith.cmpi eq, %33, %35 : vector<1024x96xi32>
    %c5_i32_12 = arith.constant 5 : i32
    %37 = vector.broadcast %c5_i32_12 : i32 to vector<1024x96xi32>
    %38 = arith.shrsi %31, %37 : vector<1024x96xi32>
    %39 = arith.sitofp %38 : vector<1024x96xi32> to vector<1024x96xf32>
    %40 = vector.extract_strided_slice %2 {offsets = [0, 15], sizes = [1024, 1], strides = [1, 1]} : vector<1024x16xf32> to vector<1024x1xf32>
    %41 = vector.broadcast %40 : vector<1024x1xf32> to vector<1024x96xf32>
    %42 = arith.cmpf oeq, %41, %39 : vector<1024x96xf32>
    %43 = arith.andi %36, %42 : vector<1024x96xi1>
    %cst_13 = arith.constant 1.000000e+00 : f32
    %cst_14 = arith.constant 0.000000e+00 : f32
    %44 = vector.broadcast %cst_13 : f32 to vector<1024x96xf32>
    %45 = vector.broadcast %cst_14 : f32 to vector<1024x96xf32>
    %46 = arith.select %43, %44, %45 : vector<1024x96xi1>, vector<1024x96xf32>
    %47 = vector.broadcast %29 : vector<1024x1xf32> to vector<1024x96xf32>
    %48 = arith.mulf %47, %46 : vector<1024x96xf32>
    %cst_15 = arith.constant dense<0.000000e+00> : vector<96xf32>
    %49 = vector.multi_reduction <add>, %48, %cst_15 [0] : vector<1024x96xf32> to vector<96xf32>
    %50 = vector.shape_cast %49 : vector<96xf32> to vector<1x96xf32>
    %51 = arith.mulf %24, %25 : vector<1024x1xf32>
    %52 = vector.broadcast %51 : vector<1024x1xf32> to vector<1024x96xf32>
    %53 = arith.mulf %52, %46 : vector<1024x96xf32>
    %cst_16 = arith.constant dense<0.000000e+00> : vector<96xf32>
    %54 = vector.multi_reduction <add>, %53, %cst_16 [0] : vector<1024x96xf32> to vector<96xf32>
    %55 = vector.shape_cast %54 : vector<96xf32> to vector<1x96xf32>
    %56 = tpu.iota {dimensions = array<i32: 1>} : vector<1x96xi32>
    %c32_i32_17 = arith.constant 32 : i32
    %57 = vector.broadcast %c32_i32_17 : i32 to vector<1x96xi32>
    %58 = arith.cmpi slt, %56, %57 : vector<1x96xi32>
    %cst_18 = arith.constant 0.000000e+00 : f32
    %59 = vector.broadcast %cst_18 : f32 to vector<1x96xf32>
    %60 = arith.subf %59, %50 : vector<1x96xf32>
    %61 = arith.select %58, %50, %60 : vector<1x96xi1>, vector<1x96xf32>
    %62 = math.absf %61 : vector<1x96xf32>
    %cst_19 = arith.constant 0.000000e+00 : f32
    %63 = vector.broadcast %cst_19 : f32 to vector<1x96xf32>
    %64 = arith.subf %63, %62 : vector<1x96xf32>
    %65 = math.exp %64 : vector<1x96xf32>
    %cst_20 = arith.constant 1.000000e+00 : f32
    %66 = vector.broadcast %cst_20 : f32 to vector<1x96xf32>
    %67 = arith.addf %66, %65 : vector<1x96xf32>
    %cst_21 = arith.constant 1.000000e+00 : f32
    %68 = vector.broadcast %cst_21 : f32 to vector<1x96xf32>
    %69 = arith.divf %68, %67 : vector<1x96xf32>
    %cst_22 = arith.constant 0.000000e+00 : f32
    %70 = vector.broadcast %cst_22 : f32 to vector<1x96xf32>
    %71 = arith.cmpf oge, %61, %70 : vector<1x96xf32>
    %72 = arith.mulf %65, %69 : vector<1x96xf32>
    %73 = arith.select %71, %69, %72 : vector<1x96xi1>, vector<1x96xf32>
    %cst_23 = arith.constant 9.99999997E-7 : f32
    %74 = vector.broadcast %cst_23 : f32 to vector<1x96xf32>
    %75 = arith.addf %73, %74 : vector<1x96xf32>
    %76 = math.log %75 : vector<1x96xf32>
    %77 = arith.mulf %55, %76 : vector<1x96xf32>
    %78 = tpu.iota {dimensions = array<i32: 0>} : vector<32x96xi32>
    %79 = tpu.iota {dimensions = array<i32: 1>} : vector<32x96xi32>
    %c31_i32_24 = arith.constant 31 : i32
    %80 = vector.broadcast %c31_i32_24 : i32 to vector<32x96xi32>
    %81 = arith.andi %79, %80 : vector<32x96xi32>
    %82 = arith.cmpi eq, %78, %81 : vector<32x96xi32>
    %cst_25 = arith.constant 1.000000e+00 : f32
    %cst_26 = arith.constant 0.000000e+00 : f32
    %83 = vector.broadcast %cst_25 : f32 to vector<32x96xf32>
    %84 = vector.broadcast %cst_26 : f32 to vector<32x96xf32>
    %85 = arith.select %82, %83, %84 : vector<32x96xi1>, vector<32x96xf32>
    %86 = vector.broadcast %77 : vector<1x96xf32> to vector<32x96xf32>
    %87 = arith.mulf %85, %86 : vector<32x96xf32>
    %cst_27 = arith.constant dense<0.000000e+00> : vector<32xf32>
    %88 = vector.multi_reduction <add>, %87, %cst_27 [1] : vector<32x96xf32> to vector<32xf32>
    %89 = vector.shape_cast %88 : vector<32xf32> to vector<32x1xf32>
    %cst_28 = arith.constant 0.000000e+00 : f32
    %90 = vector.broadcast %cst_28 : f32 to vector<32x1xf32>
    %91 = arith.subf %90, %89 : vector<32x1xf32>
    %92 = vector.shape_cast %91 : vector<32x1xf32> to vector<32x1xf32>
    %93 = vector.broadcast %92 : vector<32x1xf32> to vector<32x128xf32>
    %c0_29 = arith.constant 0 : index
    %c0_30 = arith.constant 0 : index
    %94 = vector.load %arg6[%c0_29, %c0_30] : memref<32x128xf32, #tpu.memory_space<vmem>>, vector<32x128xf32>
    tpu.vector_store %arg6[%c0_29, %c0_30], %93 {strides = array<i32>} : memref<32x128xf32, #tpu.memory_space<vmem>>, vector<32x128xf32>,
    return
  }
  func.func @transform_0(%arg0: i32) -> (i32, i32) {
    %c0_i32 = arith.constant 0 : i32
    %c0_i32_0 = arith.constant 0 : i32
    %c0_i32_1 = arith.constant 0 : i32
    return %c0_i32, %c0_i32_0 : i32, i32
  }
  func.func @transform_1(%arg0: i32) -> (i32, i32) {
    %c0_i32 = arith.constant 0 : i32
    %c0_i32_0 = arith.constant 0 : i32
    %c0_i32_1 = arith.constant 0 : i32
    return %c0_i32, %c0_i32_0 : i32, i32
  }
  func.func @transform_2(%arg0: i32) -> (i32, i32) {
    %c0_i32 = arith.constant 0 : i32
    %c0_i32_0 = arith.constant 0 : i32
    return %arg0, %c0_i32 : i32, i32
  }
  func.func @transform_3(%arg0: i32) -> (i32, i32) {
    %c0_i32 = arith.constant 0 : i32
    %c0_i32_0 = arith.constant 0 : i32
    return %arg0, %c0_i32 : i32, i32
  }
  func.func @transform_4(%arg0: i32) -> (i32, i32) {
    %c0_i32 = arith.constant 0 : i32
    %c0_i32_0 = arith.constant 0 : i32
    return %arg0, %c0_i32 : i32, i32
  }
  func.func @transform_5(%arg0: i32) -> (i32, i32) {
    %c0_i32 = arith.constant 0 : i32
    %c0_i32_0 = arith.constant 0 : i32
    return %arg0, %c0_i32 : i32, i32
  }
}

</mosaic_0001>

<llo_original>
// kernel: mtne_loss_pallas.1
$region0: #{mtne_loss_pallas.1}
  #allocation0 [shape = 'u32[]', space=smem, size = 0x4, offset = 0x4, fixed_abs, tag = 'smem constant byte address 0x4 - core index']
  #allocation1 [shape = 'u32[144,128]{1,0:T(1,128)}', space=vmem, size = 0x12000, scoped, tag = 'internal scratch']
  %s0 = inlined_call_operand.vmem [shape: f32[32,128], index: 0, kind: input, shape index: {}]
  %s1 = inlined_call_operand.vmem [shape: f32[16,128], index: 1, kind: input, shape index: {}]
  %s2 = inlined_call_operand.vmem [shape: f32[8192,32], index: 2, kind: input, shape index: {}]
  %s3 = inlined_call_operand.vmem [shape: f32[8192,32], index: 3, kind: input, shape index: {}]
  %s4 = inlined_call_operand.vmem [shape: f32[8192,16], index: 4, kind: input, shape index: {}]
  %s5 = inlined_call_operand.vmem [shape: f32[256,128], index: 5, kind: output, shape index: {}]
  %s6 = sld [smem:[#allocation0]]
  $region53: #{mtne_loss_pallas.1} parent=0
    _
  %s8 = ssub.s32 1, %s6
  %s9 = scalar_select 0, %s8, %s6
  loop: start=0, step=1, limit=10
  $region2: #{mtne_loss_pallas.1} parent=0 // loop_pre_header
    _
  $region3: #{mtne_loss_pallas.1} parent=0 // loop_header
    %s11 = sphi 0, %s15
    %p12 = scmp.ge.s32.totalorder %s11, 10
    %s19 = sphi 0, %s19
    %s21 = sphi 0, %s19
    %s22 = sphi 0, %s21
    %s36 = sphi 0, %s22
    %s40 = sphi 0, %s40
    %s42 = sphi 0, %s40
    %s43 = sphi 0, %s42
    %s57 = sphi 0, %s43
    %s63 = sphi 0, %s65
    %s66 = sphi 0, %s63
    %s67 = sphi 0, %s66
    %s83 = sphi 0, %s67
    %s89 = sphi 0, %s91
    %s92 = sphi 0, %s89
    %s93 = sphi 0, %s92
    %s109 = sphi 0, %s93
    %s115 = sphi 0, %s117
    %s118 = sphi 0, %s115
    %s119 = sphi 0, %s118
    %s135 = sphi 0, %s119
    %s141 = sphi 0, %s143
    %s144 = sphi 0, %s141
    %s145 = sphi 0, %s144
    %s161 = sphi 0, %s145
  $region4: #{mtne_loss_pallas.1} parent=0 // loop_header_branch
    %14 = sbr.rel (%p12) target = $region8
  $region5: #{mtne_loss_pallas.1} parent=0 // loop_body
    %s16 = ssub.s32 %s11, 1
    %s17 = ssub.s32 %s11, 2
    %s18 = sadd.s32 %s11, 1
    %s20 = sadd.s32 %s19, 1
    %p23 = scmp.eq.s32.totalorder %s11, 7
    %p24 = scmp.ne.s32.totalorder %s19, %s21
    %p25 = scmp.eq.s32.totalorder %s11, 0
    %p26 = por %p24, %p25
    %p27 = scmp.ne.s32.totalorder %s19, %s21
    %p28 = scmp.eq.s32.totalorder %s16, 7
    %p29 = por %p27, %p28
    %p30 = scmp.ne.s32.totalorder %s21, %s22
    %p31 = scmp.eq.s32.totalorder %s16, 0
    %p32 = por %p30, %p31
    %p33 = scmp.ne.s32.totalorder %s21, %s22
    %p34 = scmp.eq.s32.totalorder %s17, 7
    %p35 = por %p33, %p34
    %p37 = scmp.ne.s32.totalorder %s22, %s36
    %p38 = scmp.eq.s32.totalorder %s17, 0
    %p39 = por %p37, %p38
    %s41 = sadd.s32 %s40, 1
    %p44 = scmp.eq.s32.totalorder %s11, 7
    %p45 = scmp.ne.s32.totalorder %s40, %s42
    %p46 = scmp.eq.s32.totalorder %s11, 0
    %p47 = por %p45, %p46
    %p48 = scmp.ne.s32.totalorder %s40, %s42
    %p49 = scmp.eq.s32.totalorder %s16, 7
    %p50 = por %p48, %p49
    %p51 = scmp.ne.s32.totalorder %s42, %s43
    %p52 = scmp.eq.s32.totalorder %s16, 0
    %p53 = por %p51, %p52
    %p54 = scmp.ne.s32.totalorder %s42, %s43
    %p55 = scmp.eq.s32.totalorder %s17, 7
    %p56 = por %p54, %p55
    %p58 = scmp.ne.s32.totalorder %s43, %s57
    %p59 = scmp.eq.s32.totalorder %s17, 0
    %p60 = por %p58, %p59
    %s61 = ssub.s32 %s11, %s18
    %p62 = scmp.eq.s32.totalorder %s61, 0
    %s64 = sadd.s32 %s63, 1
    %s65 = scalar_select %p62, %s63, %s64
    %p68 = pneg %p62
    %p69 = scmp.eq.s32.totalorder %s11, 7
    %p70 = por %p68, %p69
    %p71 = scmp.ne.s32.totalorder %s63, %s66
    %p72 = scmp.eq.s32.totalorder %s11, 0
    %p73 = por %p71, %p72
    %p74 = scmp.ne.s32.totalorder %s63, %s66
    %p75 = scmp.eq.s32.totalorder %s16, 7
    %p76 = por %p74, %p75
    %p77 = scmp.ne.s32.totalorder %s66, %s67
    %p78 = scmp.eq.s32.totalorder %s16, 0
    %p79 = por %p77, %p78
    %p80 = scmp.ne.s32.totalorder %s66, %s67
    %p81 = scmp.eq.s32.totalorder %s17, 7
    %p82 = por %p80, %p81
    %p84 = scmp.ne.s32.totalorder %s67, %s83
    %p85 = scmp.eq.s32.totalorder %s17, 0
    %p86 = por %p84, %p85
    %s87 = ssub.s32 %s11, %s18
    %p88 = scmp.eq.s32.totalorder %s87, 0
    %s90 = sadd.s32 %s89, 1
    %s91 = scalar_select %p88, %s89, %s90
    %p94 = pneg %p88
    %p95 = scmp.eq.s32.totalorder %s11, 7
    %p96 = por %p94, %p95
    %p97 = scmp.ne.s32.totalorder %s89, %s92
    %p98 = scmp.eq.s32.totalorder %s11, 0
    %p99 = por %p97, %p98
    %p100 = scmp.ne.s32.totalorder %s89, %s92
    %p101 = scmp.eq.s32.totalorder %s16, 7
    %p102 = por %p100, %p101
    %p103 = scmp.ne.s32.totalorder %s92, %s93
    %p104 = scmp.eq.s32.totalorder %s16, 0
    %p105 = por %p103, %p104
    %p106 = scmp.ne.s32.totalorder %s92, %s93
    %p107 = scmp.eq.s32.totalorder %s17, 7
    %p108 = por %p106, %p107
    %p110 = scmp.ne.s32.totalorder %s93, %s109
    %p111 = scmp.eq.s32.totalorder %s17, 0
    %p112 = por %p110, %p111
    %s113 = ssub.s32 %s11, %s18
    %p114 = scmp.eq.s32.totalorder %s113, 0
    %s116 = sadd.s32 %s115, 1
    %s117 = scalar_select %p114, %s115, %s116
    %p120 = pneg %p114
    %p121 = scmp.eq.s32.totalorder %s11, 7
    %p122 = por %p120, %p121
    %p123 = scmp.ne.s32.totalorder %s115, %s118
    %p124 = scmp.eq.s32.totalorder %s11, 0
    %p125 = por %p123, %p124
    %p126 = scmp.ne.s32.totalorder %s115, %s118
    %p127 = scmp.eq.s32.totalorder %s16, 7
    %p128 = por %p126, %p127
    %p129 = scmp.ne.s32.totalorder %s118, %s119
    %p130 = scmp.eq.s32.totalorder %s16, 0
    %p131 = por %p129, %p130
    %p132 = scmp.ne.s32.totalorder %s118, %s119
    %p133 = scmp.eq.s32.totalorder %s17, 7
    %p134 = por %p132, %p133
    %p136 = scmp.ne.s32.totalorder %s119, %s135
    %p137 = scmp.eq.s32.totalorder %s17, 0
    %p138 = por %p136, %p137
    %s139 = ssub.s32 %s11, %s18
    %p140 = scmp.eq.s32.totalorder %s139, 0
    %s142 = sadd.s32 %s141, 1
    %s143 = scalar_select %p140, %s141, %s142
    %p146 = pneg %p140
    %p147 = scmp.eq.s32.totalorder %s11, 7
    %p148 = por %p146, %p147
    %p149 = scmp.ne.s32.totalorder %s141, %s144
    %p150 = scmp.eq.s32.totalorder %s11, 0
    %p151 = por %p149, %p150
    %p152 = scmp.ne.s32.totalorder %s141, %s144
    %p153 = scmp.eq.s32.totalorder %s16, 7
    %p154 = por %p152, %p153
    %p155 = scmp.ne.s32.totalorder %s144, %s145
    %p156 = scmp.eq.s32.totalorder %s16, 0
    %p157 = por %p155, %p156
    %p158 = scmp.ne.s32.totalorder %s144, %s145
    %p159 = scmp.eq.s32.totalorder %s17, 7
    %p160 = por %p158, %p159
    %p162 = scmp.ne.s32.totalorder %s145, %s161
    %p163 = scmp.eq.s32.totalorder %s17, 0
    %p164 = por %p162, %p163
    %p165 = scmp.le.s32.totalorder 1, %s11
    %p166 = scmp.lt.s32.totalorder %s11, 9
    %p167 = pnand %p165, %p166
    %p168 = pneg %p167
    // Predicated region
    $region9: #{mtne_loss_pallas.1} parent=5 // pred_check
      _
    $region10: #{mtne_loss_pallas.1} parent=5 // pred_check_branch
      %170 = sbr.rel (%p167) target = $region12
    $region11: #{mtne_loss_pallas.1} parent=5 // pred_region
      %s171 = ssub.s32 %s11, 1
      // Predicated region
      $region13: #{mtne_loss_pallas.1} parent=11 // pred_check
        %p172 = pneg %p32
      $region14: #{mtne_loss_pallas.1} parent=11 // pred_check_branch
        %174 = sbr.rel (%p172) target = $region16
      $region15: #{mtne_loss_pallas.1} parent=11 // pred_region
        _
      $region16: #{mtne_loss_pallas.1} parent=11 // pred_fallthru
        _
      // Predicated region
      $region17: #{mtne_loss_pallas.1} parent=11 // pred_check
        %p175 = pneg %p53
      $region18: #{mtne_loss_pallas.1} parent=11 // pred_check_branch
        %177 = sbr.rel (%p175) target = $region20
      $region19: #{mtne_loss_pallas.1} parent=11 // pred_region
        _
      $region20: #{mtne_loss_pallas.1} parent=11 // pred_fallthru
        _
    $region12: #{mtne_loss_pallas.1} parent=5 // pred_fallthru
      _
    %p178 = scmp.lt.s32.totalorder %s11, 8
    // Predicated region
    $region21: #{mtne_loss_pallas.1} parent=5 // pred_check
      %p179 = pneg %p178
    $region22: #{mtne_loss_pallas.1} parent=5 // pred_check_branch
      %181 = sbr.rel (%p179) target = $region24
    $region23: #{mtne_loss_pallas.1} parent=5 // pred_region
      // Predicated region
      $region25: #{mtne_loss_pallas.1} parent=23 // pred_check
        %p182 = pneg %p73
      $region26: #{mtne_loss_pallas.1} parent=23 // pred_check_branch
        %184 = sbr.rel (%p182) target = $region28
      $region27: #{mtne_loss_pallas.1} parent=23 // pred_region
        %s185 = smul.u32 128, %s11
        %p186 = scmp.lt.s32.totalorder %s185, 1023
        %s187 = scalar_select %p186, %s185, 1023
        %s188 = smul.addr %s187, 8
        %s189 = scalar_lea.vmem %s2, %s188
        %s190 = smul.u32 128, %s11
      $region28: #{mtne_loss_pallas.1} parent=23 // pred_fallthru
        _
      // Predicated region
      $region29: #{mtne_loss_pallas.1} parent=23 // pred_check
        %p191 = pneg %p99
      $region30: #{mtne_loss_pallas.1} parent=23 // pred_check_branch
        %193 = sbr.rel (%p191) target = $region32
      $region31: #{mtne_loss_pallas.1} parent=23 // pred_region
        %s194 = smul.u32 128, %s11
        %p195 = scmp.lt.s32.totalorder %s194, 1023
        %s196 = scalar_select %p195, %s194, 1023
        %s197 = smul.addr %s196, 8
        %s198 = scalar_lea.vmem %s3, %s197
        %s199 = smul.u32 128, %s11
      $region32: #{mtne_loss_pallas.1} parent=23 // pred_fallthru
        _
      // Predicated region
      $region33: #{mtne_loss_pallas.1} parent=23 // pred_check
        %p200 = pneg %p125
      $region34: #{mtne_loss_pallas.1} parent=23 // pred_check_branch
        %202 = sbr.rel (%p200) target = $region36
      $region35: #{mtne_loss_pallas.1} parent=23 // pred_region
        %s203 = smul.u32 128, %s11
        %p204 = scmp.lt.s32.totalorder %s203, 1023
        %s205 = scalar_select %p204, %s203, 1023
        %s206 = smul.addr %s205, 8
        %s207 = scalar_lea.vmem %s4, %s206
        %s208 = smul.u32 128, %s11
      $region36: #{mtne_loss_pallas.1} parent=23 // pred_fallthru
        _
    $region24: #{mtne_loss_pallas.1} parent=5 // pred_fallthru
      _
    %p209 = scmp.le.s32.totalorder 1, %s11
    %p210 = scmp.lt.s32.totalorder %s11, 9
    %p211 = pnand %p209, %p210
    %p212 = pneg %p211
    // Predicated region
    $region37: #{mtne_loss_pallas.1} parent=5 // pred_check
      _
    $region38: #{mtne_loss_pallas.1} parent=5 // pred_check_branch
      %214 = sbr.rel (%p211) target = $region40
    $region39: #{mtne_loss_pallas.1} parent=5 // pred_region
      %s215 = ssub.s32 %s11, 1
      %p216 = pneg %p32
      %p217 = pneg %p29
      %p218 = pneg %p53
      %p219 = pneg %p50
      %s220 = smul.u32 128, %s16
      %p221 = scmp.lt.s32.totalorder %s220, 1023
      %s222 = scalar_select %p221, %s220, 1023
      %s223 = smul.addr %s222, 8
      %s224 = scalar_lea.vmem %s2, %s223
      %p225 = pneg %p79
      %p226 = pneg %p76
      %s227 = smul.u32 128, %s16
      %p228 = scmp.lt.s32.totalorder %s227, 1023
      %s229 = scalar_select %p228, %s227, 1023
      %s230 = smul.addr %s229, 8
      %s231 = scalar_lea.vmem %s3, %s230
      %p232 = pneg %p105
      %p233 = pneg %p102
      %s234 = smul.u32 128, %s16
      %p235 = scmp.lt.s32.totalorder %s234, 1023
      %s236 = scalar_select %p235, %s234, 1023
      %s237 = smul.addr %s236, 8
      %s238 = scalar_lea.vmem %s4, %s237
      %p239 = pneg %p131
      %p240 = pneg %p128
      %p241 = pneg %p157
      %p242 = pneg %p154
      %s243 = smul.u32 4, %s16
      %p244 = scmp.lt.s32.totalorder %s243, 31
      %s245 = scalar_select %p244, %s243, 31
      %s246 = smul.addr %s245, 8
      %s247 = scalar_lea.vmem %s5, %s246
      %s248 = smul.u32 128, %s16
      %p249 = scmp.lt.s32.totalorder %s248, 1023
      %s250 = scalar_select %p249, %s248, 1023
      %s251 = smul.addr %s250, 8
      %s252 = scalar_lea.vmem %s2, %s251
      %s253 = smul.u32 128, %s16
      %s254 = smul.u32 128, %s16
      %p255 = scmp.lt.s32.totalorder %s254, 1023
      %s256 = scalar_select %p255, %s254, 1023
      %s257 = smul.addr %s256, 8
      %s258 = scalar_lea.vmem %s3, %s257
      %s259 = smul.u32 128, %s16
      %s260 = smul.u32 128, %s16
      %p261 = scmp.lt.s32.totalorder %s260, 1023
      %s262 = scalar_select %p261, %s260, 1023
      %s263 = smul.addr %s262, 8
      %s264 = scalar_lea.vmem %s4, %s263
      %s265 = smul.u32 128, %s16
      %s266 = smul.u32 4, %s16
      %p267 = scmp.lt.s32.totalorder %s266, 31
      %s268 = scalar_select %p267, %s266, 31
      %s269 = smul.addr %s268, 8
      %s270 = scalar_lea.vmem %s5, %s269
      %s271 = smul.u32 4, %s16
      %v272 = vld [vmem:[%s252] sm:$0xff]
      %v273 = vld [vmem:[%s252 + $0x8] sm:$0xff]
      %v274 = vld [vmem:[%s252 + $0x10] sm:$0xff]
      %v275 = vld [vmem:[%s252 + $0x18] sm:$0xff]
      %v276 = vld [vmem:[%s252 + $0x20] sm:$0xff]
      %v277 = vld [vmem:[%s252 + $0x28] sm:$0xff]
      %v278 = vld [vmem:[%s252 + $0x30] sm:$0xff]
      %v279 = vld [vmem:[%s252 + $0x38] sm:$0xff]
      %v280 = vld [vmem:[%s252 + $0x40] sm:$0xff]
      %v281 = vld [vmem:[%s252 + $0x48] sm:$0xff]
      %v282 = vld [vmem:[%s252 + $0x50] sm:$0xff]
      %v283 = vld [vmem:[%s252 + $0x58] sm:$0xff]
      %v284 = vld [vmem:[%s252 + $0x60] sm:$0xff]
      %v285 = vld [vmem:[%s252 + $0x68] sm:$0xff]
      %v286 = vld [vmem:[%s252 + $0x70] sm:$0xff]
      %v287 = vld [vmem:[%s252 + $0x78] sm:$0xff]
      %v288 = vld [vmem:[%s252 + $0x80] sm:$0xff]
      %v289 = vld [vmem:[%s252 + $0x88] sm:$0xff]
      %v290 = vld [vmem:[%s252 + $0x90] sm:$0xff]
      %v291 = vld [vmem:[%s252 + $0x98] sm:$0xff]
      %v292 = vld [vmem:[%s252 + $0xa0] sm:$0xff]
      %v293 = vld [vmem:[%s252 + $0xa8] sm:$0xff]
      %v294 = vld [vmem:[%s252 + $0xb0] sm:$0xff]
      %v295 = vld [vmem:[%s252 + $0xb8] sm:$0xff]
      %v296 = vld [vmem:[%s252 + $0xc0] sm:$0xff]
      %v297 = vld [vmem:[%s252 + $0xc8] sm:$0xff]
      %v298 = vld [vmem:[%s252 + $0xd0] sm:$0xff]
      %v299 = vld [vmem:[%s252 + $0xd8] sm:$0xff]
      %v300 = vld [vmem:[%s252 + $0xe0] sm:$0xff]
      %v301 = vld [vmem:[%s252 + $0xe8] sm:$0xff]
      %v302 = vld [vmem:[%s252 + $0xf0] sm:$0xff]
      %v303 = vld [vmem:[%s252 + $0xf8] sm:$0xff]
      %v304 = vld [vmem:[%s252 + $0x100] sm:$0xff]
      %v305 = vld [vmem:[%s252 + $0x108] sm:$0xff]
      %v306 = vld [vmem:[%s252 + $0x110] sm:$0xff]
      %v307 = vld [vmem:[%s252 + $0x118] sm:$0xff]
      %v308 = vld [vmem:[%s252 + $0x120] sm:$0xff]
      %v309 = vld [vmem:[%s252 + $0x128] sm:$0xff]
      %v310 = vld [vmem:[%s252 + $0x130] sm:$0xff]
      %v311 = vld [vmem:[%s252 + $0x138] sm:$0xff]
      %v312 = vld [vmem:[%s252 + $0x140] sm:$0xff]
      %v313 = vld [vmem:[%s252 + $0x148] sm:$0xff]
      %v314 = vld [vmem:[%s252 + $0x150] sm:$0xff]
      %v315 = vld [vmem:[%s252 + $0x158] sm:$0xff]
      %v316 = vld [vmem:[%s252 + $0x160] sm:$0xff]
      %v317 = vld [vmem:[%s252 + $0x168] sm:$0xff]
      %v318 = vld [vmem:[%s252 + $0x170] sm:$0xff]
      %v319 = vld [vmem:[%s252 + $0x178] sm:$0xff]
      %v320 = vld [vmem:[%s252 + $0x180] sm:$0xff]
      %v321 = vld [vmem:[%s252 + $0x188] sm:$0xff]
      %v322 = vld [vmem:[%s252 + $0x190] sm:$0xff]
      %v323 = vld [vmem:[%s252 + $0x198] sm:$0xff]
      %v324 = vld [vmem:[%s252 + $0x1a0] sm:$0xff]
      %v325 = vld [vmem:[%s252 + $0x1a8] sm:$0xff]
      %v326 = vld [vmem:[%s252 + $0x1b0] sm:$0xff]
      %v327 = vld [vmem:[%s252 + $0x1b8] sm:$0xff]
      %v328 = vld [vmem:[%s252 + $0x1c0] sm:$0xff]
      %v329 = vld [vmem:[%s252 + $0x1c8] sm:$0xff]
      %v330 = vld [vmem:[%s252 + $0x1d0] sm:$0xff]
      %v331 = vld [vmem:[%s252 + $0x1d8] sm:$0xff]
      %v332 = vld [vmem:[%s252 + $0x1e0] sm:$0xff]
      %v333 = vld [vmem:[%s252 + $0x1e8] sm:$0xff]
      %v334 = vld [vmem:[%s252 + $0x1f0] sm:$0xff]
      %v335 = vld [vmem:[%s252 + $0x1f8] sm:$0xff]
      %v336 = vld [vmem:[%s252 + $0x200] sm:$0xff]
      %v337 = vld [vmem:[%s252 + $0x208] sm:$0xff]
      %v338 = vld [vmem:[%s252 + $0x210] sm:$0xff]
      %v339 = vld [vmem:[%s252 + $0x218] sm:$0xff]
      %v340 = vld [vmem:[%s252 + $0x220] sm:$0xff]
      %v341 = vld [vmem:[%s252 + $0x228] sm:$0xff]
      %v342 = vld [vmem:[%s252 + $0x230] sm:$0xff]
      %v343 = vld [vmem:[%s252 + $0x238] sm:$0xff]
      %v344 = vld [vmem:[%s252 + $0x240] sm:$0xff]
      %v345 = vld [vmem:[%s252 + $0x248] sm:$0xff]
      %v346 = vld [vmem:[%s252 + $0x250] sm:$0xff]
      %v347 = vld [vmem:[%s252 + $0x258] sm:$0xff]
      %v348 = vld [vmem:[%s252 + $0x260] sm:$0xff]
      %v349 = vld [vmem:[%s252 + $0x268] sm:$0xff]
      %v350 = vld [vmem:[%s252 + $0x270] sm:$0xff]
      %v351 = vld [vmem:[%s252 + $0x278] sm:$0xff]
      %v352 = vld [vmem:[%s252 + $0x280] sm:$0xff]
      %v353 = vld [vmem:[%s252 + $0x288] sm:$0xff]
      %v354 = vld [vmem:[%s252 + $0x290] sm:$0xff]
      %v355 = vld [vmem:[%s252 + $0x298] sm:$0xff]
      %v356 = vld [vmem:[%s252 + $0x2a0] sm:$0xff]
      %v357 = vld [vmem:[%s252 + $0x2a8] sm:$0xff]
      %v358 = vld [vmem:[%s252 + $0x2b0] sm:$0xff]
      %v359 = vld [vmem:[%s252 + $0x2b8] sm:$0xff]
      %v360 = vld [vmem:[%s252 + $0x2c0] sm:$0xff]
      %v361 = vld [vmem:[%s252 + $0x2c8] sm:$0xff]
      %v362 = vld [vmem:[%s252 + $0x2d0] sm:$0xff]
      %v363 = vld [vmem:[%s252 + $0x2d8] sm:$0xff]
      %v364 = vld [vmem:[%s252 + $0x2e0] sm:$0xff]
      %v365 = vld [vmem:[%s252 + $0x2e8] sm:$0xff]
      %v366 = vld [vmem:[%s252 + $0x2f0] sm:$0xff]
      %v367 = vld [vmem:[%s252 + $0x2f8] sm:$0xff]
      %v368 = vld [vmem:[%s252 + $0x300] sm:$0xff]
      %v369 = vld [vmem:[%s252 + $0x308] sm:$0xff]
      %v370 = vld [vmem:[%s252 + $0x310] sm:$0xff]
      %v371 = vld [vmem:[%s252 + $0x318] sm:$0xff]
      %v372 = vld [vmem:[%s252 + $0x320] sm:$0xff]
      %v373 = vld [vmem:[%s252 + $0x328] sm:$0xff]
      %v374 = vld [vmem:[%s252 + $0x330] sm:$0xff]
      %v375 = vld [vmem:[%s252 + $0x338] sm:$0xff]
      %v376 = vld [vmem:[%s252 + $0x340] sm:$0xff]
      %v377 = vld [vmem:[%s252 + $0x348] sm:$0xff]
      %v378 = vld [vmem:[%s252 + $0x350] sm:$0xff]
      %v379 = vld [vmem:[%s252 + $0x358] sm:$0xff]
      %v380 = vld [vmem:[%s252 + $0x360] sm:$0xff]
      %v381 = vld [vmem:[%s252 + $0x368] sm:$0xff]
      %v382 = vld [vmem:[%s252 + $0x370] sm:$0xff]
      %v383 = vld [vmem:[%s252 + $0x378] sm:$0xff]
      %v384 = vld [vmem:[%s252 + $0x380] sm:$0xff]
      %v385 = vld [vmem:[%s252 + $0x388] sm:$0xff]
      %v386 = vld [vmem:[%s252 + $0x390] sm:$0xff]
      %v387 = vld [vmem:[%s252 + $0x398] sm:$0xff]
      %v388 = vld [vmem:[%s252 + $0x3a0] sm:$0xff]
      %v389 = vld [vmem:[%s252 + $0x3a8] sm:$0xff]
      %v390 = vld [vmem:[%s252 + $0x3b0] sm:$0xff]
      %v391 = vld [vmem:[%s252 + $0x3b8] sm:$0xff]
      %v392 = vld [vmem:[%s252 + $0x3c0] sm:$0xff]
      %v393 = vld [vmem:[%s252 + $0x3c8] sm:$0xff]
      %v394 = vld [vmem:[%s252 + $0x3d0] sm:$0xff]
      %v395 = vld [vmem:[%s252 + $0x3d8] sm:$0xff]
      %v396 = vld [vmem:[%s252 + $0x3e0] sm:$0xff]
      %v397 = vld [vmem:[%s252 + $0x3e8] sm:$0xff]
      %v398 = vld [vmem:[%s252 + $0x3f0] sm:$0xff]
      %v399 = vld [vmem:[%s252 + $0x3f8] sm:$0xff]
      %v400 = vld [vmem:[%s258] sm:$0xff]
      %v401 = vld [vmem:[%s258 + $0x8] sm:$0xff]
      %v402 = vld [vmem:[%s258 + $0x10] sm:$0xff]
      %v403 = vld [vmem:[%s258 + $0x18] sm:$0xff]
      %v404 = vld [vmem:[%s258 + $0x20] sm:$0xff]
      %v405 = vld [vmem:[%s258 + $0x28] sm:$0xff]
      %v406 = vld [vmem:[%s258 + $0x30] sm:$0xff]
      %v407 = vld [vmem:[%s258 + $0x38] sm:$0xff]
      %v408 = vld [vmem:[%s258 + $0x40] sm:$0xff]
      %v409 = vld [vmem:[%s258 + $0x48] sm:$0xff]
      %v410 = vld [vmem:[%s258 + $0x50] sm:$0xff]
      %v411 = vld [vmem:[%s258 + $0x58] sm:$0xff]
      %v412 = vld [vmem:[%s258 + $0x60] sm:$0xff]
      %v413 = vld [vmem:[%s258 + $0x68] sm:$0xff]
      %v414 = vld [vmem:[%s258 + $0x70] sm:$0xff]
      %v415 = vld [vmem:[%s258 + $0x78] sm:$0xff]
      %v416 = vld [vmem:[%s258 + $0x80] sm:$0xff]
      %v417 = vld [vmem:[%s258 + $0x88] sm:$0xff]
      %v418 = vld [vmem:[%s258 + $0x90] sm:$0xff]
      %v419 = vld [vmem:[%s258 + $0x98] sm:$0xff]
      %v420 = vld [vmem:[%s258 + $0xa0] sm:$0xff]
      %v421 = vld [vmem:[%s258 + $0xa8] sm:$0xff]
      %v422 = vld [vmem:[%s258 + $0xb0] sm:$0xff]
      %v423 = vld [vmem:[%s258 + $0xb8] sm:$0xff]
      %v424 = vld [vmem:[%s258 + $0xc0] sm:$0xff]
      %v425 = vld [vmem:[%s258 + $0xc8] sm:$0xff]
      %v426 = vld [vmem:[%s258 + $0xd0] sm:$0xff]
      %v427 = vld [vmem:[%s258 + $0xd8] sm:$0xff]
      %v428 = vld [vmem:[%s258 + $0xe0] sm:$0xff]
      %v429 = vld [vmem:[%s258 + $0xe8] sm:$0xff]
      %v430 = vld [vmem:[%s258 + $0xf0] sm:$0xff]
      %v431 = vld [vmem:[%s258 + $0xf8] sm:$0xff]
      %v432 = vld [vmem:[%s258 + $0x100] sm:$0xff]
      %v433 = vld [vmem:[%s258 + $0x108] sm:$0xff]
      %v434 = vld [vmem:[%s258 + $0x110] sm:$0xff]
      %v435 = vld [vmem:[%s258 + $0x118] sm:$0xff]
      %v436 = vld [vmem:[%s258 + $0x120] sm:$0xff]
      %v437 = vld [vmem:[%s258 + $0x128] sm:$0xff]
      %v438 = vld [vmem:[%s258 + $0x130] sm:$0xff]
      %v439 = vld [vmem:[%s258 + $0x138] sm:$0xff]
      %v440 = vld [vmem:[%s258 + $0x140] sm:$0xff]
      %v441 = vld [vmem:[%s258 + $0x148] sm:$0xff]
      %v442 = vld [vmem:[%s258 + $0x150] sm:$0xff]
      %v443 = vld [vmem:[%s258 + $0x158] sm:$0xff]
      %v444 = vld [vmem:[%s258 + $0x160] sm:$0xff]
      %v445 = vld [vmem:[%s258 + $0x168] sm:$0xff]
      %v446 = vld [vmem:[%s258 + $0x170] sm:$0xff]
      %v447 = vld [vmem:[%s258 + $0x178] sm:$0xff]
      %v448 = vld [vmem:[%s258 + $0x180] sm:$0xff]
      %v449 = vld [vmem:[%s258 + $0x188] sm:$0xff]
      %v450 = vld [vmem:[%s258 + $0x190] sm:$0xff]
      %v451 = vld [vmem:[%s258 + $0x198] sm:$0xff]
      %v452 = vld [vmem:[%s258 + $0x1a0] sm:$0xff]
      %v453 = vld [vmem:[%s258 + $0x1a8] sm:$0xff]
      %v454 = vld [vmem:[%s258 + $0x1b0] sm:$0xff]
      %v455 = vld [vmem:[%s258 + $0x1b8] sm:$0xff]
      %v456 = vld [vmem:[%s258 + $0x1c0] sm:$0xff]
      %v457 = vld [vmem:[%s258 + $0x1c8] sm:$0xff]
      %v458 = vld [vmem:[%s258 + $0x1d0] sm:$0xff]
      %v459 = vld [vmem:[%s258 + $0x1d8] sm:$0xff]
      %v460 = vld [vmem:[%s258 + $0x1e0] sm:$0xff]
      %v461 = vld [vmem:[%s258 + $0x1e8] sm:$0xff]
      %v462 = vld [vmem:[%s258 + $0x1f0] sm:$0xff]
      %v463 = vld [vmem:[%s258 + $0x1f8] sm:$0xff]
      %v464 = vld [vmem:[%s258 + $0x200] sm:$0xff]
      %v465 = vld [vmem:[%s258 + $0x208] sm:$0xff]
      %v466 = vld [vmem:[%s258 + $0x210] sm:$0xff]
      %v467 = vld [vmem:[%s258 + $0x218] sm:$0xff]
      %v468 = vld [vmem:[%s258 + $0x220] sm:$0xff]
      %v469 = vld [vmem:[%s258 + $0x228] sm:$0xff]
      %v470 = vld [vmem:[%s258 + $0x230] sm:$0xff]
      %v471 = vld [vmem:[%s258 + $0x238] sm:$0xff]
      %v472 = vld [vmem:[%s258 + $0x240] sm:$0xff]
      %v473 = vld [vmem:[%s258 + $0x248] sm:$0xff]
      %v474 = vld [vmem:[%s258 + $0x250] sm:$0xff]
      %v475 = vld [vmem:[%s258 + $0x258] sm:$0xff]
      %v476 = vld [vmem:[%s258 + $0x260] sm:$0xff]
      %v477 = vld [vmem:[%s258 + $0x268] sm:$0xff]
      %v478 = vld [vmem:[%s258 + $0x270] sm:$0xff]
      %v479 = vld [vmem:[%s258 + $0x278] sm:$0xff]
      %v480 = vld [vmem:[%s258 + $0x280] sm:$0xff]
      %v481 = vld [vmem:[%s258 + $0x288] sm:$0xff]
      %v482 = vld [vmem:[%s258 + $0x290] sm:$0xff]
      %v483 = vld [vmem:[%s258 + $0x298] sm:$0xff]
      %v484 = vld [vmem:[%s258 + $0x2a0] sm:$0xff]
      %v485 = vld [vmem:[%s258 + $0x2a8] sm:$0xff]
      %v486 = vld [vmem:[%s258 + $0x2b0] sm:$0xff]
      %v487 = vld [vmem:[%s258 + $0x2b8] sm:$0xff]
      %v488 = vld [vmem:[%s258 + $0x2c0] sm:$0xff]
      %v489 = vld [vmem:[%s258 + $0x2c8] sm:$0xff]
      %v490 = vld [vmem:[%s258 + $0x2d0] sm:$0xff]
      %v491 = vld [vmem:[%s258 + $0x2d8] sm:$0xff]
      %v492 = vld [vmem:[%s258 + $0x2e0] sm:$0xff]
      %v493 = vld [vmem:[%s258 + $0x2e8] sm:$0xff]
      %v494 = vld [vmem:[%s258 + $0x2f0] sm:$0xff]
      %v495 = vld [vmem:[%s258 + $0x2f8] sm:$0xff]
      %v496 = vld [vmem:[%s258 + $0x300] sm:$0xff]
      %v497 = vld [vmem:[%s258 + $0x308] sm:$0xff]
      %v498 = vld [vmem:[%s258 + $0x310] sm:$0xff]
      %v499 = vld [vmem:[%s258 + $0x318] sm:$0xff]
      %v500 = vld [vmem:[%s258 + $0x320] sm:$0xff]
      %v501 = vld [vmem:[%s258 + $0x328] sm:$0xff]
      %v502 = vld [vmem:[%s258 + $0x330] sm:$0xff]
      %v503 = vld [vmem:[%s258 + $0x338] sm:$0xff]
      %v504 = vld [vmem:[%s258 + $0x340] sm:$0xff]
      %v505 = vld [vmem:[%s258 + $0x348] sm:$0xff]
      %v506 = vld [vmem:[%s258 + $0x350] sm:$0xff]
      %v507 = vld [vmem:[%s258 + $0x358] sm:$0xff]
      %v508 = vld [vmem:[%s258 + $0x360] sm:$0xff]
      %v509 = vld [vmem:[%s258 + $0x368] sm:$0xff]
      %v510 = vld [vmem:[%s258 + $0x370] sm:$0xff]
      %v511 = vld [vmem:[%s258 + $0x378] sm:$0xff]
      %v512 = vld [vmem:[%s258 + $0x380] sm:$0xff]
      %v513 = vld [vmem:[%s258 + $0x388] sm:$0xff]
      %v514 = vld [vmem:[%s258 + $0x390] sm:$0xff]
      %v515 = vld [vmem:[%s258 + $0x398] sm:$0xff]
      %v516 = vld [vmem:[%s258 + $0x3a0] sm:$0xff]
      %v517 = vld [vmem:[%s258 + $0x3a8] sm:$0xff]
      %v518 = vld [vmem:[%s258 + $0x3b0] sm:$0xff]
      %v519 = vld [vmem:[%s258 + $0x3b8] sm:$0xff]
      %v520 = vld [vmem:[%s258 + $0x3c0] sm:$0xff]
      %v521 = vld [vmem:[%s258 + $0x3c8] sm:$0xff]
      %v522 = vld [vmem:[%s258 + $0x3d0] sm:$0xff]
      %v523 = vld [vmem:[%s258 + $0x3d8] sm:$0xff]
      %v524 = vld [vmem:[%s258 + $0x3e0] sm:$0xff]
      %v525 = vld [vmem:[%s258 + $0x3e8] sm:$0xff]
      %v526 = vld [vmem:[%s258 + $0x3f0] sm:$0xff]
      %v527 = vld [vmem:[%s258 + $0x3f8] sm:$0xff]
      %v528 = vld [vmem:[%s264] sm:$0xff]
      %v529 = vld [vmem:[%s264 + $0x8] sm:$0xff]
      %v530 = vld [vmem:[%s264 + $0x10] sm:$0xff]
      %v531 = vld [vmem:[%s264 + $0x18] sm:$0xff]
      %v532 = vld [vmem:[%s264 + $0x20] sm:$0xff]
      %v533 = vld [vmem:[%s264 + $0x28] sm:$0xff]
      %v534 = vld [vmem:[%s264 + $0x30] sm:$0xff]
      %v535 = vld [vmem:[%s264 + $0x38] sm:$0xff]
      %v536 = vld [vmem:[%s264 + $0x40] sm:$0xff]
      %v537 = vld [vmem:[%s264 + $0x48] sm:$0xff]
      %v538 = vld [vmem:[%s264 + $0x50] sm:$0xff]
      %v539 = vld [vmem:[%s264 + $0x58] sm:$0xff]
      %v540 = vld [vmem:[%s264 + $0x60] sm:$0xff]
      %v541 = vld [vmem:[%s264 + $0x68] sm:$0xff]
      %v542 = vld [vmem:[%s264 + $0x70] sm:$0xff]
      %v543 = vld [vmem:[%s264 + $0x78] sm:$0xff]
      %v544 = vld [vmem:[%s264 + $0x80] sm:$0xff]
      %v545 = vld [vmem:[%s264 + $0x88] sm:$0xff]
      %v546 = vld [vmem:[%s264 + $0x90] sm:$0xff]
      %v547 = vld [vmem:[%s264 + $0x98] sm:$0xff]
      %v548 = vld [vmem:[%s264 + $0xa0] sm:$0xff]
      %v549 = vld [vmem:[%s264 + $0xa8] sm:$0xff]
      %v550 = vld [vmem:[%s264 + $0xb0] sm:$0xff]
      %v551 = vld [vmem:[%s264 + $0xb8] sm:$0xff]
      %v552 = vld [vmem:[%s264 + $0xc0] sm:$0xff]
      %v553 = vld [vmem:[%s264 + $0xc8] sm:$0xff]
      %v554 = vld [vmem:[%s264 + $0xd0] sm:$0xff]
      %v555 = vld [vmem:[%s264 + $0xd8] sm:$0xff]
      %v556 = vld [vmem:[%s264 + $0xe0] sm:$0xff]
      %v557 = vld [vmem:[%s264 + $0xe8] sm:$0xff]
      %v558 = vld [vmem:[%s264 + $0xf0] sm:$0xff]
      %v559 = vld [vmem:[%s264 + $0xf8] sm:$0xff]
      %v560 = vld [vmem:[%s264 + $0x100] sm:$0xff]
      %v561 = vld [vmem:[%s264 + $0x108] sm:$0xff]
      %v562 = vld [vmem:[%s264 + $0x110] sm:$0xff]
      %v563 = vld [vmem:[%s264 + $0x118] sm:$0xff]
      %v564 = vld [vmem:[%s264 + $0x120] sm:$0xff]
      %v565 = vld [vmem:[%s264 + $0x128] sm:$0xff]
      %v566 = vld [vmem:[%s264 + $0x130] sm:$0xff]
      %v567 = vld [vmem:[%s264 + $0x138] sm:$0xff]
      %v568 = vld [vmem:[%s264 + $0x140] sm:$0xff]
      %v569 = vld [vmem:[%s264 + $0x148] sm:$0xff]
      %v570 = vld [vmem:[%s264 + $0x150] sm:$0xff]
      %v571 = vld [vmem:[%s264 + $0x158] sm:$0xff]
      %v572 = vld [vmem:[%s264 + $0x160] sm:$0xff]
      %v573 = vld [vmem:[%s264 + $0x168] sm:$0xff]
      %v574 = vld [vmem:[%s264 + $0x170] sm:$0xff]
      %v575 = vld [vmem:[%s264 + $0x178] sm:$0xff]
      %v576 = vld [vmem:[%s264 + $0x180] sm:$0xff]
      %v577 = vld [vmem:[%s264 + $0x188] sm:$0xff]
      %v578 = vld [vmem:[%s264 + $0x190] sm:$0xff]
      %v579 = vld [vmem:[%s264 + $0x198] sm:$0xff]
      %v580 = vld [vmem:[%s264 + $0x1a0] sm:$0xff]
      %v581 = vld [vmem:[%s264 + $0x1a8] sm:$0xff]
      %v582 = vld [vmem:[%s264 + $0x1b0] sm:$0xff]
      %v583 = vld [vmem:[%s264 + $0x1b8] sm:$0xff]
      %v584 = vld [vmem:[%s264 + $0x1c0] sm:$0xff]
      %v585 = vld [vmem:[%s264 + $0x1c8] sm:$0xff]
      %v586 = vld [vmem:[%s264 + $0x1d0] sm:$0xff]
      %v587 = vld [vmem:[%s264 + $0x1d8] sm:$0xff]
      %v588 = vld [vmem:[%s264 + $0x1e0] sm:$0xff]
      %v589 = vld [vmem:[%s264 + $0x1e8] sm:$0xff]
      %v590 = vld [vmem:[%s264 + $0x1f0] sm:$0xff]
      %v591 = vld [vmem:[%s264 + $0x1f8] sm:$0xff]
      %v592 = vld [vmem:[%s264 + $0x200] sm:$0xff]
      %v593 = vld [vmem:[%s264 + $0x208] sm:$0xff]
      %v594 = vld [vmem:[%s264 + $0x210] sm:$0xff]
      %v595 = vld [vmem:[%s264 + $0x218] sm:$0xff]
      %v596 = vld [vmem:[%s264 + $0x220] sm:$0xff]
      %v597 = vld [vmem:[%s264 + $0x228] sm:$0xff]
      %v598 = vld [vmem:[%s264 + $0x230] sm:$0xff]
      %v599 = vld [vmem:[%s264 + $0x238] sm:$0xff]
      %v600 = vld [vmem:[%s264 + $0x240] sm:$0xff]
      %v601 = vld [vmem:[%s264 + $0x248] sm:$0xff]
      %v602 = vld [vmem:[%s264 + $0x250] sm:$0xff]
      %v603 = vld [vmem:[%s264 + $0x258] sm:$0xff]
      %v604 = vld [vmem:[%s264 + $0x260] sm:$0xff]
      %v605 = vld [vmem:[%s264 + $0x268] sm:$0xff]
      %v606 = vld [vmem:[%s264 + $0x270] sm:$0xff]
      %v607 = vld [vmem:[%s264 + $0x278] sm:$0xff]
      %v608 = vld [vmem:[%s264 + $0x280] sm:$0xff]
      %v609 = vld [vmem:[%s264 + $0x288] sm:$0xff]
      %v610 = vld [vmem:[%s264 + $0x290] sm:$0xff]
      %v611 = vld [vmem:[%s264 + $0x298] sm:$0xff]
      %v612 = vld [vmem:[%s264 + $0x2a0] sm:$0xff]
      %v613 = vld [vmem:[%s264 + $0x2a8] sm:$0xff]
      %v614 = vld [vmem:[%s264 + $0x2b0] sm:$0xff]
      %v615 = vld [vmem:[%s264 + $0x2b8] sm:$0xff]
      %v616 = vld [vmem:[%s264 + $0x2c0] sm:$0xff]
      %v617 = vld [vmem:[%s264 + $0x2c8] sm:$0xff]
      %v618 = vld [vmem:[%s264 + $0x2d0] sm:$0xff]
      %v619 = vld [vmem:[%s264 + $0x2d8] sm:$0xff]
      %v620 = vld [vmem:[%s264 + $0x2e0] sm:$0xff]
      %v621 = vld [vmem:[%s264 + $0x2e8] sm:$0xff]
      %v622 = vld [vmem:[%s264 + $0x2f0] sm:$0xff]
      %v623 = vld [vmem:[%s264 + $0x2f8] sm:$0xff]
      %v624 = vld [vmem:[%s264 + $0x300] sm:$0xff]
      %v625 = vld [vmem:[%s264 + $0x308] sm:$0xff]
      %v626 = vld [vmem:[%s264 + $0x310] sm:$0xff]
      %v627 = vld [vmem:[%s264 + $0x318] sm:$0xff]
      %v628 = vld [vmem:[%s264 + $0x320] sm:$0xff]
      %v629 = vld [vmem:[%s264 + $0x328] sm:$0xff]
      %v630 = vld [vmem:[%s264 + $0x330] sm:$0xff]
      %v631 = vld [vmem:[%s264 + $0x338] sm:$0xff]
      %v632 = vld [vmem:[%s264 + $0x340] sm:$0xff]
      %v633 = vld [vmem:[%s264 + $0x348] sm:$0xff]
      %v634 = vld [vmem:[%s264 + $0x350] sm:$0xff]
      %v635 = vld [vmem:[%s264 + $0x358] sm:$0xff]
      %v636 = vld [vmem:[%s264 + $0x360] sm:$0xff]
      %v637 = vld [vmem:[%s264 + $0x368] sm:$0xff]
      %v638 = vld [vmem:[%s264 + $0x370] sm:$0xff]
      %v639 = vld [vmem:[%s264 + $0x378] sm:$0xff]
      %v640 = vld [vmem:[%s264 + $0x380] sm:$0xff]
      %v641 = vld [vmem:[%s264 + $0x388] sm:$0xff]
      %v642 = vld [vmem:[%s264 + $0x390] sm:$0xff]
      %v643 = vld [vmem:[%s264 + $0x398] sm:$0xff]
      %v644 = vld [vmem:[%s264 + $0x3a0] sm:$0xff]
      %v645 = vld [vmem:[%s264 + $0x3a8] sm:$0xff]
      %v646 = vld [vmem:[%s264 + $0x3b0] sm:$0xff]
      %v647 = vld [vmem:[%s264 + $0x3b8] sm:$0xff]
      %v648 = vld [vmem:[%s264 + $0x3c0] sm:$0xff]
      %v649 = vld [vmem:[%s264 + $0x3c8] sm:$0xff]
      %v650 = vld [vmem:[%s264 + $0x3d0] sm:$0xff]
      %v651 = vld [vmem:[%s264 + $0x3d8] sm:$0xff]
      %v652 = vld [vmem:[%s264 + $0x3e0] sm:$0xff]
      %v653 = vld [vmem:[%s264 + $0x3e8] sm:$0xff]
      %v654 = vld [vmem:[%s264 + $0x3f0] sm:$0xff]
      %v655 = vld [vmem:[%s264 + $0x3f8] sm:$0xff]
      %v656 = vld [vmem:[%s0] sm:$0xff]
      %v657 = vld [vmem:[%s0 + $0x8] sm:$0xff]
      %v658 = vld [vmem:[%s0 + $0x10] sm:$0xff]
      %v659 = vld [vmem:[%s0 + $0x18] sm:$0xff]
      %vm660 = vcmask 261120
      %v662 = vsel %vm660, %v272, 0
      %v665 = vsel %vm660, %v273, 0
      %v668 = vsel %vm660, %v274, 0
      %v671 = vsel %vm660, %v275, 0
      %v674 = vsel %vm660, %v276, 0
      %v677 = vsel %vm660, %v277, 0
      %v680 = vsel %vm660, %v278, 0
      %v683 = vsel %vm660, %v279, 0
      %v686 = vsel %vm660, %v280, 0
      %v689 = vsel %vm660, %v281, 0
      %v692 = vsel %vm660, %v282, 0
      %v695 = vsel %vm660, %v283, 0
      %v698 = vsel %vm660, %v284, 0
      %v701 = vsel %vm660, %v285, 0
      %v704 = vsel %vm660, %v286, 0
      %v707 = vsel %vm660, %v287, 0
      %v710 = vsel %vm660, %v288, 0
      %v713 = vsel %vm660, %v289, 0
      %v716 = vsel %vm660, %v290, 0
      %v719 = vsel %vm660, %v291, 0
      %v722 = vsel %vm660, %v292, 0
      %v725 = vsel %vm660, %v293, 0
      %v728 = vsel %vm660, %v294, 0
      %v731 = vsel %vm660, %v295, 0
      %v734 = vsel %vm660, %v296, 0
      %v737 = vsel %vm660, %v297, 0
      %v740 = vsel %vm660, %v298, 0
      %v743 = vsel %vm660, %v299, 0
      %v746 = vsel %vm660, %v300, 0
      %v749 = vsel %vm660, %v301, 0
      %v752 = vsel %vm660, %v302, 0
      %v755 = vsel %vm660, %v303, 0
      %v758 = vsel %vm660, %v304, 0
      %v761 = vsel %vm660, %v305, 0
      %v764 = vsel %vm660, %v306, 0
      %v767 = vsel %vm660, %v307, 0
      %v770 = vsel %vm660, %v308, 0
      %v773 = vsel %vm660, %v309, 0
      %v776 = vsel %vm660, %v310, 0
      %v779 = vsel %vm660, %v311, 0
      %v782 = vsel %vm660, %v312, 0
      %v785 = vsel %vm660, %v313, 0
      %v788 = vsel %vm660, %v314, 0
      %v791 = vsel %vm660, %v315, 0
      %v794 = vsel %vm660, %v316, 0
      %v797 = vsel %vm660, %v317, 0
      %v800 = vsel %vm660, %v318, 0
      %v803 = vsel %vm660, %v319, 0
      %v806 = vsel %vm660, %v320, 0
      %v809 = vsel %vm660, %v321, 0
      %v812 = vsel %vm660, %v322, 0
      %v815 = vsel %vm660, %v323, 0
      %v818 = vsel %vm660, %v324, 0
      %v821 = vsel %vm660, %v325, 0
      %v824 = vsel %vm660, %v326, 0
      %v827 = vsel %vm660, %v327, 0
      %v830 = vsel %vm660, %v328, 0
      %v833 = vsel %vm660, %v329, 0
      %v836 = vsel %vm660, %v330, 0
      %v839 = vsel %vm660, %v331, 0
      %v842 = vsel %vm660, %v332, 0
      %v845 = vsel %vm660, %v333, 0
      %v848 = vsel %vm660, %v334, 0
      %v851 = vsel %vm660, %v335, 0
      %v854 = vsel %vm660, %v336, 0
      %v857 = vsel %vm660, %v337, 0
      %v860 = vsel %vm660, %v338, 0
      %v863 = vsel %vm660, %v339, 0
      %v866 = vsel %vm660, %v340, 0
      %v869 = vsel %vm660, %v341, 0
      %v872 = vsel %vm660, %v342, 0
      %v875 = vsel %vm660, %v343, 0
      %v878 = vsel %vm660, %v344, 0
      %v881 = vsel %vm660, %v345, 0
      %v884 = vsel %vm660, %v346, 0
      %v887 = vsel %vm660, %v347, 0
      %v890 = vsel %vm660, %v348, 0
      %v893 = vsel %vm660, %v349, 0
      %v896 = vsel %vm660, %v350, 0
      %v899 = vsel %vm660, %v351, 0
      %v902 = vsel %vm660, %v352, 0
      %v905 = vsel %vm660, %v353, 0
      %v908 = vsel %vm660, %v354, 0
      %v911 = vsel %vm660, %v355, 0
      %v914 = vsel %vm660, %v356, 0
      %v917 = vsel %vm660, %v357, 0
      %v920 = vsel %vm660, %v358, 0
      %v923 = vsel %vm660, %v359, 0
      %v926 = vsel %vm660, %v360, 0
      %v929 = vsel %vm660, %v361, 0
      %v932 = vsel %vm660, %v362, 0
      %v935 = vsel %vm660, %v363, 0
      %v938 = vsel %vm660, %v364, 0
      %v941 = vsel %vm660, %v365, 0
      %v944 = vsel %vm660, %v366, 0
      %v947 = vsel %vm660, %v367, 0
      %v950 = vsel %vm660, %v368, 0
      %v953 = vsel %vm660, %v369, 0
      %v956 = vsel %vm660, %v370, 0
      %v959 = vsel %vm660, %v371, 0
      %v962 = vsel %vm660, %v372, 0
      %v965 = vsel %vm660, %v373, 0
      %v968 = vsel %vm660, %v374, 0
      %v971 = vsel %vm660, %v375, 0
      %v974 = vsel %vm660, %v376, 0
      %v977 = vsel %vm660, %v377, 0
      %v980 = vsel %vm660, %v378, 0
      %v983 = vsel %vm660, %v379, 0
      %v986 = vsel %vm660, %v380, 0
      %v989 = vsel %vm660, %v381, 0
      %v992 = vsel %vm660, %v382, 0
      %v995 = vsel %vm660, %v383, 0
      %v998 = vsel %vm660, %v384, 0
      %v1001 = vsel %vm660, %v385, 0
      %v1004 = vsel %vm660, %v386, 0
      %v1007 = vsel %vm660, %v387, 0
      %v1010 = vsel %vm660, %v388, 0
      %v1013 = vsel %vm660, %v389, 0
      %v1016 = vsel %vm660, %v390, 0
      %v1019 = vsel %vm660, %v391, 0
      %v1022 = vsel %vm660, %v392, 0
      %v1025 = vsel %vm660, %v393, 0
      %v1028 = vsel %vm660, %v394, 0
      %v1031 = vsel %vm660, %v395, 0
      %v1034 = vsel %vm660, %v396, 0
      %v1037 = vsel %vm660, %v397, 0
      %v1040 = vsel %vm660, %v398, 0
      %v1043 = vsel %vm660, %v399, 0
      %1045 = vmatprep.subr.mxu0 0.0
      %1046 = vmatpush1.msra.mxu0 %v656
      %1047 = vmatprep.subr.mxu0 0.0
      %1048 = vmatpush1.msra.mxu0 %v657
      %1049 = vmatprep.subr.mxu0 0.0
      %1050 = vmatpush1.msra.mxu0 %v658
      %1051 = vmatprep.subr.mxu0 0.0
      %1052 = vmatpush1.msra.mxu0 %v659
      %1053 = vmatprep.subr.mxu0 0.0
      %1054 = vmatpush1.msra.mxu0 0.0
      %1055 = vmatprep.subr.mxu0 0.0
      %1056 = vmatpush1.msra.mxu0 0.0
      %1057 = vmatprep.subr.mxu0 0.0
      %1058 = vmatpush1.msra.mxu0 0.0
      %1059 = vmatprep.subr.mxu0 0.0
      %1060 = vmatpush1.msra.mxu0 0.0
      %1061 = vmatprep.subr.mxu0 0.0
      %1062 = vmatpush1.msra.mxu0 0.0
      %1063 = vmatprep.subr.mxu0 0.0
      %1064 = vmatpush1.msra.mxu0 0.0
      %1065 = vmatprep.subr.mxu0 0.0
      %1066 = vmatpush1.msra.mxu0 0.0
      %1067 = vmatprep.subr.mxu0 0.0
      %1068 = vmatpush1.msra.mxu0 0.0
      %1069 = vmatprep.subr.mxu0 0.0
      %1070 = vmatpush1.msra.mxu0 0.0
      %1071 = vmatprep.subr.mxu0 0.0
      %1072 = vmatpush1.msra.mxu0 0.0
      %1073 = vmatprep.subr.mxu0 0.0
      %1074 = vmatpush1.msra.mxu0 0.0
      %1075 = vmatprep.subr.mxu0 0.0
      %1076 = vmatpush1.msra.mxu0 0.0
      %1077 = vmatprep.subr.mxu0 0.0
      %1078 = vmatpush1.msra.mxu0 0.0
      %1079 = vmatprep.subr.mxu0 0.0
      %1080 = vmatpush1.msra.mxu0 0.0
      %1081 = vmatprep.subr.mxu0 0.0
      %1082 = vmatpush1.msra.mxu0 0.0
      %1083 = vmatprep.subr.mxu0 0.0
      %1084 = vmatpush1.msra.mxu0 0.0
      %1085 = vmatprep.subr.mxu0 0.0
      %1086 = vmatpush1.msra.mxu0 0.0
      %1087 = vmatprep.subr.mxu0 0.0
      %1088 = vmatpush1.msra.mxu0 0.0
      %1089 = vmatprep.subr.mxu0 0.0
      %1090 = vmatpush1.msra.mxu0 0.0
      %1091 = vmatprep.subr.mxu0 0.0
      %1092 = vmatpush1.msra.mxu0 0.0
      %1093 = vmatprep.subr.mxu0 0.0
      %1094 = vmatpush1.msra.mxu0 0.0
      %1095 = vmatprep.subr.mxu0 0.0
      %1096 = vmatpush1.msra.mxu0 0.0
      %1097 = vmatprep.subr.mxu0 0.0
      %1098 = vmatpush1.msra.mxu0 0.0
      %1099 = vmatprep.subr.mxu0 0.0
      %1100 = vmatpush1.msra.mxu0 0.0
      %1101 = vmatprep.subr.mxu0 0.0
      %1102 = vmatpush1.msra.mxu0 0.0
      %1103 = vmatprep.subr.mxu0 0.0
      %1104 = vmatpush1.msra.mxu0 0.0
      %1105 = vmatprep.subr.mxu0 0.0
      %1106 = vmatpush1.msra.mxu0 0.0
      %1107 = vmatprep.subr.mxu0 0.0
      %1108 = vmatpush1.msra.mxu0 0.0
      %1109 = vmatprep.mubr.f32.mxu0 0.0
      %1110 = vmatmul.mubr.f32.gmra.mrb[0].mxu0 %v662
      %v1111 = vpop.f32.mrb[0].mxu0
      %v1112 = vadd.f32 0.0, %v1111
      %v1113 = vpop.f32.mrb[0].mxu0
      %1114 = vmatprep.mubr.f32.mxu0 0.0
      %1115 = vmatmul.mubr.f32.gmra.mrb[0].mxu0 %v665
      %v1116 = vpop.f32.mrb[0].mxu0
      %v1117 = vadd.f32 0.0, %v1116
      %v1118 = vpop.f32.mrb[0].mxu0
      %1119 = vmatprep.mubr.f32.mxu0 0.0
      %1120 = vmatmul.mubr.f32.gmra.mrb[0].mxu0 %v668
      %v1121 = vpop.f32.mrb[0].mxu0
      %v1122 = vadd.f32 0.0, %v1121
      %v1123 = vpop.f32.mrb[0].mxu0
      %1124 = vmatprep.mubr.f32.mxu0 0.0
      %1125 = vmatmul.mubr.f32.gmra.mrb[0].mxu0 %v671
      %v1126 = vpop.f32.mrb[0].mxu0
      %v1127 = vadd.f32 0.0, %v1126
      %v1128 = vpop.f32.mrb[0].mxu0
      %1129 = vmatprep.mubr.f32.mxu0 0.0
      %1130 = vmatmul.mubr.f32.gmra.mrb[0].mxu0 %v674
      %v1131 = vpop.f32.mrb[0].mxu0
      %v1132 = vadd.f32 0.0, %v1131
      %v1133 = vpop.f32.mrb[0].mxu0
      %1134 = vmatprep.mubr.f32.mxu0 0.0
      %1135 = vmatmul.mubr.f32.gmra.mrb[0].mxu0 %v677
      %v1136 = vpop.f32.mrb[0].mxu0
      %v1137 = vadd.f32 0.0, %v1136
      %v1138 = vpop.f32.mrb[0].mxu0
      %1139 = vmatprep.mubr.f32.mxu0 0.0
      %1140 = vmatmul.mubr.f32.gmra.mrb[0].mxu0 %v680
      %v1141 = vpop.f32.mrb[0].mxu0
      %v1142 = vadd.f32 0.0, %v1141
      %v1143 = vpop.f32.mrb[0].mxu0
      %1144 = vmatprep.mubr.f32.mxu0 0.0
      %1145 = vmatmul.mubr.f32.gmra.mrb[0].mxu0 %v683
      %v1146 = vpop.f32.mrb[0].mxu0
      %v1147 = vadd.f32 0.0, %v1146
      %v1148 = vpop.f32.mrb[0].mxu0
      %1149 = vmatprep.mubr.f32.mxu0 0.0
      %1150 = vmatmul.mubr.f32.gmra.mrb[0].mxu0 %v686
      %v1151 = vpop.f32.mrb[0].mxu0
      %v1152 = vadd.f32 0.0, %v1151
      %v1153 = vpop.f32.mrb[0].mxu0
      %1154 = vmatprep.mubr.f32.mxu0 0.0
      %1155 = vmatmul.mubr.f32.gmra.mrb[0].mxu0 %v689
      %v1156 = vpop.f32.mrb[0].mxu0
      %v1157 = vadd.f32 0.0, %v1156
      %v1158 = vpop.f32.mrb[0].mxu0
      %1159 = vmatprep.mubr.f32.mxu0 0.0
      %1160 = vmatmul.mubr.f32.gmra.mrb[0].mxu0 %v692
      %v1161 = vpop.f32.mrb[0].mxu0
      %v1162 = vadd.f32 0.0, %v1161
      %v1163 = vpop.f32.mrb[0].mxu0
      %1164 = vmatprep.mubr.f32.mxu0 0.0
      %1165 = vmatmul.mubr.f32.gmra.mrb[0].mxu0 %v695
      %v1166 = vpop.f32.mrb[0].mxu0
      %v1167 = vadd.f32 0.0, %v1166
      %v1168 = vpop.f32.mrb[0].mxu0
      %1169 = vmatprep.mubr.f32.mxu0 0.0
      %1170 = vmatmul.mubr.f32.gmra.mrb[0].mxu0 %v698
      %v1171 = vpop.f32.mrb[0].mxu0
      %v1172 = vadd.f32 0.0, %v1171
      %v1173 = vpop.f32.mrb[0].mxu0
      %1174 = vmatprep.mubr.f32.mxu0 0.0
      %1175 = vmatmul.mubr.f32.gmra.mrb[0].mxu0 %v701
      %v1176 = vpop.f32.mrb[0].mxu0
      %v1177 = vadd.f32 0.0, %v1176
      %v1178 = vpop.f32.mrb[0].mxu0
      %1179 = vmatprep.mubr.f32.mxu0 0.0
      %1180 = vmatmul.mubr.f32.gmra.mrb[0].mxu0 %v704
      %v1181 = vpop.f32.mrb[0].mxu0
      %v1182 = vadd.f32 0.0, %v1181
      %v1183 = vpop.f32.mrb[0].mxu0
      %1184 = vmatprep.mubr.f32.mxu0 0.0
      %1185 = vmatmul.mubr.f32.gmra.mrb[0].mxu0 %v707
      %v1186 = vpop.f32.mrb[0].mxu0
      %v1187 = vadd.f32 0.0, %v1186
      %v1188 = vpop.f32.mrb[0].mxu0
      %1189 = vmatprep.mubr.f32.mxu0 0.0
      %1190 = vmatmul.mubr.f32.gmra.mrb[0].mxu0 %v710
      %v1191 = vpop.f32.mrb[0].mxu0
      %v1192 = vadd.f32 0.0, %v1191
      %v1193 = vpop.f32.mrb[0].mxu0
      %1194 = vmatprep.mubr.f32.mxu0 0.0
      %1195 = vmatmul.mubr.f32.gmra.mrb[0].mxu0 %v713
      %v1196 = vpop.f32.mrb[0].mxu0
      %v1197 = vadd.f32 0.0, %v1196
      %v1198 = vpop.f32.mrb[0].mxu0
      %1199 = vmatprep.mubr.f32.mxu0 0.0
      %1200 = vmatmul.mubr.f32.gmra.mrb[0].mxu0 %v716
      %v1201 = vpop.f32.mrb[0].mxu0
      %v1202 = vadd.f32 0.0, %v1201
      %v1203 = vpop.f32.mrb[0].mxu0
      %1204 = vmatprep.mubr.f32.mxu0 0.0
      %1205 = vmatmul.mubr.f32.gmra.mrb[0].mxu0 %v719
      %v1206 = vpop.f32.mrb[0].mxu0
      %v1207 = vadd.f32 0.0, %v1206
      %v1208 = vpop.f32.mrb[0].mxu0
      %1209 = vmatprep.mubr.f32.mxu0 0.0
      %1210 = vmatmul.mubr.f32.gmra.mrb[0].mxu0 %v722
      %v1211 = vpop.f32.mrb[0].mxu0
      %v1212 = vadd.f32 0.0, %v1211
      %v1213 = vpop.f32.mrb[0].mxu0
      %1214 = vmatprep.mubr.f32.mxu0 0.0
      %1215 = vmatmul.mubr.f32.gmra.mrb[0].mxu0 %v725
      %v1216 = vpop.f32.mrb[0].mxu0
      %v1217 = vadd.f32 0.0, %v1216
      %v1218 = vpop.f32.mrb[0].mxu0
      %1219 = vmatprep.mubr.f32.mxu0 0.0
      %1220 = vmatmul.mubr.f32.gmra.mrb[0].mxu0 %v728
      %v1221 = vpop.f32.mrb[0].mxu0
      %v1222 = vadd.f32 0.0, %v1221
      %v1223 = vpop.f32.mrb[0].mxu0
      %1224 = vmatprep.mubr.f32.mxu0 0.0
      %1225 = vmatmul.mubr.f32.gmra.mrb[0].mxu0 %v731
      %v1226 = vpop.f32.mrb[0].mxu0
      %v1227 = vadd.f32 0.0, %v1226
      %v1228 = vpop.f32.mrb[0].mxu0
      %1229 = vmatprep.mubr.f32.mxu0 0.0
      %1230 = vmatmul.mubr.f32.gmra.mrb[0].mxu0 %v734
      %v1231 = vpop.f32.mrb[0].mxu0
      %v1232 = vadd.f32 0.0, %v1231
      %v1233 = vpop.f32.mrb[0].mxu0
      %1234 = vmatprep.mubr.f32.mxu0 0.0
      %1235 = vmatmul.mubr.f32.gmra.mrb[0].mxu0 %v737
      %v1236 = vpop.f32.mrb[0].mxu0
      %v1237 = vadd.f32 0.0, %v1236
      %v1238 = vpop.f32.mrb[0].mxu0
      %1239 = vmatprep.mubr.f32.mxu0 0.0
      %1240 = vmatmul.mubr.f32.gmra.mrb[0].mxu0 %v740
      %v1241 = vpop.f32.mrb[0].mxu0
      %v1242 = vadd.f32 0.0, %v1241
      %v1243 = vpop.f32.mrb[0].mxu0
      %1244 = vmatprep.mubr.f32.mxu0 0.0
      %1245 = vmatmul.mubr.f32.gmra.mrb[0].mxu0 %v743
      %v1246 = vpop.f32.mrb[0].mxu0
      %v1247 = vadd.f32 0.0, %v1246
      %v1248 = vpop.f32.mrb[0].mxu0
      %1249 = vmatprep.mubr.f32.mxu0 0.0
      %1250 = vmatmul.mubr.f32.gmra.mrb[0].mxu0 %v746
      %v1251 = vpop.f32.mrb[0].mxu0
      %v1252 = vadd.f32 0.0, %v1251
      %v1253 = vpop.f32.mrb[0].mxu0
      %1254 = vmatprep.mubr.f32.mxu0 0.0
      %1255 = vmatmul.mubr.f32.gmra.mrb[0].mxu0 %v749
      %v1256 = vpop.f32.mrb[0].mxu0
      %v1257 = vadd.f32 0.0, %v1256
      %v1258 = vpop.f32.mrb[0].mxu0
      %1259 = vmatprep.mubr.f32.mxu0 0.0
      %1260 = vmatmul.mubr.f32.gmra.mrb[0].mxu0 %v752
      %v1261 = vpop.f32.mrb[0].mxu0
      %v1262 = vadd.f32 0.0, %v1261
      %v1263 = vpop.f32.mrb[0].mxu0
      %1264 = vmatprep.mubr.f32.mxu0 0.0
      %1265 = vmatmul.mubr.f32.gmra.mrb[0].mxu0 %v755
      %v1266 = vpop.f32.mrb[0].mxu0
      %v1267 = vadd.f32 0.0, %v1266
      %v1268 = vpop.f32.mrb[0].mxu0
      %1269 = vmatprep.mubr.f32.mxu0 0.0
      %1270 = vmatmul.mubr.f32.gmra.mrb[0].mxu0 %v758
      %v1271 = vpop.f32.mrb[0].mxu0
      %v1272 = vadd.f32 0.0, %v1271
      %v1273 = vpop.f32.mrb[0].mxu0
      %1274 = vmatprep.mubr.f32.mxu0 0.0
      %1275 = vmatmul.mubr.f32.gmra.mrb[0].mxu0 %v761
      %v1276 = vpop.f32.mrb[0].mxu0
      %v1277 = vadd.f32 0.0, %v1276
      %v1278 = vpop.f32.mrb[0].mxu0
      %1279 = vmatprep.mubr.f32.mxu0 0.0
      %1280 = vmatmul.mubr.f32.gmra.mrb[0].mxu0 %v764
      %v1281 = vpop.f32.mrb[0].mxu0
      %v1282 = vadd.f32 0.0, %v1281
      %v1283 = vpop.f32.mrb[0].mxu0
      %1284 = vmatprep.mubr.f32.mxu0 0.0
      %1285 = vmatmul.mubr.f32.gmra.mrb[0].mxu0 %v767
      %v1286 = vpop.f32.mrb[0].mxu0
      %v1287 = vadd.f32 0.0, %v1286
      %v1288 = vpop.f32.mrb[0].mxu0
      %1289 = vmatprep.mubr.f32.mxu0 0.0
      %1290 = vmatmul.mubr.f32.gmra.mrb[0].mxu0 %v770
      %v1291 = vpop.f32.mrb[0].mxu0
      %v1292 = vadd.f32 0.0, %v1291
      %v1293 = vpop.f32.mrb[0].mxu0
      %1294 = vmatprep.mubr.f32.mxu0 0.0
      %1295 = vmatmul.mubr.f32.gmra.mrb[0].mxu0 %v773
      %v1296 = vpop.f32.mrb[0].mxu0
      %v1297 = vadd.f32 0.0, %v1296
      %v1298 = vpop.f32.mrb[0].mxu0
      %1299 = vmatprep.mubr.f32.mxu0 0.0
      %1300 = vmatmul.mubr.f32.gmra.mrb[0].mxu0 %v776
      %v1301 = vpop.f32.mrb[0].mxu0
      %v1302 = vadd.f32 0.0, %v1301
      %v1303 = vpop.f32.mrb[0].mxu0
      %1304 = vmatprep.mubr.f32.mxu0 0.0
      %1305 = vmatmul.mubr.f32.gmra.mrb[0].mxu0 %v779
      %v1306 = vpop.f32.mrb[0].mxu0
      %v1307 = vadd.f32 0.0, %v1306
      %v1308 = vpop.f32.mrb[0].mxu0
      %1309 = vmatprep.mubr.f32.mxu0 0.0
      %1310 = vmatmul.mubr.f32.gmra.mrb[0].mxu0 %v782
      %v1311 = vpop.f32.mrb[0].mxu0
      %v1312 = vadd.f32 0.0, %v1311
      %v1313 = vpop.f32.mrb[0].mxu0
      %1314 = vmatprep.mubr.f32.mxu0 0.0
      %1315 = vmatmul.mubr.f32.gmra.mrb[0].mxu0 %v785
      %v1316 = vpop.f32.mrb[0].mxu0
      %v1317 = vadd.f32 0.0, %v1316
      %v1318 = vpop.f32.mrb[0].mxu0
      %1319 = vmatprep.mubr.f32.mxu0 0.0
      %1320 = vmatmul.mubr.f32.gmra.mrb[0].mxu0 %v788
      %v1321 = vpop.f32.mrb[0].mxu0
      %v1322 = vadd.f32 0.0, %v1321
      %v1323 = vpop.f32.mrb[0].mxu0
      %1324 = vmatprep.mubr.f32.mxu0 0.0
      %1325 = vmatmul.mubr.f32.gmra.mrb[0].mxu0 %v791
      %v1326 = vpop.f32.mrb[0].mxu0
      %v1327 = vadd.f32 0.0, %v1326
      %v1328 = vpop.f32.mrb[0].mxu0
      %1329 = vmatprep.mubr.f32.mxu0 0.0
      %1330 = vmatmul.mubr.f32.gmra.mrb[0].mxu0 %v794
      %v1331 = vpop.f32.mrb[0].mxu0
      %v1332 = vadd.f32 0.0, %v1331
      %v1333 = vpop.f32.mrb[0].mxu0
      %1334 = vmatprep.mubr.f32.mxu0 0.0
      %1335 = vmatmul.mubr.f32.gmra.mrb[0].mxu0 %v797
      %v1336 = vpop.f32.mrb[0].mxu0
      %v1337 = vadd.f32 0.0, %v1336
      %v1338 = vpop.f32.mrb[0].mxu0
      %1339 = vmatprep.mubr.f32.mxu0 0.0
      %1340 = vmatmul.mubr.f32.gmra.mrb[0].mxu0 %v800
      %v1341 = vpop.f32.mrb[0].mxu0
      %v1342 = vadd.f32 0.0, %v1341
      %v1343 = vpop.f32.mrb[0].mxu0
      %1344 = vmatprep.mubr.f32.mxu0 0.0
      %1345 = vmatmul.mubr.f32.gmra.mrb[0].mxu0 %v803
      %v1346 = vpop.f32.mrb[0].mxu0
      %v1347 = vadd.f32 0.0, %v1346
      %v1348 = vpop.f32.mrb[0].mxu0
      %1349 = vmatprep.mubr.f32.mxu0 0.0
      %1350 = vmatmul.mubr.f32.gmra.mrb[0].mxu0 %v806
      %v1351 = vpop.f32.mrb[0].mxu0
      %v1352 = vadd.f32 0.0, %v1351
      %v1353 = vpop.f32.mrb[0].mxu0
      %1354 = vmatprep.mubr.f32.mxu0 0.0
      %1355 = vmatmul.mubr.f32.gmra.mrb[0].mxu0 %v809
      %v1356 = vpop.f32.mrb[0].mxu0
      %v1357 = vadd.f32 0.0, %v1356
      %v1358 = vpop.f32.mrb[0].mxu0
      %1359 = vmatprep.mubr.f32.mxu0 0.0
      %1360 = vmatmul.mubr.f32.gmra.mrb[0].mxu0 %v812
      %v1361 = vpop.f32.mrb[0].mxu0
      %v1362 = vadd.f32 0.0, %v1361
      %v1363 = vpop.f32.mrb[0].mxu0
      %1364 = vmatprep.mubr.f32.mxu0 0.0
      %1365 = vmatmul.mubr.f32.gmra.mrb[0].mxu0 %v815
      %v1366 = vpop.f32.mrb[0].mxu0
      %v1367 = vadd.f32 0.0, %v1366
      %v1368 = vpop.f32.mrb[0].mxu0
      %1369 = vmatprep.mubr.f32.mxu0 0.0
      %1370 = vmatmul.mubr.f32.gmra.mrb[0].mxu0 %v818
      %v1371 = vpop.f32.mrb[0].mxu0
      %v1372 = vadd.f32 0.0, %v1371
      %v1373 = vpop.f32.mrb[0].mxu0
      %1374 = vmatprep.mubr.f32.mxu0 0.0
      %1375 = vmatmul.mubr.f32.gmra.mrb[0].mxu0 %v821
      %v1376 = vpop.f32.mrb[0].mxu0
      %v1377 = vadd.f32 0.0, %v1376
      %v1378 = vpop.f32.mrb[0].mxu0
      %1379 = vmatprep.mubr.f32.mxu0 0.0
      %1380 = vmatmul.mubr.f32.gmra.mrb[0].mxu0 %v824
      %v1381 = vpop.f32.mrb[0].mxu0
      %v1382 = vadd.f32 0.0, %v1381
      %v1383 = vpop.f32.mrb[0].mxu0
      %1384 = vmatprep.mubr.f32.mxu0 0.0
      %1385 = vmatmul.mubr.f32.gmra.mrb[0].mxu0 %v827
      %v1386 = vpop.f32.mrb[0].mxu0
      %v1387 = vadd.f32 0.0, %v1386
      %v1388 = vpop.f32.mrb[0].mxu0
      %1389 = vmatprep.mubr.f32.mxu0 0.0
      %1390 = vmatmul.mubr.f32.gmra.mrb[0].mxu0 %v830
      %v1391 = vpop.f32.mrb[0].mxu0
      %v1392 = vadd.f32 0.0, %v1391
      %v1393 = vpop.f32.mrb[0].mxu0
      %1394 = vmatprep.mubr.f32.mxu0 0.0
      %1395 = vmatmul.mubr.f32.gmra.mrb[0].mxu0 %v833
      %v1396 = vpop.f32.mrb[0].mxu0
      %v1397 = vadd.f32 0.0, %v1396
      %v1398 = vpop.f32.mrb[0].mxu0
      %1399 = vmatprep.mubr.f32.mxu0 0.0
      %1400 = vmatmul.mubr.f32.gmra.mrb[0].mxu0 %v836
      %v1401 = vpop.f32.mrb[0].mxu0
      %v1402 = vadd.f32 0.0, %v1401
      %v1403 = vpop.f32.mrb[0].mxu0
      %1404 = vmatprep.mubr.f32.mxu0 0.0
      %1405 = vmatmul.mubr.f32.gmra.mrb[0].mxu0 %v839
      %v1406 = vpop.f32.mrb[0].mxu0
      %v1407 = vadd.f32 0.0, %v1406
      %v1408 = vpop.f32.mrb[0].mxu0
      %1409 = vmatprep.mubr.f32.mxu0 0.0
      %1410 = vmatmul.mubr.f32.gmra.mrb[0].mxu0 %v842
      %v1411 = vpop.f32.mrb[0].mxu0
      %v1412 = vadd.f32 0.0, %v1411
      %v1413 = vpop.f32.mrb[0].mxu0
      %1414 = vmatprep.mubr.f32.mxu0 0.0
      %1415 = vmatmul.mubr.f32.gmra.mrb[0].mxu0 %v845
      %v1416 = vpop.f32.mrb[0].mxu0
      %v1417 = vadd.f32 0.0, %v1416
      %v1418 = vpop.f32.mrb[0].mxu0
      %1419 = vmatprep.mubr.f32.mxu0 0.0
      %1420 = vmatmul.mubr.f32.gmra.mrb[0].mxu0 %v848
      %v1421 = vpop.f32.mrb[0].mxu0
      %v1422 = vadd.f32 0.0, %v1421
      %v1423 = vpop.f32.mrb[0].mxu0
      %1424 = vmatprep.mubr.f32.mxu0 0.0
      %1425 = vmatmul.mubr.f32.gmra.mrb[0].mxu0 %v851
      %v1426 = vpop.f32.mrb[0].mxu0
      %v1427 = vadd.f32 0.0, %v1426
      %v1428 = vpop.f32.mrb[0].mxu0
      %1429 = vmatprep.mubr.f32.mxu0 0.0
      %1430 = vmatmul.mubr.f32.gmra.mrb[0].mxu0 %v854
      %v1431 = vpop.f32.mrb[0].mxu0
      %v1432 = vadd.f32 0.0, %v1431
      %v1433 = vpop.f32.mrb[0].mxu0
      %1434 = vmatprep.mubr.f32.mxu0 0.0
      %1435 = vmatmul.mubr.f32.gmra.mrb[0].mxu0 %v857
      %v1436 = vpop.f32.mrb[0].mxu0
      %v1437 = vadd.f32 0.0, %v1436
      %v1438 = vpop.f32.mrb[0].mxu0
      %1439 = vmatprep.mubr.f32.mxu0 0.0
      %1440 = vmatmul.mubr.f32.gmra.mrb[0].mxu0 %v860
      %v1441 = vpop.f32.mrb[0].mxu0
      %v1442 = vadd.f32 0.0, %v1441
      %v1443 = vpop.f32.mrb[0].mxu0
      %1444 = vmatprep.mubr.f32.mxu0 0.0
      %1445 = vmatmul.mubr.f32.gmra.mrb[0].mxu0 %v863
      %v1446 = vpop.f32.mrb[0].mxu0
      %v1447 = vadd.f32 0.0, %v1446
      %v1448 = vpop.f32.mrb[0].mxu0
      %1449 = vmatprep.mubr.f32.mxu0 0.0
      %1450 = vmatmul.mubr.f32.gmra.mrb[0].mxu0 %v866
      %v1451 = vpop.f32.mrb[0].mxu0
      %v1452 = vadd.f32 0.0, %v1451
      %v1453 = vpop.f32.mrb[0].mxu0
      %1454 = vmatprep.mubr.f32.mxu0 0.0
      %1455 = vmatmul.mubr.f32.gmra.mrb[0].mxu0 %v869
      %v1456 = vpop.f32.mrb[0].mxu0
      %v1457 = vadd.f32 0.0, %v1456
      %v1458 = vpop.f32.mrb[0].mxu0
      %1459 = vmatprep.mubr.f32.mxu0 0.0
      %1460 = vmatmul.mubr.f32.gmra.mrb[0].mxu0 %v872
      %v1461 = vpop.f32.mrb[0].mxu0
      %v1462 = vadd.f32 0.0, %v1461
      %v1463 = vpop.f32.mrb[0].mxu0
      %1464 = vmatprep.mubr.f32.mxu0 0.0
      %1465 = vmatmul.mubr.f32.gmra.mrb[0].mxu0 %v875
      %v1466 = vpop.f32.mrb[0].mxu0
      %v1467 = vadd.f32 0.0, %v1466
      %v1468 = vpop.f32.mrb[0].mxu0
      %1469 = vmatprep.mubr.f32.mxu0 0.0
      %1470 = vmatmul.mubr.f32.gmra.mrb[0].mxu0 %v878
      %v1471 = vpop.f32.mrb[0].mxu0
      %v1472 = vadd.f32 0.0, %v1471
      %v1473 = vpop.f32.mrb[0].mxu0
      %1474 = vmatprep.mubr.f32.mxu0 0.0
      %1475 = vmatmul.mubr.f32.gmra.mrb[0].mxu0 %v881
      %v1476 = vpop.f32.mrb[0].mxu0
      %v1477 = vadd.f32 0.0, %v1476
      %v1478 = vpop.f32.mrb[0].mxu0
      %1479 = vmatprep.mubr.f32.mxu0 0.0
      %1480 = vmatmul.mubr.f32.gmra.mrb[0].mxu0 %v884
      %v1481 = vpop.f32.mrb[0].mxu0
      %v1482 = vadd.f32 0.0, %v1481
      %v1483 = vpop.f32.mrb[0].mxu0
      %1484 = vmatprep.mubr.f32.mxu0 0.0
      %1485 = vmatmul.mubr.f32.gmra.mrb[0].mxu0 %v887
      %v1486 = vpop.f32.mrb[0].mxu0
      %v1487 = vadd.f32 0.0, %v1486
      %v1488 = vpop.f32.mrb[0].mxu0
      %1489 = vmatprep.mubr.f32.mxu0 0.0
      %1490 = vmatmul.mubr.f32.gmra.mrb[0].mxu0 %v890
      %v1491 = vpop.f32.mrb[0].mxu0
      %v1492 = vadd.f32 0.0, %v1491
      %v1493 = vpop.f32.mrb[0].mxu0
      %1494 = vmatprep.mubr.f32.mxu0 0.0
      %1495 = vmatmul.mubr.f32.gmra.mrb[0].mxu0 %v893
      %v1496 = vpop.f32.mrb[0].mxu0
      %v1497 = vadd.f32 0.0, %v1496
      %v1498 = vpop.f32.mrb[0].mxu0
      %1499 = vmatprep.mubr.f32.mxu0 0.0
      %1500 = vmatmul.mubr.f32.gmra.mrb[0].mxu0 %v896
      %v1501 = vpop.f32.mrb[0].mxu0
      %v1502 = vadd.f32 0.0, %v1501
      %v1503 = vpop.f32.mrb[0].mxu0
      %1504 = vmatprep.mubr.f32.mxu0 0.0
      %1505 = vmatmul.mubr.f32.gmra.mrb[0].mxu0 %v899
      %v1506 = vpop.f32.mrb[0].mxu0
      %v1507 = vadd.f32 0.0, %v1506
      %v1508 = vpop.f32.mrb[0].mxu0
      %1509 = vmatprep.mubr.f32.mxu0 0.0
      %1510 = vmatmul.mubr.f32.gmra.mrb[0].mxu0 %v902
      %v1511 = vpop.f32.mrb[0].mxu0
      %v1512 = vadd.f32 0.0, %v1511
      %v1513 = vpop.f32.mrb[0].mxu0
      %1514 = vmatprep.mubr.f32.mxu0 0.0
      %1515 = vmatmul.mubr.f32.gmra.mrb[0].mxu0 %v905
      %v1516 = vpop.f32.mrb[0].mxu0
      %v1517 = vadd.f32 0.0, %v1516
      %v1518 = vpop.f32.mrb[0].mxu0
      %1519 = vmatprep.mubr.f32.mxu0 0.0
      %1520 = vmatmul.mubr.f32.gmra.mrb[0].mxu0 %v908
      %v1521 = vpop.f32.mrb[0].mxu0
      %v1522 = vadd.f32 0.0, %v1521
      %v1523 = vpop.f32.mrb[0].mxu0
      %1524 = vmatprep.mubr.f32.mxu0 0.0
      %1525 = vmatmul.mubr.f32.gmra.mrb[0].mxu0 %v911
      %v1526 = vpop.f32.mrb[0].mxu0
      %v1527 = vadd.f32 0.0, %v1526
      %v1528 = vpop.f32.mrb[0].mxu0
      %1529 = vmatprep.mubr.f32.mxu0 0.0
      %1530 = vmatmul.mubr.f32.gmra.mrb[0].mxu0 %v914
      %v1531 = vpop.f32.mrb[0].mxu0
      %v1532 = vadd.f32 0.0, %v1531
      %v1533 = vpop.f32.mrb[0].mxu0
      %1534 = vmatprep.mubr.f32.mxu0 0.0
      %1535 = vmatmul.mubr.f32.gmra.mrb[0].mxu0 %v917
      %v1536 = vpop.f32.mrb[0].mxu0
      %v1537 = vadd.f32 0.0, %v1536
      %v1538 = vpop.f32.mrb[0].mxu0
      %1539 = vmatprep.mubr.f32.mxu0 0.0
      %1540 = vmatmul.mubr.f32.gmra.mrb[0].mxu0 %v920
      %v1541 = vpop.f32.mrb[0].mxu0
      %v1542 = vadd.f32 0.0, %v1541
      %v1543 = vpop.f32.mrb[0].mxu0
      %1544 = vmatprep.mubr.f32.mxu0 0.0
      %1545 = vmatmul.mubr.f32.gmra.mrb[0].mxu0 %v923
      %v1546 = vpop.f32.mrb[0].mxu0
      %v1547 = vadd.f32 0.0, %v1546
      %v1548 = vpop.f32.mrb[0].mxu0
      %1549 = vmatprep.mubr.f32.mxu0 0.0
      %1550 = vmatmul.mubr.f32.gmra.mrb[0].mxu0 %v926
      %v1551 = vpop.f32.mrb[0].mxu0
      %v1552 = vadd.f32 0.0, %v1551
      %v1553 = vpop.f32.mrb[0].mxu0
      %1554 = vmatprep.mubr.f32.mxu0 0.0
      %1555 = vmatmul.mubr.f32.gmra.mrb[0].mxu0 %v929
      %v1556 = vpop.f32.mrb[0].mxu0
      %v1557 = vadd.f32 0.0, %v1556
      %v1558 = vpop.f32.mrb[0].mxu0
      %1559 = vmatprep.mubr.f32.mxu0 0.0
      %1560 = vmatmul.mubr.f32.gmra.mrb[0].mxu0 %v932
      %v1561 = vpop.f32.mrb[0].mxu0
      %v1562 = vadd.f32 0.0, %v1561
      %v1563 = vpop.f32.mrb[0].mxu0
      %1564 = vmatprep.mubr.f32.mxu0 0.0
      %1565 = vmatmul.mubr.f32.gmra.mrb[0].mxu0 %v935
      %v1566 = vpop.f32.mrb[0].mxu0
      %v1567 = vadd.f32 0.0, %v1566
      %v1568 = vpop.f32.mrb[0].mxu0
      %1569 = vmatprep.mubr.f32.mxu0 0.0
      %1570 = vmatmul.mubr.f32.gmra.mrb[0].mxu0 %v938
      %v1571 = vpop.f32.mrb[0].mxu0
      %v1572 = vadd.f32 0.0, %v1571
      %v1573 = vpop.f32.mrb[0].mxu0
      %1574 = vmatprep.mubr.f32.mxu0 0.0
      %1575 = vmatmul.mubr.f32.gmra.mrb[0].mxu0 %v941
      %v1576 = vpop.f32.mrb[0].mxu0
      %v1577 = vadd.f32 0.0, %v1576
      %v1578 = vpop.f32.mrb[0].mxu0
      %1579 = vmatprep.mubr.f32.mxu0 0.0
      %1580 = vmatmul.mubr.f32.gmra.mrb[0].mxu0 %v944
      %v1581 = vpop.f32.mrb[0].mxu0
      %v1582 = vadd.f32 0.0, %v1581
      %v1583 = vpop.f32.mrb[0].mxu0
      %1584 = vmatprep.mubr.f32.mxu0 0.0
      %1585 = vmatmul.mubr.f32.gmra.mrb[0].mxu0 %v947
      %v1586 = vpop.f32.mrb[0].mxu0
      %v1587 = vadd.f32 0.0, %v1586
      %v1588 = vpop.f32.mrb[0].mxu0
      %1589 = vmatprep.mubr.f32.mxu0 0.0
      %1590 = vmatmul.mubr.f32.gmra.mrb[0].mxu0 %v950
      %v1591 = vpop.f32.mrb[0].mxu0
      %v1592 = vadd.f32 0.0, %v1591
      %v1593 = vpop.f32.mrb[0].mxu0
      %1594 = vmatprep.mubr.f32.mxu0 0.0
      %1595 = vmatmul.mubr.f32.gmra.mrb[0].mxu0 %v953
      %v1596 = vpop.f32.mrb[0].mxu0
      %v1597 = vadd.f32 0.0, %v1596
      %v1598 = vpop.f32.mrb[0].mxu0
      %1599 = vmatprep.mubr.f32.mxu0 0.0
      %1600 = vmatmul.mubr.f32.gmra.mrb[0].mxu0 %v956
      %v1601 = vpop.f32.mrb[0].mxu0
      %v1602 = vadd.f32 0.0, %v1601
      %v1603 = vpop.f32.mrb[0].mxu0
      %1604 = vmatprep.mubr.f32.mxu0 0.0
      %1605 = vmatmul.mubr.f32.gmra.mrb[0].mxu0 %v959
      %v1606 = vpop.f32.mrb[0].mxu0
      %v1607 = vadd.f32 0.0, %v1606
      %v1608 = vpop.f32.mrb[0].mxu0
      %1609 = vmatprep.mubr.f32.mxu0 0.0
      %1610 = vmatmul.mubr.f32.gmra.mrb[0].mxu0 %v962
      %v1611 = vpop.f32.mrb[0].mxu0
      %v1612 = vadd.f32 0.0, %v1611
      %v1613 = vpop.f32.mrb[0].mxu0
      %1614 = vmatprep.mubr.f32.mxu0 0.0
      %1615 = vmatmul.mubr.f32.gmra.mrb[0].mxu0 %v965
      %v1616 = vpop.f32.mrb[0].mxu0
      %v1617 = vadd.f32 0.0, %v1616
      %v1618 = vpop.f32.mrb[0].mxu0
      %1619 = vmatprep.mubr.f32.mxu0 0.0
      %1620 = vmatmul.mubr.f32.gmra.mrb[0].mxu0 %v968
      %v1621 = vpop.f32.mrb[0].mxu0
      %v1622 = vadd.f32 0.0, %v1621
      %v1623 = vpop.f32.mrb[0].mxu0
      %1624 = vmatprep.mubr.f32.mxu0 0.0
      %1625 = vmatmul.mubr.f32.gmra.mrb[0].mxu0 %v971
      %v1626 = vpop.f32.mrb[0].mxu0
      %v1627 = vadd.f32 0.0, %v1626
      %v1628 = vpop.f32.mrb[0].mxu0
      %1629 = vmatprep.mubr.f32.mxu0 0.0
      %1630 = vmatmul.mubr.f32.gmra.mrb[0].mxu0 %v974
      %v1631 = vpop.f32.mrb[0].mxu0
      %v1632 = vadd.f32 0.0, %v1631
      %v1633 = vpop.f32.mrb[0].mxu0
      %1634 = vmatprep.mubr.f32.mxu0 0.0
      %1635 = vmatmul.mubr.f32.gmra.mrb[0].mxu0 %v977
      %v1636 = vpop.f32.mrb[0].mxu0
      %v1637 = vadd.f32 0.0, %v1636
      %v1638 = vpop.f32.mrb[0].mxu0
      %1639 = vmatprep.mubr.f32.mxu0 0.0
      %1640 = vmatmul.mubr.f32.gmra.mrb[0].mxu0 %v980
      %v1641 = vpop.f32.mrb[0].mxu0
      %v1642 = vadd.f32 0.0, %v1641
      %v1643 = vpop.f32.mrb[0].mxu0
      %1644 = vmatprep.mubr.f32.mxu0 0.0
      %1645 = vmatmul.mubr.f32.gmra.mrb[0].mxu0 %v983
      %v1646 = vpop.f32.mrb[0].mxu0
      %v1647 = vadd.f32 0.0, %v1646
      %v1648 = vpop.f32.mrb[0].mxu0
      %1649 = vmatprep.mubr.f32.mxu0 0.0
      %1650 = vmatmul.mubr.f32.gmra.mrb[0].mxu0 %v986
      %v1651 = vpop.f32.mrb[0].mxu0
      %v1652 = vadd.f32 0.0, %v1651
      %v1653 = vpop.f32.mrb[0].mxu0
      %1654 = vmatprep.mubr.f32.mxu0 0.0
      %1655 = vmatmul.mubr.f32.gmra.mrb[0].mxu0 %v989
      %v1656 = vpop.f32.mrb[0].mxu0
      %v1657 = vadd.f32 0.0, %v1656
      %v1658 = vpop.f32.mrb[0].mxu0
      %1659 = vmatprep.mubr.f32.mxu0 0.0
      %1660 = vmatmul.mubr.f32.gmra.mrb[0].mxu0 %v992
      %v1661 = vpop.f32.mrb[0].mxu0
      %v1662 = vadd.f32 0.0, %v1661
      %v1663 = vpop.f32.mrb[0].mxu0
      %1664 = vmatprep.mubr.f32.mxu0 0.0
      %1665 = vmatmul.mubr.f32.gmra.mrb[0].mxu0 %v995
      %v1666 = vpop.f32.mrb[0].mxu0
      %v1667 = vadd.f32 0.0, %v1666
      %v1668 = vpop.f32.mrb[0].mxu0
      %1669 = vmatprep.mubr.f32.mxu0 0.0
      %1670 = vmatmul.mubr.f32.gmra.mrb[0].mxu0 %v998
      %v1671 = vpop.f32.mrb[0].mxu0
      %v1672 = vadd.f32 0.0, %v1671
      %v1673 = vpop.f32.mrb[0].mxu0
      %1674 = vmatprep.mubr.f32.mxu0 0.0
      %1675 = vmatmul.mubr.f32.gmra.mrb[0].mxu0 %v1001
      %v1676 = vpop.f32.mrb[0].mxu0
      %v1677 = vadd.f32 0.0, %v1676
      %v1678 = vpop.f32.mrb[0].mxu0
      %1679 = vmatprep.mubr.f32.mxu0 0.0
      %1680 = vmatmul.mubr.f32.gmra.mrb[0].mxu0 %v1004
      %v1681 = vpop.f32.mrb[0].mxu0
      %v1682 = vadd.f32 0.0, %v1681
      %v1683 = vpop.f32.mrb[0].mxu0
      %1684 = vmatprep.mubr.f32.mxu0 0.0
      %1685 = vmatmul.mubr.f32.gmra.mrb[0].mxu0 %v1007
      %v1686 = vpop.f32.mrb[0].mxu0
      %v1687 = vadd.f32 0.0, %v1686
      %v1688 = vpop.f32.mrb[0].mxu0
      %1689 = vmatprep.mubr.f32.mxu0 0.0
      %1690 = vmatmul.mubr.f32.gmra.mrb[0].mxu0 %v1010
      %v1691 = vpop.f32.mrb[0].mxu0
      %v1692 = vadd.f32 0.0, %v1691
      %v1693 = vpop.f32.mrb[0].mxu0
      %1694 = vmatprep.mubr.f32.mxu0 0.0
      %1695 = vmatmul.mubr.f32.gmra.mrb[0].mxu0 %v1013
      %v1696 = vpop.f32.mrb[0].mxu0
      %v1697 = vadd.f32 0.0, %v1696
      %v1698 = vpop.f32.mrb[0].mxu0
      %1699 = vmatprep.mubr.f32.mxu0 0.0
      %1700 = vmatmul.mubr.f32.gmra.mrb[0].mxu0 %v1016
      %v1701 = vpop.f32.mrb[0].mxu0
      %v1702 = vadd.f32 0.0, %v1701
      %v1703 = vpop.f32.mrb[0].mxu0
      %1704 = vmatprep.mubr.f32.mxu0 0.0
      %1705 = vmatmul.mubr.f32.gmra.mrb[0].mxu0 %v1019
      %v1706 = vpop.f32.mrb[0].mxu0
      %v1707 = vadd.f32 0.0, %v1706
      %v1708 = vpop.f32.mrb[0].mxu0
      %1709 = vmatprep.mubr.f32.mxu0 0.0
      %1710 = vmatmul.mubr.f32.gmra.mrb[0].mxu0 %v1022
      %v1711 = vpop.f32.mrb[0].mxu0
      %v1712 = vadd.f32 0.0, %v1711
      %v1713 = vpop.f32.mrb[0].mxu0
      %1714 = vmatprep.mubr.f32.mxu0 0.0
      %1715 = vmatmul.mubr.f32.gmra.mrb[0].mxu0 %v1025
      %v1716 = vpop.f32.mrb[0].mxu0
      %v1717 = vadd.f32 0.0, %v1716
      %v1718 = vpop.f32.mrb[0].mxu0
      %1719 = vmatprep.mubr.f32.mxu0 0.0
      %1720 = vmatmul.mubr.f32.gmra.mrb[0].mxu0 %v1028
      %v1721 = vpop.f32.mrb[0].mxu0
      %v1722 = vadd.f32 0.0, %v1721
      %v1723 = vpop.f32.mrb[0].mxu0
      %1724 = vmatprep.mubr.f32.mxu0 0.0
      %1725 = vmatmul.mubr.f32.gmra.mrb[0].mxu0 %v1031
      %v1726 = vpop.f32.mrb[0].mxu0
      %v1727 = vadd.f32 0.0, %v1726
      %v1728 = vpop.f32.mrb[0].mxu0
      %1729 = vmatprep.mubr.f32.mxu0 0.0
      %1730 = vmatmul.mubr.f32.gmra.mrb[0].mxu0 %v1034
      %v1731 = vpop.f32.mrb[0].mxu0
      %v1732 = vadd.f32 0.0, %v1731
      %v1733 = vpop.f32.mrb[0].mxu0
      %1734 = vmatprep.mubr.f32.mxu0 0.0
      %1735 = vmatmul.mubr.f32.gmra.mrb[0].mxu0 %v1037
      %v1736 = vpop.f32.mrb[0].mxu0
      %v1737 = vadd.f32 0.0, %v1736
      %v1738 = vpop.f32.mrb[0].mxu0
      %1739 = vmatprep.mubr.f32.mxu0 0.0
      %1740 = vmatmul.mubr.f32.gmra.mrb[0].mxu0 %v1040
      %v1741 = vpop.f32.mrb[0].mxu0
      %v1742 = vadd.f32 0.0, %v1741
      %v1743 = vpop.f32.mrb[0].mxu0
      %1744 = vmatprep.mubr.f32.mxu0 0.0
      %1745 = vmatmul.mubr.f32.gmra.mrb[0].mxu0 %v1043
      %v1746 = vpop.f32.mrb[0].mxu0
      %v1747 = vadd.f32 0.0, %v1746
      %v1748 = vpop.f32.mrb[0].mxu0
      %1749 = vdwg.mxu0
      %v1750 = vld [vmem:[%s1] sm:$0xff]
      %v1751 = vld [vmem:[%s1 + $0x8] sm:$0xff]
      %vm1752 = vcmask 130048
      %v1754 = vsel %vm1752, %v528, 0
      %v1757 = vsel %vm1752, %v529, 0
      %v1760 = vsel %vm1752, %v530, 0
      %v1763 = vsel %vm1752, %v531, 0
      %v1766 = vsel %vm1752, %v532, 0
      %v1769 = vsel %vm1752, %v533, 0
      %v1772 = vsel %vm1752, %v534, 0
      %v1775 = vsel %vm1752, %v535, 0
      %v1778 = vsel %vm1752, %v536, 0
      %v1781 = vsel %vm1752, %v537, 0
      %v1784 = vsel %vm1752, %v538, 0
      %v1787 = vsel %vm1752, %v539, 0
      %v1790 = vsel %vm1752, %v540, 0
      %v1793 = vsel %vm1752, %v541, 0
      %v1796 = vsel %vm1752, %v542, 0
      %v1799 = vsel %vm1752, %v543, 0
      %v1802 = vsel %vm1752, %v544, 0
      %v1805 = vsel %vm1752, %v545, 0
      %v1808 = vsel %vm1752, %v546, 0
      %v1811 = vsel %vm1752, %v547, 0
      %v1814 = vsel %vm1752, %v548, 0
      %v1817 = vsel %vm1752, %v549, 0
      %v1820 = vsel %vm1752, %v550, 0
      %v1823 = vsel %vm1752, %v551, 0
      %v1826 = vsel %vm1752, %v552, 0
      %v1829 = vsel %vm1752, %v553, 0
      %v1832 = vsel %vm1752, %v554, 0
      %v1835 = vsel %vm1752, %v555, 0
      %v1838 = vsel %vm1752, %v556, 0
      %v1841 = vsel %vm1752, %v557, 0
      %v1844 = vsel %vm1752, %v558, 0
      %v1847 = vsel %vm1752, %v559, 0
      %v1850 = vsel %vm1752, %v560, 0
      %v1853 = vsel %vm1752, %v561, 0
      %v1856 = vsel %vm1752, %v562, 0
      %v1859 = vsel %vm1752, %v563, 0
      %v1862 = vsel %vm1752, %v564, 0
      %v1865 = vsel %vm1752, %v565, 0
      %v1868 = vsel %vm1752, %v566, 0
      %v1871 = vsel %vm1752, %v567, 0
      %v1874 = vsel %vm1752, %v568, 0
      %v1877 = vsel %vm1752, %v569, 0
      %v1880 = vsel %vm1752, %v570, 0
      %v1883 = vsel %vm1752, %v571, 0
      %v1886 = vsel %vm1752, %v572, 0
      %v1889 = vsel %vm1752, %v573, 0
      %v1892 = vsel %vm1752, %v574, 0
      %v1895 = vsel %vm1752, %v575, 0
      %v1898 = vsel %vm1752, %v576, 0
      %v1901 = vsel %vm1752, %v577, 0
      %v1904 = vsel %vm1752, %v578, 0
      %v1907 = vsel %vm1752, %v579, 0
      %v1910 = vsel %vm1752, %v580, 0
      %v1913 = vsel %vm1752, %v581, 0
      %v1916 = vsel %vm1752, %v582, 0
      %v1919 = vsel %vm1752, %v583, 0
      %v1922 = vsel %vm1752, %v584, 0
      %v1925 = vsel %vm1752, %v585, 0
      %v1928 = vsel %vm1752, %v586, 0
      %v1931 = vsel %vm1752, %v587, 0
      %v1934 = vsel %vm1752, %v588, 0
      %v1937 = vsel %vm1752, %v589, 0
      %v1940 = vsel %vm1752, %v590, 0
      %v1943 = vsel %vm1752, %v591, 0
      %v1946 = vsel %vm1752, %v592, 0
      %v1949 = vsel %vm1752, %v593, 0
      %v1952 = vsel %vm1752, %v594, 0
      %v1955 = vsel %vm1752, %v595, 0
      %v1958 = vsel %vm1752, %v596, 0
      %v1961 = vsel %vm1752, %v597, 0
      %v1964 = vsel %vm1752, %v598, 0
      %v1967 = vsel %vm1752, %v599, 0
      %v1970 = vsel %vm1752, %v600, 0
      %v1973 = vsel %vm1752, %v601, 0
      %v1976 = vsel %vm1752, %v602, 0
      %v1979 = vsel %vm1752, %v603, 0
      %v1982 = vsel %vm1752, %v604, 0
      %v1985 = vsel %vm1752, %v605, 0
      %v1988 = vsel %vm1752, %v606, 0
      %v1991 = vsel %vm1752, %v607, 0
      %v1994 = vsel %vm1752, %v608, 0
      %v1997 = vsel %vm1752, %v609, 0
      %v2000 = vsel %vm1752, %v610, 0
      %v2003 = vsel %vm1752, %v611, 0
      %v2006 = vsel %vm1752, %v612, 0
      %v2009 = vsel %vm1752, %v613, 0
      %v2012 = vsel %vm1752, %v614, 0
      %v2015 = vsel %vm1752, %v615, 0
      %v2018 = vsel %vm1752, %v616, 0
      %v2021 = vsel %vm1752, %v617, 0
      %v2024 = vsel %vm1752, %v618, 0
      %v2027 = vsel %vm1752, %v619, 0
      %v2030 = vsel %vm1752, %v620, 0
      %v2033 = vsel %vm1752, %v621, 0
      %v2036 = vsel %vm1752, %v622, 0
      %v2039 = vsel %vm1752, %v623, 0
      %v2042 = vsel %vm1752, %v624, 0
      %v2045 = vsel %vm1752, %v625, 0
      %v2048 = vsel %vm1752, %v626, 0
      %v2051 = vsel %vm1752, %v627, 0
      %v2054 = vsel %vm1752, %v628, 0
      %v2057 = vsel %vm1752, %v629, 0
      %v2060 = vsel %vm1752, %v630, 0
      %v2063 = vsel %vm1752, %v631, 0
      %v2066 = vsel %vm1752, %v632, 0
      %v2069 = vsel %vm1752, %v633, 0
      %v2072 = vsel %vm1752, %v634, 0
      %v2075 = vsel %vm1752, %v635, 0
      %v2078 = vsel %vm1752, %v636, 0
      %v2081 = vsel %vm1752, %v637, 0
      %v2084 = vsel %vm1752, %v638, 0
      %v2087 = vsel %vm1752, %v639, 0
      %v2090 = vsel %vm1752, %v640, 0
      %v2093 = vsel %vm1752, %v641, 0
      %v2096 = vsel %vm1752, %v642, 0
      %v2099 = vsel %vm1752, %v643, 0
      %v2102 = vsel %vm1752, %v644, 0
      %v2105 = vsel %vm1752, %v645, 0
      %v2108 = vsel %vm1752, %v646, 0
      %v2111 = vsel %vm1752, %v647, 0
      %v2114 = vsel %vm1752, %v648, 0
      %v2117 = vsel %vm1752, %v649, 0
      %v2120 = vsel %vm1752, %v650, 0
      %v2123 = vsel %vm1752, %v651, 0
      %v2126 = vsel %vm1752, %v652, 0
      %v2129 = vsel %vm1752, %v653, 0
      %v2132 = vsel %vm1752, %v654, 0
      %v2135 = vsel %vm1752, %v655, 0
      %2137 = vmatprep.subr.mxu0 0.0
      %2138 = vmatpush1.msra.mxu0 %v1750
      %2139 = vmatprep.subr.mxu0 0.0
      %2140 = vmatpush1.msra.mxu0 %v1751
      %2141 = vmatprep.subr.mxu0 0.0
      %2142 = vmatpush1.msra.mxu0 0.0
      %2143 = vmatprep.subr.mxu0 0.0
      %2144 = vmatpush1.msra.mxu0 0.0
      %2145 = vmatprep.subr.mxu0 0.0
      %2146 = vmatpush1.msra.mxu0 0.0
      %2147 = vmatprep.subr.mxu0 0.0
      %2148 = vmatpush1.msra.mxu0 0.0
      %2149 = vmatprep.subr.mxu0 0.0
      %2150 = vmatpush1.msra.mxu0 0.0
      %2151 = vmatprep.subr.mxu0 0.0
      %2152 = vmatpush1.msra.mxu0 0.0
      %2153 = vmatprep.subr.mxu0 0.0
      %2154 = vmatpush1.msra.mxu0 0.0
      %2155 = vmatprep.subr.mxu0 0.0
      %2156 = vmatpush1.msra.mxu0 0.0
      %2157 = vmatprep.subr.mxu0 0.0
      %2158 = vmatpush1.msra.mxu0 0.0
      %2159 = vmatprep.subr.mxu0 0.0
      %2160 = vmatpush1.msra.mxu0 0.0
      %2161 = vmatprep.subr.mxu0 0.0
      %2162 = vmatpush1.msra.mxu0 0.0
      %2163 = vmatprep.subr.mxu0 0.0
      %2164 = vmatpush1.msra.mxu0 0.0
      %2165 = vmatprep.subr.mxu0 0.0
      %2166 = vmatpush1.msra.mxu0 0.0
      %2167 = vmatprep.subr.mxu0 0.0
      %2168 = vmatpush1.msra.mxu0 0.0
      %2169 = vmatprep.subr.mxu0 0.0
      %2170 = vmatpush1.msra.mxu0 0.0
      %2171 = vmatprep.subr.mxu0 0.0
      %2172 = vmatpush1.msra.mxu0 0.0
      %2173 = vmatprep.subr.mxu0 0.0
      %2174 = vmatpush1.msra.mxu0 0.0
      %2175 = vmatprep.subr.mxu0 0.0
      %2176 = vmatpush1.msra.mxu0 0.0
      %2177 = vmatprep.subr.mxu0 0.0
      %2178 = vmatpush1.msra.mxu0 0.0
      %2179 = vmatprep.subr.mxu0 0.0
      %2180 = vmatpush1.msra.mxu0 0.0
      %2181 = vmatprep.subr.mxu0 0.0
      %2182 = vmatpush1.msra.mxu0 0.0
      %2183 = vmatprep.subr.mxu0 0.0
      %2184 = vmatpush1.msra.mxu0 0.0
      %2185 = vmatprep.subr.mxu0 0.0
      %2186 = vmatpush1.msra.mxu0 0.0
      %2187 = vmatprep.subr.mxu0 0.0
      %2188 = vmatpush1.msra.mxu0 0.0
      %2189 = vmatprep.subr.mxu0 0.0
      %2190 = vmatpush1.msra.mxu0 0.0
      %2191 = vmatprep.subr.mxu0 0.0
      %2192 = vmatpush1.msra.mxu0 0.0
      %2193 = vmatprep.subr.mxu0 0.0
      %2194 = vmatpush1.msra.mxu0 0.0
      %2195 = vmatprep.subr.mxu0 0.0
      %2196 = vmatpush1.msra.mxu0 0.0
      %2197 = vmatprep.subr.mxu0 0.0
      %2198 = vmatpush1.msra.mxu0 0.0
      %2199 = vmatprep.subr.mxu0 0.0
      %2200 = vmatpush1.msra.mxu0 0.0
      %2201 = vmatprep.mubr.f32.mxu0 0.0
      %2202 = vmatmul.mubr.f32.gmra.mrb[0].mxu0 %v1754
      %v2203 = vpop.f32.mrb[0].mxu0
      %v2204 = vadd.f32 0.0, %v2203
      %v2205 = vpop.f32.mrb[0].mxu0
      %2206 = vmatprep.mubr.f32.mxu0 0.0
      %2207 = vmatmul.mubr.f32.gmra.mrb[0].mxu0 %v1757
      %v2208 = vpop.f32.mrb[0].mxu0
      %v2209 = vadd.f32 0.0, %v2208
      %v2210 = vpop.f32.mrb[0].mxu0
      %2211 = vmatprep.mubr.f32.mxu0 0.0
      %2212 = vmatmul.mubr.f32.gmra.mrb[0].mxu0 %v1760
      %v2213 = vpop.f32.mrb[0].mxu0
      %v2214 = vadd.f32 0.0, %v2213
      %v2215 = vpop.f32.mrb[0].mxu0
      %2216 = vmatprep.mubr.f32.mxu0 0.0
      %2217 = vmatmul.mubr.f32.gmra.mrb[0].mxu0 %v1763
      %v2218 = vpop.f32.mrb[0].mxu0
      %v2219 = vadd.f32 0.0, %v2218
      %v2220 = vpop.f32.mrb[0].mxu0
      %2221 = vmatprep.mubr.f32.mxu0 0.0
      %2222 = vmatmul.mubr.f32.gmra.mrb[0].mxu0 %v1766
      %v2223 = vpop.f32.mrb[0].mxu0
      %v2224 = vadd.f32 0.0, %v2223
      %v2225 = vpop.f32.mrb[0].mxu0
      %2226 = vmatprep.mubr.f32.mxu0 0.0
      %2227 = vmatmul.mubr.f32.gmra.mrb[0].mxu0 %v1769
      %v2228 = vpop.f32.mrb[0].mxu0
      %v2229 = vadd.f32 0.0, %v2228
      %v2230 = vpop.f32.mrb[0].mxu0
      %2231 = vmatprep.mubr.f32.mxu0 0.0
      %2232 = vmatmul.mubr.f32.gmra.mrb[0].mxu0 %v1772
      %v2233 = vpop.f32.mrb[0].mxu0
      %v2234 = vadd.f32 0.0, %v2233
      %v2235 = vpop.f32.mrb[0].mxu0
      %2236 = vmatprep.mubr.f32.mxu0 0.0
      %2237 = vmatmul.mubr.f32.gmra.mrb[0].mxu0 %v1775
      %v2238 = vpop.f32.mrb[0].mxu0
      %v2239 = vadd.f32 0.0, %v2238
      %v2240 = vpop.f32.mrb[0].mxu0
      %2241 = vmatprep.mubr.f32.mxu0 0.0
      %2242 = vmatmul.mubr.f32.gmra.mrb[0].mxu0 %v1778
      %v2243 = vpop.f32.mrb[0].mxu0
      %v2244 = vadd.f32 0.0, %v2243
      %v2245 = vpop.f32.mrb[0].mxu0
      %2246 = vmatprep.mubr.f32.mxu0 0.0
      %2247 = vmatmul.mubr.f32.gmra.mrb[0].mxu0 %v1781
      %v2248 = vpop.f32.mrb[0].mxu0
      %v2249 = vadd.f32 0.0, %v2248
      %v2250 = vpop.f32.mrb[0].mxu0
      %2251 = vmatprep.mubr.f32.mxu0 0.0
      %2252 = vmatmul.mubr.f32.gmra.mrb[0].mxu0 %v1784
      %v2253 = vpop.f32.mrb[0].mxu0
      %v2254 = vadd.f32 0.0, %v2253
      %v2255 = vpop.f32.mrb[0].mxu0
      %2256 = vmatprep.mubr.f32.mxu0 0.0
      %2257 = vmatmul.mubr.f32.gmra.mrb[0].mxu0 %v1787
      %v2258 = vpop.f32.mrb[0].mxu0
      %v2259 = vadd.f32 0.0, %v2258
      %v2260 = vpop.f32.mrb[0].mxu0
      %2261 = vmatprep.mubr.f32.mxu0 0.0
      %2262 = vmatmul.mubr.f32.gmra.mrb[0].mxu0 %v1790
      %v2263 = vpop.f32.mrb[0].mxu0
      %v2264 = vadd.f32 0.0, %v2263
      %v2265 = vpop.f32.mrb[0].mxu0
      %2266 = vmatprep.mubr.f32.mxu0 0.0
      %2267 = vmatmul.mubr.f32.gmra.mrb[0].mxu0 %v1793
      %v2268 = vpop.f32.mrb[0].mxu0
      %v2269 = vadd.f32 0.0, %v2268
      %v2270 = vpop.f32.mrb[0].mxu0
      %2271 = vmatprep.mubr.f32.mxu0 0.0
      %2272 = vmatmul.mubr.f32.gmra.mrb[0].mxu0 %v1796
      %v2273 = vpop.f32.mrb[0].mxu0
      %v2274 = vadd.f32 0.0, %v2273
      %v2275 = vpop.f32.mrb[0].mxu0
      %2276 = vmatprep.mubr.f32.mxu0 0.0
      %2277 = vmatmul.mubr.f32.gmra.mrb[0].mxu0 %v1799
      %v2278 = vpop.f32.mrb[0].mxu0
      %v2279 = vadd.f32 0.0, %v2278
      %v2280 = vpop.f32.mrb[0].mxu0
      %2281 = vmatprep.mubr.f32.mxu0 0.0
      %2282 = vmatmul.mubr.f32.gmra.mrb[0].mxu0 %v1802
      %v2283 = vpop.f32.mrb[0].mxu0
      %v2284 = vadd.f32 0.0, %v2283
      %v2285 = vpop.f32.mrb[0].mxu0
      %2286 = vmatprep.mubr.f32.mxu0 0.0
      %2287 = vmatmul.mubr.f32.gmra.mrb[0].mxu0 %v1805
      %v2288 = vpop.f32.mrb[0].mxu0
      %v2289 = vadd.f32 0.0, %v2288
      %v2290 = vpop.f32.mrb[0].mxu0
      %2291 = vmatprep.mubr.f32.mxu0 0.0
      %2292 = vmatmul.mubr.f32.gmra.mrb[0].mxu0 %v1808
      %v2293 = vpop.f32.mrb[0].mxu0
      %v2294 = vadd.f32 0.0, %v2293
      %v2295 = vpop.f32.mrb[0].mxu0
      %2296 = vmatprep.mubr.f32.mxu0 0.0
      %2297 = vmatmul.mubr.f32.gmra.mrb[0].mxu0 %v1811
      %v2298 = vpop.f32.mrb[0].mxu0
      %v2299 = vadd.f32 0.0, %v2298
      %v2300 = vpop.f32.mrb[0].mxu0
      %2301 = vmatprep.mubr.f32.mxu0 0.0
      %2302 = vmatmul.mubr.f32.gmra.mrb[0].mxu0 %v1814
      %v2303 = vpop.f32.mrb[0].mxu0
      %v2304 = vadd.f32 0.0, %v2303
      %v2305 = vpop.f32.mrb[0].mxu0
      %2306 = vmatprep.mubr.f32.mxu0 0.0
      %2307 = vmatmul.mubr.f32.gmra.mrb[0].mxu0 %v1817
      %v2308 = vpop.f32.mrb[0].mxu0
      %v2309 = vadd.f32 0.0, %v2308
      %v2310 = vpop.f32.mrb[0].mxu0
      %2311 = vmatprep.mubr.f32.mxu0 0.0
      %2312 = vmatmul.mubr.f32.gmra.mrb[0].mxu0 %v1820
      %v2313 = vpop.f32.mrb[0].mxu0
      %v2314 = vadd.f32 0.0, %v2313
      %v2315 = vpop.f32.mrb[0].mxu0
      %2316 = vmatprep.mubr.f32.mxu0 0.0
      %2317 = vmatmul.mubr.f32.gmra.mrb[0].mxu0 %v1823
      %v2318 = vpop.f32.mrb[0].mxu0
      %v2319 = vadd.f32 0.0, %v2318
      %v2320 = vpop.f32.mrb[0].mxu0
      %2321 = vmatprep.mubr.f32.mxu0 0.0
      %2322 = vmatmul.mubr.f32.gmra.mrb[0].mxu0 %v1826
      %v2323 = vpop.f32.mrb[0].mxu0
      %v2324 = vadd.f32 0.0, %v2323
      %v2325 = vpop.f32.mrb[0].mxu0
      %2326 = vmatprep.mubr.f32.mxu0 0.0
      %2327 = vmatmul.mubr.f32.gmra.mrb[0].mxu0 %v1829
      %v2328 = vpop.f32.mrb[0].mxu0
      %v2329 = vadd.f32 0.0, %v2328
      %v2330 = vpop.f32.mrb[0].mxu0
      %2331 = vmatprep.mubr.f32.mxu0 0.0
      %2332 = vmatmul.mubr.f32.gmra.mrb[0].mxu0 %v1832
      %v2333 = vpop.f32.mrb[0].mxu0
      %v2334 = vadd.f32 0.0, %v2333
      %v2335 = vpop.f32.mrb[0].mxu0
      %2336 = vmatprep.mubr.f32.mxu0 0.0
      %2337 = vmatmul.mubr.f32.gmra.mrb[0].mxu0 %v1835
      %v2338 = vpop.f32.mrb[0].mxu0
      %v2339 = vadd.f32 0.0, %v2338
      %v2340 = vpop.f32.mrb[0].mxu0
      %2341 = vmatprep.mubr.f32.mxu0 0.0
      %2342 = vmatmul.mubr.f32.gmra.mrb[0].mxu0 %v1838
      %v2343 = vpop.f32.mrb[0].mxu0
      %v2344 = vadd.f32 0.0, %v2343
      %v2345 = vpop.f32.mrb[0].mxu0
      %2346 = vmatprep.mubr.f32.mxu0 0.0
      %2347 = vmatmul.mubr.f32.gmra.mrb[0].mxu0 %v1841
      %v2348 = vpop.f32.mrb[0].mxu0
      %v2349 = vadd.f32 0.0, %v2348
      %v2350 = vpop.f32.mrb[0].mxu0
      %2351 = vmatprep.mubr.f32.mxu0 0.0
      %2352 = vmatmul.mubr.f32.gmra.mrb[0].mxu0 %v1844
      %v2353 = vpop.f32.mrb[0].mxu0
      %v2354 = vadd.f32 0.0, %v2353
      %v2355 = vpop.f32.mrb[0].mxu0
      %2356 = vmatprep.mubr.f32.mxu0 0.0
      %2357 = vmatmul.mubr.f32.gmra.mrb[0].mxu0 %v1847
      %v2358 = vpop.f32.mrb[0].mxu0
      %v2359 = vadd.f32 0.0, %v2358
      %v2360 = vpop.f32.mrb[0].mxu0
      %2361 = vmatprep.mubr.f32.mxu0 0.0
      %2362 = vmatmul.mubr.f32.gmra.mrb[0].mxu0 %v1850
      %v2363 = vpop.f32.mrb[0].mxu0
      %v2364 = vadd.f32 0.0, %v2363
      %v2365 = vpop.f32.mrb[0].mxu0
      %2366 = vmatprep.mubr.f32.mxu0 0.0
      %2367 = vmatmul.mubr.f32.gmra.mrb[0].mxu0 %v1853
      %v2368 = vpop.f32.mrb[0].mxu0
      %v2369 = vadd.f32 0.0, %v2368
      %v2370 = vpop.f32.mrb[0].mxu0
      %2371 = vmatprep.mubr.f32.mxu0 0.0
      %2372 = vmatmul.mubr.f32.gmra.mrb[0].mxu0 %v1856
      %v2373 = vpop.f32.mrb[0].mxu0
      %v2374 = vadd.f32 0.0, %v2373
      %v2375 = vpop.f32.mrb[0].mxu0
      %2376 = vmatprep.mubr.f32.mxu0 0.0
      %2377 = vmatmul.mubr.f32.gmra.mrb[0].mxu0 %v1859
      %v2378 = vpop.f32.mrb[0].mxu0
      %v2379 = vadd.f32 0.0, %v2378
      %v2380 = vpop.f32.mrb[0].mxu0
      %2381 = vmatprep.mubr.f32.mxu0 0.0
      %2382 = vmatmul.mubr.f32.gmra.mrb[0].mxu0 %v1862
      %v2383 = vpop.f32.mrb[0].mxu0
      %v2384 = vadd.f32 0.0, %v2383
      %v2385 = vpop.f32.mrb[0].mxu0
      %2386 = vmatprep.mubr.f32.mxu0 0.0
      %2387 = vmatmul.mubr.f32.gmra.mrb[0].mxu0 %v1865
      %v2388 = vpop.f32.mrb[0].mxu0
      %v2389 = vadd.f32 0.0, %v2388
      %v2390 = vpop.f32.mrb[0].mxu0
      %2391 = vmatprep.mubr.f32.mxu0 0.0
      %2392 = vmatmul.mubr.f32.gmra.mrb[0].mxu0 %v1868
      %v2393 = vpop.f32.mrb[0].mxu0
      %v2394 = vadd.f32 0.0, %v2393
      %v2395 = vpop.f32.mrb[0].mxu0
      %2396 = vmatprep.mubr.f32.mxu0 0.0
      %2397 = vmatmul.mubr.f32.gmra.mrb[0].mxu0 %v1871
      %v2398 = vpop.f32.mrb[0].mxu0
      %v2399 = vadd.f32 0.0, %v2398
      %v2400 = vpop.f32.mrb[0].mxu0
      %2401 = vmatprep.mubr.f32.mxu0 0.0
      %2402 = vmatmul.mubr.f32.gmra.mrb[0].mxu0 %v1874
      %v2403 = vpop.f32.mrb[0].mxu0
      %v2404 = vadd.f32 0.0, %v2403
      %v2405 = vpop.f32.mrb[0].mxu0
      %2406 = vmatprep.mubr.f32.mxu0 0.0
      %2407 = vmatmul.mubr.f32.gmra.mrb[0].mxu0 %v1877
      %v2408 = vpop.f32.mrb[0].mxu0
      %v2409 = vadd.f32 0.0, %v2408
      %v2410 = vpop.f32.mrb[0].mxu0
      %2411 = vmatprep.mubr.f32.mxu0 0.0
      %2412 = vmatmul.mubr.f32.gmra.mrb[0].mxu0 %v1880
      %v2413 = vpop.f32.mrb[0].mxu0
      %v2414 = vadd.f32 0.0, %v2413
      %v2415 = vpop.f32.mrb[0].mxu0
      %2416 = vmatprep.mubr.f32.mxu0 0.0
      %2417 = vmatmul.mubr.f32.gmra.mrb[0].mxu0 %v1883
      %v2418 = vpop.f32.mrb[0].mxu0
      %v2419 = vadd.f32 0.0, %v2418
      %v2420 = vpop.f32.mrb[0].mxu0
      %2421 = vmatprep.mubr.f32.mxu0 0.0
      %2422 = vmatmul.mubr.f32.gmra.mrb[0].mxu0 %v1886
      %v2423 = vpop.f32.mrb[0].mxu0
      %v2424 = vadd.f32 0.0, %v2423
      %v2425 = vpop.f32.mrb[0].mxu0
      %2426 = vmatprep.mubr.f32.mxu0 0.0
      %2427 = vmatmul.mubr.f32.gmra.mrb[0].mxu0 %v1889
      %v2428 = vpop.f32.mrb[0].mxu0
      %v2429 = vadd.f32 0.0, %v2428
      %v2430 = vpop.f32.mrb[0].mxu0
      %2431 = vmatprep.mubr.f32.mxu0 0.0
      %2432 = vmatmul.mubr.f32.gmra.mrb[0].mxu0 %v1892
      %v2433 = vpop.f32.mrb[0].mxu0
      %v2434 = vadd.f32 0.0, %v2433
      %v2435 = vpop.f32.mrb[0].mxu0
      %2436 = vmatprep.mubr.f32.mxu0 0.0
      %2437 = vmatmul.mubr.f32.gmra.mrb[0].mxu0 %v1895
      %v2438 = vpop.f32.mrb[0].mxu0
      %v2439 = vadd.f32 0.0, %v2438
      %v2440 = vpop.f32.mrb[0].mxu0
      %2441 = vmatprep.mubr.f32.mxu0 0.0
      %2442 = vmatmul.mubr.f32.gmra.mrb[0].mxu0 %v1898
      %v2443 = vpop.f32.mrb[0].mxu0
      %v2444 = vadd.f32 0.0, %v2443
      %v2445 = vpop.f32.mrb[0].mxu0
      %2446 = vmatprep.mubr.f32.mxu0 0.0
      %2447 = vmatmul.mubr.f32.gmra.mrb[0].mxu0 %v1901
      %v2448 = vpop.f32.mrb[0].mxu0
      %v2449 = vadd.f32 0.0, %v2448
      %v2450 = vpop.f32.mrb[0].mxu0
      %2451 = vmatprep.mubr.f32.mxu0 0.0
      %2452 = vmatmul.mubr.f32.gmra.mrb[0].mxu0 %v1904
      %v2453 = vpop.f32.mrb[0].mxu0
      %v2454 = vadd.f32 0.0, %v2453
      %v2455 = vpop.f32.mrb[0].mxu0
      %2456 = vmatprep.mubr.f32.mxu0 0.0
      %2457 = vmatmul.mubr.f32.gmra.mrb[0].mxu0 %v1907
      %v2458 = vpop.f32.mrb[0].mxu0
      %v2459 = vadd.f32 0.0, %v2458
      %v2460 = vpop.f32.mrb[0].mxu0
      %2461 = vmatprep.mubr.f32.mxu0 0.0
      %2462 = vmatmul.mubr.f32.gmra.mrb[0].mxu0 %v1910
      %v2463 = vpop.f32.mrb[0].mxu0
      %v2464 = vadd.f32 0.0, %v2463
      %v2465 = vpop.f32.mrb[0].mxu0
      %2466 = vmatprep.mubr.f32.mxu0 0.0
      %2467 = vmatmul.mubr.f32.gmra.mrb[0].mxu0 %v1913
      %v2468 = vpop.f32.mrb[0].mxu0
      %v2469 = vadd.f32 0.0, %v2468
      %v2470 = vpop.f32.mrb[0].mxu0
      %2471 = vmatprep.mubr.f32.mxu0 0.0
      %2472 = vmatmul.mubr.f32.gmra.mrb[0].mxu0 %v1916
      %v2473 = vpop.f32.mrb[0].mxu0
      %v2474 = vadd.f32 0.0, %v2473
      %v2475 = vpop.f32.mrb[0].mxu0
      %2476 = vmatprep.mubr.f32.mxu0 0.0
      %2477 = vmatmul.mubr.f32.gmra.mrb[0].mxu0 %v1919
      %v2478 = vpop.f32.mrb[0].mxu0
      %v2479 = vadd.f32 0.0, %v2478
      %v2480 = vpop.f32.mrb[0].mxu0
      %2481 = vmatprep.mubr.f32.mxu0 0.0
      %2482 = vmatmul.mubr.f32.gmra.mrb[0].mxu0 %v1922
      %v2483 = vpop.f32.mrb[0].mxu0
      %v2484 = vadd.f32 0.0, %v2483
      %v2485 = vpop.f32.mrb[0].mxu0
      %2486 = vmatprep.mubr.f32.mxu0 0.0
      %2487 = vmatmul.mubr.f32.gmra.mrb[0].mxu0 %v1925
      %v2488 = vpop.f32.mrb[0].mxu0
      %v2489 = vadd.f32 0.0, %v2488
      %v2490 = vpop.f32.mrb[0].mxu0
      %2491 = vmatprep.mubr.f32.mxu0 0.0
      %2492 = vmatmul.mubr.f32.gmra.mrb[0].mxu0 %v1928
      %v2493 = vpop.f32.mrb[0].mxu0
      %v2494 = vadd.f32 0.0, %v2493
      %v2495 = vpop.f32.mrb[0].mxu0
      %2496 = vmatprep.mubr.f32.mxu0 0.0
      %2497 = vmatmul.mubr.f32.gmra.mrb[0].mxu0 %v1931
      %v2498 = vpop.f32.mrb[0].mxu0
      %v2499 = vadd.f32 0.0, %v2498
      %v2500 = vpop.f32.mrb[0].mxu0
      %2501 = vmatprep.mubr.f32.mxu0 0.0
      %2502 = vmatmul.mubr.f32.gmra.mrb[0].mxu0 %v1934
      %v2503 = vpop.f32.mrb[0].mxu0
      %v2504 = vadd.f32 0.0, %v2503
      %v2505 = vpop.f32.mrb[0].mxu0
      %2506 = vmatprep.mubr.f32.mxu0 0.0
      %2507 = vmatmul.mubr.f32.gmra.mrb[0].mxu0 %v1937
      %v2508 = vpop.f32.mrb[0].mxu0
      %v2509 = vadd.f32 0.0, %v2508
      %v2510 = vpop.f32.mrb[0].mxu0
      %2511 = vmatprep.mubr.f32.mxu0 0.0
      %2512 = vmatmul.mubr.f32.gmra.mrb[0].mxu0 %v1940
      %v2513 = vpop.f32.mrb[0].mxu0
      %v2514 = vadd.f32 0.0, %v2513
      %v2515 = vpop.f32.mrb[0].mxu0
      %2516 = vmatprep.mubr.f32.mxu0 0.0
      %2517 = vmatmul.mubr.f32.gmra.mrb[0].mxu0 %v1943
      %v2518 = vpop.f32.mrb[0].mxu0
      %v2519 = vadd.f32 0.0, %v2518
      %v2520 = vpop.f32.mrb[0].mxu0
      %2521 = vmatprep.mubr.f32.mxu0 0.0
      %2522 = vmatmul.mubr.f32.gmra.mrb[0].mxu0 %v1946
      %v2523 = vpop.f32.mrb[0].mxu0
      %v2524 = vadd.f32 0.0, %v2523
      %v2525 = vpop.f32.mrb[0].mxu0
      %2526 = vmatprep.mubr.f32.mxu0 0.0
      %2527 = vmatmul.mubr.f32.gmra.mrb[0].mxu0 %v1949
      %v2528 = vpop.f32.mrb[0].mxu0
      %v2529 = vadd.f32 0.0, %v2528
      %v2530 = vpop.f32.mrb[0].mxu0
      %2531 = vmatprep.mubr.f32.mxu0 0.0
      %2532 = vmatmul.mubr.f32.gmra.mrb[0].mxu0 %v1952
      %v2533 = vpop.f32.mrb[0].mxu0
      %v2534 = vadd.f32 0.0, %v2533
      %v2535 = vpop.f32.mrb[0].mxu0
      %2536 = vmatprep.mubr.f32.mxu0 0.0
      %2537 = vmatmul.mubr.f32.gmra.mrb[0].mxu0 %v1955
      %v2538 = vpop.f32.mrb[0].mxu0
      %v2539 = vadd.f32 0.0, %v2538
      %v2540 = vpop.f32.mrb[0].mxu0
      %2541 = vmatprep.mubr.f32.mxu0 0.0
      %2542 = vmatmul.mubr.f32.gmra.mrb[0].mxu0 %v1958
      %v2543 = vpop.f32.mrb[0].mxu0
      %v2544 = vadd.f32 0.0, %v2543
      %v2545 = vpop.f32.mrb[0].mxu0
      %2546 = vmatprep.mubr.f32.mxu0 0.0
      %2547 = vmatmul.mubr.f32.gmra.mrb[0].mxu0 %v1961
      %v2548 = vpop.f32.mrb[0].mxu0
      %v2549 = vadd.f32 0.0, %v2548
      %v2550 = vpop.f32.mrb[0].mxu0
      %2551 = vmatprep.mubr.f32.mxu0 0.0
      %2552 = vmatmul.mubr.f32.gmra.mrb[0].mxu0 %v1964
      %v2553 = vpop.f32.mrb[0].mxu0
      %v2554 = vadd.f32 0.0, %v2553
      %v2555 = vpop.f32.mrb[0].mxu0
      %2556 = vmatprep.mubr.f32.mxu0 0.0
      %2557 = vmatmul.mubr.f32.gmra.mrb[0].mxu0 %v1967
      %v2558 = vpop.f32.mrb[0].mxu0
      %v2559 = vadd.f32 0.0, %v2558
      %v2560 = vpop.f32.mrb[0].mxu0
      %2561 = vmatprep.mubr.f32.mxu0 0.0
      %2562 = vmatmul.mubr.f32.gmra.mrb[0].mxu0 %v1970
      %v2563 = vpop.f32.mrb[0].mxu0
      %v2564 = vadd.f32 0.0, %v2563
      %v2565 = vpop.f32.mrb[0].mxu0
      %2566 = vmatprep.mubr.f32.mxu0 0.0
      %2567 = vmatmul.mubr.f32.gmra.mrb[0].mxu0 %v1973
      %v2568 = vpop.f32.mrb[0].mxu0
      %v2569 = vadd.f32 0.0, %v2568
      %v2570 = vpop.f32.mrb[0].mxu0
      %2571 = vmatprep.mubr.f32.mxu0 0.0
      %2572 = vmatmul.mubr.f32.gmra.mrb[0].mxu0 %v1976
      %v2573 = vpop.f32.mrb[0].mxu0
      %v2574 = vadd.f32 0.0, %v2573
      %v2575 = vpop.f32.mrb[0].mxu0
      %2576 = vmatprep.mubr.f32.mxu0 0.0
      %2577 = vmatmul.mubr.f32.gmra.mrb[0].mxu0 %v1979
      %v2578 = vpop.f32.mrb[0].mxu0
      %v2579 = vadd.f32 0.0, %v2578
      %v2580 = vpop.f32.mrb[0].mxu0
      %2581 = vmatprep.mubr.f32.mxu0 0.0
      %2582 = vmatmul.mubr.f32.gmra.mrb[0].mxu0 %v1982
      %v2583 = vpop.f32.mrb[0].mxu0
      %v2584 = vadd.f32 0.0, %v2583
      %v2585 = vpop.f32.mrb[0].mxu0
      %2586 = vmatprep.mubr.f32.mxu0 0.0
      %2587 = vmatmul.mubr.f32.gmra.mrb[0].mxu0 %v1985
      %v2588 = vpop.f32.mrb[0].mxu0
      %v2589 = vadd.f32 0.0, %v2588
      %v2590 = vpop.f32.mrb[0].mxu0
      %2591 = vmatprep.mubr.f32.mxu0 0.0
      %2592 = vmatmul.mubr.f32.gmra.mrb[0].mxu0 %v1988
      %v2593 = vpop.f32.mrb[0].mxu0
      %v2594 = vadd.f32 0.0, %v2593
      %v2595 = vpop.f32.mrb[0].mxu0
      %2596 = vmatprep.mubr.f32.mxu0 0.0
      %2597 = vmatmul.mubr.f32.gmra.mrb[0].mxu0 %v1991
      %v2598 = vpop.f32.mrb[0].mxu0
      %v2599 = vadd.f32 0.0, %v2598
      %v2600 = vpop.f32.mrb[0].mxu0
      %2601 = vmatprep.mubr.f32.mxu0 0.0
      %2602 = vmatmul.mubr.f32.gmra.mrb[0].mxu0 %v1994
      %v2603 = vpop.f32.mrb[0].mxu0
      %v2604 = vadd.f32 0.0, %v2603
      %v2605 = vpop.f32.mrb[0].mxu0
      %2606 = vmatprep.mubr.f32.mxu0 0.0
      %2607 = vmatmul.mubr.f32.gmra.mrb[0].mxu0 %v1997
      %v2608 = vpop.f32.mrb[0].mxu0
      %v2609 = vadd.f32 0.0, %v2608
      %v2610 = vpop.f32.mrb[0].mxu0
      %2611 = vmatprep.mubr.f32.mxu0 0.0
      %2612 = vmatmul.mubr.f32.gmra.mrb[0].mxu0 %v2000
      %v2613 = vpop.f32.mrb[0].mxu0
      %v2614 = vadd.f32 0.0, %v2613
      %v2615 = vpop.f32.mrb[0].mxu0
      %2616 = vmatprep.mubr.f32.mxu0 0.0
      %2617 = vmatmul.mubr.f32.gmra.mrb[0].mxu0 %v2003
      %v2618 = vpop.f32.mrb[0].mxu0
      %v2619 = vadd.f32 0.0, %v2618
      %v2620 = vpop.f32.mrb[0].mxu0
      %2621 = vmatprep.mubr.f32.mxu0 0.0
      %2622 = vmatmul.mubr.f32.gmra.mrb[0].mxu0 %v2006
      %v2623 = vpop.f32.mrb[0].mxu0
      %v2624 = vadd.f32 0.0, %v2623
      %v2625 = vpop.f32.mrb[0].mxu0
      %2626 = vmatprep.mubr.f32.mxu0 0.0
      %2627 = vmatmul.mubr.f32.gmra.mrb[0].mxu0 %v2009
      %v2628 = vpop.f32.mrb[0].mxu0
      %v2629 = vadd.f32 0.0, %v2628
      %v2630 = vpop.f32.mrb[0].mxu0
      %2631 = vmatprep.mubr.f32.mxu0 0.0
      %2632 = vmatmul.mubr.f32.gmra.mrb[0].mxu0 %v2012
      %v2633 = vpop.f32.mrb[0].mxu0
      %v2634 = vadd.f32 0.0, %v2633
      %v2635 = vpop.f32.mrb[0].mxu0
      %2636 = vmatprep.mubr.f32.mxu0 0.0
      %2637 = vmatmul.mubr.f32.gmra.mrb[0].mxu0 %v2015
      %v2638 = vpop.f32.mrb[0].mxu0
      %v2639 = vadd.f32 0.0, %v2638
      %v2640 = vpop.f32.mrb[0].mxu0
      %2641 = vmatprep.mubr.f32.mxu0 0.0
      %2642 = vmatmul.mubr.f32.gmra.mrb[0].mxu0 %v2018
      %v2643 = vpop.f32.mrb[0].mxu0
      %v2644 = vadd.f32 0.0, %v2643
      %v2645 = vpop.f32.mrb[0].mxu0
      %2646 = vmatprep.mubr.f32.mxu0 0.0
      %2647 = vmatmul.mubr.f32.gmra.mrb[0].mxu0 %v2021
      %v2648 = vpop.f32.mrb[0].mxu0
      %v2649 = vadd.f32 0.0, %v2648
      %v2650 = vpop.f32.mrb[0].mxu0
      %2651 = vmatprep.mubr.f32.mxu0 0.0
      %2652 = vmatmul.mubr.f32.gmra.mrb[0].mxu0 %v2024
      %v2653 = vpop.f32.mrb[0].mxu0
      %v2654 = vadd.f32 0.0, %v2653
      %v2655 = vpop.f32.mrb[0].mxu0
      %2656 = vmatprep.mubr.f32.mxu0 0.0
      %2657 = vmatmul.mubr.f32.gmra.mrb[0].mxu0 %v2027
      %v2658 = vpop.f32.mrb[0].mxu0
      %v2659 = vadd.f32 0.0, %v2658
      %v2660 = vpop.f32.mrb[0].mxu0
      %2661 = vmatprep.mubr.f32.mxu0 0.0
      %2662 = vmatmul.mubr.f32.gmra.mrb[0].mxu0 %v2030
      %v2663 = vpop.f32.mrb[0].mxu0
      %v2664 = vadd.f32 0.0, %v2663
      %v2665 = vpop.f32.mrb[0].mxu0
      %2666 = vmatprep.mubr.f32.mxu0 0.0
      %2667 = vmatmul.mubr.f32.gmra.mrb[0].mxu0 %v2033
      %v2668 = vpop.f32.mrb[0].mxu0
      %v2669 = vadd.f32 0.0, %v2668
      %v2670 = vpop.f32.mrb[0].mxu0
      %2671 = vmatprep.mubr.f32.mxu0 0.0
      %2672 = vmatmul.mubr.f32.gmra.mrb[0].mxu0 %v2036
      %v2673 = vpop.f32.mrb[0].mxu0
      %v2674 = vadd.f32 0.0, %v2673
      %v2675 = vpop.f32.mrb[0].mxu0
      %2676 = vmatprep.mubr.f32.mxu0 0.0
      %2677 = vmatmul.mubr.f32.gmra.mrb[0].mxu0 %v2039
      %v2678 = vpop.f32.mrb[0].mxu0
      %v2679 = vadd.f32 0.0, %v2678
      %v2680 = vpop.f32.mrb[0].mxu0
      %2681 = vmatprep.mubr.f32.mxu0 0.0
      %2682 = vmatmul.mubr.f32.gmra.mrb[0].mxu0 %v2042
      %v2683 = vpop.f32.mrb[0].mxu0
      %v2684 = vadd.f32 0.0, %v2683
      %v2685 = vpop.f32.mrb[0].mxu0
      %2686 = vmatprep.mubr.f32.mxu0 0.0
      %2687 = vmatmul.mubr.f32.gmra.mrb[0].mxu0 %v2045
      %v2688 = vpop.f32.mrb[0].mxu0
      %v2689 = vadd.f32 0.0, %v2688
      %v2690 = vpop.f32.mrb[0].mxu0
      %2691 = vmatprep.mubr.f32.mxu0 0.0
      %2692 = vmatmul.mubr.f32.gmra.mrb[0].mxu0 %v2048
      %v2693 = vpop.f32.mrb[0].mxu0
      %v2694 = vadd.f32 0.0, %v2693
      %v2695 = vpop.f32.mrb[0].mxu0
      %2696 = vmatprep.mubr.f32.mxu0 0.0
      %2697 = vmatmul.mubr.f32.gmra.mrb[0].mxu0 %v2051
      %v2698 = vpop.f32.mrb[0].mxu0
      %v2699 = vadd.f32 0.0, %v2698
      %v2700 = vpop.f32.mrb[0].mxu0
      %2701 = vmatprep.mubr.f32.mxu0 0.0
      %2702 = vmatmul.mubr.f32.gmra.mrb[0].mxu0 %v2054
      %v2703 = vpop.f32.mrb[0].mxu0
      %v2704 = vadd.f32 0.0, %v2703
      %v2705 = vpop.f32.mrb[0].mxu0
      %2706 = vmatprep.mubr.f32.mxu0 0.0
      %2707 = vmatmul.mubr.f32.gmra.mrb[0].mxu0 %v2057
      %v2708 = vpop.f32.mrb[0].mxu0
      %v2709 = vadd.f32 0.0, %v2708
      %v2710 = vpop.f32.mrb[0].mxu0
      %2711 = vmatprep.mubr.f32.mxu0 0.0
      %2712 = vmatmul.mubr.f32.gmra.mrb[0].mxu0 %v2060
      %v2713 = vpop.f32.mrb[0].mxu0
      %v2714 = vadd.f32 0.0, %v2713
      %v2715 = vpop.f32.mrb[0].mxu0
      %2716 = vmatprep.mubr.f32.mxu0 0.0
      %2717 = vmatmul.mubr.f32.gmra.mrb[0].mxu0 %v2063
      %v2718 = vpop.f32.mrb[0].mxu0
      %v2719 = vadd.f32 0.0, %v2718
      %v2720 = vpop.f32.mrb[0].mxu0
      %2721 = vmatprep.mubr.f32.mxu0 0.0
      %2722 = vmatmul.mubr.f32.gmra.mrb[0].mxu0 %v2066
      %v2723 = vpop.f32.mrb[0].mxu0
      %v2724 = vadd.f32 0.0, %v2723
      %v2725 = vpop.f32.mrb[0].mxu0
      %2726 = vmatprep.mubr.f32.mxu0 0.0
      %2727 = vmatmul.mubr.f32.gmra.mrb[0].mxu0 %v2069
      %v2728 = vpop.f32.mrb[0].mxu0
      %v2729 = vadd.f32 0.0, %v2728
      %v2730 = vpop.f32.mrb[0].mxu0
      %2731 = vmatprep.mubr.f32.mxu0 0.0
      %2732 = vmatmul.mubr.f32.gmra.mrb[0].mxu0 %v2072
      %v2733 = vpop.f32.mrb[0].mxu0
      %v2734 = vadd.f32 0.0, %v2733
      %v2735 = vpop.f32.mrb[0].mxu0
      %2736 = vmatprep.mubr.f32.mxu0 0.0
      %2737 = vmatmul.mubr.f32.gmra.mrb[0].mxu0 %v2075
      %v2738 = vpop.f32.mrb[0].mxu0
      %v2739 = vadd.f32 0.0, %v2738
      %v2740 = vpop.f32.mrb[0].mxu0
      %2741 = vmatprep.mubr.f32.mxu0 0.0
      %2742 = vmatmul.mubr.f32.gmra.mrb[0].mxu0 %v2078
      %v2743 = vpop.f32.mrb[0].mxu0
      %v2744 = vadd.f32 0.0, %v2743
      %v2745 = vpop.f32.mrb[0].mxu0
      %2746 = vmatprep.mubr.f32.mxu0 0.0
      %2747 = vmatmul.mubr.f32.gmra.mrb[0].mxu0 %v2081
      %v2748 = vpop.f32.mrb[0].mxu0
      %v2749 = vadd.f32 0.0, %v2748
      %v2750 = vpop.f32.mrb[0].mxu0
      %2751 = vmatprep.mubr.f32.mxu0 0.0
      %2752 = vmatmul.mubr.f32.gmra.mrb[0].mxu0 %v2084
      %v2753 = vpop.f32.mrb[0].mxu0
      %v2754 = vadd.f32 0.0, %v2753
      %v2755 = vpop.f32.mrb[0].mxu0
      %2756 = vmatprep.mubr.f32.mxu0 0.0
      %2757 = vmatmul.mubr.f32.gmra.mrb[0].mxu0 %v2087
      %v2758 = vpop.f32.mrb[0].mxu0
      %v2759 = vadd.f32 0.0, %v2758
      %v2760 = vpop.f32.mrb[0].mxu0
      %2761 = vmatprep.mubr.f32.mxu0 0.0
      %2762 = vmatmul.mubr.f32.gmra.mrb[0].mxu0 %v2090
      %v2763 = vpop.f32.mrb[0].mxu0
      %v2764 = vadd.f32 0.0, %v2763
      %v2765 = vpop.f32.mrb[0].mxu0
      %2766 = vmatprep.mubr.f32.mxu0 0.0
      %2767 = vmatmul.mubr.f32.gmra.mrb[0].mxu0 %v2093
      %v2768 = vpop.f32.mrb[0].mxu0
      %v2769 = vadd.f32 0.0, %v2768
      %v2770 = vpop.f32.mrb[0].mxu0
      %2771 = vmatprep.mubr.f32.mxu0 0.0
      %2772 = vmatmul.mubr.f32.gmra.mrb[0].mxu0 %v2096
      %v2773 = vpop.f32.mrb[0].mxu0
      %v2774 = vadd.f32 0.0, %v2773
      %v2775 = vpop.f32.mrb[0].mxu0
      %2776 = vmatprep.mubr.f32.mxu0 0.0
      %2777 = vmatmul.mubr.f32.gmra.mrb[0].mxu0 %v2099
      %v2778 = vpop.f32.mrb[0].mxu0
      %v2779 = vadd.f32 0.0, %v2778
      %v2780 = vpop.f32.mrb[0].mxu0
      %2781 = vmatprep.mubr.f32.mxu0 0.0
      %2782 = vmatmul.mubr.f32.gmra.mrb[0].mxu0 %v2102
      %v2783 = vpop.f32.mrb[0].mxu0
      %v2784 = vadd.f32 0.0, %v2783
      %v2785 = vpop.f32.mrb[0].mxu0
      %2786 = vmatprep.mubr.f32.mxu0 0.0
      %2787 = vmatmul.mubr.f32.gmra.mrb[0].mxu0 %v2105
      %v2788 = vpop.f32.mrb[0].mxu0
      %v2789 = vadd.f32 0.0, %v2788
      %v2790 = vpop.f32.mrb[0].mxu0
      %2791 = vmatprep.mubr.f32.mxu0 0.0
      %2792 = vmatmul.mubr.f32.gmra.mrb[0].mxu0 %v2108
      %v2793 = vpop.f32.mrb[0].mxu0
      %v2794 = vadd.f32 0.0, %v2793
      %v2795 = vpop.f32.mrb[0].mxu0
      %2796 = vmatprep.mubr.f32.mxu0 0.0
      %2797 = vmatmul.mubr.f32.gmra.mrb[0].mxu0 %v2111
      %v2798 = vpop.f32.mrb[0].mxu0
      %v2799 = vadd.f32 0.0, %v2798
      %v2800 = vpop.f32.mrb[0].mxu0
      %2801 = vmatprep.mubr.f32.mxu0 0.0
      %2802 = vmatmul.mubr.f32.gmra.mrb[0].mxu0 %v2114
      %v2803 = vpop.f32.mrb[0].mxu0
      %v2804 = vadd.f32 0.0, %v2803
      %v2805 = vpop.f32.mrb[0].mxu0
      %2806 = vmatprep.mubr.f32.mxu0 0.0
      %2807 = vmatmul.mubr.f32.gmra.mrb[0].mxu0 %v2117
      %v2808 = vpop.f32.mrb[0].mxu0
      %v2809 = vadd.f32 0.0, %v2808
      %v2810 = vpop.f32.mrb[0].mxu0
      %2811 = vmatprep.mubr.f32.mxu0 0.0
      %2812 = vmatmul.mubr.f32.gmra.mrb[0].mxu0 %v2120
      %v2813 = vpop.f32.mrb[0].mxu0
      %v2814 = vadd.f32 0.0, %v2813
      %v2815 = vpop.f32.mrb[0].mxu0
      %2816 = vmatprep.mubr.f32.mxu0 0.0
      %2817 = vmatmul.mubr.f32.gmra.mrb[0].mxu0 %v2123
      %v2818 = vpop.f32.mrb[0].mxu0
      %v2819 = vadd.f32 0.0, %v2818
      %v2820 = vpop.f32.mrb[0].mxu0
      %2821 = vmatprep.mubr.f32.mxu0 0.0
      %2822 = vmatmul.mubr.f32.gmra.mrb[0].mxu0 %v2126
      %v2823 = vpop.f32.mrb[0].mxu0
      %v2824 = vadd.f32 0.0, %v2823
      %v2825 = vpop.f32.mrb[0].mxu0
      %2826 = vmatprep.mubr.f32.mxu0 0.0
      %2827 = vmatmul.mubr.f32.gmra.mrb[0].mxu0 %v2129
      %v2828 = vpop.f32.mrb[0].mxu0
      %v2829 = vadd.f32 0.0, %v2828
      %v2830 = vpop.f32.mrb[0].mxu0
      %2831 = vmatprep.mubr.f32.mxu0 0.0
      %2832 = vmatmul.mubr.f32.gmra.mrb[0].mxu0 %v2132
      %v2833 = vpop.f32.mrb[0].mxu0
      %v2834 = vadd.f32 0.0, %v2833
      %v2835 = vpop.f32.mrb[0].mxu0
      %2836 = vmatprep.mubr.f32.mxu0 0.0
      %2837 = vmatmul.mubr.f32.gmra.mrb[0].mxu0 %v2135
      %v2838 = vpop.f32.mrb[0].mxu0
      %v2839 = vadd.f32 0.0, %v2838
      %v2840 = vpop.f32.mrb[0].mxu0
      %2841 = vdwg.mxu0
      %v2842 = vmul.f32 %v1112, %v2204
      %v2843 = vmul.f32 %v1117, %v2209
      %v2844 = vmul.f32 %v1122, %v2214
      %v2845 = vmul.f32 %v1127, %v2219
      %v2846 = vmul.f32 %v1132, %v2224
      %v2847 = vmul.f32 %v1137, %v2229
      %v2848 = vmul.f32 %v1142, %v2234
      %v2849 = vmul.f32 %v1147, %v2239
      %v2850 = vmul.f32 %v1152, %v2244
      %v2851 = vmul.f32 %v1157, %v2249
      %v2852 = vmul.f32 %v1162, %v2254
      %v2853 = vmul.f32 %v1167, %v2259
      %v2854 = vmul.f32 %v1172, %v2264
      %v2855 = vmul.f32 %v1177, %v2269
      %v2856 = vmul.f32 %v1182, %v2274
      %v2857 = vmul.f32 %v1187, %v2279
      %v2858 = vmul.f32 %v1192, %v2284
      %v2859 = vmul.f32 %v1197, %v2289
      %v2860 = vmul.f32 %v1202, %v2294
      %v2861 = vmul.f32 %v1207, %v2299
      %v2862 = vmul.f32 %v1212, %v2304
      %v2863 = vmul.f32 %v1217, %v2309
      %v2864 = vmul.f32 %v1222, %v2314
      %v2865 = vmul.f32 %v1227, %v2319
      %v2866 = vmul.f32 %v1232, %v2324
      %v2867 = vmul.f32 %v1237, %v2329
      %v2868 = vmul.f32 %v1242, %v2334
      %v2869 = vmul.f32 %v1247, %v2339
      %v2870 = vmul.f32 %v1252, %v2344
      %v2871 = vmul.f32 %v1257, %v2349
      %v2872 = vmul.f32 %v1262, %v2354
      %v2873 = vmul.f32 %v1267, %v2359
      %v2874 = vmul.f32 %v1272, %v2364
      %v2875 = vmul.f32 %v1277, %v2369
      %v2876 = vmul.f32 %v1282, %v2374
      %v2877 = vmul.f32 %v1287, %v2379
      %v2878 = vmul.f32 %v1292, %v2384
      %v2879 = vmul.f32 %v1297, %v2389
      %v2880 = vmul.f32 %v1302, %v2394
      %v2881 = vmul.f32 %v1307, %v2399
      %v2882 = vmul.f32 %v1312, %v2404
      %v2883 = vmul.f32 %v1317, %v2409
      %v2884 = vmul.f32 %v1322, %v2414
      %v2885 = vmul.f32 %v1327, %v2419
      %v2886 = vmul.f32 %v1332, %v2424
      %v2887 = vmul.f32 %v1337, %v2429
      %v2888 = vmul.f32 %v1342, %v2434
      %v2889 = vmul.f32 %v1347, %v2439
      %v2890 = vmul.f32 %v1352, %v2444
      %v2891 = vmul.f32 %v1357, %v2449
      %v2892 = vmul.f32 %v1362, %v2454
      %v2893 = vmul.f32 %v1367, %v2459
      %v2894 = vmul.f32 %v1372, %v2464
      %v2895 = vmul.f32 %v1377, %v2469
      %v2896 = vmul.f32 %v1382, %v2474
      %v2897 = vmul.f32 %v1387, %v2479
      %v2898 = vmul.f32 %v1392, %v2484
      %v2899 = vmul.f32 %v1397, %v2489
      %v2900 = vmul.f32 %v1402, %v2494
      %v2901 = vmul.f32 %v1407, %v2499
      %v2902 = vmul.f32 %v1412, %v2504
      %v2903 = vmul.f32 %v1417, %v2509
      %v2904 = vmul.f32 %v1422, %v2514
      %v2905 = vmul.f32 %v1427, %v2519
      %v2906 = vmul.f32 %v1432, %v2524
      %v2907 = vmul.f32 %v1437, %v2529
      %v2908 = vmul.f32 %v1442, %v2534
      %v2909 = vmul.f32 %v1447, %v2539
      %v2910 = vmul.f32 %v1452, %v2544
      %v2911 = vmul.f32 %v1457, %v2549
      %v2912 = vmul.f32 %v1462, %v2554
      %v2913 = vmul.f32 %v1467, %v2559
      %v2914 = vmul.f32 %v1472, %v2564
      %v2915 = vmul.f32 %v1477, %v2569
      %v2916 = vmul.f32 %v1482, %v2574
      %v2917 = vmul.f32 %v1487, %v2579
      %v2918 = vmul.f32 %v1492, %v2584
      %v2919 = vmul.f32 %v1497, %v2589
      %v2920 = vmul.f32 %v1502, %v2594
      %v2921 = vmul.f32 %v1507, %v2599
      %v2922 = vmul.f32 %v1512, %v2604
      %v2923 = vmul.f32 %v1517, %v2609
      %v2924 = vmul.f32 %v1522, %v2614
      %v2925 = vmul.f32 %v1527, %v2619
      %v2926 = vmul.f32 %v1532, %v2624
      %v2927 = vmul.f32 %v1537, %v2629
      %v2928 = vmul.f32 %v1542, %v2634
      %v2929 = vmul.f32 %v1547, %v2639
      %v2930 = vmul.f32 %v1552, %v2644
      %v2931 = vmul.f32 %v1557, %v2649
      %v2932 = vmul.f32 %v1562, %v2654
      %v2933 = vmul.f32 %v1567, %v2659
      %v2934 = vmul.f32 %v1572, %v2664
      %v2935 = vmul.f32 %v1577, %v2669
      %v2936 = vmul.f32 %v1582, %v2674
      %v2937 = vmul.f32 %v1587, %v2679
      %v2938 = vmul.f32 %v1592, %v2684
      %v2939 = vmul.f32 %v1597, %v2689
      %v2940 = vmul.f32 %v1602, %v2694
      %v2941 = vmul.f32 %v1607, %v2699
      %v2942 = vmul.f32 %v1612, %v2704
      %v2943 = vmul.f32 %v1617, %v2709
      %v2944 = vmul.f32 %v1622, %v2714
      %v2945 = vmul.f32 %v1627, %v2719
      %v2946 = vmul.f32 %v1632, %v2724
      %v2947 = vmul.f32 %v1637, %v2729
      %v2948 = vmul.f32 %v1642, %v2734
      %v2949 = vmul.f32 %v1647, %v2739
      %v2950 = vmul.f32 %v1652, %v2744
      %v2951 = vmul.f32 %v1657, %v2749
      %v2952 = vmul.f32 %v1662, %v2754
      %v2953 = vmul.f32 %v1667, %v2759
      %v2954 = vmul.f32 %v1672, %v2764
      %v2955 = vmul.f32 %v1677, %v2769
      %v2956 = vmul.f32 %v1682, %v2774
      %v2957 = vmul.f32 %v1687, %v2779
      %v2958 = vmul.f32 %v1692, %v2784
      %v2959 = vmul.f32 %v1697, %v2789
      %v2960 = vmul.f32 %v1702, %v2794
      %v2961 = vmul.f32 %v1707, %v2799
      %v2962 = vmul.f32 %v1712, %v2804
      %v2963 = vmul.f32 %v1717, %v2809
      %v2964 = vmul.f32 %v1722, %v2814
      %v2965 = vmul.f32 %v1727, %v2819
      %v2966 = vmul.f32 %v1732, %v2824
      %v2967 = vmul.f32 %v1737, %v2829
      %v2968 = vmul.f32 %v1742, %v2834
      %v2969 = vmul.f32 %v1747, %v2839
      %2970 = vrot.lane.b32.xlu0 %v2842, 64
      %v2971 = vpop.permute.xlu0 %2970
      %2972 = vrot.lane.b32.xlu0 %v2843, 64
      %v2973 = vpop.permute.xlu0 %2972
      %2974 = vrot.lane.b32.xlu0 %v2844, 64
      %v2975 = vpop.permute.xlu0 %2974
      %2976 = vrot.lane.b32.xlu0 %v2845, 64
      %v2977 = vpop.permute.xlu0 %2976
      %2978 = vrot.lane.b32.xlu0 %v2846, 64
      %v2979 = vpop.permute.xlu0 %2978
      %2980 = vrot.lane.b32.xlu0 %v2847, 64
      %v2981 = vpop.permute.xlu0 %2980
      %2982 = vrot.lane.b32.xlu0 %v2848, 64
      %v2983 = vpop.permute.xlu0 %2982
      %2984 = vrot.lane.b32.xlu0 %v2849, 64
      %v2985 = vpop.permute.xlu0 %2984
      %2986 = vrot.lane.b32.xlu0 %v2850, 64
      %v2987 = vpop.permute.xlu0 %2986
      %2988 = vrot.lane.b32.xlu0 %v2851, 64
      %v2989 = vpop.permute.xlu0 %2988
      %2990 = vrot.lane.b32.xlu0 %v2852, 64
      %v2991 = vpop.permute.xlu0 %2990
      %2992 = vrot.lane.b32.xlu0 %v2853, 64
      %v2993 = vpop.permute.xlu0 %2992
      %2994 = vrot.lane.b32.xlu0 %v2854, 64
      %v2995 = vpop.permute.xlu0 %2994
      %2996 = vrot.lane.b32.xlu0 %v2855, 64
      %v2997 = vpop.permute.xlu0 %2996
      %2998 = vrot.lane.b32.xlu0 %v2856, 64
      %v2999 = vpop.permute.xlu0 %2998
      %3000 = vrot.lane.b32.xlu0 %v2857, 64
      %v3001 = vpop.permute.xlu0 %3000
      %3002 = vrot.lane.b32.xlu0 %v2858, 64
      %v3003 = vpop.permute.xlu0 %3002
      %3004 = vrot.lane.b32.xlu0 %v2859, 64
      %v3005 = vpop.permute.xlu0 %3004
      %3006 = vrot.lane.b32.xlu0 %v2860, 64
      %v3007 = vpop.permute.xlu0 %3006
      %3008 = vrot.lane.b32.xlu0 %v2861, 64
      %v3009 = vpop.permute.xlu0 %3008
      %3010 = vrot.lane.b32.xlu0 %v2862, 64
      %v3011 = vpop.permute.xlu0 %3010
      %3012 = vrot.lane.b32.xlu0 %v2863, 64
      %v3013 = vpop.permute.xlu0 %3012
      %3014 = vrot.lane.b32.xlu0 %v2864, 64
      %v3015 = vpop.permute.xlu0 %3014
      %3016 = vrot.lane.b32.xlu0 %v2865, 64
      %v3017 = vpop.permute.xlu0 %3016
      %3018 = vrot.lane.b32.xlu0 %v2866, 64
      %v3019 = vpop.permute.xlu0 %3018
      %3020 = vrot.lane.b32.xlu0 %v2867, 64
      %v3021 = vpop.permute.xlu0 %3020
      %3022 = vrot.lane.b32.xlu0 %v2868, 64
      %v3023 = vpop.permute.xlu0 %3022
      %3024 = vrot.lane.b32.xlu0 %v2869, 64
      %v3025 = vpop.permute.xlu0 %3024
      %3026 = vrot.lane.b32.xlu0 %v2870, 64
      %v3027 = vpop.permute.xlu0 %3026
      %3028 = vrot.lane.b32.xlu0 %v2871, 64
      %v3029 = vpop.permute.xlu0 %3028
      %3030 = vrot.lane.b32.xlu0 %v2872, 64
      %v3031 = vpop.permute.xlu0 %3030
      %3032 = vrot.lane.b32.xlu0 %v2873, 64
      %v3033 = vpop.permute.xlu0 %3032
      %3034 = vrot.lane.b32.xlu0 %v2874, 64
      %v3035 = vpop.permute.xlu0 %3034
      %3036 = vrot.lane.b32.xlu0 %v2875, 64
      %v3037 = vpop.permute.xlu0 %3036
      %3038 = vrot.lane.b32.xlu0 %v2876, 64
      %v3039 = vpop.permute.xlu0 %3038
      %3040 = vrot.lane.b32.xlu0 %v2877, 64
      %v3041 = vpop.permute.xlu0 %3040
      %3042 = vrot.lane.b32.xlu0 %v2878, 64
      %v3043 = vpop.permute.xlu0 %3042
      %3044 = vrot.lane.b32.xlu0 %v2879, 64
      %v3045 = vpop.permute.xlu0 %3044
      %3046 = vrot.lane.b32.xlu0 %v2880, 64
      %v3047 = vpop.permute.xlu0 %3046
      %3048 = vrot.lane.b32.xlu0 %v2881, 64
      %v3049 = vpop.permute.xlu0 %3048
      %3050 = vrot.lane.b32.xlu0 %v2882, 64
      %v3051 = vpop.permute.xlu0 %3050
      %3052 = vrot.lane.b32.xlu0 %v2883, 64
      %v3053 = vpop.permute.xlu0 %3052
      %3054 = vrot.lane.b32.xlu0 %v2884, 64
      %v3055 = vpop.permute.xlu0 %3054
      %3056 = vrot.lane.b32.xlu0 %v2885, 64
      %v3057 = vpop.permute.xlu0 %3056
      %3058 = vrot.lane.b32.xlu0 %v2886, 64
      %v3059 = vpop.permute.xlu0 %3058
      %3060 = vrot.lane.b32.xlu0 %v2887, 64
      %v3061 = vpop.permute.xlu0 %3060
      %3062 = vrot.lane.b32.xlu0 %v2888, 64
      %v3063 = vpop.permute.xlu0 %3062
      %3064 = vrot.lane.b32.xlu0 %v2889, 64
      %v3065 = vpop.permute.xlu0 %3064
      %3066 = vrot.lane.b32.xlu0 %v2890, 64
      %v3067 = vpop.permute.xlu0 %3066
      %3068 = vrot.lane.b32.xlu0 %v2891, 64
      %v3069 = vpop.permute.xlu0 %3068
      %3070 = vrot.lane.b32.xlu0 %v2892, 64
      %v3071 = vpop.permute.xlu0 %3070
      %3072 = vrot.lane.b32.xlu0 %v2893, 64
      %v3073 = vpop.permute.xlu0 %3072
      %3074 = vrot.lane.b32.xlu0 %v2894, 64
      %v3075 = vpop.permute.xlu0 %3074
      %3076 = vrot.lane.b32.xlu0 %v2895, 64
      %v3077 = vpop.permute.xlu0 %3076
      %3078 = vrot.lane.b32.xlu0 %v2896, 64
      %v3079 = vpop.permute.xlu0 %3078
      %3080 = vrot.lane.b32.xlu0 %v2897, 64
      %v3081 = vpop.permute.xlu0 %3080
      %3082 = vrot.lane.b32.xlu0 %v2898, 64
      %v3083 = vpop.permute.xlu0 %3082
      %3084 = vrot.lane.b32.xlu0 %v2899, 64
      %v3085 = vpop.permute.xlu0 %3084
      %3086 = vrot.lane.b32.xlu0 %v2900, 64
      %v3087 = vpop.permute.xlu0 %3086
      %3088 = vrot.lane.b32.xlu0 %v2901, 64
      %v3089 = vpop.permute.xlu0 %3088
      %3090 = vrot.lane.b32.xlu0 %v2902, 64
      %v3091 = vpop.permute.xlu0 %3090
      %3092 = vrot.lane.b32.xlu0 %v2903, 64
      %v3093 = vpop.permute.xlu0 %3092
      %3094 = vrot.lane.b32.xlu0 %v2904, 64
      %v3095 = vpop.permute.xlu0 %3094
      %3096 = vrot.lane.b32.xlu0 %v2905, 64
      %v3097 = vpop.permute.xlu0 %3096
      %3098 = vrot.lane.b32.xlu0 %v2906, 64
      %v3099 = vpop.permute.xlu0 %3098
      %3100 = vrot.lane.b32.xlu0 %v2907, 64
      %v3101 = vpop.permute.xlu0 %3100
      %3102 = vrot.lane.b32.xlu0 %v2908, 64
      %v3103 = vpop.permute.xlu0 %3102
      %3104 = vrot.lane.b32.xlu0 %v2909, 64
      %v3105 = vpop.permute.xlu0 %3104
      %3106 = vrot.lane.b32.xlu0 %v2910, 64
      %v3107 = vpop.permute.xlu0 %3106
      %3108 = vrot.lane.b32.xlu0 %v2911, 64
      %v3109 = vpop.permute.xlu0 %3108
      %3110 = vrot.lane.b32.xlu0 %v2912, 64
      %v3111 = vpop.permute.xlu0 %3110
      %3112 = vrot.lane.b32.xlu0 %v2913, 64
      %v3113 = vpop.permute.xlu0 %3112
      %3114 = vrot.lane.b32.xlu0 %v2914, 64
      %v3115 = vpop.permute.xlu0 %3114
      %3116 = vrot.lane.b32.xlu0 %v2915, 64
      %v3117 = vpop.permute.xlu0 %3116
      %3118 = vrot.lane.b32.xlu0 %v2916, 64
      %v3119 = vpop.permute.xlu0 %3118
      %3120 = vrot.lane.b32.xlu0 %v2917, 64
      %v3121 = vpop.permute.xlu0 %3120
      %3122 = vrot.lane.b32.xlu0 %v2918, 64
      %v3123 = vpop.permute.xlu0 %3122
      %3124 = vrot.lane.b32.xlu0 %v2919, 64
      %v3125 = vpop.permute.xlu0 %3124
      %3126 = vrot.lane.b32.xlu0 %v2920, 64
      %v3127 = vpop.permute.xlu0 %3126
      %3128 = vrot.lane.b32.xlu0 %v2921, 64
      %v3129 = vpop.permute.xlu0 %3128
      %3130 = vrot.lane.b32.xlu0 %v2922, 64
      %v3131 = vpop.permute.xlu0 %3130
      %3132 = vrot.lane.b32.xlu0 %v2923, 64
      %v3133 = vpop.permute.xlu0 %3132
      %3134 = vrot.lane.b32.xlu0 %v2924, 64
      %v3135 = vpop.permute.xlu0 %3134
      %3136 = vrot.lane.b32.xlu0 %v2925, 64
      %v3137 = vpop.permute.xlu0 %3136
      %3138 = vrot.lane.b32.xlu0 %v2926, 64
      %v3139 = vpop.permute.xlu0 %3138
      %3140 = vrot.lane.b32.xlu0 %v2927, 64
      %v3141 = vpop.permute.xlu0 %3140
      %3142 = vrot.lane.b32.xlu0 %v2928, 64
      %v3143 = vpop.permute.xlu0 %3142
      %3144 = vrot.lane.b32.xlu0 %v2929, 64
      %v3145 = vpop.permute.xlu0 %3144
      %3146 = vrot.lane.b32.xlu0 %v2930, 64
      %v3147 = vpop.permute.xlu0 %3146
      %3148 = vrot.lane.b32.xlu0 %v2931, 64
      %v3149 = vpop.permute.xlu0 %3148
      %3150 = vrot.lane.b32.xlu0 %v2932, 64
      %v3151 = vpop.permute.xlu0 %3150
      %3152 = vrot.lane.b32.xlu0 %v2933, 64
      %v3153 = vpop.permute.xlu0 %3152
      %3154 = vrot.lane.b32.xlu0 %v2934, 64
      %v3155 = vpop.permute.xlu0 %3154
      %3156 = vrot.lane.b32.xlu0 %v2935, 64
      %v3157 = vpop.permute.xlu0 %3156
      %3158 = vrot.lane.b32.xlu0 %v2936, 64
      %v3159 = vpop.permute.xlu0 %3158
      %3160 = vrot.lane.b32.xlu0 %v2937, 64
      %v3161 = vpop.permute.xlu0 %3160
      %3162 = vrot.lane.b32.xlu0 %v2938, 64
      %v3163 = vpop.permute.xlu0 %3162
      %3164 = vrot.lane.b32.xlu0 %v2939, 64
      %v3165 = vpop.permute.xlu0 %3164
      %3166 = vrot.lane.b32.xlu0 %v2940, 64
      %v3167 = vpop.permute.xlu0 %3166
      %3168 = vrot.lane.b32.xlu0 %v2941, 64
      %v3169 = vpop.permute.xlu0 %3168
      %3170 = vrot.lane.b32.xlu0 %v2942, 64
      %v3171 = vpop.permute.xlu0 %3170
      %3172 = vrot.lane.b32.xlu0 %v2943, 64
      %v3173 = vpop.permute.xlu0 %3172
      %3174 = vrot.lane.b32.xlu0 %v2944, 64
      %v3175 = vpop.permute.xlu0 %3174
      %3176 = vrot.lane.b32.xlu0 %v2945, 64
      %v3177 = vpop.permute.xlu0 %3176
      %3178 = vrot.lane.b32.xlu0 %v2946, 64
      %v3179 = vpop.permute.xlu0 %3178
      %3180 = vrot.lane.b32.xlu0 %v2947, 64
      %v3181 = vpop.permute.xlu0 %3180
      %3182 = vrot.lane.b32.xlu0 %v2948, 64
      %v3183 = vpop.permute.xlu0 %3182
      %3184 = vrot.lane.b32.xlu0 %v2949, 64
      %v3185 = vpop.permute.xlu0 %3184
      %3186 = vrot.lane.b32.xlu0 %v2950, 64
      %v3187 = vpop.permute.xlu0 %3186
      %3188 = vrot.lane.b32.xlu0 %v2951, 64
      %v3189 = vpop.permute.xlu0 %3188
      %3190 = vrot.lane.b32.xlu0 %v2952, 64
      %v3191 = vpop.permute.xlu0 %3190
      %3192 = vrot.lane.b32.xlu0 %v2953, 64
      %v3193 = vpop.permute.xlu0 %3192
      %3194 = vrot.lane.b32.xlu0 %v2954, 64
      %v3195 = vpop.permute.xlu0 %3194
      %3196 = vrot.lane.b32.xlu0 %v2955, 64
      %v3197 = vpop.permute.xlu0 %3196
      %3198 = vrot.lane.b32.xlu0 %v2956, 64
      %v3199 = vpop.permute.xlu0 %3198
      %3200 = vrot.lane.b32.xlu0 %v2957, 64
      %v3201 = vpop.permute.xlu0 %3200
      %3202 = vrot.lane.b32.xlu0 %v2958, 64
      %v3203 = vpop.permute.xlu0 %3202
      %3204 = vrot.lane.b32.xlu0 %v2959, 64
      %v3205 = vpop.permute.xlu0 %3204
      %3206 = vrot.lane.b32.xlu0 %v2960, 64
      %v3207 = vpop.permute.xlu0 %3206
      %3208 = vrot.lane.b32.xlu0 %v2961, 64
      %v3209 = vpop.permute.xlu0 %3208
      %3210 = vrot.lane.b32.xlu0 %v2962, 64
      %v3211 = vpop.permute.xlu0 %3210
      %3212 = vrot.lane.b32.xlu0 %v2963, 64
      %v3213 = vpop.permute.xlu0 %3212
      %3214 = vrot.lane.b32.xlu0 %v2964, 64
      %v3215 = vpop.permute.xlu0 %3214
      %3216 = vrot.lane.b32.xlu0 %v2965, 64
      %v3217 = vpop.permute.xlu0 %3216
      %3218 = vrot.lane.b32.xlu0 %v2966, 64
      %v3219 = vpop.permute.xlu0 %3218
      %3220 = vrot.lane.b32.xlu0 %v2967, 64
      %v3221 = vpop.permute.xlu0 %3220
      %3222 = vrot.lane.b32.xlu0 %v2968, 64
      %v3223 = vpop.permute.xlu0 %3222
      %3224 = vrot.lane.b32.xlu0 %v2969, 64
      %v3225 = vpop.permute.xlu0 %3224
      %v3226 = vadd.f32 %v2842, %v2971
      %v3227 = vadd.f32 %v2843, %v2973
      %v3228 = vadd.f32 %v2844, %v2975
      %v3229 = vadd.f32 %v2845, %v2977
      %v3230 = vadd.f32 %v2846, %v2979
      %v3231 = vadd.f32 %v2847, %v2981
      %v3232 = vadd.f32 %v2848, %v2983
      %v3233 = vadd.f32 %v2849, %v2985
      %v3234 = vadd.f32 %v2850, %v2987
      %v3235 = vadd.f32 %v2851, %v2989
      %v3236 = vadd.f32 %v2852, %v2991
      %v3237 = vadd.f32 %v2853, %v2993
      %v3238 = vadd.f32 %v2854, %v2995
      %v3239 = vadd.f32 %v2855, %v2997
      %v3240 = vadd.f32 %v2856, %v2999
      %v3241 = vadd.f32 %v2857, %v3001
      %v3242 = vadd.f32 %v2858, %v3003
      %v3243 = vadd.f32 %v2859, %v3005
      %v3244 = vadd.f32 %v2860, %v3007
      %v3245 = vadd.f32 %v2861, %v3009
      %v3246 = vadd.f32 %v2862, %v3011
      %v3247 = vadd.f32 %v2863, %v3013
      %v3248 = vadd.f32 %v2864, %v3015
      %v3249 = vadd.f32 %v2865, %v3017
      %v3250 = vadd.f32 %v2866, %v3019
      %v3251 = vadd.f32 %v2867, %v3021
      %v3252 = vadd.f32 %v2868, %v3023
      %v3253 = vadd.f32 %v2869, %v3025
      %v3254 = vadd.f32 %v2870, %v3027
      %v3255 = vadd.f32 %v2871, %v3029
      %v3256 = vadd.f32 %v2872, %v3031
      %v3257 = vadd.f32 %v2873, %v3033
      %v3258 = vadd.f32 %v2874, %v3035
      %v3259 = vadd.f32 %v2875, %v3037
      %v3260 = vadd.f32 %v2876, %v3039
      %v3261 = vadd.f32 %v2877, %v3041
      %v3262 = vadd.f32 %v2878, %v3043
      %v3263 = vadd.f32 %v2879, %v3045
      %v3264 = vadd.f32 %v2880, %v3047
      %v3265 = vadd.f32 %v2881, %v3049
      %v3266 = vadd.f32 %v2882, %v3051
      %v3267 = vadd.f32 %v2883, %v3053
      %v3268 = vadd.f32 %v2884, %v3055
      %v3269 = vadd.f32 %v2885, %v3057
      %v3270 = vadd.f32 %v2886, %v3059
      %v3271 = vadd.f32 %v2887, %v3061
      %v3272 = vadd.f32 %v2888, %v3063
      %v3273 = vadd.f32 %v2889, %v3065
      %v3274 = vadd.f32 %v2890, %v3067
      %v3275 = vadd.f32 %v2891, %v3069
      %v3276 = vadd.f32 %v2892, %v3071
      %v3277 = vadd.f32 %v2893, %v3073
      %v3278 = vadd.f32 %v2894, %v3075
      %v3279 = vadd.f32 %v2895, %v3077
      %v3280 = vadd.f32 %v2896, %v3079
      %v3281 = vadd.f32 %v2897, %v3081
      %v3282 = vadd.f32 %v2898, %v3083
      %v3283 = vadd.f32 %v2899, %v3085
      %v3284 = vadd.f32 %v2900, %v3087
      %v3285 = vadd.f32 %v2901, %v3089
      %v3286 = vadd.f32 %v2902, %v3091
      %v3287 = vadd.f32 %v2903, %v3093
      %v3288 = vadd.f32 %v2904, %v3095
      %v3289 = vadd.f32 %v2905, %v3097
      %v3290 = vadd.f32 %v2906, %v3099
      %v3291 = vadd.f32 %v2907, %v3101
      %v3292 = vadd.f32 %v2908, %v3103
      %v3293 = vadd.f32 %v2909, %v3105
      %v3294 = vadd.f32 %v2910, %v3107
      %v3295 = vadd.f32 %v2911, %v3109
      %v3296 = vadd.f32 %v2912, %v3111
      %v3297 = vadd.f32 %v2913, %v3113
      %v3298 = vadd.f32 %v2914, %v3115
      %v3299 = vadd.f32 %v2915, %v3117
      %v3300 = vadd.f32 %v2916, %v3119
      %v3301 = vadd.f32 %v2917, %v3121
      %v3302 = vadd.f32 %v2918, %v3123
      %v3303 = vadd.f32 %v2919, %v3125
      %v3304 = vadd.f32 %v2920, %v3127
      %v3305 = vadd.f32 %v2921, %v3129
      %v3306 = vadd.f32 %v2922, %v3131
      %v3307 = vadd.f32 %v2923, %v3133
      %v3308 = vadd.f32 %v2924, %v3135
      %v3309 = vadd.f32 %v2925, %v3137
      %v3310 = vadd.f32 %v2926, %v3139
      %v3311 = vadd.f32 %v2927, %v3141
      %v3312 = vadd.f32 %v2928, %v3143
      %v3313 = vadd.f32 %v2929, %v3145
      %v3314 = vadd.f32 %v2930, %v3147
      %v3315 = vadd.f32 %v2931, %v3149
      %v3316 = vadd.f32 %v2932, %v3151
      %v3317 = vadd.f32 %v2933, %v3153
      %v3318 = vadd.f32 %v2934, %v3155
      %v3319 = vadd.f32 %v2935, %v3157
      %v3320 = vadd.f32 %v2936, %v3159
      %v3321 = vadd.f32 %v2937, %v3161
      %v3322 = vadd.f32 %v2938, %v3163
      %v3323 = vadd.f32 %v2939, %v3165
      %v3324 = vadd.f32 %v2940, %v3167
      %v3325 = vadd.f32 %v2941, %v3169
      %v3326 = vadd.f32 %v2942, %v3171
      %v3327 = vadd.f32 %v2943, %v3173
      %v3328 = vadd.f32 %v2944, %v3175
      %v3329 = vadd.f32 %v2945, %v3177
      %v3330 = vadd.f32 %v2946, %v3179
      %v3331 = vadd.f32 %v2947, %v3181
      %v3332 = vadd.f32 %v2948, %v3183
      %v3333 = vadd.f32 %v2949, %v3185
      %v3334 = vadd.f32 %v2950, %v3187
      %v3335 = vadd.f32 %v2951, %v3189
      %v3336 = vadd.f32 %v2952, %v3191
      %v3337 = vadd.f32 %v2953, %v3193
      %v3338 = vadd.f32 %v2954, %v3195
      %v3339 = vadd.f32 %v2955, %v3197
      %v3340 = vadd.f32 %v2956, %v3199
      %v3341 = vadd.f32 %v2957, %v3201
      %v3342 = vadd.f32 %v2958, %v3203
      %v3343 = vadd.f32 %v2959, %v3205
      %v3344 = vadd.f32 %v2960, %v3207
      %v3345 = vadd.f32 %v2961, %v3209
      %v3346 = vadd.f32 %v2962, %v3211
      %v3347 = vadd.f32 %v2963, %v3213
      %v3348 = vadd.f32 %v2964, %v3215
      %v3349 = vadd.f32 %v2965, %v3217
      %v3350 = vadd.f32 %v2966, %v3219
      %v3351 = vadd.f32 %v2967, %v3221
      %v3352 = vadd.f32 %v2968, %v3223
      %v3353 = vadd.f32 %v2969, %v3225
      %3354 = vrot.lane.b32.xlu0 %v3226, 32
      %v3355 = vpop.permute.xlu0 %3354
      %3356 = vrot.lane.b32.xlu0 %v3227, 32
      %v3357 = vpop.permute.xlu0 %3356
      %3358 = vrot.lane.b32.xlu0 %v3228, 32
      %v3359 = vpop.permute.xlu0 %3358
      %3360 = vrot.lane.b32.xlu0 %v3229, 32
      %v3361 = vpop.permute.xlu0 %3360
      %3362 = vrot.lane.b32.xlu0 %v3230, 32
      %v3363 = vpop.permute.xlu0 %3362
      %3364 = vrot.lane.b32.xlu0 %v3231, 32
      %v3365 = vpop.permute.xlu0 %3364
      %3366 = vrot.lane.b32.xlu0 %v3232, 32
      %v3367 = vpop.permute.xlu0 %3366
      %3368 = vrot.lane.b32.xlu0 %v3233, 32
      %v3369 = vpop.permute.xlu0 %3368
      %3370 = vrot.lane.b32.xlu0 %v3234, 32
      %v3371 = vpop.permute.xlu0 %3370
      %3372 = vrot.lane.b32.xlu0 %v3235, 32
      %v3373 = vpop.permute.xlu0 %3372
      %3374 = vrot.lane.b32.xlu0 %v3236, 32
      %v3375 = vpop.permute.xlu0 %3374
      %3376 = vrot.lane.b32.xlu0 %v3237, 32
      %v3377 = vpop.permute.xlu0 %3376
      %3378 = vrot.lane.b32.xlu0 %v3238, 32
      %v3379 = vpop.permute.xlu0 %3378
      %3380 = vrot.lane.b32.xlu0 %v3239, 32
      %v3381 = vpop.permute.xlu0 %3380
      %3382 = vrot.lane.b32.xlu0 %v3240, 32
      %v3383 = vpop.permute.xlu0 %3382
      %3384 = vrot.lane.b32.xlu0 %v3241, 32
      %v3385 = vpop.permute.xlu0 %3384
      %3386 = vrot.lane.b32.xlu0 %v3242, 32
      %v3387 = vpop.permute.xlu0 %3386
      %3388 = vrot.lane.b32.xlu0 %v3243, 32
      %v3389 = vpop.permute.xlu0 %3388
      %3390 = vrot.lane.b32.xlu0 %v3244, 32
      %v3391 = vpop.permute.xlu0 %3390
      %3392 = vrot.lane.b32.xlu0 %v3245, 32
      %v3393 = vpop.permute.xlu0 %3392
      %3394 = vrot.lane.b32.xlu0 %v3246, 32
      %v3395 = vpop.permute.xlu0 %3394
      %3396 = vrot.lane.b32.xlu0 %v3247, 32
      %v3397 = vpop.permute.xlu0 %3396
      %3398 = vrot.lane.b32.xlu0 %v3248, 32
      %v3399 = vpop.permute.xlu0 %3398
      %3400 = vrot.lane.b32.xlu0 %v3249, 32
      %v3401 = vpop.permute.xlu0 %3400
      %3402 = vrot.lane.b32.xlu0 %v3250, 32
      %v3403 = vpop.permute.xlu0 %3402
      %3404 = vrot.lane.b32.xlu0 %v3251, 32
      %v3405 = vpop.permute.xlu0 %3404
      %3406 = vrot.lane.b32.xlu0 %v3252, 32
      %v3407 = vpop.permute.xlu0 %3406
      %3408 = vrot.lane.b32.xlu0 %v3253, 32
      %v3409 = vpop.permute.xlu0 %3408
      %3410 = vrot.lane.b32.xlu0 %v3254, 32
      %v3411 = vpop.permute.xlu0 %3410
      %3412 = vrot.lane.b32.xlu0 %v3255, 32
      %v3413 = vpop.permute.xlu0 %3412
      %3414 = vrot.lane.b32.xlu0 %v3256, 32
      %v3415 = vpop.permute.xlu0 %3414
      %3416 = vrot.lane.b32.xlu0 %v3257, 32
      %v3417 = vpop.permute.xlu0 %3416
      %3418 = vrot.lane.b32.xlu0 %v3258, 32
      %v3419 = vpop.permute.xlu0 %3418
      %3420 = vrot.lane.b32.xlu0 %v3259, 32
      %v3421 = vpop.permute.xlu0 %3420
      %3422 = vrot.lane.b32.xlu0 %v3260, 32
      %v3423 = vpop.permute.xlu0 %3422
      %3424 = vrot.lane.b32.xlu0 %v3261, 32
      %v3425 = vpop.permute.xlu0 %3424
      %3426 = vrot.lane.b32.xlu0 %v3262, 32
      %v3427 = vpop.permute.xlu0 %3426
      %3428 = vrot.lane.b32.xlu0 %v3263, 32
      %v3429 = vpop.permute.xlu0 %3428
      %3430 = vrot.lane.b32.xlu0 %v3264, 32
      %v3431 = vpop.permute.xlu0 %3430
      %3432 = vrot.lane.b32.xlu0 %v3265, 32
      %v3433 = vpop.permute.xlu0 %3432
      %3434 = vrot.lane.b32.xlu0 %v3266, 32
      %v3435 = vpop.permute.xlu0 %3434
      %3436 = vrot.lane.b32.xlu0 %v3267, 32
      %v3437 = vpop.permute.xlu0 %3436
      %3438 = vrot.lane.b32.xlu0 %v3268, 32
      %v3439 = vpop.permute.xlu0 %3438
      %3440 = vrot.lane.b32.xlu0 %v3269, 32
      %v3441 = vpop.permute.xlu0 %3440
      %3442 = vrot.lane.b32.xlu0 %v3270, 32
      %v3443 = vpop.permute.xlu0 %3442
      %3444 = vrot.lane.b32.xlu0 %v3271, 32
      %v3445 = vpop.permute.xlu0 %3444
      %3446 = vrot.lane.b32.xlu0 %v3272, 32
      %v3447 = vpop.permute.xlu0 %3446
      %3448 = vrot.lane.b32.xlu0 %v3273, 32
      %v3449 = vpop.permute.xlu0 %3448
      %3450 = vrot.lane.b32.xlu0 %v3274, 32
      %v3451 = vpop.permute.xlu0 %3450
      %3452 = vrot.lane.b32.xlu0 %v3275, 32
      %v3453 = vpop.permute.xlu0 %3452
      %3454 = vrot.lane.b32.xlu0 %v3276, 32
      %v3455 = vpop.permute.xlu0 %3454
      %3456 = vrot.lane.b32.xlu0 %v3277, 32
      %v3457 = vpop.permute.xlu0 %3456
      %3458 = vrot.lane.b32.xlu0 %v3278, 32
      %v3459 = vpop.permute.xlu0 %3458
      %3460 = vrot.lane.b32.xlu0 %v3279, 32
      %v3461 = vpop.permute.xlu0 %3460
      %3462 = vrot.lane.b32.xlu0 %v3280, 32
      %v3463 = vpop.permute.xlu0 %3462
      %3464 = vrot.lane.b32.xlu0 %v3281, 32
      %v3465 = vpop.permute.xlu0 %3464
      %3466 = vrot.lane.b32.xlu0 %v3282, 32
      %v3467 = vpop.permute.xlu0 %3466
      %3468 = vrot.lane.b32.xlu0 %v3283, 32
      %v3469 = vpop.permute.xlu0 %3468
      %3470 = vrot.lane.b32.xlu0 %v3284, 32
      %v3471 = vpop.permute.xlu0 %3470
      %3472 = vrot.lane.b32.xlu0 %v3285, 32
      %v3473 = vpop.permute.xlu0 %3472
      %3474 = vrot.lane.b32.xlu0 %v3286, 32
      %v3475 = vpop.permute.xlu0 %3474
      %3476 = vrot.lane.b32.xlu0 %v3287, 32
      %v3477 = vpop.permute.xlu0 %3476
      %3478 = vrot.lane.b32.xlu0 %v3288, 32
      %v3479 = vpop.permute.xlu0 %3478
      %3480 = vrot.lane.b32.xlu0 %v3289, 32
      %v3481 = vpop.permute.xlu0 %3480
      %3482 = vrot.lane.b32.xlu0 %v3290, 32
      %v3483 = vpop.permute.xlu0 %3482
      %3484 = vrot.lane.b32.xlu0 %v3291, 32
      %v3485 = vpop.permute.xlu0 %3484
      %3486 = vrot.lane.b32.xlu0 %v3292, 32
      %v3487 = vpop.permute.xlu0 %3486
      %3488 = vrot.lane.b32.xlu0 %v3293, 32
      %v3489 = vpop.permute.xlu0 %3488
      %3490 = vrot.lane.b32.xlu0 %v3294, 32
      %v3491 = vpop.permute.xlu0 %3490
      %3492 = vrot.lane.b32.xlu0 %v3295, 32
      %v3493 = vpop.permute.xlu0 %3492
      %3494 = vrot.lane.b32.xlu0 %v3296, 32
      %v3495 = vpop.permute.xlu0 %3494
      %3496 = vrot.lane.b32.xlu0 %v3297, 32
      %v3497 = vpop.permute.xlu0 %3496
      %3498 = vrot.lane.b32.xlu0 %v3298, 32
      %v3499 = vpop.permute.xlu0 %3498
      %3500 = vrot.lane.b32.xlu0 %v3299, 32
      %v3501 = vpop.permute.xlu0 %3500
      %3502 = vrot.lane.b32.xlu0 %v3300, 32
      %v3503 = vpop.permute.xlu0 %3502
      %3504 = vrot.lane.b32.xlu0 %v3301, 32
      %v3505 = vpop.permute.xlu0 %3504
      %3506 = vrot.lane.b32.xlu0 %v3302, 32
      %v3507 = vpop.permute.xlu0 %3506
      %3508 = vrot.lane.b32.xlu0 %v3303, 32
      %v3509 = vpop.permute.xlu0 %3508
      %3510 = vrot.lane.b32.xlu0 %v3304, 32
      %v3511 = vpop.permute.xlu0 %3510
      %3512 = vrot.lane.b32.xlu0 %v3305, 32
      %v3513 = vpop.permute.xlu0 %3512
      %3514 = vrot.lane.b32.xlu0 %v3306, 32
      %v3515 = vpop.permute.xlu0 %3514
      %3516 = vrot.lane.b32.xlu0 %v3307, 32
      %v3517 = vpop.permute.xlu0 %3516
      %3518 = vrot.lane.b32.xlu0 %v3308, 32
      %v3519 = vpop.permute.xlu0 %3518
      %3520 = vrot.lane.b32.xlu0 %v3309, 32
      %v3521 = vpop.permute.xlu0 %3520
      %3522 = vrot.lane.b32.xlu0 %v3310, 32
      %v3523 = vpop.permute.xlu0 %3522
      %3524 = vrot.lane.b32.xlu0 %v3311, 32
      %v3525 = vpop.permute.xlu0 %3524
      %3526 = vrot.lane.b32.xlu0 %v3312, 32
      %v3527 = vpop.permute.xlu0 %3526
      %3528 = vrot.lane.b32.xlu0 %v3313, 32
      %v3529 = vpop.permute.xlu0 %3528
      %3530 = vrot.lane.b32.xlu0 %v3314, 32
      %v3531 = vpop.permute.xlu0 %3530
      %3532 = vrot.lane.b32.xlu0 %v3315, 32
      %v3533 = vpop.permute.xlu0 %3532
      %3534 = vrot.lane.b32.xlu0 %v3316, 32
      %v3535 = vpop.permute.xlu0 %3534
      %3536 = vrot.lane.b32.xlu0 %v3317, 32
      %v3537 = vpop.permute.xlu0 %3536
      %3538 = vrot.lane.b32.xlu0 %v3318, 32
      %v3539 = vpop.permute.xlu0 %3538
      %3540 = vrot.lane.b32.xlu0 %v3319, 32
      %v3541 = vpop.permute.xlu0 %3540
      %3542 = vrot.lane.b32.xlu0 %v3320, 32
      %v3543 = vpop.permute.xlu0 %3542
      %3544 = vrot.lane.b32.xlu0 %v3321, 32
      %v3545 = vpop.permute.xlu0 %3544
      %3546 = vrot.lane.b32.xlu0 %v3322, 32
      %v3547 = vpop.permute.xlu0 %3546
      %3548 = vrot.lane.b32.xlu0 %v3323, 32
      %v3549 = vpop.permute.xlu0 %3548
      %3550 = vrot.lane.b32.xlu0 %v3324, 32
      %v3551 = vpop.permute.xlu0 %3550
      %3552 = vrot.lane.b32.xlu0 %v3325, 32
      %v3553 = vpop.permute.xlu0 %3552
      %3554 = vrot.lane.b32.xlu0 %v3326, 32
      %v3555 = vpop.permute.xlu0 %3554
      %3556 = vrot.lane.b32.xlu0 %v3327, 32
      %v3557 = vpop.permute.xlu0 %3556
      %3558 = vrot.lane.b32.xlu0 %v3328, 32
      %v3559 = vpop.permute.xlu0 %3558
      %3560 = vrot.lane.b32.xlu0 %v3329, 32
      %v3561 = vpop.permute.xlu0 %3560
      %3562 = vrot.lane.b32.xlu0 %v3330, 32
      %v3563 = vpop.permute.xlu0 %3562
      %3564 = vrot.lane.b32.xlu0 %v3331, 32
      %v3565 = vpop.permute.xlu0 %3564
      %3566 = vrot.lane.b32.xlu0 %v3332, 32
      %v3567 = vpop.permute.xlu0 %3566
      %3568 = vrot.lane.b32.xlu0 %v3333, 32
      %v3569 = vpop.permute.xlu0 %3568
      %3570 = vrot.lane.b32.xlu0 %v3334, 32
      %v3571 = vpop.permute.xlu0 %3570
      %3572 = vrot.lane.b32.xlu0 %v3335, 32
      %v3573 = vpop.permute.xlu0 %3572
      %3574 = vrot.lane.b32.xlu0 %v3336, 32
      %v3575 = vpop.permute.xlu0 %3574
      %3576 = vrot.lane.b32.xlu0 %v3337, 32
      %v3577 = vpop.permute.xlu0 %3576
      %3578 = vrot.lane.b32.xlu0 %v3338, 32
      %v3579 = vpop.permute.xlu0 %3578
      %3580 = vrot.lane.b32.xlu0 %v3339, 32
      %v3581 = vpop.permute.xlu0 %3580
      %3582 = vrot.lane.b32.xlu0 %v3340, 32
      %v3583 = vpop.permute.xlu0 %3582
      %3584 = vrot.lane.b32.xlu0 %v3341, 32
      %v3585 = vpop.permute.xlu0 %3584
      %3586 = vrot.lane.b32.xlu0 %v3342, 32
      %v3587 = vpop.permute.xlu0 %3586
      %3588 = vrot.lane.b32.xlu0 %v3343, 32
      %v3589 = vpop.permute.xlu0 %3588
      %3590 = vrot.lane.b32.xlu0 %v3344, 32
      %v3591 = vpop.permute.xlu0 %3590
      %3592 = vrot.lane.b32.xlu0 %v3345, 32
      %v3593 = vpop.permute.xlu0 %3592
      %3594 = vrot.lane.b32.xlu0 %v3346, 32
      %v3595 = vpop.permute.xlu0 %3594
      %3596 = vrot.lane.b32.xlu0 %v3347, 32
      %v3597 = vpop.permute.xlu0 %3596
      %3598 = vrot.lane.b32.xlu0 %v3348, 32
      %v3599 = vpop.permute.xlu0 %3598
      %3600 = vrot.lane.b32.xlu0 %v3349, 32
      %v3601 = vpop.permute.xlu0 %3600
      %3602 = vrot.lane.b32.xlu0 %v3350, 32
      %v3603 = vpop.permute.xlu0 %3602
      %3604 = vrot.lane.b32.xlu0 %v3351, 32
      %v3605 = vpop.permute.xlu0 %3604
      %3606 = vrot.lane.b32.xlu0 %v3352, 32
      %v3607 = vpop.permute.xlu0 %3606
      %3608 = vrot.lane.b32.xlu0 %v3353, 32
      %v3609 = vpop.permute.xlu0 %3608
      %v3610 = vadd.f32 %v3226, %v3355
      %v3611 = vadd.f32 %v3227, %v3357
      %v3612 = vadd.f32 %v3228, %v3359
      %v3613 = vadd.f32 %v3229, %v3361
      %v3614 = vadd.f32 %v3230, %v3363
      %v3615 = vadd.f32 %v3231, %v3365
      %v3616 = vadd.f32 %v3232, %v3367
      %v3617 = vadd.f32 %v3233, %v3369
      %v3618 = vadd.f32 %v3234, %v3371
      %v3619 = vadd.f32 %v3235, %v3373
      %v3620 = vadd.f32 %v3236, %v3375
      %v3621 = vadd.f32 %v3237, %v3377
      %v3622 = vadd.f32 %v3238, %v3379
      %v3623 = vadd.f32 %v3239, %v3381
      %v3624 = vadd.f32 %v3240, %v3383
      %v3625 = vadd.f32 %v3241, %v3385
      %v3626 = vadd.f32 %v3242, %v3387
      %v3627 = vadd.f32 %v3243, %v3389
      %v3628 = vadd.f32 %v3244, %v3391
      %v3629 = vadd.f32 %v3245, %v3393
      %v3630 = vadd.f32 %v3246, %v3395
      %v3631 = vadd.f32 %v3247, %v3397
      %v3632 = vadd.f32 %v3248, %v3399
      %v3633 = vadd.f32 %v3249, %v3401
      %v3634 = vadd.f32 %v3250, %v3403
      %v3635 = vadd.f32 %v3251, %v3405
      %v3636 = vadd.f32 %v3252, %v3407
      %v3637 = vadd.f32 %v3253, %v3409
      %v3638 = vadd.f32 %v3254, %v3411
      %v3639 = vadd.f32 %v3255, %v3413
      %v3640 = vadd.f32 %v3256, %v3415
      %v3641 = vadd.f32 %v3257, %v3417
      %v3642 = vadd.f32 %v3258, %v3419
      %v3643 = vadd.f32 %v3259, %v3421
      %v3644 = vadd.f32 %v3260, %v3423
      %v3645 = vadd.f32 %v3261, %v3425
      %v3646 = vadd.f32 %v3262, %v3427
      %v3647 = vadd.f32 %v3263, %v3429
      %v3648 = vadd.f32 %v3264, %v3431
      %v3649 = vadd.f32 %v3265, %v3433
      %v3650 = vadd.f32 %v3266, %v3435
      %v3651 = vadd.f32 %v3267, %v3437
      %v3652 = vadd.f32 %v3268, %v3439
      %v3653 = vadd.f32 %v3269, %v3441
      %v3654 = vadd.f32 %v3270, %v3443
      %v3655 = vadd.f32 %v3271, %v3445
      %v3656 = vadd.f32 %v3272, %v3447
      %v3657 = vadd.f32 %v3273, %v3449
      %v3658 = vadd.f32 %v3274, %v3451
      %v3659 = vadd.f32 %v3275, %v3453
      %v3660 = vadd.f32 %v3276, %v3455
      %v3661 = vadd.f32 %v3277, %v3457
      %v3662 = vadd.f32 %v3278, %v3459
      %v3663 = vadd.f32 %v3279, %v3461
      %v3664 = vadd.f32 %v3280, %v3463
      %v3665 = vadd.f32 %v3281, %v3465
      %v3666 = vadd.f32 %v3282, %v3467
      %v3667 = vadd.f32 %v3283, %v3469
      %v3668 = vadd.f32 %v3284, %v3471
      %v3669 = vadd.f32 %v3285, %v3473
      %v3670 = vadd.f32 %v3286, %v3475
      %v3671 = vadd.f32 %v3287, %v3477
      %v3672 = vadd.f32 %v3288, %v3479
      %v3673 = vadd.f32 %v3289, %v3481
      %v3674 = vadd.f32 %v3290, %v3483
      %v3675 = vadd.f32 %v3291, %v3485
      %v3676 = vadd.f32 %v3292, %v3487
      %v3677 = vadd.f32 %v3293, %v3489
      %v3678 = vadd.f32 %v3294, %v3491
      %v3679 = vadd.f32 %v3295, %v3493
      %v3680 = vadd.f32 %v3296, %v3495
      %v3681 = vadd.f32 %v3297, %v3497
      %v3682 = vadd.f32 %v3298, %v3499
      %v3683 = vadd.f32 %v3299, %v3501
      %v3684 = vadd.f32 %v3300, %v3503
      %v3685 = vadd.f32 %v3301, %v3505
      %v3686 = vadd.f32 %v3302, %v3507
      %v3687 = vadd.f32 %v3303, %v3509
      %v3688 = vadd.f32 %v3304, %v3511
      %v3689 = vadd.f32 %v3305, %v3513
      %v3690 = vadd.f32 %v3306, %v3515
      %v3691 = vadd.f32 %v3307, %v3517
      %v3692 = vadd.f32 %v3308, %v3519
      %v3693 = vadd.f32 %v3309, %v3521
      %v3694 = vadd.f32 %v3310, %v3523
      %v3695 = vadd.f32 %v3311, %v3525
      %v3696 = vadd.f32 %v3312, %v3527
      %v3697 = vadd.f32 %v3313, %v3529
      %v3698 = vadd.f32 %v3314, %v3531
      %v3699 = vadd.f32 %v3315, %v3533
      %v3700 = vadd.f32 %v3316, %v3535
      %v3701 = vadd.f32 %v3317, %v3537
      %v3702 = vadd.f32 %v3318, %v3539
      %v3703 = vadd.f32 %v3319, %v3541
      %v3704 = vadd.f32 %v3320, %v3543
      %v3705 = vadd.f32 %v3321, %v3545
      %v3706 = vadd.f32 %v3322, %v3547
      %v3707 = vadd.f32 %v3323, %v3549
      %v3708 = vadd.f32 %v3324, %v3551
      %v3709 = vadd.f32 %v3325, %v3553
      %v3710 = vadd.f32 %v3326, %v3555
      %v3711 = vadd.f32 %v3327, %v3557
      %v3712 = vadd.f32 %v3328, %v3559
      %v3713 = vadd.f32 %v3329, %v3561
      %v3714 = vadd.f32 %v3330, %v3563
      %v3715 = vadd.f32 %v3331, %v3565
      %v3716 = vadd.f32 %v3332, %v3567
      %v3717 = vadd.f32 %v3333, %v3569
      %v3718 = vadd.f32 %v3334, %v3571
      %v3719 = vadd.f32 %v3335, %v3573
      %v3720 = vadd.f32 %v3336, %v3575
      %v3721 = vadd.f32 %v3337, %v3577
      %v3722 = vadd.f32 %v3338, %v3579
      %v3723 = vadd.f32 %v3339, %v3581
      %v3724 = vadd.f32 %v3340, %v3583
      %v3725 = vadd.f32 %v3341, %v3585
      %v3726 = vadd.f32 %v3342, %v3587
      %v3727 = vadd.f32 %v3343, %v3589
      %v3728 = vadd.f32 %v3344, %v3591
      %v3729 = vadd.f32 %v3345, %v3593
      %v3730 = vadd.f32 %v3346, %v3595
      %v3731 = vadd.f32 %v3347, %v3597
      %v3732 = vadd.f32 %v3348, %v3599
      %v3733 = vadd.f32 %v3349, %v3601
      %v3734 = vadd.f32 %v3350, %v3603
      %v3735 = vadd.f32 %v3351, %v3605
      %v3736 = vadd.f32 %v3352, %v3607
      %v3737 = vadd.f32 %v3353, %v3609
      %v3738 = vmul.f32 %v3610, %v400
      %v3739 = vmul.f32 %v3611, %v401
      %v3740 = vmul.f32 %v3612, %v402
      %v3741 = vmul.f32 %v3613, %v403
      %v3742 = vmul.f32 %v3614, %v404
      %v3743 = vmul.f32 %v3615, %v405
      %v3744 = vmul.f32 %v3616, %v406
      %v3745 = vmul.f32 %v3617, %v407
      %v3746 = vmul.f32 %v3618, %v408
      %v3747 = vmul.f32 %v3619, %v409
      %v3748 = vmul.f32 %v3620, %v410
      %v3749 = vmul.f32 %v3621, %v411
      %v3750 = vmul.f32 %v3622, %v412
      %v3751 = vmul.f32 %v3623, %v413
      %v3752 = vmul.f32 %v3624, %v414
      %v3753 = vmul.f32 %v3625, %v415
      %v3754 = vmul.f32 %v3626, %v416
      %v3755 = vmul.f32 %v3627, %v417
      %v3756 = vmul.f32 %v3628, %v418
      %v3757 = vmul.f32 %v3629, %v419
      %v3758 = vmul.f32 %v3630, %v420
      %v3759 = vmul.f32 %v3631, %v421
      %v3760 = vmul.f32 %v3632, %v422
      %v3761 = vmul.f32 %v3633, %v423
      %v3762 = vmul.f32 %v3634, %v424
      %v3763 = vmul.f32 %v3635, %v425
      %v3764 = vmul.f32 %v3636, %v426
      %v3765 = vmul.f32 %v3637, %v427
      %v3766 = vmul.f32 %v3638, %v428
      %v3767 = vmul.f32 %v3639, %v429
      %v3768 = vmul.f32 %v3640, %v430
      %v3769 = vmul.f32 %v3641, %v431
      %v3770 = vmul.f32 %v3642, %v432
      %v3771 = vmul.f32 %v3643, %v433
      %v3772 = vmul.f32 %v3644, %v434
      %v3773 = vmul.f32 %v3645, %v435
      %v3774 = vmul.f32 %v3646, %v436
      %v3775 = vmul.f32 %v3647, %v437
      %v3776 = vmul.f32 %v3648, %v438
      %v3777 = vmul.f32 %v3649, %v439
      %v3778 = vmul.f32 %v3650, %v440
      %v3779 = vmul.f32 %v3651, %v441
      %v3780 = vmul.f32 %v3652, %v442
      %v3781 = vmul.f32 %v3653, %v443
      %v3782 = vmul.f32 %v3654, %v444
      %v3783 = vmul.f32 %v3655, %v445
      %v3784 = vmul.f32 %v3656, %v446
      %v3785 = vmul.f32 %v3657, %v447
      %v3786 = vmul.f32 %v3658, %v448
      %v3787 = vmul.f32 %v3659, %v449
      %v3788 = vmul.f32 %v3660, %v450
      %v3789 = vmul.f32 %v3661, %v451
      %v3790 = vmul.f32 %v3662, %v452
      %v3791 = vmul.f32 %v3663, %v453
      %v3792 = vmul.f32 %v3664, %v454
      %v3793 = vmul.f32 %v3665, %v455
      %v3794 = vmul.f32 %v3666, %v456
      %v3795 = vmul.f32 %v3667, %v457
      %v3796 = vmul.f32 %v3668, %v458
      %v3797 = vmul.f32 %v3669, %v459
      %v3798 = vmul.f32 %v3670, %v460
      %v3799 = vmul.f32 %v3671, %v461
      %v3800 = vmul.f32 %v3672, %v462
      %v3801 = vmul.f32 %v3673, %v463
      %v3802 = vmul.f32 %v3674, %v464
      %v3803 = vmul.f32 %v3675, %v465
      %v3804 = vmul.f32 %v3676, %v466
      %v3805 = vmul.f32 %v3677, %v467
      %v3806 = vmul.f32 %v3678, %v468
      %v3807 = vmul.f32 %v3679, %v469
      %v3808 = vmul.f32 %v3680, %v470
      %v3809 = vmul.f32 %v3681, %v471
      %v3810 = vmul.f32 %v3682, %v472
      %v3811 = vmul.f32 %v3683, %v473
      %v3812 = vmul.f32 %v3684, %v474
      %v3813 = vmul.f32 %v3685, %v475
      %v3814 = vmul.f32 %v3686, %v476
      %v3815 = vmul.f32 %v3687, %v477
      %v3816 = vmul.f32 %v3688, %v478
      %v3817 = vmul.f32 %v3689, %v479
      %v3818 = vmul.f32 %v3690, %v480
      %v3819 = vmul.f32 %v3691, %v481
      %v3820 = vmul.f32 %v3692, %v482
      %v3821 = vmul.f32 %v3693, %v483
      %v3822 = vmul.f32 %v3694, %v484
      %v3823 = vmul.f32 %v3695, %v485
      %v3824 = vmul.f32 %v3696, %v486
      %v3825 = vmul.f32 %v3697, %v487
      %v3826 = vmul.f32 %v3698, %v488
      %v3827 = vmul.f32 %v3699, %v489
      %v3828 = vmul.f32 %v3700, %v490
      %v3829 = vmul.f32 %v3701, %v491
      %v3830 = vmul.f32 %v3702, %v492
      %v3831 = vmul.f32 %v3703, %v493
      %v3832 = vmul.f32 %v3704, %v494
      %v3833 = vmul.f32 %v3705, %v495
      %v3834 = vmul.f32 %v3706, %v496
      %v3835 = vmul.f32 %v3707, %v497
      %v3836 = vmul.f32 %v3708, %v498
      %v3837 = vmul.f32 %v3709, %v499
      %v3838 = vmul.f32 %v3710, %v500
      %v3839 = vmul.f32 %v3711, %v501
      %v3840 = vmul.f32 %v3712, %v502
      %v3841 = vmul.f32 %v3713, %v503
      %v3842 = vmul.f32 %v3714, %v504
      %v3843 = vmul.f32 %v3715, %v505
      %v3844 = vmul.f32 %v3716, %v506
      %v3845 = vmul.f32 %v3717, %v507
      %v3846 = vmul.f32 %v3718, %v508
      %v3847 = vmul.f32 %v3719, %v509
      %v3848 = vmul.f32 %v3720, %v510
      %v3849 = vmul.f32 %v3721, %v511
      %v3850 = vmul.f32 %v3722, %v512
      %v3851 = vmul.f32 %v3723, %v513
      %v3852 = vmul.f32 %v3724, %v514
      %v3853 = vmul.f32 %v3725, %v515
      %v3854 = vmul.f32 %v3726, %v516
      %v3855 = vmul.f32 %v3727, %v517
      %v3856 = vmul.f32 %v3728, %v518
      %v3857 = vmul.f32 %v3729, %v519
      %v3858 = vmul.f32 %v3730, %v520
      %v3859 = vmul.f32 %v3731, %v521
      %v3860 = vmul.f32 %v3732, %v522
      %v3861 = vmul.f32 %v3733, %v523
      %v3862 = vmul.f32 %v3734, %v524
      %v3863 = vmul.f32 %v3735, %v525
      %v3864 = vmul.f32 %v3736, %v526
      %v3865 = vmul.f32 %v3737, %v527
      %v3866 = vsel %vm660, %v3738, 0.0
      %3867 = vadd.xlane.f32.xlu0 %v3866
      %v3868 = vpop.xlane.xlu0 %3867
      %v3869 = vsel %vm660, %v3739, 0.0
      %3870 = vadd.xlane.f32.xlu0 %v3869
      %v3871 = vpop.xlane.xlu0 %3870
      %v3872 = vsel %vm660, %v3740, 0.0
      %3873 = vadd.xlane.f32.xlu0 %v3872
      %v3874 = vpop.xlane.xlu0 %3873
      %v3875 = vsel %vm660, %v3741, 0.0
      %3876 = vadd.xlane.f32.xlu0 %v3875
      %v3877 = vpop.xlane.xlu0 %3876
      %v3878 = vsel %vm660, %v3742, 0.0
      %3879 = vadd.xlane.f32.xlu0 %v3878
      %v3880 = vpop.xlane.xlu0 %3879
      %v3881 = vsel %vm660, %v3743, 0.0
      %3882 = vadd.xlane.f32.xlu0 %v3881
      %v3883 = vpop.xlane.xlu0 %3882
      %v3884 = vsel %vm660, %v3744, 0.0
      %3885 = vadd.xlane.f32.xlu0 %v3884
      %v3886 = vpop.xlane.xlu0 %3885
      %v3887 = vsel %vm660, %v3745, 0.0
      %3888 = vadd.xlane.f32.xlu0 %v3887
      %v3889 = vpop.xlane.xlu0 %3888
      %v3890 = vsel %vm660, %v3746, 0.0
      %3891 = vadd.xlane.f32.xlu0 %v3890
      %v3892 = vpop.xlane.xlu0 %3891
      %v3893 = vsel %vm660, %v3747, 0.0
      %3894 = vadd.xlane.f32.xlu0 %v3893
      %v3895 = vpop.xlane.xlu0 %3894
      %v3896 = vsel %vm660, %v3748, 0.0
      %3897 = vadd.xlane.f32.xlu0 %v3896
      %v3898 = vpop.xlane.xlu0 %3897
      %v3899 = vsel %vm660, %v3749, 0.0
      %3900 = vadd.xlane.f32.xlu0 %v3899
      %v3901 = vpop.xlane.xlu0 %3900
      %v3902 = vsel %vm660, %v3750, 0.0
      %3903 = vadd.xlane.f32.xlu0 %v3902
      %v3904 = vpop.xlane.xlu0 %3903
      %v3905 = vsel %vm660, %v3751, 0.0
      %3906 = vadd.xlane.f32.xlu0 %v3905
      %v3907 = vpop.xlane.xlu0 %3906
      %v3908 = vsel %vm660, %v3752, 0.0
      %3909 = vadd.xlane.f32.xlu0 %v3908
      %v3910 = vpop.xlane.xlu0 %3909
      %v3911 = vsel %vm660, %v3753, 0.0
      %3912 = vadd.xlane.f32.xlu0 %v3911
      %v3913 = vpop.xlane.xlu0 %3912
      %v3914 = vsel %vm660, %v3754, 0.0
      %3915 = vadd.xlane.f32.xlu0 %v3914
      %v3916 = vpop.xlane.xlu0 %3915
      %v3917 = vsel %vm660, %v3755, 0.0
      %3918 = vadd.xlane.f32.xlu0 %v3917
      %v3919 = vpop.xlane.xlu0 %3918
      %v3920 = vsel %vm660, %v3756, 0.0
      %3921 = vadd.xlane.f32.xlu0 %v3920
      %v3922 = vpop.xlane.xlu0 %3921
      %v3923 = vsel %vm660, %v3757, 0.0
      %3924 = vadd.xlane.f32.xlu0 %v3923
      %v3925 = vpop.xlane.xlu0 %3924
      %v3926 = vsel %vm660, %v3758, 0.0
      %3927 = vadd.xlane.f32.xlu0 %v3926
      %v3928 = vpop.xlane.xlu0 %3927
      %v3929 = vsel %vm660, %v3759, 0.0
      %3930 = vadd.xlane.f32.xlu0 %v3929
      %v3931 = vpop.xlane.xlu0 %3930
      %v3932 = vsel %vm660, %v3760, 0.0
      %3933 = vadd.xlane.f32.xlu0 %v3932
      %v3934 = vpop.xlane.xlu0 %3933
      %v3935 = vsel %vm660, %v3761, 0.0
      %3936 = vadd.xlane.f32.xlu0 %v3935
      %v3937 = vpop.xlane.xlu0 %3936
      %v3938 = vsel %vm660, %v3762, 0.0
      %3939 = vadd.xlane.f32.xlu0 %v3938
      %v3940 = vpop.xlane.xlu0 %3939
      %v3941 = vsel %vm660, %v3763, 0.0
      %3942 = vadd.xlane.f32.xlu0 %v3941
      %v3943 = vpop.xlane.xlu0 %3942
      %v3944 = vsel %vm660, %v3764, 0.0
      %3945 = vadd.xlane.f32.xlu0 %v3944
      %v3946 = vpop.xlane.xlu0 %3945
      %v3947 = vsel %vm660, %v3765, 0.0
      %3948 = vadd.xlane.f32.xlu0 %v3947
      %v3949 = vpop.xlane.xlu0 %3948
      %v3950 = vsel %vm660, %v3766, 0.0
      %3951 = vadd.xlane.f32.xlu0 %v3950
      %v3952 = vpop.xlane.xlu0 %3951
      %v3953 = vsel %vm660, %v3767, 0.0
      %3954 = vadd.xlane.f32.xlu0 %v3953
      %v3955 = vpop.xlane.xlu0 %3954
      %v3956 = vsel %vm660, %v3768, 0.0
      %3957 = vadd.xlane.f32.xlu0 %v3956
      %v3958 = vpop.xlane.xlu0 %3957
      %v3959 = vsel %vm660, %v3769, 0.0
      %3960 = vadd.xlane.f32.xlu0 %v3959
      %v3961 = vpop.xlane.xlu0 %3960
      %v3962 = vsel %vm660, %v3770, 0.0
      %3963 = vadd.xlane.f32.xlu0 %v3962
      %v3964 = vpop.xlane.xlu0 %3963
      %v3965 = vsel %vm660, %v3771, 0.0
      %3966 = vadd.xlane.f32.xlu0 %v3965
      %v3967 = vpop.xlane.xlu0 %3966
      %v3968 = vsel %vm660, %v3772, 0.0
      %3969 = vadd.xlane.f32.xlu0 %v3968
      %v3970 = vpop.xlane.xlu0 %3969
      %v3971 = vsel %vm660, %v3773, 0.0
      %3972 = vadd.xlane.f32.xlu0 %v3971
      %v3973 = vpop.xlane.xlu0 %3972
      %v3974 = vsel %vm660, %v3774, 0.0
      %3975 = vadd.xlane.f32.xlu0 %v3974
      %v3976 = vpop.xlane.xlu0 %3975
      %v3977 = vsel %vm660, %v3775, 0.0
      %3978 = vadd.xlane.f32.xlu0 %v3977
      %v3979 = vpop.xlane.xlu0 %3978
      %v3980 = vsel %vm660, %v3776, 0.0
      %3981 = vadd.xlane.f32.xlu0 %v3980
      %v3982 = vpop.xlane.xlu0 %3981
      %v3983 = vsel %vm660, %v3777, 0.0
      %3984 = vadd.xlane.f32.xlu0 %v3983
      %v3985 = vpop.xlane.xlu0 %3984
      %v3986 = vsel %vm660, %v3778, 0.0
      %3987 = vadd.xlane.f32.xlu0 %v3986
      %v3988 = vpop.xlane.xlu0 %3987
      %v3989 = vsel %vm660, %v3779, 0.0
      %3990 = vadd.xlane.f32.xlu0 %v3989
      %v3991 = vpop.xlane.xlu0 %3990
      %v3992 = vsel %vm660, %v3780, 0.0
      %3993 = vadd.xlane.f32.xlu0 %v3992
      %v3994 = vpop.xlane.xlu0 %3993
      %v3995 = vsel %vm660, %v3781, 0.0
      %3996 = vadd.xlane.f32.xlu0 %v3995
      %v3997 = vpop.xlane.xlu0 %3996
      %v3998 = vsel %vm660, %v3782, 0.0
      %3999 = vadd.xlane.f32.xlu0 %v3998
      %v4000 = vpop.xlane.xlu0 %3999
      %v4001 = vsel %vm660, %v3783, 0.0
      %4002 = vadd.xlane.f32.xlu0 %v4001
      %v4003 = vpop.xlane.xlu0 %4002
      %v4004 = vsel %vm660, %v3784, 0.0
      %4005 = vadd.xlane.f32.xlu0 %v4004
      %v4006 = vpop.xlane.xlu0 %4005
      %v4007 = vsel %vm660, %v3785, 0.0
      %4008 = vadd.xlane.f32.xlu0 %v4007
      %v4009 = vpop.xlane.xlu0 %4008
      %v4010 = vsel %vm660, %v3786, 0.0
      %4011 = vadd.xlane.f32.xlu0 %v4010
      %v4012 = vpop.xlane.xlu0 %4011
      %v4013 = vsel %vm660, %v3787, 0.0
      %4014 = vadd.xlane.f32.xlu0 %v4013
      %v4015 = vpop.xlane.xlu0 %4014
      %v4016 = vsel %vm660, %v3788, 0.0
      %4017 = vadd.xlane.f32.xlu0 %v4016
      %v4018 = vpop.xlane.xlu0 %4017
      %v4019 = vsel %vm660, %v3789, 0.0
      %4020 = vadd.xlane.f32.xlu0 %v4019
      %v4021 = vpop.xlane.xlu0 %4020
      %v4022 = vsel %vm660, %v3790, 0.0
      %4023 = vadd.xlane.f32.xlu0 %v4022
      %v4024 = vpop.xlane.xlu0 %4023
      %v4025 = vsel %vm660, %v3791, 0.0
      %4026 = vadd.xlane.f32.xlu0 %v4025
      %v4027 = vpop.xlane.xlu0 %4026
      %v4028 = vsel %vm660, %v3792, 0.0
      %4029 = vadd.xlane.f32.xlu0 %v4028
      %v4030 = vpop.xlane.xlu0 %4029
      %v4031 = vsel %vm660, %v3793, 0.0
      %4032 = vadd.xlane.f32.xlu0 %v4031
      %v4033 = vpop.xlane.xlu0 %4032
      %v4034 = vsel %vm660, %v3794, 0.0
      %4035 = vadd.xlane.f32.xlu0 %v4034
      %v4036 = vpop.xlane.xlu0 %4035
      %v4037 = vsel %vm660, %v3795, 0.0
      %4038 = vadd.xlane.f32.xlu0 %v4037
      %v4039 = vpop.xlane.xlu0 %4038
      %v4040 = vsel %vm660, %v3796, 0.0
      %4041 = vadd.xlane.f32.xlu0 %v4040
      %v4042 = vpop.xlane.xlu0 %4041
      %v4043 = vsel %vm660, %v3797, 0.0
      %4044 = vadd.xlane.f32.xlu0 %v4043
      %v4045 = vpop.xlane.xlu0 %4044
      %v4046 = vsel %vm660, %v3798, 0.0
      %4047 = vadd.xlane.f32.xlu0 %v4046
      %v4048 = vpop.xlane.xlu0 %4047
      %v4049 = vsel %vm660, %v3799, 0.0
      %4050 = vadd.xlane.f32.xlu0 %v4049
      %v4051 = vpop.xlane.xlu0 %4050
      %v4052 = vsel %vm660, %v3800, 0.0
      %4053 = vadd.xlane.f32.xlu0 %v4052
      %v4054 = vpop.xlane.xlu0 %4053
      %v4055 = vsel %vm660, %v3801, 0.0
      %4056 = vadd.xlane.f32.xlu0 %v4055
      %v4057 = vpop.xlane.xlu0 %4056
      %v4058 = vsel %vm660, %v3802, 0.0
      %4059 = vadd.xlane.f32.xlu0 %v4058
      %v4060 = vpop.xlane.xlu0 %4059
      %v4061 = vsel %vm660, %v3803, 0.0
      %4062 = vadd.xlane.f32.xlu0 %v4061
      %v4063 = vpop.xlane.xlu0 %4062
      %v4064 = vsel %vm660, %v3804, 0.0
      %4065 = vadd.xlane.f32.xlu0 %v4064
      %v4066 = vpop.xlane.xlu0 %4065
      %v4067 = vsel %vm660, %v3805, 0.0
      %4068 = vadd.xlane.f32.xlu0 %v4067
      %v4069 = vpop.xlane.xlu0 %4068
      %v4070 = vsel %vm660, %v3806, 0.0
      %4071 = vadd.xlane.f32.xlu0 %v4070
      %v4072 = vpop.xlane.xlu0 %4071
      %v4073 = vsel %vm660, %v3807, 0.0
      %4074 = vadd.xlane.f32.xlu0 %v4073
      %v4075 = vpop.xlane.xlu0 %4074
      %v4076 = vsel %vm660, %v3808, 0.0
      %4077 = vadd.xlane.f32.xlu0 %v4076
      %v4078 = vpop.xlane.xlu0 %4077
      %v4079 = vsel %vm660, %v3809, 0.0
      %4080 = vadd.xlane.f32.xlu0 %v4079
      %v4081 = vpop.xlane.xlu0 %4080
      %v4082 = vsel %vm660, %v3810, 0.0
      %4083 = vadd.xlane.f32.xlu0 %v4082
      %v4084 = vpop.xlane.xlu0 %4083
      %v4085 = vsel %vm660, %v3811, 0.0
      %4086 = vadd.xlane.f32.xlu0 %v4085
      %v4087 = vpop.xlane.xlu0 %4086
      %v4088 = vsel %vm660, %v3812, 0.0
      %4089 = vadd.xlane.f32.xlu0 %v4088
      %v4090 = vpop.xlane.xlu0 %4089
      %v4091 = vsel %vm660, %v3813, 0.0
      %4092 = vadd.xlane.f32.xlu0 %v4091
      %v4093 = vpop.xlane.xlu0 %4092
      %v4094 = vsel %vm660, %v3814, 0.0
      %4095 = vadd.xlane.f32.xlu0 %v4094
      %v4096 = vpop.xlane.xlu0 %4095
      %v4097 = vsel %vm660, %v3815, 0.0
      %4098 = vadd.xlane.f32.xlu0 %v4097
      %v4099 = vpop.xlane.xlu0 %4098
      %v4100 = vsel %vm660, %v3816, 0.0
      %4101 = vadd.xlane.f32.xlu0 %v4100
      %v4102 = vpop.xlane.xlu0 %4101
      %v4103 = vsel %vm660, %v3817, 0.0
      %4104 = vadd.xlane.f32.xlu0 %v4103
      %v4105 = vpop.xlane.xlu0 %4104
      %v4106 = vsel %vm660, %v3818, 0.0
      %4107 = vadd.xlane.f32.xlu0 %v4106
      %v4108 = vpop.xlane.xlu0 %4107
      %v4109 = vsel %vm660, %v3819, 0.0
      %4110 = vadd.xlane.f32.xlu0 %v4109
      %v4111 = vpop.xlane.xlu0 %4110
      %v4112 = vsel %vm660, %v3820, 0.0
      %4113 = vadd.xlane.f32.xlu0 %v4112
      %v4114 = vpop.xlane.xlu0 %4113
      %v4115 = vsel %vm660, %v3821, 0.0
      %4116 = vadd.xlane.f32.xlu0 %v4115
      %v4117 = vpop.xlane.xlu0 %4116
      %v4118 = vsel %vm660, %v3822, 0.0
      %4119 = vadd.xlane.f32.xlu0 %v4118
      %v4120 = vpop.xlane.xlu0 %4119
      %v4121 = vsel %vm660, %v3823, 0.0
      %4122 = vadd.xlane.f32.xlu0 %v4121
      %v4123 = vpop.xlane.xlu0 %4122
      %v4124 = vsel %vm660, %v3824, 0.0
      %4125 = vadd.xlane.f32.xlu0 %v4124
      %v4126 = vpop.xlane.xlu0 %4125
      %v4127 = vsel %vm660, %v3825, 0.0
      %4128 = vadd.xlane.f32.xlu0 %v4127
      %v4129 = vpop.xlane.xlu0 %4128
      %v4130 = vsel %vm660, %v3826, 0.0
      %4131 = vadd.xlane.f32.xlu0 %v4130
      %v4132 = vpop.xlane.xlu0 %4131
      %v4133 = vsel %vm660, %v3827, 0.0
      %4134 = vadd.xlane.f32.xlu0 %v4133
      %v4135 = vpop.xlane.xlu0 %4134
      %v4136 = vsel %vm660, %v3828, 0.0
      %4137 = vadd.xlane.f32.xlu0 %v4136
      %v4138 = vpop.xlane.xlu0 %4137
      %v4139 = vsel %vm660, %v3829, 0.0
      %4140 = vadd.xlane.f32.xlu0 %v4139
      %v4141 = vpop.xlane.xlu0 %4140
      %v4142 = vsel %vm660, %v3830, 0.0
      %4143 = vadd.xlane.f32.xlu0 %v4142
      %v4144 = vpop.xlane.xlu0 %4143
      %v4145 = vsel %vm660, %v3831, 0.0
      %4146 = vadd.xlane.f32.xlu0 %v4145
      %v4147 = vpop.xlane.xlu0 %4146
      %v4148 = vsel %vm660, %v3832, 0.0
      %4149 = vadd.xlane.f32.xlu0 %v4148
      %v4150 = vpop.xlane.xlu0 %4149
      %v4151 = vsel %vm660, %v3833, 0.0
      %4152 = vadd.xlane.f32.xlu0 %v4151
      %v4153 = vpop.xlane.xlu0 %4152
      %v4154 = vsel %vm660, %v3834, 0.0
      %4155 = vadd.xlane.f32.xlu0 %v4154
      %v4156 = vpop.xlane.xlu0 %4155
      %v4157 = vsel %vm660, %v3835, 0.0
      %4158 = vadd.xlane.f32.xlu0 %v4157
      %v4159 = vpop.xlane.xlu0 %4158
      %v4160 = vsel %vm660, %v3836, 0.0
      %4161 = vadd.xlane.f32.xlu0 %v4160
      %v4162 = vpop.xlane.xlu0 %4161
      %v4163 = vsel %vm660, %v3837, 0.0
      %4164 = vadd.xlane.f32.xlu0 %v4163
      %v4165 = vpop.xlane.xlu0 %4164
      %v4166 = vsel %vm660, %v3838, 0.0
      %4167 = vadd.xlane.f32.xlu0 %v4166
      %v4168 = vpop.xlane.xlu0 %4167
      %v4169 = vsel %vm660, %v3839, 0.0
      %4170 = vadd.xlane.f32.xlu0 %v4169
      %v4171 = vpop.xlane.xlu0 %4170
      %v4172 = vsel %vm660, %v3840, 0.0
      %4173 = vadd.xlane.f32.xlu0 %v4172
      %v4174 = vpop.xlane.xlu0 %4173
      %v4175 = vsel %vm660, %v3841, 0.0
      %4176 = vadd.xlane.f32.xlu0 %v4175
      %v4177 = vpop.xlane.xlu0 %4176
      %v4178 = vsel %vm660, %v3842, 0.0
      %4179 = vadd.xlane.f32.xlu0 %v4178
      %v4180 = vpop.xlane.xlu0 %4179
      %v4181 = vsel %vm660, %v3843, 0.0
      %4182 = vadd.xlane.f32.xlu0 %v4181
      %v4183 = vpop.xlane.xlu0 %4182
      %v4184 = vsel %vm660, %v3844, 0.0
      %4185 = vadd.xlane.f32.xlu0 %v4184
      %v4186 = vpop.xlane.xlu0 %4185
      %v4187 = vsel %vm660, %v3845, 0.0
      %4188 = vadd.xlane.f32.xlu0 %v4187
      %v4189 = vpop.xlane.xlu0 %4188
      %v4190 = vsel %vm660, %v3846, 0.0
      %4191 = vadd.xlane.f32.xlu0 %v4190
      %v4192 = vpop.xlane.xlu0 %4191
      %v4193 = vsel %vm660, %v3847, 0.0
      %4194 = vadd.xlane.f32.xlu0 %v4193
      %v4195 = vpop.xlane.xlu0 %4194
      %v4196 = vsel %vm660, %v3848, 0.0
      %4197 = vadd.xlane.f32.xlu0 %v4196
      %v4198 = vpop.xlane.xlu0 %4197
      %v4199 = vsel %vm660, %v3849, 0.0
      %4200 = vadd.xlane.f32.xlu0 %v4199
      %v4201 = vpop.xlane.xlu0 %4200
      %v4202 = vsel %vm660, %v3850, 0.0
      %4203 = vadd.xlane.f32.xlu0 %v4202
      %v4204 = vpop.xlane.xlu0 %4203
      %v4205 = vsel %vm660, %v3851, 0.0
      %4206 = vadd.xlane.f32.xlu0 %v4205
      %v4207 = vpop.xlane.xlu0 %4206
      %v4208 = vsel %vm660, %v3852, 0.0
      %4209 = vadd.xlane.f32.xlu0 %v4208
      %v4210 = vpop.xlane.xlu0 %4209
      %v4211 = vsel %vm660, %v3853, 0.0
      %4212 = vadd.xlane.f32.xlu0 %v4211
      %v4213 = vpop.xlane.xlu0 %4212
      %v4214 = vsel %vm660, %v3854, 0.0
      %4215 = vadd.xlane.f32.xlu0 %v4214
      %v4216 = vpop.xlane.xlu0 %4215
      %v4217 = vsel %vm660, %v3855, 0.0
      %4218 = vadd.xlane.f32.xlu0 %v4217
      %v4219 = vpop.xlane.xlu0 %4218
      %v4220 = vsel %vm660, %v3856, 0.0
      %4221 = vadd.xlane.f32.xlu0 %v4220
      %v4222 = vpop.xlane.xlu0 %4221
      %v4223 = vsel %vm660, %v3857, 0.0
      %4224 = vadd.xlane.f32.xlu0 %v4223
      %v4225 = vpop.xlane.xlu0 %4224
      %v4226 = vsel %vm660, %v3858, 0.0
      %4227 = vadd.xlane.f32.xlu0 %v4226
      %v4228 = vpop.xlane.xlu0 %4227
      %v4229 = vsel %vm660, %v3859, 0.0
      %4230 = vadd.xlane.f32.xlu0 %v4229
      %v4231 = vpop.xlane.xlu0 %4230
      %v4232 = vsel %vm660, %v3860, 0.0
      %4233 = vadd.xlane.f32.xlu0 %v4232
      %v4234 = vpop.xlane.xlu0 %4233
      %v4235 = vsel %vm660, %v3861, 0.0
      %4236 = vadd.xlane.f32.xlu0 %v4235
      %v4237 = vpop.xlane.xlu0 %4236
      %v4238 = vsel %vm660, %v3862, 0.0
      %4239 = vadd.xlane.f32.xlu0 %v4238
      %v4240 = vpop.xlane.xlu0 %4239
      %v4241 = vsel %vm660, %v3863, 0.0
      %4242 = vadd.xlane.f32.xlu0 %v4241
      %v4243 = vpop.xlane.xlu0 %4242
      %v4244 = vsel %vm660, %v3864, 0.0
      %4245 = vadd.xlane.f32.xlu0 %v4244
      %v4246 = vpop.xlane.xlu0 %4245
      %v4247 = vsel %vm660, %v3865, 0.0
      %4248 = vadd.xlane.f32.xlu0 %v4247
      %v4249 = vpop.xlane.xlu0 %4248
      %v4250 = vtanh.pop %v3868
      %v4251 = vtanh.pop %v3871
      %v4252 = vtanh.pop %v3874
      %v4253 = vtanh.pop %v3877
      %v4254 = vtanh.pop %v3880
      %v4255 = vtanh.pop %v3883
      %v4256 = vtanh.pop %v3886
      %v4257 = vtanh.pop %v3889
      %v4258 = vtanh.pop %v3892
      %v4259 = vtanh.pop %v3895
      %v4260 = vtanh.pop %v3898
      %v4261 = vtanh.pop %v3901
      %v4262 = vtanh.pop %v3904
      %v4263 = vtanh.pop %v3907
      %v4264 = vtanh.pop %v3910
      %v4265 = vtanh.pop %v3913
      %v4266 = vtanh.pop %v3916
      %v4267 = vtanh.pop %v3919
      %v4268 = vtanh.pop %v3922
      %v4269 = vtanh.pop %v3925
      %v4270 = vtanh.pop %v3928
      %v4271 = vtanh.pop %v3931
      %v4272 = vtanh.pop %v3934
      %v4273 = vtanh.pop %v3937
      %v4274 = vtanh.pop %v3940
      %v4275 = vtanh.pop %v3943
      %v4276 = vtanh.pop %v3946
      %v4277 = vtanh.pop %v3949
      %v4278 = vtanh.pop %v3952
      %v4279 = vtanh.pop %v3955
      %v4280 = vtanh.pop %v3958
      %v4281 = vtanh.pop %v3961
      %v4282 = vtanh.pop %v3964
      %v4283 = vtanh.pop %v3967
      %v4284 = vtanh.pop %v3970
      %v4285 = vtanh.pop %v3973
      %v4286 = vtanh.pop %v3976
      %v4287 = vtanh.pop %v3979
      %v4288 = vtanh.pop %v3982
      %v4289 = vtanh.pop %v3985
      %v4290 = vtanh.pop %v3988
      %v4291 = vtanh.pop %v3991
      %v4292 = vtanh.pop %v3994
      %v4293 = vtanh.pop %v3997
      %v4294 = vtanh.pop %v4000
      %v4295 = vtanh.pop %v4003
      %v4296 = vtanh.pop %v4006
      %v4297 = vtanh.pop %v4009
      %v4298 = vtanh.pop %v4012
      %v4299 = vtanh.pop %v4015
      %v4300 = vtanh.pop %v4018
      %v4301 = vtanh.pop %v4021
      %v4302 = vtanh.pop %v4024
      %v4303 = vtanh.pop %v4027
      %v4304 = vtanh.pop %v4030
      %v4305 = vtanh.pop %v4033
      %v4306 = vtanh.pop %v4036
      %v4307 = vtanh.pop %v4039
      %v4308 = vtanh.pop %v4042
      %v4309 = vtanh.pop %v4045
      %v4310 = vtanh.pop %v4048
      %v4311 = vtanh.pop %v4051
      %v4312 = vtanh.pop %v4054
      %v4313 = vtanh.pop %v4057
      %v4314 = vtanh.pop %v4060
      %v4315 = vtanh.pop %v4063
      %v4316 = vtanh.pop %v4066
      %v4317 = vtanh.pop %v4069
      %v4318 = vtanh.pop %v4072
      %v4319 = vtanh.pop %v4075
      %v4320 = vtanh.pop %v4078
      %v4321 = vtanh.pop %v4081
      %v4322 = vtanh.pop %v4084
      %v4323 = vtanh.pop %v4087
      %v4324 = vtanh.pop %v4090
      %v4325 = vtanh.pop %v4093
      %v4326 = vtanh.pop %v4096
      %v4327 = vtanh.pop %v4099
      %v4328 = vtanh.pop %v4102
      %v4329 = vtanh.pop %v4105
      %v4330 = vtanh.pop %v4108
      %v4331 = vtanh.pop %v4111
      %v4332 = vtanh.pop %v4114
      %v4333 = vtanh.pop %v4117
      %v4334 = vtanh.pop %v4120
      %v4335 = vtanh.pop %v4123
      %v4336 = vtanh.pop %v4126
      %v4337 = vtanh.pop %v4129
      %v4338 = vtanh.pop %v4132
      %v4339 = vtanh.pop %v4135
      %v4340 = vtanh.pop %v4138
      %v4341 = vtanh.pop %v4141
      %v4342 = vtanh.pop %v4144
      %v4343 = vtanh.pop %v4147
      %v4344 = vtanh.pop %v4150
      %v4345 = vtanh.pop %v4153
      %v4346 = vtanh.pop %v4156
      %v4347 = vtanh.pop %v4159
      %v4348 = vtanh.pop %v4162
      %v4349 = vtanh.pop %v4165
      %v4350 = vtanh.pop %v4168
      %v4351 = vtanh.pop %v4171
      %v4352 = vtanh.pop %v4174
      %v4353 = vtanh.pop %v4177
      %v4354 = vtanh.pop %v4180
      %v4355 = vtanh.pop %v4183
      %v4356 = vtanh.pop %v4186
      %v4357 = vtanh.pop %v4189
      %v4358 = vtanh.pop %v4192
      %v4359 = vtanh.pop %v4195
      %v4360 = vtanh.pop %v4198
      %v4361 = vtanh.pop %v4201
      %v4362 = vtanh.pop %v4204
      %v4363 = vtanh.pop %v4207
      %v4364 = vtanh.pop %v4210
      %v4365 = vtanh.pop %v4213
      %v4366 = vtanh.pop %v4216
      %v4367 = vtanh.pop %v4219
      %v4368 = vtanh.pop %v4222
      %v4369 = vtanh.pop %v4225
      %v4370 = vtanh.pop %v4228
      %v4371 = vtanh.pop %v4231
      %v4372 = vtanh.pop %v4234
      %v4373 = vtanh.pop %v4237
      %v4374 = vtanh.pop %v4240
      %v4375 = vtanh.pop %v4243
      %v4376 = vtanh.pop %v4246
      %v4377 = vtanh.pop %v4249
      %4378 = vrot.lane.b32.xlu0 %v528, 1
      %v4379 = vpop.permute.xlu0 %4378
      %4380 = vrot.lane.b32.xlu0 %v529, 1
      %v4381 = vpop.permute.xlu0 %4380
      %4382 = vrot.lane.b32.xlu0 %v530, 1
      %v4383 = vpop.permute.xlu0 %4382
      %4384 = vrot.lane.b32.xlu0 %v531, 1
      %v4385 = vpop.permute.xlu0 %4384
      %4386 = vrot.lane.b32.xlu0 %v532, 1
      %v4387 = vpop.permute.xlu0 %4386
      %4388 = vrot.lane.b32.xlu0 %v533, 1
      %v4389 = vpop.permute.xlu0 %4388
      %4390 = vrot.lane.b32.xlu0 %v534, 1
      %v4391 = vpop.permute.xlu0 %4390
      %4392 = vrot.lane.b32.xlu0 %v535, 1
      %v4393 = vpop.permute.xlu0 %4392
      %4394 = vrot.lane.b32.xlu0 %v536, 1
      %v4395 = vpop.permute.xlu0 %4394
      %4396 = vrot.lane.b32.xlu0 %v537, 1
      %v4397 = vpop.permute.xlu0 %4396
      %4398 = vrot.lane.b32.xlu0 %v538, 1
      %v4399 = vpop.permute.xlu0 %4398
      %4400 = vrot.lane.b32.xlu0 %v539, 1
      %v4401 = vpop.permute.xlu0 %4400
      %4402 = vrot.lane.b32.xlu0 %v540, 1
      %v4403 = vpop.permute.xlu0 %4402
      %4404 = vrot.lane.b32.xlu0 %v541, 1
      %v4405 = vpop.permute.xlu0 %4404
      %4406 = vrot.lane.b32.xlu0 %v542, 1
      %v4407 = vpop.permute.xlu0 %4406
      %4408 = vrot.lane.b32.xlu0 %v543, 1
      %v4409 = vpop.permute.xlu0 %4408
      %4410 = vrot.lane.b32.xlu0 %v544, 1
      %v4411 = vpop.permute.xlu0 %4410
      %4412 = vrot.lane.b32.xlu0 %v545, 1
      %v4413 = vpop.permute.xlu0 %4412
      %4414 = vrot.lane.b32.xlu0 %v546, 1
      %v4415 = vpop.permute.xlu0 %4414
      %4416 = vrot.lane.b32.xlu0 %v547, 1
      %v4417 = vpop.permute.xlu0 %4416
      %4418 = vrot.lane.b32.xlu0 %v548, 1
      %v4419 = vpop.permute.xlu0 %4418
      %4420 = vrot.lane.b32.xlu0 %v549, 1
      %v4421 = vpop.permute.xlu0 %4420
      %4422 = vrot.lane.b32.xlu0 %v550, 1
      %v4423 = vpop.permute.xlu0 %4422
      %4424 = vrot.lane.b32.xlu0 %v551, 1
      %v4425 = vpop.permute.xlu0 %4424
      %4426 = vrot.lane.b32.xlu0 %v552, 1
      %v4427 = vpop.permute.xlu0 %4426
      %4428 = vrot.lane.b32.xlu0 %v553, 1
      %v4429 = vpop.permute.xlu0 %4428
      %4430 = vrot.lane.b32.xlu0 %v554, 1
      %v4431 = vpop.permute.xlu0 %4430
      %4432 = vrot.lane.b32.xlu0 %v555, 1
      %v4433 = vpop.permute.xlu0 %4432
      %4434 = vrot.lane.b32.xlu0 %v556, 1
      %v4435 = vpop.permute.xlu0 %4434
      %4436 = vrot.lane.b32.xlu0 %v557, 1
      %v4437 = vpop.permute.xlu0 %4436
      %4438 = vrot.lane.b32.xlu0 %v558, 1
      %v4439 = vpop.permute.xlu0 %4438
      %4440 = vrot.lane.b32.xlu0 %v559, 1
      %v4441 = vpop.permute.xlu0 %4440
      %4442 = vrot.lane.b32.xlu0 %v560, 1
      %v4443 = vpop.permute.xlu0 %4442
      %4444 = vrot.lane.b32.xlu0 %v561, 1
      %v4445 = vpop.permute.xlu0 %4444
      %4446 = vrot.lane.b32.xlu0 %v562, 1
      %v4447 = vpop.permute.xlu0 %4446
      %4448 = vrot.lane.b32.xlu0 %v563, 1
      %v4449 = vpop.permute.xlu0 %4448
      %4450 = vrot.lane.b32.xlu0 %v564, 1
      %v4451 = vpop.permute.xlu0 %4450
      %4452 = vrot.lane.b32.xlu0 %v565, 1
      %v4453 = vpop.permute.xlu0 %4452
      %4454 = vrot.lane.b32.xlu0 %v566, 1
      %v4455 = vpop.permute.xlu0 %4454
      %4456 = vrot.lane.b32.xlu0 %v567, 1
      %v4457 = vpop.permute.xlu0 %4456
      %4458 = vrot.lane.b32.xlu0 %v568, 1
      %v4459 = vpop.permute.xlu0 %4458
      %4460 = vrot.lane.b32.xlu0 %v569, 1
      %v4461 = vpop.permute.xlu0 %4460
      %4462 = vrot.lane.b32.xlu0 %v570, 1
      %v4463 = vpop.permute.xlu0 %4462
      %4464 = vrot.lane.b32.xlu0 %v571, 1
      %v4465 = vpop.permute.xlu0 %4464
      %4466 = vrot.lane.b32.xlu0 %v572, 1
      %v4467 = vpop.permute.xlu0 %4466
      %4468 = vrot.lane.b32.xlu0 %v573, 1
      %v4469 = vpop.permute.xlu0 %4468
      %4470 = vrot.lane.b32.xlu0 %v574, 1
      %v4471 = vpop.permute.xlu0 %4470
      %4472 = vrot.lane.b32.xlu0 %v575, 1
      %v4473 = vpop.permute.xlu0 %4472
      %4474 = vrot.lane.b32.xlu0 %v576, 1
      %v4475 = vpop.permute.xlu0 %4474
      %4476 = vrot.lane.b32.xlu0 %v577, 1
      %v4477 = vpop.permute.xlu0 %4476
      %4478 = vrot.lane.b32.xlu0 %v578, 1
      %v4479 = vpop.permute.xlu0 %4478
      %4480 = vrot.lane.b32.xlu0 %v579, 1
      %v4481 = vpop.permute.xlu0 %4480
      %4482 = vrot.lane.b32.xlu0 %v580, 1
      %v4483 = vpop.permute.xlu0 %4482
      %4484 = vrot.lane.b32.xlu0 %v581, 1
      %v4485 = vpop.permute.xlu0 %4484
      %4486 = vrot.lane.b32.xlu0 %v582, 1
      %v4487 = vpop.permute.xlu0 %4486
      %4488 = vrot.lane.b32.xlu0 %v583, 1
      %v4489 = vpop.permute.xlu0 %4488
      %4490 = vrot.lane.b32.xlu0 %v584, 1
      %v4491 = vpop.permute.xlu0 %4490
      %4492 = vrot.lane.b32.xlu0 %v585, 1
      %v4493 = vpop.permute.xlu0 %4492
      %4494 = vrot.lane.b32.xlu0 %v586, 1
      %v4495 = vpop.permute.xlu0 %4494
      %4496 = vrot.lane.b32.xlu0 %v587, 1
      %v4497 = vpop.permute.xlu0 %4496
      %4498 = vrot.lane.b32.xlu0 %v588, 1
      %v4499 = vpop.permute.xlu0 %4498
      %4500 = vrot.lane.b32.xlu0 %v589, 1
      %v4501 = vpop.permute.xlu0 %4500
      %4502 = vrot.lane.b32.xlu0 %v590, 1
      %v4503 = vpop.permute.xlu0 %4502
      %4504 = vrot.lane.b32.xlu0 %v591, 1
      %v4505 = vpop.permute.xlu0 %4504
      %4506 = vrot.lane.b32.xlu0 %v592, 1
      %v4507 = vpop.permute.xlu0 %4506
      %4508 = vrot.lane.b32.xlu0 %v593, 1
      %v4509 = vpop.permute.xlu0 %4508
      %4510 = vrot.lane.b32.xlu0 %v594, 1
      %v4511 = vpop.permute.xlu0 %4510
      %4512 = vrot.lane.b32.xlu0 %v595, 1
      %v4513 = vpop.permute.xlu0 %4512
      %4514 = vrot.lane.b32.xlu0 %v596, 1
      %v4515 = vpop.permute.xlu0 %4514
      %4516 = vrot.lane.b32.xlu0 %v597, 1
      %v4517 = vpop.permute.xlu0 %4516
      %4518 = vrot.lane.b32.xlu0 %v598, 1
      %v4519 = vpop.permute.xlu0 %4518
      %4520 = vrot.lane.b32.xlu0 %v599, 1
      %v4521 = vpop.permute.xlu0 %4520
      %4522 = vrot.lane.b32.xlu0 %v600, 1
      %v4523 = vpop.permute.xlu0 %4522
      %4524 = vrot.lane.b32.xlu0 %v601, 1
      %v4525 = vpop.permute.xlu0 %4524
      %4526 = vrot.lane.b32.xlu0 %v602, 1
      %v4527 = vpop.permute.xlu0 %4526
      %4528 = vrot.lane.b32.xlu0 %v603, 1
      %v4529 = vpop.permute.xlu0 %4528
      %4530 = vrot.lane.b32.xlu0 %v604, 1
      %v4531 = vpop.permute.xlu0 %4530
      %4532 = vrot.lane.b32.xlu0 %v605, 1
      %v4533 = vpop.permute.xlu0 %4532
      %4534 = vrot.lane.b32.xlu0 %v606, 1
      %v4535 = vpop.permute.xlu0 %4534
      %4536 = vrot.lane.b32.xlu0 %v607, 1
      %v4537 = vpop.permute.xlu0 %4536
      %4538 = vrot.lane.b32.xlu0 %v608, 1
      %v4539 = vpop.permute.xlu0 %4538
      %4540 = vrot.lane.b32.xlu0 %v609, 1
      %v4541 = vpop.permute.xlu0 %4540
      %4542 = vrot.lane.b32.xlu0 %v610, 1
      %v4543 = vpop.permute.xlu0 %4542
      %4544 = vrot.lane.b32.xlu0 %v611, 1
      %v4545 = vpop.permute.xlu0 %4544
      %4546 = vrot.lane.b32.xlu0 %v612, 1
      %v4547 = vpop.permute.xlu0 %4546
      %4548 = vrot.lane.b32.xlu0 %v613, 1
      %v4549 = vpop.permute.xlu0 %4548
      %4550 = vrot.lane.b32.xlu0 %v614, 1
      %v4551 = vpop.permute.xlu0 %4550
      %4552 = vrot.lane.b32.xlu0 %v615, 1
      %v4553 = vpop.permute.xlu0 %4552
      %4554 = vrot.lane.b32.xlu0 %v616, 1
      %v4555 = vpop.permute.xlu0 %4554
      %4556 = vrot.lane.b32.xlu0 %v617, 1
      %v4557 = vpop.permute.xlu0 %4556
      %4558 = vrot.lane.b32.xlu0 %v618, 1
      %v4559 = vpop.permute.xlu0 %4558
      %4560 = vrot.lane.b32.xlu0 %v619, 1
      %v4561 = vpop.permute.xlu0 %4560
      %4562 = vrot.lane.b32.xlu0 %v620, 1
      %v4563 = vpop.permute.xlu0 %4562
      %4564 = vrot.lane.b32.xlu0 %v621, 1
      %v4565 = vpop.permute.xlu0 %4564
      %4566 = vrot.lane.b32.xlu0 %v622, 1
      %v4567 = vpop.permute.xlu0 %4566
      %4568 = vrot.lane.b32.xlu0 %v623, 1
      %v4569 = vpop.permute.xlu0 %4568
      %4570 = vrot.lane.b32.xlu0 %v624, 1
      %v4571 = vpop.permute.xlu0 %4570
      %4572 = vrot.lane.b32.xlu0 %v625, 1
      %v4573 = vpop.permute.xlu0 %4572
      %4574 = vrot.lane.b32.xlu0 %v626, 1
      %v4575 = vpop.permute.xlu0 %4574
      %4576 = vrot.lane.b32.xlu0 %v627, 1
      %v4577 = vpop.permute.xlu0 %4576
      %4578 = vrot.lane.b32.xlu0 %v628, 1
      %v4579 = vpop.permute.xlu0 %4578
      %4580 = vrot.lane.b32.xlu0 %v629, 1
      %v4581 = vpop.permute.xlu0 %4580
      %4582 = vrot.lane.b32.xlu0 %v630, 1
      %v4583 = vpop.permute.xlu0 %4582
      %4584 = vrot.lane.b32.xlu0 %v631, 1
      %v4585 = vpop.permute.xlu0 %4584
      %4586 = vrot.lane.b32.xlu0 %v632, 1
      %v4587 = vpop.permute.xlu0 %4586
      %4588 = vrot.lane.b32.xlu0 %v633, 1
      %v4589 = vpop.permute.xlu0 %4588
      %4590 = vrot.lane.b32.xlu0 %v634, 1
      %v4591 = vpop.permute.xlu0 %4590
      %4592 = vrot.lane.b32.xlu0 %v635, 1
      %v4593 = vpop.permute.xlu0 %4592
      %4594 = vrot.lane.b32.xlu0 %v636, 1
      %v4595 = vpop.permute.xlu0 %4594
      %4596 = vrot.lane.b32.xlu0 %v637, 1
      %v4597 = vpop.permute.xlu0 %4596
      %4598 = vrot.lane.b32.xlu0 %v638, 1
      %v4599 = vpop.permute.xlu0 %4598
      %4600 = vrot.lane.b32.xlu0 %v639, 1
      %v4601 = vpop.permute.xlu0 %4600
      %4602 = vrot.lane.b32.xlu0 %v640, 1
      %v4603 = vpop.permute.xlu0 %4602
      %4604 = vrot.lane.b32.xlu0 %v641, 1
      %v4605 = vpop.permute.xlu0 %4604
      %4606 = vrot.lane.b32.xlu0 %v642, 1
      %v4607 = vpop.permute.xlu0 %4606
      %4608 = vrot.lane.b32.xlu0 %v643, 1
      %v4609 = vpop.permute.xlu0 %4608
      %4610 = vrot.lane.b32.xlu0 %v644, 1
      %v4611 = vpop.permute.xlu0 %4610
      %4612 = vrot.lane.b32.xlu0 %v645, 1
      %v4613 = vpop.permute.xlu0 %4612
      %4614 = vrot.lane.b32.xlu0 %v646, 1
      %v4615 = vpop.permute.xlu0 %4614
      %4616 = vrot.lane.b32.xlu0 %v647, 1
      %v4617 = vpop.permute.xlu0 %4616
      %4618 = vrot.lane.b32.xlu0 %v648, 1
      %v4619 = vpop.permute.xlu0 %4618
      %4620 = vrot.lane.b32.xlu0 %v649, 1
      %v4621 = vpop.permute.xlu0 %4620
      %4622 = vrot.lane.b32.xlu0 %v650, 1
      %v4623 = vpop.permute.xlu0 %4622
      %4624 = vrot.lane.b32.xlu0 %v651, 1
      %v4625 = vpop.permute.xlu0 %4624
      %4626 = vrot.lane.b32.xlu0 %v652, 1
      %v4627 = vpop.permute.xlu0 %4626
      %4628 = vrot.lane.b32.xlu0 %v653, 1
      %v4629 = vpop.permute.xlu0 %4628
      %4630 = vrot.lane.b32.xlu0 %v654, 1
      %v4631 = vpop.permute.xlu0 %4630
      %4632 = vrot.lane.b32.xlu0 %v655, 1
      %v4633 = vpop.permute.xlu0 %4632
      %v4762 = vmul.f32 %v528, %v4379
      %v4763 = vmul.f32 %v529, %v4381
      %v4764 = vmul.f32 %v530, %v4383
      %v4765 = vmul.f32 %v531, %v4385
      %v4766 = vmul.f32 %v532, %v4387
      %v4767 = vmul.f32 %v533, %v4389
      %v4768 = vmul.f32 %v534, %v4391
      %v4769 = vmul.f32 %v535, %v4393
      %v4770 = vmul.f32 %v536, %v4395
      %v4771 = vmul.f32 %v537, %v4397
      %v4772 = vmul.f32 %v538, %v4399
      %v4773 = vmul.f32 %v539, %v4401
      %v4774 = vmul.f32 %v540, %v4403
      %v4775 = vmul.f32 %v541, %v4405
      %v4776 = vmul.f32 %v542, %v4407
      %v4777 = vmul.f32 %v543, %v4409
      %v4778 = vmul.f32 %v544, %v4411
      %v4779 = vmul.f32 %v545, %v4413
      %v4780 = vmul.f32 %v546, %v4415
      %v4781 = vmul.f32 %v547, %v4417
      %v4782 = vmul.f32 %v548, %v4419
      %v4783 = vmul.f32 %v549, %v4421
      %v4784 = vmul.f32 %v550, %v4423
      %v4785 = vmul.f32 %v551, %v4425
      %v4786 = vmul.f32 %v552, %v4427
      %v4787 = vmul.f32 %v553, %v4429
      %v4788 = vmul.f32 %v554, %v4431
      %v4789 = vmul.f32 %v555, %v4433
      %v4790 = vmul.f32 %v556, %v4435
      %v4791 = vmul.f32 %v557, %v4437
      %v4792 = vmul.f32 %v558, %v4439
      %v4793 = vmul.f32 %v559, %v4441
      %v4794 = vmul.f32 %v560, %v4443
      %v4795 = vmul.f32 %v561, %v4445
      %v4796 = vmul.f32 %v562, %v4447
      %v4797 = vmul.f32 %v563, %v4449
      %v4798 = vmul.f32 %v564, %v4451
      %v4799 = vmul.f32 %v565, %v4453
      %v4800 = vmul.f32 %v566, %v4455
      %v4801 = vmul.f32 %v567, %v4457
      %v4802 = vmul.f32 %v568, %v4459
      %v4803 = vmul.f32 %v569, %v4461
      %v4804 = vmul.f32 %v570, %v4463
      %v4805 = vmul.f32 %v571, %v4465
      %v4806 = vmul.f32 %v572, %v4467
      %v4807 = vmul.f32 %v573, %v4469
      %v4808 = vmul.f32 %v574, %v4471
      %v4809 = vmul.f32 %v575, %v4473
      %v4810 = vmul.f32 %v576, %v4475
      %v4811 = vmul.f32 %v577, %v4477
      %v4812 = vmul.f32 %v578, %v4479
      %v4813 = vmul.f32 %v579, %v4481
      %v4814 = vmul.f32 %v580, %v4483
      %v4815 = vmul.f32 %v581, %v4485
      %v4816 = vmul.f32 %v582, %v4487
      %v4817 = vmul.f32 %v583, %v4489
      %v4818 = vmul.f32 %v584, %v4491
      %v4819 = vmul.f32 %v585, %v4493
      %v4820 = vmul.f32 %v586, %v4495
      %v4821 = vmul.f32 %v587, %v4497
      %v4822 = vmul.f32 %v588, %v4499
      %v4823 = vmul.f32 %v589, %v4501
      %v4824 = vmul.f32 %v590, %v4503
      %v4825 = vmul.f32 %v591, %v4505
      %v4826 = vmul.f32 %v592, %v4507
      %v4827 = vmul.f32 %v593, %v4509
      %v4828 = vmul.f32 %v594, %v4511
      %v4829 = vmul.f32 %v595, %v4513
      %v4830 = vmul.f32 %v596, %v4515
      %v4831 = vmul.f32 %v597, %v4517
      %v4832 = vmul.f32 %v598, %v4519
      %v4833 = vmul.f32 %v599, %v4521
      %v4834 = vmul.f32 %v600, %v4523
      %v4835 = vmul.f32 %v601, %v4525
      %v4836 = vmul.f32 %v602, %v4527
      %v4837 = vmul.f32 %v603, %v4529
      %v4838 = vmul.f32 %v604, %v4531
      %v4839 = vmul.f32 %v605, %v4533
      %v4840 = vmul.f32 %v606, %v4535
      %v4841 = vmul.f32 %v607, %v4537
      %v4842 = vmul.f32 %v608, %v4539
      %v4843 = vmul.f32 %v609, %v4541
      %v4844 = vmul.f32 %v610, %v4543
      %v4845 = vmul.f32 %v611, %v4545
      %v4846 = vmul.f32 %v612, %v4547
      %v4847 = vmul.f32 %v613, %v4549
      %v4848 = vmul.f32 %v614, %v4551
      %v4849 = vmul.f32 %v615, %v4553
      %v4850 = vmul.f32 %v616, %v4555
      %v4851 = vmul.f32 %v617, %v4557
      %v4852 = vmul.f32 %v618, %v4559
      %v4853 = vmul.f32 %v619, %v4561
      %v4854 = vmul.f32 %v620, %v4563
      %v4855 = vmul.f32 %v621, %v4565
      %v4856 = vmul.f32 %v622, %v4567
      %v4857 = vmul.f32 %v623, %v4569
      %v4858 = vmul.f32 %v624, %v4571
      %v4859 = vmul.f32 %v625, %v4573
      %v4860 = vmul.f32 %v626, %v4575
      %v4861 = vmul.f32 %v627, %v4577
      %v4862 = vmul.f32 %v628, %v4579
      %v4863 = vmul.f32 %v629, %v4581
      %v4864 = vmul.f32 %v630, %v4583
      %v4865 = vmul.f32 %v631, %v4585
      %v4866 = vmul.f32 %v632, %v4587
      %v4867 = vmul.f32 %v633, %v4589
      %v4868 = vmul.f32 %v634, %v4591
      %v4869 = vmul.f32 %v635, %v4593
      %v4870 = vmul.f32 %v636, %v4595
      %v4871 = vmul.f32 %v637, %v4597
      %v4872 = vmul.f32 %v638, %v4599
      %v4873 = vmul.f32 %v639, %v4601
      %v4874 = vmul.f32 %v640, %v4603
      %v4875 = vmul.f32 %v641, %v4605
      %v4876 = vmul.f32 %v642, %v4607
      %v4877 = vmul.f32 %v643, %v4609
      %v4878 = vmul.f32 %v644, %v4611
      %v4879 = vmul.f32 %v645, %v4613
      %v4880 = vmul.f32 %v646, %v4615
      %v4881 = vmul.f32 %v647, %v4617
      %v4882 = vmul.f32 %v648, %v4619
      %v4883 = vmul.f32 %v649, %v4621
      %v4884 = vmul.f32 %v650, %v4623
      %v4885 = vmul.f32 %v651, %v4625
      %v4886 = vmul.f32 %v652, %v4627
      %v4887 = vmul.f32 %v653, %v4629
      %v4888 = vmul.f32 %v654, %v4631
      %v4889 = vmul.f32 %v655, %v4633
      %v4890 = vsub.f32 0.0, %v4762
      %v4891 = vsub.f32 0.0, %v4763
      %v4892 = vsub.f32 0.0, %v4764
      %v4893 = vsub.f32 0.0, %v4765
      %v4894 = vsub.f32 0.0, %v4766
      %v4895 = vsub.f32 0.0, %v4767
      %v4896 = vsub.f32 0.0, %v4768
      %v4897 = vsub.f32 0.0, %v4769
      %v4898 = vsub.f32 0.0, %v4770
      %v4899 = vsub.f32 0.0, %v4771
      %v4900 = vsub.f32 0.0, %v4772
      %v4901 = vsub.f32 0.0, %v4773
      %v4902 = vsub.f32 0.0, %v4774
      %v4903 = vsub.f32 0.0, %v4775
      %v4904 = vsub.f32 0.0, %v4776
      %v4905 = vsub.f32 0.0, %v4777
      %v4906 = vsub.f32 0.0, %v4778
      %v4907 = vsub.f32 0.0, %v4779
      %v4908 = vsub.f32 0.0, %v4780
      %v4909 = vsub.f32 0.0, %v4781
      %v4910 = vsub.f32 0.0, %v4782
      %v4911 = vsub.f32 0.0, %v4783
      %v4912 = vsub.f32 0.0, %v4784
      %v4913 = vsub.f32 0.0, %v4785
      %v4914 = vsub.f32 0.0, %v4786
      %v4915 = vsub.f32 0.0, %v4787
      %v4916 = vsub.f32 0.0, %v4788
      %v4917 = vsub.f32 0.0, %v4789
      %v4918 = vsub.f32 0.0, %v4790
      %v4919 = vsub.f32 0.0, %v4791
      %v4920 = vsub.f32 0.0, %v4792
      %v4921 = vsub.f32 0.0, %v4793
      %v4922 = vsub.f32 0.0, %v4794
      %v4923 = vsub.f32 0.0, %v4795
      %v4924 = vsub.f32 0.0, %v4796
      %v4925 = vsub.f32 0.0, %v4797
      %v4926 = vsub.f32 0.0, %v4798
      %v4927 = vsub.f32 0.0, %v4799
      %v4928 = vsub.f32 0.0, %v4800
      %v4929 = vsub.f32 0.0, %v4801
      %v4930 = vsub.f32 0.0, %v4802
      %v4931 = vsub.f32 0.0, %v4803
      %v4932 = vsub.f32 0.0, %v4804
      %v4933 = vsub.f32 0.0, %v4805
      %v4934 = vsub.f32 0.0, %v4806
      %v4935 = vsub.f32 0.0, %v4807
      %v4936 = vsub.f32 0.0, %v4808
      %v4937 = vsub.f32 0.0, %v4809
      %v4938 = vsub.f32 0.0, %v4810
      %v4939 = vsub.f32 0.0, %v4811
      %v4940 = vsub.f32 0.0, %v4812
      %v4941 = vsub.f32 0.0, %v4813
      %v4942 = vsub.f32 0.0, %v4814
      %v4943 = vsub.f32 0.0, %v4815
      %v4944 = vsub.f32 0.0, %v4816
      %v4945 = vsub.f32 0.0, %v4817
      %v4946 = vsub.f32 0.0, %v4818
      %v4947 = vsub.f32 0.0, %v4819
      %v4948 = vsub.f32 0.0, %v4820
      %v4949 = vsub.f32 0.0, %v4821
      %v4950 = vsub.f32 0.0, %v4822
      %v4951 = vsub.f32 0.0, %v4823
      %v4952 = vsub.f32 0.0, %v4824
      %v4953 = vsub.f32 0.0, %v4825
      %v4954 = vsub.f32 0.0, %v4826
      %v4955 = vsub.f32 0.0, %v4827
      %v4956 = vsub.f32 0.0, %v4828
      %v4957 = vsub.f32 0.0, %v4829
      %v4958 = vsub.f32 0.0, %v4830
      %v4959 = vsub.f32 0.0, %v4831
      %v4960 = vsub.f32 0.0, %v4832
      %v4961 = vsub.f32 0.0, %v4833
      %v4962 = vsub.f32 0.0, %v4834
      %v4963 = vsub.f32 0.0, %v4835
      %v4964 = vsub.f32 0.0, %v4836
      %v4965 = vsub.f32 0.0, %v4837
      %v4966 = vsub.f32 0.0, %v4838
      %v4967 = vsub.f32 0.0, %v4839
      %v4968 = vsub.f32 0.0, %v4840
      %v4969 = vsub.f32 0.0, %v4841
      %v4970 = vsub.f32 0.0, %v4842
      %v4971 = vsub.f32 0.0, %v4843
      %v4972 = vsub.f32 0.0, %v4844
      %v4973 = vsub.f32 0.0, %v4845
      %v4974 = vsub.f32 0.0, %v4846
      %v4975 = vsub.f32 0.0, %v4847
      %v4976 = vsub.f32 0.0, %v4848
      %v4977 = vsub.f32 0.0, %v4849
      %v4978 = vsub.f32 0.0, %v4850
      %v4979 = vsub.f32 0.0, %v4851
      %v4980 = vsub.f32 0.0, %v4852
      %v4981 = vsub.f32 0.0, %v4853
      %v4982 = vsub.f32 0.0, %v4854
      %v4983 = vsub.f32 0.0, %v4855
      %v4984 = vsub.f32 0.0, %v4856
      %v4985 = vsub.f32 0.0, %v4857
      %v4986 = vsub.f32 0.0, %v4858
      %v4987 = vsub.f32 0.0, %v4859
      %v4988 = vsub.f32 0.0, %v4860
      %v4989 = vsub.f32 0.0, %v4861
      %v4990 = vsub.f32 0.0, %v4862
      %v4991 = vsub.f32 0.0, %v4863
      %v4992 = vsub.f32 0.0, %v4864
      %v4993 = vsub.f32 0.0, %v4865
      %v4994 = vsub.f32 0.0, %v4866
      %v4995 = vsub.f32 0.0, %v4867
      %v4996 = vsub.f32 0.0, %v4868
      %v4997 = vsub.f32 0.0, %v4869
      %v4998 = vsub.f32 0.0, %v4870
      %v4999 = vsub.f32 0.0, %v4871
      %v5000 = vsub.f32 0.0, %v4872
      %v5001 = vsub.f32 0.0, %v4873
      %v5002 = vsub.f32 0.0, %v4874
      %v5003 = vsub.f32 0.0, %v4875
      %v5004 = vsub.f32 0.0, %v4876
      %v5005 = vsub.f32 0.0, %v4877
      %v5006 = vsub.f32 0.0, %v4878
      %v5007 = vsub.f32 0.0, %v4879
      %v5008 = vsub.f32 0.0, %v4880
      %v5009 = vsub.f32 0.0, %v4881
      %v5010 = vsub.f32 0.0, %v4882
      %v5011 = vsub.f32 0.0, %v4883
      %v5012 = vsub.f32 0.0, %v4884
      %v5013 = vsub.f32 0.0, %v4885
      %v5014 = vsub.f32 0.0, %v4886
      %v5015 = vsub.f32 0.0, %v4887
      %v5016 = vsub.f32 0.0, %v4888
      %v5017 = vsub.f32 0.0, %v4889
      %v5018 = vmul.f32 %v4890, 1.442695
      %v5019 = vpow.pop %v5018
      %v5020 = vmul.f32 %v4891, 1.442695
      %v5021 = vpow.pop %v5020
      %v5022 = vmul.f32 %v4892, 1.442695
      %v5023 = vpow.pop %v5022
      %v5024 = vmul.f32 %v4893, 1.442695
      %v5025 = vpow.pop %v5024
      %v5026 = vmul.f32 %v4894, 1.442695
      %v5027 = vpow.pop %v5026
      %v5028 = vmul.f32 %v4895, 1.442695
      %v5029 = vpow.pop %v5028
      %v5030 = vmul.f32 %v4896, 1.442695
      %v5031 = vpow.pop %v5030
      %v5032 = vmul.f32 %v4897, 1.442695
      %v5033 = vpow.pop %v5032
      %v5034 = vmul.f32 %v4898, 1.442695
      %v5035 = vpow.pop %v5034
      %v5036 = vmul.f32 %v4899, 1.442695
      %v5037 = vpow.pop %v5036
      %v5038 = vmul.f32 %v4900, 1.442695
      %v5039 = vpow.pop %v5038
      %v5040 = vmul.f32 %v4901, 1.442695
      %v5041 = vpow.pop %v5040
      %v5042 = vmul.f32 %v4902, 1.442695
      %v5043 = vpow.pop %v5042
      %v5044 = vmul.f32 %v4903, 1.442695
      %v5045 = vpow.pop %v5044
      %v5046 = vmul.f32 %v4904, 1.442695
      %v5047 = vpow.pop %v5046
      %v5048 = vmul.f32 %v4905, 1.442695
      %v5049 = vpow.pop %v5048
      %v5050 = vmul.f32 %v4906, 1.442695
      %v5051 = vpow.pop %v5050
      %v5052 = vmul.f32 %v4907, 1.442695
      %v5053 = vpow.pop %v5052
      %v5054 = vmul.f32 %v4908, 1.442695
      %v5055 = vpow.pop %v5054
      %v5056 = vmul.f32 %v4909, 1.442695
      %v5057 = vpow.pop %v5056
      %v5058 = vmul.f32 %v4910, 1.442695
      %v5059 = vpow.pop %v5058
      %v5060 = vmul.f32 %v4911, 1.442695
      %v5061 = vpow.pop %v5060
      %v5062 = vmul.f32 %v4912, 1.442695
      %v5063 = vpow.pop %v5062
      %v5064 = vmul.f32 %v4913, 1.442695
      %v5065 = vpow.pop %v5064
      %v5066 = vmul.f32 %v4914, 1.442695
      %v5067 = vpow.pop %v5066
      %v5068 = vmul.f32 %v4915, 1.442695
      %v5069 = vpow.pop %v5068
      %v5070 = vmul.f32 %v4916, 1.442695
      %v5071 = vpow.pop %v5070
      %v5072 = vmul.f32 %v4917, 1.442695
      %v5073 = vpow.pop %v5072
      %v5074 = vmul.f32 %v4918, 1.442695
      %v5075 = vpow.pop %v5074
      %v5076 = vmul.f32 %v4919, 1.442695
      %v5077 = vpow.pop %v5076
      %v5078 = vmul.f32 %v4920, 1.442695
      %v5079 = vpow.pop %v5078
      %v5080 = vmul.f32 %v4921, 1.442695
      %v5081 = vpow.pop %v5080
      %v5082 = vmul.f32 %v4922, 1.442695
      %v5083 = vpow.pop %v5082
      %v5084 = vmul.f32 %v4923, 1.442695
      %v5085 = vpow.pop %v5084
      %v5086 = vmul.f32 %v4924, 1.442695
      %v5087 = vpow.pop %v5086
      %v5088 = vmul.f32 %v4925, 1.442695
      %v5089 = vpow.pop %v5088
      %v5090 = vmul.f32 %v4926, 1.442695
      %v5091 = vpow.pop %v5090
      %v5092 = vmul.f32 %v4927, 1.442695
      %v5093 = vpow.pop %v5092
      %v5094 = vmul.f32 %v4928, 1.442695
      %v5095 = vpow.pop %v5094
      %v5096 = vmul.f32 %v4929, 1.442695
      %v5097 = vpow.pop %v5096
      %v5098 = vmul.f32 %v4930, 1.442695
      %v5099 = vpow.pop %v5098
      %v5100 = vmul.f32 %v4931, 1.442695
      %v5101 = vpow.pop %v5100
      %v5102 = vmul.f32 %v4932, 1.442695
      %v5103 = vpow.pop %v5102
      %v5104 = vmul.f32 %v4933, 1.442695
      %v5105 = vpow.pop %v5104
      %v5106 = vmul.f32 %v4934, 1.442695
      %v5107 = vpow.pop %v5106
      %v5108 = vmul.f32 %v4935, 1.442695
      %v5109 = vpow.pop %v5108
      %v5110 = vmul.f32 %v4936, 1.442695
      %v5111 = vpow.pop %v5110
      %v5112 = vmul.f32 %v4937, 1.442695
      %v5113 = vpow.pop %v5112
      %v5114 = vmul.f32 %v4938, 1.442695
      %v5115 = vpow.pop %v5114
      %v5116 = vmul.f32 %v4939, 1.442695
      %v5117 = vpow.pop %v5116
      %v5118 = vmul.f32 %v4940, 1.442695
      %v5119 = vpow.pop %v5118
      %v5120 = vmul.f32 %v4941, 1.442695
      %v5121 = vpow.pop %v5120
      %v5122 = vmul.f32 %v4942, 1.442695
      %v5123 = vpow.pop %v5122
      %v5124 = vmul.f32 %v4943, 1.442695
      %v5125 = vpow.pop %v5124
      %v5126 = vmul.f32 %v4944, 1.442695
      %v5127 = vpow.pop %v5126
      %v5128 = vmul.f32 %v4945, 1.442695
      %v5129 = vpow.pop %v5128
      %v5130 = vmul.f32 %v4946, 1.442695
      %v5131 = vpow.pop %v5130
      %v5132 = vmul.f32 %v4947, 1.442695
      %v5133 = vpow.pop %v5132
      %v5134 = vmul.f32 %v4948, 1.442695
      %v5135 = vpow.pop %v5134
      %v5136 = vmul.f32 %v4949, 1.442695
      %v5137 = vpow.pop %v5136
      %v5138 = vmul.f32 %v4950, 1.442695
      %v5139 = vpow.pop %v5138
      %v5140 = vmul.f32 %v4951, 1.442695
      %v5141 = vpow.pop %v5140
      %v5142 = vmul.f32 %v4952, 1.442695
      %v5143 = vpow.pop %v5142
      %v5144 = vmul.f32 %v4953, 1.442695
      %v5145 = vpow.pop %v5144
      %v5146 = vmul.f32 %v4954, 1.442695
      %v5147 = vpow.pop %v5146
      %v5148 = vmul.f32 %v4955, 1.442695
      %v5149 = vpow.pop %v5148
      %v5150 = vmul.f32 %v4956, 1.442695
      %v5151 = vpow.pop %v5150
      %v5152 = vmul.f32 %v4957, 1.442695
      %v5153 = vpow.pop %v5152
      %v5154 = vmul.f32 %v4958, 1.442695
      %v5155 = vpow.pop %v5154
      %v5156 = vmul.f32 %v4959, 1.442695
      %v5157 = vpow.pop %v5156
      %v5158 = vmul.f32 %v4960, 1.442695
      %v5159 = vpow.pop %v5158
      %v5160 = vmul.f32 %v4961, 1.442695
      %v5161 = vpow.pop %v5160
      %v5162 = vmul.f32 %v4962, 1.442695
      %v5163 = vpow.pop %v5162
      %v5164 = vmul.f32 %v4963, 1.442695
      %v5165 = vpow.pop %v5164
      %v5166 = vmul.f32 %v4964, 1.442695
      %v5167 = vpow.pop %v5166
      %v5168 = vmul.f32 %v4965, 1.442695
      %v5169 = vpow.pop %v5168
      %v5170 = vmul.f32 %v4966, 1.442695
      %v5171 = vpow.pop %v5170
      %v5172 = vmul.f32 %v4967, 1.442695
      %v5173 = vpow.pop %v5172
      %v5174 = vmul.f32 %v4968, 1.442695
      %v5175 = vpow.pop %v5174
      %v5176 = vmul.f32 %v4969, 1.442695
      %v5177 = vpow.pop %v5176
      %v5178 = vmul.f32 %v4970, 1.442695
      %v5179 = vpow.pop %v5178
      %v5180 = vmul.f32 %v4971, 1.442695
      %v5181 = vpow.pop %v5180
      %v5182 = vmul.f32 %v4972, 1.442695
      %v5183 = vpow.pop %v5182
      %v5184 = vmul.f32 %v4973, 1.442695
      %v5185 = vpow.pop %v5184
      %v5186 = vmul.f32 %v4974, 1.442695
      %v5187 = vpow.pop %v5186
      %v5188 = vmul.f32 %v4975, 1.442695
      %v5189 = vpow.pop %v5188
      %v5190 = vmul.f32 %v4976, 1.442695
      %v5191 = vpow.pop %v5190
      %v5192 = vmul.f32 %v4977, 1.442695
      %v5193 = vpow.pop %v5192
      %v5194 = vmul.f32 %v4978, 1.442695
      %v5195 = vpow.pop %v5194
      %v5196 = vmul.f32 %v4979, 1.442695
      %v5197 = vpow.pop %v5196
      %v5198 = vmul.f32 %v4980, 1.442695
      %v5199 = vpow.pop %v5198
      %v5200 = vmul.f32 %v4981, 1.442695
      %v5201 = vpow.pop %v5200
      %v5202 = vmul.f32 %v4982, 1.442695
      %v5203 = vpow.pop %v5202
      %v5204 = vmul.f32 %v4983, 1.442695
      %v5205 = vpow.pop %v5204
      %v5206 = vmul.f32 %v4984, 1.442695
      %v5207 = vpow.pop %v5206
      %v5208 = vmul.f32 %v4985, 1.442695
      %v5209 = vpow.pop %v5208
      %v5210 = vmul.f32 %v4986, 1.442695
      %v5211 = vpow.pop %v5210
      %v5212 = vmul.f32 %v4987, 1.442695
      %v5213 = vpow.pop %v5212
      %v5214 = vmul.f32 %v4988, 1.442695
      %v5215 = vpow.pop %v5214
      %v5216 = vmul.f32 %v4989, 1.442695
      %v5217 = vpow.pop %v5216
      %v5218 = vmul.f32 %v4990, 1.442695
      %v5219 = vpow.pop %v5218
      %v5220 = vmul.f32 %v4991, 1.442695
      %v5221 = vpow.pop %v5220
      %v5222 = vmul.f32 %v4992, 1.442695
      %v5223 = vpow.pop %v5222
      %v5224 = vmul.f32 %v4993, 1.442695
      %v5225 = vpow.pop %v5224
      %v5226 = vmul.f32 %v4994, 1.442695
      %v5227 = vpow.pop %v5226
      %v5228 = vmul.f32 %v4995, 1.442695
      %v5229 = vpow.pop %v5228
      %v5230 = vmul.f32 %v4996, 1.442695
      %v5231 = vpow.pop %v5230
      %v5232 = vmul.f32 %v4997, 1.442695
      %v5233 = vpow.pop %v5232
      %v5234 = vmul.f32 %v4998, 1.442695
      %v5235 = vpow.pop %v5234
      %v5236 = vmul.f32 %v4999, 1.442695
      %v5237 = vpow.pop %v5236
      %v5238 = vmul.f32 %v5000, 1.442695
      %v5239 = vpow.pop %v5238
      %v5240 = vmul.f32 %v5001, 1.442695
      %v5241 = vpow.pop %v5240
      %v5242 = vmul.f32 %v5002, 1.442695
      %v5243 = vpow.pop %v5242
      %v5244 = vmul.f32 %v5003, 1.442695
      %v5245 = vpow.pop %v5244
      %v5246 = vmul.f32 %v5004, 1.442695
      %v5247 = vpow.pop %v5246
      %v5248 = vmul.f32 %v5005, 1.442695
      %v5249 = vpow.pop %v5248
      %v5250 = vmul.f32 %v5006, 1.442695
      %v5251 = vpow.pop %v5250
      %v5252 = vmul.f32 %v5007, 1.442695
      %v5253 = vpow.pop %v5252
      %v5254 = vmul.f32 %v5008, 1.442695
      %v5255 = vpow.pop %v5254
      %v5256 = vmul.f32 %v5009, 1.442695
      %v5257 = vpow.pop %v5256
      %v5258 = vmul.f32 %v5010, 1.442695
      %v5259 = vpow.pop %v5258
      %v5260 = vmul.f32 %v5011, 1.442695
      %v5261 = vpow.pop %v5260
      %v5262 = vmul.f32 %v5012, 1.442695
      %v5263 = vpow.pop %v5262
      %v5264 = vmul.f32 %v5013, 1.442695
      %v5265 = vpow.pop %v5264
      %v5266 = vmul.f32 %v5014, 1.442695
      %v5267 = vpow.pop %v5266
      %v5268 = vmul.f32 %v5015, 1.442695
      %v5269 = vpow.pop %v5268
      %v5270 = vmul.f32 %v5016, 1.442695
      %v5271 = vpow.pop %v5270
      %v5272 = vmul.f32 %v5017, 1.442695
      %v5273 = vpow.pop %v5272
      %v5274 = vmul.f32 %v4250, %v5019
      %v5275 = vmul.f32 %v4251, %v5021
      %v5276 = vmul.f32 %v4252, %v5023
      %v5277 = vmul.f32 %v4253, %v5025
      %v5278 = vmul.f32 %v4254, %v5027
      %v5279 = vmul.f32 %v4255, %v5029
      %v5280 = vmul.f32 %v4256, %v5031
      %v5281 = vmul.f32 %v4257, %v5033
      %v5282 = vmul.f32 %v4258, %v5035
      %v5283 = vmul.f32 %v4259, %v5037
      %v5284 = vmul.f32 %v4260, %v5039
      %v5285 = vmul.f32 %v4261, %v5041
      %v5286 = vmul.f32 %v4262, %v5043
      %v5287 = vmul.f32 %v4263, %v5045
      %v5288 = vmul.f32 %v4264, %v5047
      %v5289 = vmul.f32 %v4265, %v5049
      %v5290 = vmul.f32 %v4266, %v5051
      %v5291 = vmul.f32 %v4267, %v5053
      %v5292 = vmul.f32 %v4268, %v5055
      %v5293 = vmul.f32 %v4269, %v5057
      %v5294 = vmul.f32 %v4270, %v5059
      %v5295 = vmul.f32 %v4271, %v5061
      %v5296 = vmul.f32 %v4272, %v5063
      %v5297 = vmul.f32 %v4273, %v5065
      %v5298 = vmul.f32 %v4274, %v5067
      %v5299 = vmul.f32 %v4275, %v5069
      %v5300 = vmul.f32 %v4276, %v5071
      %v5301 = vmul.f32 %v4277, %v5073
      %v5302 = vmul.f32 %v4278, %v5075
      %v5303 = vmul.f32 %v4279, %v5077
      %v5304 = vmul.f32 %v4280, %v5079
      %v5305 = vmul.f32 %v4281, %v5081
      %v5306 = vmul.f32 %v4282, %v5083
      %v5307 = vmul.f32 %v4283, %v5085
      %v5308 = vmul.f32 %v4284, %v5087
      %v5309 = vmul.f32 %v4285, %v5089
      %v5310 = vmul.f32 %v4286, %v5091
      %v5311 = vmul.f32 %v4287, %v5093
      %v5312 = vmul.f32 %v4288, %v5095
      %v5313 = vmul.f32 %v4289, %v5097
      %v5314 = vmul.f32 %v4290, %v5099
      %v5315 = vmul.f32 %v4291, %v5101
      %v5316 = vmul.f32 %v4292, %v5103
      %v5317 = vmul.f32 %v4293, %v5105
      %v5318 = vmul.f32 %v4294, %v5107
      %v5319 = vmul.f32 %v4295, %v5109
      %v5320 = vmul.f32 %v4296, %v5111
      %v5321 = vmul.f32 %v4297, %v5113
      %v5322 = vmul.f32 %v4298, %v5115
      %v5323 = vmul.f32 %v4299, %v5117
      %v5324 = vmul.f32 %v4300, %v5119
      %v5325 = vmul.f32 %v4301, %v5121
      %v5326 = vmul.f32 %v4302, %v5123
      %v5327 = vmul.f32 %v4303, %v5125
      %v5328 = vmul.f32 %v4304, %v5127
      %v5329 = vmul.f32 %v4305, %v5129
      %v5330 = vmul.f32 %v4306, %v5131
      %v5331 = vmul.f32 %v4307, %v5133
      %v5332 = vmul.f32 %v4308, %v5135
      %v5333 = vmul.f32 %v4309, %v5137
      %v5334 = vmul.f32 %v4310, %v5139
      %v5335 = vmul.f32 %v4311, %v5141
      %v5336 = vmul.f32 %v4312, %v5143
      %v5337 = vmul.f32 %v4313, %v5145
      %v5338 = vmul.f32 %v4314, %v5147
      %v5339 = vmul.f32 %v4315, %v5149
      %v5340 = vmul.f32 %v4316, %v5151
      %v5341 = vmul.f32 %v4317, %v5153
      %v5342 = vmul.f32 %v4318, %v5155
      %v5343 = vmul.f32 %v4319, %v5157
      %v5344 = vmul.f32 %v4320, %v5159
      %v5345 = vmul.f32 %v4321, %v5161
      %v5346 = vmul.f32 %v4322, %v5163
      %v5347 = vmul.f32 %v4323, %v5165
      %v5348 = vmul.f32 %v4324, %v5167
      %v5349 = vmul.f32 %v4325, %v5169
      %v5350 = vmul.f32 %v4326, %v5171
      %v5351 = vmul.f32 %v4327, %v5173
      %v5352 = vmul.f32 %v4328, %v5175
      %v5353 = vmul.f32 %v4329, %v5177
      %v5354 = vmul.f32 %v4330, %v5179
      %v5355 = vmul.f32 %v4331, %v5181
      %v5356 = vmul.f32 %v4332, %v5183
      %v5357 = vmul.f32 %v4333, %v5185
      %v5358 = vmul.f32 %v4334, %v5187
      %v5359 = vmul.f32 %v4335, %v5189
      %v5360 = vmul.f32 %v4336, %v5191
      %v5361 = vmul.f32 %v4337, %v5193
      %v5362 = vmul.f32 %v4338, %v5195
      %v5363 = vmul.f32 %v4339, %v5197
      %v5364 = vmul.f32 %v4340, %v5199
      %v5365 = vmul.f32 %v4341, %v5201
      %v5366 = vmul.f32 %v4342, %v5203
      %v5367 = vmul.f32 %v4343, %v5205
      %v5368 = vmul.f32 %v4344, %v5207
      %v5369 = vmul.f32 %v4345, %v5209
      %v5370 = vmul.f32 %v4346, %v5211
      %v5371 = vmul.f32 %v4347, %v5213
      %v5372 = vmul.f32 %v4348, %v5215
      %v5373 = vmul.f32 %v4349, %v5217
      %v5374 = vmul.f32 %v4350, %v5219
      %v5375 = vmul.f32 %v4351, %v5221
      %v5376 = vmul.f32 %v4352, %v5223
      %v5377 = vmul.f32 %v4353, %v5225
      %v5378 = vmul.f32 %v4354, %v5227
      %v5379 = vmul.f32 %v4355, %v5229
      %v5380 = vmul.f32 %v4356, %v5231
      %v5381 = vmul.f32 %v4357, %v5233
      %v5382 = vmul.f32 %v4358, %v5235
      %v5383 = vmul.f32 %v4359, %v5237
      %v5384 = vmul.f32 %v4360, %v5239
      %v5385 = vmul.f32 %v4361, %v5241
      %v5386 = vmul.f32 %v4362, %v5243
      %v5387 = vmul.f32 %v4363, %v5245
      %v5388 = vmul.f32 %v4364, %v5247
      %v5389 = vmul.f32 %v4365, %v5249
      %v5390 = vmul.f32 %v4366, %v5251
      %v5391 = vmul.f32 %v4367, %v5253
      %v5392 = vmul.f32 %v4368, %v5255
      %v5393 = vmul.f32 %v4369, %v5257
      %v5394 = vmul.f32 %v4370, %v5259
      %v5395 = vmul.f32 %v4371, %v5261
      %v5396 = vmul.f32 %v4372, %v5263
      %v5397 = vmul.f32 %v4373, %v5265
      %v5398 = vmul.f32 %v4374, %v5267
      %v5399 = vmul.f32 %v4375, %v5269
      %v5400 = vmul.f32 %v4376, %v5271
      %v5401 = vmul.f32 %v4377, %v5273
      %5530 = vrot.lane.b32.xlu0 %v2204, 45
      %v5531 = vpop.permute.xlu0 %5530
      %5532 = vrot.lane.b32.xlu0 %v2209, 45
      %v5533 = vpop.permute.xlu0 %5532
      %5534 = vrot.lane.b32.xlu0 %v2214, 45
      %v5535 = vpop.permute.xlu0 %5534
      %5536 = vrot.lane.b32.xlu0 %v2219, 45
      %v5537 = vpop.permute.xlu0 %5536
      %5538 = vrot.lane.b32.xlu0 %v2224, 45
      %v5539 = vpop.permute.xlu0 %5538
      %5540 = vrot.lane.b32.xlu0 %v2229, 45
      %v5541 = vpop.permute.xlu0 %5540
      %5542 = vrot.lane.b32.xlu0 %v2234, 45
      %v5543 = vpop.permute.xlu0 %5542
      %5544 = vrot.lane.b32.xlu0 %v2239, 45
      %v5545 = vpop.permute.xlu0 %5544
      %5546 = vrot.lane.b32.xlu0 %v2244, 45
      %v5547 = vpop.permute.xlu0 %5546
      %5548 = vrot.lane.b32.xlu0 %v2249, 45
      %v5549 = vpop.permute.xlu0 %5548
      %5550 = vrot.lane.b32.xlu0 %v2254, 45
      %v5551 = vpop.permute.xlu0 %5550
      %5552 = vrot.lane.b32.xlu0 %v2259, 45
      %v5553 = vpop.permute.xlu0 %5552
      %5554 = vrot.lane.b32.xlu0 %v2264, 45
      %v5555 = vpop.permute.xlu0 %5554
      %5556 = vrot.lane.b32.xlu0 %v2269, 45
      %v5557 = vpop.permute.xlu0 %5556
      %5558 = vrot.lane.b32.xlu0 %v2274, 45
      %v5559 = vpop.permute.xlu0 %5558
      %5560 = vrot.lane.b32.xlu0 %v2279, 45
      %v5561 = vpop.permute.xlu0 %5560
      %5562 = vrot.lane.b32.xlu0 %v2284, 45
      %v5563 = vpop.permute.xlu0 %5562
      %5564 = vrot.lane.b32.xlu0 %v2289, 45
      %v5565 = vpop.permute.xlu0 %5564
      %5566 = vrot.lane.b32.xlu0 %v2294, 45
      %v5567 = vpop.permute.xlu0 %5566
      %5568 = vrot.lane.b32.xlu0 %v2299, 45
      %v5569 = vpop.permute.xlu0 %5568
      %5570 = vrot.lane.b32.xlu0 %v2304, 45
      %v5571 = vpop.permute.xlu0 %5570
      %5572 = vrot.lane.b32.xlu0 %v2309, 45
      %v5573 = vpop.permute.xlu0 %5572
      %5574 = vrot.lane.b32.xlu0 %v2314, 45
      %v5575 = vpop.permute.xlu0 %5574
      %5576 = vrot.lane.b32.xlu0 %v2319, 45
      %v5577 = vpop.permute.xlu0 %5576
      %5578 = vrot.lane.b32.xlu0 %v2324, 45
      %v5579 = vpop.permute.xlu0 %5578
      %5580 = vrot.lane.b32.xlu0 %v2329, 45
      %v5581 = vpop.permute.xlu0 %5580
      %5582 = vrot.lane.b32.xlu0 %v2334, 45
      %v5583 = vpop.permute.xlu0 %5582
      %5584 = vrot.lane.b32.xlu0 %v2339, 45
      %v5585 = vpop.permute.xlu0 %5584
      %5586 = vrot.lane.b32.xlu0 %v2344, 45
      %v5587 = vpop.permute.xlu0 %5586
      %5588 = vrot.lane.b32.xlu0 %v2349, 45
      %v5589 = vpop.permute.xlu0 %5588
      %5590 = vrot.lane.b32.xlu0 %v2354, 45
      %v5591 = vpop.permute.xlu0 %5590
      %5592 = vrot.lane.b32.xlu0 %v2359, 45
      %v5593 = vpop.permute.xlu0 %5592
      %5594 = vrot.lane.b32.xlu0 %v2364, 45
      %v5595 = vpop.permute.xlu0 %5594
      %5596 = vrot.lane.b32.xlu0 %v2369, 45
      %v5597 = vpop.permute.xlu0 %5596
      %5598 = vrot.lane.b32.xlu0 %v2374, 45
      %v5599 = vpop.permute.xlu0 %5598
      %5600 = vrot.lane.b32.xlu0 %v2379, 45
      %v5601 = vpop.permute.xlu0 %5600
      %5602 = vrot.lane.b32.xlu0 %v2384, 45
      %v5603 = vpop.permute.xlu0 %5602
      %5604 = vrot.lane.b32.xlu0 %v2389, 45
      %v5605 = vpop.permute.xlu0 %5604
      %5606 = vrot.lane.b32.xlu0 %v2394, 45
      %v5607 = vpop.permute.xlu0 %5606
      %5608 = vrot.lane.b32.xlu0 %v2399, 45
      %v5609 = vpop.permute.xlu0 %5608
      %5610 = vrot.lane.b32.xlu0 %v2404, 45
      %v5611 = vpop.permute.xlu0 %5610
      %5612 = vrot.lane.b32.xlu0 %v2409, 45
      %v5613 = vpop.permute.xlu0 %5612
      %5614 = vrot.lane.b32.xlu0 %v2414, 45
      %v5615 = vpop.permute.xlu0 %5614
      %5616 = vrot.lane.b32.xlu0 %v2419, 45
      %v5617 = vpop.permute.xlu0 %5616
      %5618 = vrot.lane.b32.xlu0 %v2424, 45
      %v5619 = vpop.permute.xlu0 %5618
      %5620 = vrot.lane.b32.xlu0 %v2429, 45
      %v5621 = vpop.permute.xlu0 %5620
      %5622 = vrot.lane.b32.xlu0 %v2434, 45
      %v5623 = vpop.permute.xlu0 %5622
      %5624 = vrot.lane.b32.xlu0 %v2439, 45
      %v5625 = vpop.permute.xlu0 %5624
      %5626 = vrot.lane.b32.xlu0 %v2444, 45
      %v5627 = vpop.permute.xlu0 %5626
      %5628 = vrot.lane.b32.xlu0 %v2449, 45
      %v5629 = vpop.permute.xlu0 %5628
      %5630 = vrot.lane.b32.xlu0 %v2454, 45
      %v5631 = vpop.permute.xlu0 %5630
      %5632 = vrot.lane.b32.xlu0 %v2459, 45
      %v5633 = vpop.permute.xlu0 %5632
      %5634 = vrot.lane.b32.xlu0 %v2464, 45
      %v5635 = vpop.permute.xlu0 %5634
      %5636 = vrot.lane.b32.xlu0 %v2469, 45
      %v5637 = vpop.permute.xlu0 %5636
      %5638 = vrot.lane.b32.xlu0 %v2474, 45
      %v5639 = vpop.permute.xlu0 %5638
      %5640 = vrot.lane.b32.xlu0 %v2479, 45
      %v5641 = vpop.permute.xlu0 %5640
      %5642 = vrot.lane.b32.xlu0 %v2484, 45
      %v5643 = vpop.permute.xlu0 %5642
      %5644 = vrot.lane.b32.xlu0 %v2489, 45
      %v5645 = vpop.permute.xlu0 %5644
      %5646 = vrot.lane.b32.xlu0 %v2494, 45
      %v5647 = vpop.permute.xlu0 %5646
      %5648 = vrot.lane.b32.xlu0 %v2499, 45
      %v5649 = vpop.permute.xlu0 %5648
      %5650 = vrot.lane.b32.xlu0 %v2504, 45
      %v5651 = vpop.permute.xlu0 %5650
      %5652 = vrot.lane.b32.xlu0 %v2509, 45
      %v5653 = vpop.permute.xlu0 %5652
      %5654 = vrot.lane.b32.xlu0 %v2514, 45
      %v5655 = vpop.permute.xlu0 %5654
      %5656 = vrot.lane.b32.xlu0 %v2519, 45
      %v5657 = vpop.permute.xlu0 %5656
      %5658 = vrot.lane.b32.xlu0 %v2524, 45
      %v5659 = vpop.permute.xlu0 %5658
      %5660 = vrot.lane.b32.xlu0 %v2529, 45
      %v5661 = vpop.permute.xlu0 %5660
      %5662 = vrot.lane.b32.xlu0 %v2534, 45
      %v5663 = vpop.permute.xlu0 %5662
      %5664 = vrot.lane.b32.xlu0 %v2539, 45
      %v5665 = vpop.permute.xlu0 %5664
      %5666 = vrot.lane.b32.xlu0 %v2544, 45
      %v5667 = vpop.permute.xlu0 %5666
      %5668 = vrot.lane.b32.xlu0 %v2549, 45
      %v5669 = vpop.permute.xlu0 %5668
      %5670 = vrot.lane.b32.xlu0 %v2554, 45
      %v5671 = vpop.permute.xlu0 %5670
      %5672 = vrot.lane.b32.xlu0 %v2559, 45
      %v5673 = vpop.permute.xlu0 %5672
      %5674 = vrot.lane.b32.xlu0 %v2564, 45
      %v5675 = vpop.permute.xlu0 %5674
      %5676 = vrot.lane.b32.xlu0 %v2569, 45
      %v5677 = vpop.permute.xlu0 %5676
      %5678 = vrot.lane.b32.xlu0 %v2574, 45
      %v5679 = vpop.permute.xlu0 %5678
      %5680 = vrot.lane.b32.xlu0 %v2579, 45
      %v5681 = vpop.permute.xlu0 %5680
      %5682 = vrot.lane.b32.xlu0 %v2584, 45
      %v5683 = vpop.permute.xlu0 %5682
      %5684 = vrot.lane.b32.xlu0 %v2589, 45
      %v5685 = vpop.permute.xlu0 %5684
      %5686 = vrot.lane.b32.xlu0 %v2594, 45
      %v5687 = vpop.permute.xlu0 %5686
      %5688 = vrot.lane.b32.xlu0 %v2599, 45
      %v5689 = vpop.permute.xlu0 %5688
      %5690 = vrot.lane.b32.xlu0 %v2604, 45
      %v5691 = vpop.permute.xlu0 %5690
      %5692 = vrot.lane.b32.xlu0 %v2609, 45
      %v5693 = vpop.permute.xlu0 %5692
      %5694 = vrot.lane.b32.xlu0 %v2614, 45
      %v5695 = vpop.permute.xlu0 %5694
      %5696 = vrot.lane.b32.xlu0 %v2619, 45
      %v5697 = vpop.permute.xlu0 %5696
      %5698 = vrot.lane.b32.xlu0 %v2624, 45
      %v5699 = vpop.permute.xlu0 %5698
      %5700 = vrot.lane.b32.xlu0 %v2629, 45
      %v5701 = vpop.permute.xlu0 %5700
      %5702 = vrot.lane.b32.xlu0 %v2634, 45
      %v5703 = vpop.permute.xlu0 %5702
      %5704 = vrot.lane.b32.xlu0 %v2639, 45
      %v5705 = vpop.permute.xlu0 %5704
      %5706 = vrot.lane.b32.xlu0 %v2644, 45
      %v5707 = vpop.permute.xlu0 %5706
      %5708 = vrot.lane.b32.xlu0 %v2649, 45
      %v5709 = vpop.permute.xlu0 %5708
      %5710 = vrot.lane.b32.xlu0 %v2654, 45
      %v5711 = vpop.permute.xlu0 %5710
      %5712 = vrot.lane.b32.xlu0 %v2659, 45
      %v5713 = vpop.permute.xlu0 %5712
      %5714 = vrot.lane.b32.xlu0 %v2664, 45
      %v5715 = vpop.permute.xlu0 %5714
      %5716 = vrot.lane.b32.xlu0 %v2669, 45
      %v5717 = vpop.permute.xlu0 %5716
      %5718 = vrot.lane.b32.xlu0 %v2674, 45
      %v5719 = vpop.permute.xlu0 %5718
      %5720 = vrot.lane.b32.xlu0 %v2679, 45
      %v5721 = vpop.permute.xlu0 %5720
      %5722 = vrot.lane.b32.xlu0 %v2684, 45
      %v5723 = vpop.permute.xlu0 %5722
      %5724 = vrot.lane.b32.xlu0 %v2689, 45
      %v5725 = vpop.permute.xlu0 %5724
      %5726 = vrot.lane.b32.xlu0 %v2694, 45
      %v5727 = vpop.permute.xlu0 %5726
      %5728 = vrot.lane.b32.xlu0 %v2699, 45
      %v5729 = vpop.permute.xlu0 %5728
      %5730 = vrot.lane.b32.xlu0 %v2704, 45
      %v5731 = vpop.permute.xlu0 %5730
      %5732 = vrot.lane.b32.xlu0 %v2709, 45
      %v5733 = vpop.permute.xlu0 %5732
      %5734 = vrot.lane.b32.xlu0 %v2714, 45
      %v5735 = vpop.permute.xlu0 %5734
      %5736 = vrot.lane.b32.xlu0 %v2719, 45
      %v5737 = vpop.permute.xlu0 %5736
      %5738 = vrot.lane.b32.xlu0 %v2724, 45
      %v5739 = vpop.permute.xlu0 %5738
      %5740 = vrot.lane.b32.xlu0 %v2729, 45
      %v5741 = vpop.permute.xlu0 %5740
      %5742 = vrot.lane.b32.xlu0 %v2734, 45
      %v5743 = vpop.permute.xlu0 %5742
      %5744 = vrot.lane.b32.xlu0 %v2739, 45
      %v5745 = vpop.permute.xlu0 %5744
      %5746 = vrot.lane.b32.xlu0 %v2744, 45
      %v5747 = vpop.permute.xlu0 %5746
      %5748 = vrot.lane.b32.xlu0 %v2749, 45
      %v5749 = vpop.permute.xlu0 %5748
      %5750 = vrot.lane.b32.xlu0 %v2754, 45
      %v5751 = vpop.permute.xlu0 %5750
      %5752 = vrot.lane.b32.xlu0 %v2759, 45
      %v5753 = vpop.permute.xlu0 %5752
      %5754 = vrot.lane.b32.xlu0 %v2764, 45
      %v5755 = vpop.permute.xlu0 %5754
      %5756 = vrot.lane.b32.xlu0 %v2769, 45
      %v5757 = vpop.permute.xlu0 %5756
      %5758 = vrot.lane.b32.xlu0 %v2774, 45
      %v5759 = vpop.permute.xlu0 %5758
      %5760 = vrot.lane.b32.xlu0 %v2779, 45
      %v5761 = vpop.permute.xlu0 %5760
      %5762 = vrot.lane.b32.xlu0 %v2784, 45
      %v5763 = vpop.permute.xlu0 %5762
      %5764 = vrot.lane.b32.xlu0 %v2789, 45
      %v5765 = vpop.permute.xlu0 %5764
      %5766 = vrot.lane.b32.xlu0 %v2794, 45
      %v5767 = vpop.permute.xlu0 %5766
      %5768 = vrot.lane.b32.xlu0 %v2799, 45
      %v5769 = vpop.permute.xlu0 %5768
      %5770 = vrot.lane.b32.xlu0 %v2804, 45
      %v5771 = vpop.permute.xlu0 %5770
      %5772 = vrot.lane.b32.xlu0 %v2809, 45
      %v5773 = vpop.permute.xlu0 %5772
      %5774 = vrot.lane.b32.xlu0 %v2814, 45
      %v5775 = vpop.permute.xlu0 %5774
      %5776 = vrot.lane.b32.xlu0 %v2819, 45
      %v5777 = vpop.permute.xlu0 %5776
      %5778 = vrot.lane.b32.xlu0 %v2824, 45
      %v5779 = vpop.permute.xlu0 %5778
      %5780 = vrot.lane.b32.xlu0 %v2829, 45
      %v5781 = vpop.permute.xlu0 %5780
      %5782 = vrot.lane.b32.xlu0 %v2834, 45
      %v5783 = vpop.permute.xlu0 %5782
      %5784 = vrot.lane.b32.xlu0 %v2839, 45
      %v5785 = vpop.permute.xlu0 %5784
      %v5914 = vadd.f32 %v528, %v5531
      %v5915 = vadd.f32 %v529, %v5533
      %v5916 = vadd.f32 %v530, %v5535
      %v5917 = vadd.f32 %v531, %v5537
      %v5918 = vadd.f32 %v532, %v5539
      %v5919 = vadd.f32 %v533, %v5541
      %v5920 = vadd.f32 %v534, %v5543
      %v5921 = vadd.f32 %v535, %v5545
      %v5922 = vadd.f32 %v536, %v5547
      %v5923 = vadd.f32 %v537, %v5549
      %v5924 = vadd.f32 %v538, %v5551
      %v5925 = vadd.f32 %v539, %v5553
      %v5926 = vadd.f32 %v540, %v5555
      %v5927 = vadd.f32 %v541, %v5557
      %v5928 = vadd.f32 %v542, %v5559
      %v5929 = vadd.f32 %v543, %v5561
      %v5930 = vadd.f32 %v544, %v5563
      %v5931 = vadd.f32 %v545, %v5565
      %v5932 = vadd.f32 %v546, %v5567
      %v5933 = vadd.f32 %v547, %v5569
      %v5934 = vadd.f32 %v548, %v5571
      %v5935 = vadd.f32 %v549, %v5573
      %v5936 = vadd.f32 %v550, %v5575
      %v5937 = vadd.f32 %v551, %v5577
      %v5938 = vadd.f32 %v552, %v5579
      %v5939 = vadd.f32 %v553, %v5581
      %v5940 = vadd.f32 %v554, %v5583
      %v5941 = vadd.f32 %v555, %v5585
      %v5942 = vadd.f32 %v556, %v5587
      %v5943 = vadd.f32 %v557, %v5589
      %v5944 = vadd.f32 %v558, %v5591
      %v5945 = vadd.f32 %v559, %v5593
      %v5946 = vadd.f32 %v560, %v5595
      %v5947 = vadd.f32 %v561, %v5597
      %v5948 = vadd.f32 %v562, %v5599
      %v5949 = vadd.f32 %v563, %v5601
      %v5950 = vadd.f32 %v564, %v5603
      %v5951 = vadd.f32 %v565, %v5605
      %v5952 = vadd.f32 %v566, %v5607
      %v5953 = vadd.f32 %v567, %v5609
      %v5954 = vadd.f32 %v568, %v5611
      %v5955 = vadd.f32 %v569, %v5613
      %v5956 = vadd.f32 %v570, %v5615
      %v5957 = vadd.f32 %v571, %v5617
      %v5958 = vadd.f32 %v572, %v5619
      %v5959 = vadd.f32 %v573, %v5621
      %v5960 = vadd.f32 %v574, %v5623
      %v5961 = vadd.f32 %v575, %v5625
      %v5962 = vadd.f32 %v576, %v5627
      %v5963 = vadd.f32 %v577, %v5629
      %v5964 = vadd.f32 %v578, %v5631
      %v5965 = vadd.f32 %v579, %v5633
      %v5966 = vadd.f32 %v580, %v5635
      %v5967 = vadd.f32 %v581, %v5637
      %v5968 = vadd.f32 %v582, %v5639
      %v5969 = vadd.f32 %v583, %v5641
      %v5970 = vadd.f32 %v584, %v5643
      %v5971 = vadd.f32 %v585, %v5645
      %v5972 = vadd.f32 %v586, %v5647
      %v5973 = vadd.f32 %v587, %v5649
      %v5974 = vadd.f32 %v588, %v5651
      %v5975 = vadd.f32 %v589, %v5653
      %v5976 = vadd.f32 %v590, %v5655
      %v5977 = vadd.f32 %v591, %v5657
      %v5978 = vadd.f32 %v592, %v5659
      %v5979 = vadd.f32 %v593, %v5661
      %v5980 = vadd.f32 %v594, %v5663
      %v5981 = vadd.f32 %v595, %v5665
      %v5982 = vadd.f32 %v596, %v5667
      %v5983 = vadd.f32 %v597, %v5669
      %v5984 = vadd.f32 %v598, %v5671
      %v5985 = vadd.f32 %v599, %v5673
      %v5986 = vadd.f32 %v600, %v5675
      %v5987 = vadd.f32 %v601, %v5677
      %v5988 = vadd.f32 %v602, %v5679
      %v5989 = vadd.f32 %v603, %v5681
      %v5990 = vadd.f32 %v604, %v5683
      %v5991 = vadd.f32 %v605, %v5685
      %v5992 = vadd.f32 %v606, %v5687
      %v5993 = vadd.f32 %v607, %v5689
      %v5994 = vadd.f32 %v608, %v5691
      %v5995 = vadd.f32 %v609, %v5693
      %v5996 = vadd.f32 %v610, %v5695
      %v5997 = vadd.f32 %v611, %v5697
      %v5998 = vadd.f32 %v612, %v5699
      %v5999 = vadd.f32 %v613, %v5701
      %v6000 = vadd.f32 %v614, %v5703
      %v6001 = vadd.f32 %v615, %v5705
      %v6002 = vadd.f32 %v616, %v5707
      %v6003 = vadd.f32 %v617, %v5709
      %v6004 = vadd.f32 %v618, %v5711
      %v6005 = vadd.f32 %v619, %v5713
      %v6006 = vadd.f32 %v620, %v5715
      %v6007 = vadd.f32 %v621, %v5717
      %v6008 = vadd.f32 %v622, %v5719
      %v6009 = vadd.f32 %v623, %v5721
      %v6010 = vadd.f32 %v624, %v5723
      %v6011 = vadd.f32 %v625, %v5725
      %v6012 = vadd.f32 %v626, %v5727
      %v6013 = vadd.f32 %v627, %v5729
      %v6014 = vadd.f32 %v628, %v5731
      %v6015 = vadd.f32 %v629, %v5733
      %v6016 = vadd.f32 %v630, %v5735
      %v6017 = vadd.f32 %v631, %v5737
      %v6018 = vadd.f32 %v632, %v5739
      %v6019 = vadd.f32 %v633, %v5741
      %v6020 = vadd.f32 %v634, %v5743
      %v6021 = vadd.f32 %v635, %v5745
      %v6022 = vadd.f32 %v636, %v5747
      %v6023 = vadd.f32 %v637, %v5749
      %v6024 = vadd.f32 %v638, %v5751
      %v6025 = vadd.f32 %v639, %v5753
      %v6026 = vadd.f32 %v640, %v5755
      %v6027 = vadd.f32 %v641, %v5757
      %v6028 = vadd.f32 %v642, %v5759
      %v6029 = vadd.f32 %v643, %v5761
      %v6030 = vadd.f32 %v644, %v5763
      %v6031 = vadd.f32 %v645, %v5765
      %v6032 = vadd.f32 %v646, %v5767
      %v6033 = vadd.f32 %v647, %v5769
      %v6034 = vadd.f32 %v648, %v5771
      %v6035 = vadd.f32 %v649, %v5773
      %v6036 = vadd.f32 %v650, %v5775
      %v6037 = vadd.f32 %v651, %v5777
      %v6038 = vadd.f32 %v652, %v5779
      %v6039 = vadd.f32 %v653, %v5781
      %v6040 = vadd.f32 %v654, %v5783
      %v6041 = vadd.f32 %v655, %v5785
      %6170 = vrot.lane.b32.xlu0 %v5914, 127
      %v6171 = vpop.permute.xlu0 %6170
      %6172 = vrot.lane.b32.xlu0 %v5915, 127
      %v6173 = vpop.permute.xlu0 %6172
      %6174 = vrot.lane.b32.xlu0 %v5916, 127
      %v6175 = vpop.permute.xlu0 %6174
      %6176 = vrot.lane.b32.xlu0 %v5917, 127
      %v6177 = vpop.permute.xlu0 %6176
      %6178 = vrot.lane.b32.xlu0 %v5918, 127
      %v6179 = vpop.permute.xlu0 %6178
      %6180 = vrot.lane.b32.xlu0 %v5919, 127
      %v6181 = vpop.permute.xlu0 %6180
      %6182 = vrot.lane.b32.xlu0 %v5920, 127
      %v6183 = vpop.permute.xlu0 %6182
      %6184 = vrot.lane.b32.xlu0 %v5921, 127
      %v6185 = vpop.permute.xlu0 %6184
      %6186 = vrot.lane.b32.xlu0 %v5922, 127
      %v6187 = vpop.permute.xlu0 %6186
      %6188 = vrot.lane.b32.xlu0 %v5923, 127
      %v6189 = vpop.permute.xlu0 %6188
      %6190 = vrot.lane.b32.xlu0 %v5924, 127
      %v6191 = vpop.permute.xlu0 %6190
      %6192 = vrot.lane.b32.xlu0 %v5925, 127
      %v6193 = vpop.permute.xlu0 %6192
      %6194 = vrot.lane.b32.xlu0 %v5926, 127
      %v6195 = vpop.permute.xlu0 %6194
      %6196 = vrot.lane.b32.xlu0 %v5927, 127
      %v6197 = vpop.permute.xlu0 %6196
      %6198 = vrot.lane.b32.xlu0 %v5928, 127
      %v6199 = vpop.permute.xlu0 %6198
      %6200 = vrot.lane.b32.xlu0 %v5929, 127
      %v6201 = vpop.permute.xlu0 %6200
      %6202 = vrot.lane.b32.xlu0 %v5930, 127
      %v6203 = vpop.permute.xlu0 %6202
      %6204 = vrot.lane.b32.xlu0 %v5931, 127
      %v6205 = vpop.permute.xlu0 %6204
      %6206 = vrot.lane.b32.xlu0 %v5932, 127
      %v6207 = vpop.permute.xlu0 %6206
      %6208 = vrot.lane.b32.xlu0 %v5933, 127
      %v6209 = vpop.permute.xlu0 %6208
      %6210 = vrot.lane.b32.xlu0 %v5934, 127
      %v6211 = vpop.permute.xlu0 %6210
      %6212 = vrot.lane.b32.xlu0 %v5935, 127
      %v6213 = vpop.permute.xlu0 %6212
      %6214 = vrot.lane.b32.xlu0 %v5936, 127
      %v6215 = vpop.permute.xlu0 %6214
      %6216 = vrot.lane.b32.xlu0 %v5937, 127
      %v6217 = vpop.permute.xlu0 %6216
      %6218 = vrot.lane.b32.xlu0 %v5938, 127
      %v6219 = vpop.permute.xlu0 %6218
      %6220 = vrot.lane.b32.xlu0 %v5939, 127
      %v6221 = vpop.permute.xlu0 %6220
      %6222 = vrot.lane.b32.xlu0 %v5940, 127
      %v6223 = vpop.permute.xlu0 %6222
      %6224 = vrot.lane.b32.xlu0 %v5941, 127
      %v6225 = vpop.permute.xlu0 %6224
      %6226 = vrot.lane.b32.xlu0 %v5942, 127
      %v6227 = vpop.permute.xlu0 %6226
      %6228 = vrot.lane.b32.xlu0 %v5943, 127
      %v6229 = vpop.permute.xlu0 %6228
      %6230 = vrot.lane.b32.xlu0 %v5944, 127
      %v6231 = vpop.permute.xlu0 %6230
      %6232 = vrot.lane.b32.xlu0 %v5945, 127
      %v6233 = vpop.permute.xlu0 %6232
      %6234 = vrot.lane.b32.xlu0 %v5946, 127
      %v6235 = vpop.permute.xlu0 %6234
      %6236 = vrot.lane.b32.xlu0 %v5947, 127
      %v6237 = vpop.permute.xlu0 %6236
      %6238 = vrot.lane.b32.xlu0 %v5948, 127
      %v6239 = vpop.permute.xlu0 %6238
      %6240 = vrot.lane.b32.xlu0 %v5949, 127
      %v6241 = vpop.permute.xlu0 %6240
      %6242 = vrot.lane.b32.xlu0 %v5950, 127
      %v6243 = vpop.permute.xlu0 %6242
      %6244 = vrot.lane.b32.xlu0 %v5951, 127
      %v6245 = vpop.permute.xlu0 %6244
      %6246 = vrot.lane.b32.xlu0 %v5952, 127
      %v6247 = vpop.permute.xlu0 %6246
      %6248 = vrot.lane.b32.xlu0 %v5953, 127
      %v6249 = vpop.permute.xlu0 %6248
      %6250 = vrot.lane.b32.xlu0 %v5954, 127
      %v6251 = vpop.permute.xlu0 %6250
      %6252 = vrot.lane.b32.xlu0 %v5955, 127
      %v6253 = vpop.permute.xlu0 %6252
      %6254 = vrot.lane.b32.xlu0 %v5956, 127
      %v6255 = vpop.permute.xlu0 %6254
      %6256 = vrot.lane.b32.xlu0 %v5957, 127
      %v6257 = vpop.permute.xlu0 %6256
      %6258 = vrot.lane.b32.xlu0 %v5958, 127
      %v6259 = vpop.permute.xlu0 %6258
      %6260 = vrot.lane.b32.xlu0 %v5959, 127
      %v6261 = vpop.permute.xlu0 %6260
      %6262 = vrot.lane.b32.xlu0 %v5960, 127
      %v6263 = vpop.permute.xlu0 %6262
      %6264 = vrot.lane.b32.xlu0 %v5961, 127
      %v6265 = vpop.permute.xlu0 %6264
      %6266 = vrot.lane.b32.xlu0 %v5962, 127
      %v6267 = vpop.permute.xlu0 %6266
      %6268 = vrot.lane.b32.xlu0 %v5963, 127
      %v6269 = vpop.permute.xlu0 %6268
      %6270 = vrot.lane.b32.xlu0 %v5964, 127
      %v6271 = vpop.permute.xlu0 %6270
      %6272 = vrot.lane.b32.xlu0 %v5965, 127
      %v6273 = vpop.permute.xlu0 %6272
      %6274 = vrot.lane.b32.xlu0 %v5966, 127
      %v6275 = vpop.permute.xlu0 %6274
      %6276 = vrot.lane.b32.xlu0 %v5967, 127
      %v6277 = vpop.permute.xlu0 %6276
      %6278 = vrot.lane.b32.xlu0 %v5968, 127
      %v6279 = vpop.permute.xlu0 %6278
      %6280 = vrot.lane.b32.xlu0 %v5969, 127
      %v6281 = vpop.permute.xlu0 %6280
      %6282 = vrot.lane.b32.xlu0 %v5970, 127
      %v6283 = vpop.permute.xlu0 %6282
      %6284 = vrot.lane.b32.xlu0 %v5971, 127
      %v6285 = vpop.permute.xlu0 %6284
      %6286 = vrot.lane.b32.xlu0 %v5972, 127
      %v6287 = vpop.permute.xlu0 %6286
      %6288 = vrot.lane.b32.xlu0 %v5973, 127
      %v6289 = vpop.permute.xlu0 %6288
      %6290 = vrot.lane.b32.xlu0 %v5974, 127
      %v6291 = vpop.permute.xlu0 %6290
      %6292 = vrot.lane.b32.xlu0 %v5975, 127
      %v6293 = vpop.permute.xlu0 %6292
      %6294 = vrot.lane.b32.xlu0 %v5976, 127
      %v6295 = vpop.permute.xlu0 %6294
      %6296 = vrot.lane.b32.xlu0 %v5977, 127
      %v6297 = vpop.permute.xlu0 %6296
      %6298 = vrot.lane.b32.xlu0 %v5978, 127
      %v6299 = vpop.permute.xlu0 %6298
      %6300 = vrot.lane.b32.xlu0 %v5979, 127
      %v6301 = vpop.permute.xlu0 %6300
      %6302 = vrot.lane.b32.xlu0 %v5980, 127
      %v6303 = vpop.permute.xlu0 %6302
      %6304 = vrot.lane.b32.xlu0 %v5981, 127
      %v6305 = vpop.permute.xlu0 %6304
      %6306 = vrot.lane.b32.xlu0 %v5982, 127
      %v6307 = vpop.permute.xlu0 %6306
      %6308 = vrot.lane.b32.xlu0 %v5983, 127
      %v6309 = vpop.permute.xlu0 %6308
      %6310 = vrot.lane.b32.xlu0 %v5984, 127
      %v6311 = vpop.permute.xlu0 %6310
      %6312 = vrot.lane.b32.xlu0 %v5985, 127
      %v6313 = vpop.permute.xlu0 %6312
      %6314 = vrot.lane.b32.xlu0 %v5986, 127
      %v6315 = vpop.permute.xlu0 %6314
      %6316 = vrot.lane.b32.xlu0 %v5987, 127
      %v6317 = vpop.permute.xlu0 %6316
      %6318 = vrot.lane.b32.xlu0 %v5988, 127
      %v6319 = vpop.permute.xlu0 %6318
      %6320 = vrot.lane.b32.xlu0 %v5989, 127
      %v6321 = vpop.permute.xlu0 %6320
      %6322 = vrot.lane.b32.xlu0 %v5990, 127
      %v6323 = vpop.permute.xlu0 %6322
      %6324 = vrot.lane.b32.xlu0 %v5991, 127
      %v6325 = vpop.permute.xlu0 %6324
      %6326 = vrot.lane.b32.xlu0 %v5992, 127
      %v6327 = vpop.permute.xlu0 %6326
      %6328 = vrot.lane.b32.xlu0 %v5993, 127
      %v6329 = vpop.permute.xlu0 %6328
      %6330 = vrot.lane.b32.xlu0 %v5994, 127
      %v6331 = vpop.permute.xlu0 %6330
      %6332 = vrot.lane.b32.xlu0 %v5995, 127
      %v6333 = vpop.permute.xlu0 %6332
      %6334 = vrot.lane.b32.xlu0 %v5996, 127
      %v6335 = vpop.permute.xlu0 %6334
      %6336 = vrot.lane.b32.xlu0 %v5997, 127
      %v6337 = vpop.permute.xlu0 %6336
      %6338 = vrot.lane.b32.xlu0 %v5998, 127
      %v6339 = vpop.permute.xlu0 %6338
      %6340 = vrot.lane.b32.xlu0 %v5999, 127
      %v6341 = vpop.permute.xlu0 %6340
      %6342 = vrot.lane.b32.xlu0 %v6000, 127
      %v6343 = vpop.permute.xlu0 %6342
      %6344 = vrot.lane.b32.xlu0 %v6001, 127
      %v6345 = vpop.permute.xlu0 %6344
      %6346 = vrot.lane.b32.xlu0 %v6002, 127
      %v6347 = vpop.permute.xlu0 %6346
      %6348 = vrot.lane.b32.xlu0 %v6003, 127
      %v6349 = vpop.permute.xlu0 %6348
      %6350 = vrot.lane.b32.xlu0 %v6004, 127
      %v6351 = vpop.permute.xlu0 %6350
      %6352 = vrot.lane.b32.xlu0 %v6005, 127
      %v6353 = vpop.permute.xlu0 %6352
      %6354 = vrot.lane.b32.xlu0 %v6006, 127
      %v6355 = vpop.permute.xlu0 %6354
      %6356 = vrot.lane.b32.xlu0 %v6007, 127
      %v6357 = vpop.permute.xlu0 %6356
      %6358 = vrot.lane.b32.xlu0 %v6008, 127
      %v6359 = vpop.permute.xlu0 %6358
      %6360 = vrot.lane.b32.xlu0 %v6009, 127
      %v6361 = vpop.permute.xlu0 %6360
      %6362 = vrot.lane.b32.xlu0 %v6010, 127
      %v6363 = vpop.permute.xlu0 %6362
      %6364 = vrot.lane.b32.xlu0 %v6011, 127
      %v6365 = vpop.permute.xlu0 %6364
      %6366 = vrot.lane.b32.xlu0 %v6012, 127
      %v6367 = vpop.permute.xlu0 %6366
      %6368 = vrot.lane.b32.xlu0 %v6013, 127
      %v6369 = vpop.permute.xlu0 %6368
      %6370 = vrot.lane.b32.xlu0 %v6014, 127
      %v6371 = vpop.permute.xlu0 %6370
      %6372 = vrot.lane.b32.xlu0 %v6015, 127
      %v6373 = vpop.permute.xlu0 %6372
      %6374 = vrot.lane.b32.xlu0 %v6016, 127
      %v6375 = vpop.permute.xlu0 %6374
      %6376 = vrot.lane.b32.xlu0 %v6017, 127
      %v6377 = vpop.permute.xlu0 %6376
      %6378 = vrot.lane.b32.xlu0 %v6018, 127
      %v6379 = vpop.permute.xlu0 %6378
      %6380 = vrot.lane.b32.xlu0 %v6019, 127
      %v6381 = vpop.permute.xlu0 %6380
      %6382 = vrot.lane.b32.xlu0 %v6020, 127
      %v6383 = vpop.permute.xlu0 %6382
      %6384 = vrot.lane.b32.xlu0 %v6021, 127
      %v6385 = vpop.permute.xlu0 %6384
      %6386 = vrot.lane.b32.xlu0 %v6022, 127
      %v6387 = vpop.permute.xlu0 %6386
      %6388 = vrot.lane.b32.xlu0 %v6023, 127
      %v6389 = vpop.permute.xlu0 %6388
      %6390 = vrot.lane.b32.xlu0 %v6024, 127
      %v6391 = vpop.permute.xlu0 %6390
      %6392 = vrot.lane.b32.xlu0 %v6025, 127
      %v6393 = vpop.permute.xlu0 %6392
      %6394 = vrot.lane.b32.xlu0 %v6026, 127
      %v6395 = vpop.permute.xlu0 %6394
      %6396 = vrot.lane.b32.xlu0 %v6027, 127
      %v6397 = vpop.permute.xlu0 %6396
      %6398 = vrot.lane.b32.xlu0 %v6028, 127
      %v6399 = vpop.permute.xlu0 %6398
      %6400 = vrot.lane.b32.xlu0 %v6029, 127
      %v6401 = vpop.permute.xlu0 %6400
      %6402 = vrot.lane.b32.xlu0 %v6030, 127
      %v6403 = vpop.permute.xlu0 %6402
      %6404 = vrot.lane.b32.xlu0 %v6031, 127
      %v6405 = vpop.permute.xlu0 %6404
      %6406 = vrot.lane.b32.xlu0 %v6032, 127
      %v6407 = vpop.permute.xlu0 %6406
      %6408 = vrot.lane.b32.xlu0 %v6033, 127
      %v6409 = vpop.permute.xlu0 %6408
      %6410 = vrot.lane.b32.xlu0 %v6034, 127
      %v6411 = vpop.permute.xlu0 %6410
      %6412 = vrot.lane.b32.xlu0 %v6035, 127
      %v6413 = vpop.permute.xlu0 %6412
      %6414 = vrot.lane.b32.xlu0 %v6036, 127
      %v6415 = vpop.permute.xlu0 %6414
      %6416 = vrot.lane.b32.xlu0 %v6037, 127
      %v6417 = vpop.permute.xlu0 %6416
      %6418 = vrot.lane.b32.xlu0 %v6038, 127
      %v6419 = vpop.permute.xlu0 %6418
      %6420 = vrot.lane.b32.xlu0 %v6039, 127
      %v6421 = vpop.permute.xlu0 %6420
      %6422 = vrot.lane.b32.xlu0 %v6040, 127
      %v6423 = vpop.permute.xlu0 %6422
      %6424 = vrot.lane.b32.xlu0 %v6041, 127
      %v6425 = vpop.permute.xlu0 %6424
      %v6554 = vmul.f32 %v5274, %v6171
      %v6555 = vmul.f32 %v5275, %v6173
      %v6556 = vmul.f32 %v5276, %v6175
      %v6557 = vmul.f32 %v5277, %v6177
      %v6558 = vmul.f32 %v5278, %v6179
      %v6559 = vmul.f32 %v5279, %v6181
      %v6560 = vmul.f32 %v5280, %v6183
      %v6561 = vmul.f32 %v5281, %v6185
      %v6562 = vmul.f32 %v5282, %v6187
      %v6563 = vmul.f32 %v5283, %v6189
      %v6564 = vmul.f32 %v5284, %v6191
      %v6565 = vmul.f32 %v5285, %v6193
      %v6566 = vmul.f32 %v5286, %v6195
      %v6567 = vmul.f32 %v5287, %v6197
      %v6568 = vmul.f32 %v5288, %v6199
      %v6569 = vmul.f32 %v5289, %v6201
      %v6570 = vmul.f32 %v5290, %v6203
      %v6571 = vmul.f32 %v5291, %v6205
      %v6572 = vmul.f32 %v5292, %v6207
      %v6573 = vmul.f32 %v5293, %v6209
      %v6574 = vmul.f32 %v5294, %v6211
      %v6575 = vmul.f32 %v5295, %v6213
      %v6576 = vmul.f32 %v5296, %v6215
      %v6577 = vmul.f32 %v5297, %v6217
      %v6578 = vmul.f32 %v5298, %v6219
      %v6579 = vmul.f32 %v5299, %v6221
      %v6580 = vmul.f32 %v5300, %v6223
      %v6581 = vmul.f32 %v5301, %v6225
      %v6582 = vmul.f32 %v5302, %v6227
      %v6583 = vmul.f32 %v5303, %v6229
      %v6584 = vmul.f32 %v5304, %v6231
      %v6585 = vmul.f32 %v5305, %v6233
      %v6586 = vmul.f32 %v5306, %v6235
      %v6587 = vmul.f32 %v5307, %v6237
      %v6588 = vmul.f32 %v5308, %v6239
      %v6589 = vmul.f32 %v5309, %v6241
      %v6590 = vmul.f32 %v5310, %v6243
      %v6591 = vmul.f32 %v5311, %v6245
      %v6592 = vmul.f32 %v5312, %v6247
      %v6593 = vmul.f32 %v5313, %v6249
      %v6594 = vmul.f32 %v5314, %v6251
      %v6595 = vmul.f32 %v5315, %v6253
      %v6596 = vmul.f32 %v5316, %v6255
      %v6597 = vmul.f32 %v5317, %v6257
      %v6598 = vmul.f32 %v5318, %v6259
      %v6599 = vmul.f32 %v5319, %v6261
      %v6600 = vmul.f32 %v5320, %v6263
      %v6601 = vmul.f32 %v5321, %v6265
      %v6602 = vmul.f32 %v5322, %v6267
      %v6603 = vmul.f32 %v5323, %v6269
      %v6604 = vmul.f32 %v5324, %v6271
      %v6605 = vmul.f32 %v5325, %v6273
      %v6606 = vmul.f32 %v5326, %v6275
      %v6607 = vmul.f32 %v5327, %v6277
      %v6608 = vmul.f32 %v5328, %v6279
      %v6609 = vmul.f32 %v5329, %v6281
      %v6610 = vmul.f32 %v5330, %v6283
      %v6611 = vmul.f32 %v5331, %v6285
      %v6612 = vmul.f32 %v5332, %v6287
      %v6613 = vmul.f32 %v5333, %v6289
      %v6614 = vmul.f32 %v5334, %v6291
      %v6615 = vmul.f32 %v5335, %v6293
      %v6616 = vmul.f32 %v5336, %v6295
      %v6617 = vmul.f32 %v5337, %v6297
      %v6618 = vmul.f32 %v5338, %v6299
      %v6619 = vmul.f32 %v5339, %v6301
      %v6620 = vmul.f32 %v5340, %v6303
      %v6621 = vmul.f32 %v5341, %v6305
      %v6622 = vmul.f32 %v5342, %v6307
      %v6623 = vmul.f32 %v5343, %v6309
      %v6624 = vmul.f32 %v5344, %v6311
      %v6625 = vmul.f32 %v5345, %v6313
      %v6626 = vmul.f32 %v5346, %v6315
      %v6627 = vmul.f32 %v5347, %v6317
      %v6628 = vmul.f32 %v5348, %v6319
      %v6629 = vmul.f32 %v5349, %v6321
      %v6630 = vmul.f32 %v5350, %v6323
      %v6631 = vmul.f32 %v5351, %v6325
      %v6632 = vmul.f32 %v5352, %v6327
      %v6633 = vmul.f32 %v5353, %v6329
      %v6634 = vmul.f32 %v5354, %v6331
      %v6635 = vmul.f32 %v5355, %v6333
      %v6636 = vmul.f32 %v5356, %v6335
      %v6637 = vmul.f32 %v5357, %v6337
      %v6638 = vmul.f32 %v5358, %v6339
      %v6639 = vmul.f32 %v5359, %v6341
      %v6640 = vmul.f32 %v5360, %v6343
      %v6641 = vmul.f32 %v5361, %v6345
      %v6642 = vmul.f32 %v5362, %v6347
      %v6643 = vmul.f32 %v5363, %v6349
      %v6644 = vmul.f32 %v5364, %v6351
      %v6645 = vmul.f32 %v5365, %v6353
      %v6646 = vmul.f32 %v5366, %v6355
      %v6647 = vmul.f32 %v5367, %v6357
      %v6648 = vmul.f32 %v5368, %v6359
      %v6649 = vmul.f32 %v5369, %v6361
      %v6650 = vmul.f32 %v5370, %v6363
      %v6651 = vmul.f32 %v5371, %v6365
      %v6652 = vmul.f32 %v5372, %v6367
      %v6653 = vmul.f32 %v5373, %v6369
      %v6654 = vmul.f32 %v5374, %v6371
      %v6655 = vmul.f32 %v5375, %v6373
      %v6656 = vmul.f32 %v5376, %v6375
      %v6657 = vmul.f32 %v5377, %v6377
      %v6658 = vmul.f32 %v5378, %v6379
      %v6659 = vmul.f32 %v5379, %v6381
      %v6660 = vmul.f32 %v5380, %v6383
      %v6661 = vmul.f32 %v5381, %v6385
      %v6662 = vmul.f32 %v5382, %v6387
      %v6663 = vmul.f32 %v5383, %v6389
      %v6664 = vmul.f32 %v5384, %v6391
      %v6665 = vmul.f32 %v5385, %v6393
      %v6666 = vmul.f32 %v5386, %v6395
      %v6667 = vmul.f32 %v5387, %v6397
      %v6668 = vmul.f32 %v5388, %v6399
      %v6669 = vmul.f32 %v5389, %v6401
      %v6670 = vmul.f32 %v5390, %v6403
      %v6671 = vmul.f32 %v5391, %v6405
      %v6672 = vmul.f32 %v5392, %v6407
      %v6673 = vmul.f32 %v5393, %v6409
      %v6674 = vmul.f32 %v5394, %v6411
      %v6675 = vmul.f32 %v5395, %v6413
      %v6676 = vmul.f32 %v5396, %v6415
      %v6677 = vmul.f32 %v5397, %v6417
      %v6678 = vmul.f32 %v5398, %v6419
      %v6679 = vmul.f32 %v5399, %v6421
      %v6680 = vmul.f32 %v5400, %v6423
      %v6681 = vmul.f32 %v5401, %v6425
      %6682 = vrot.lane.b32.xlu0 %v528, 126
      %v6683 = vpop.permute.xlu0 %6682
      %6684 = vrot.lane.b32.xlu0 %v529, 126
      %v6685 = vpop.permute.xlu0 %6684
      %6686 = vrot.lane.b32.xlu0 %v530, 126
      %v6687 = vpop.permute.xlu0 %6686
      %6688 = vrot.lane.b32.xlu0 %v531, 126
      %v6689 = vpop.permute.xlu0 %6688
      %6690 = vrot.lane.b32.xlu0 %v532, 126
      %v6691 = vpop.permute.xlu0 %6690
      %6692 = vrot.lane.b32.xlu0 %v533, 126
      %v6693 = vpop.permute.xlu0 %6692
      %6694 = vrot.lane.b32.xlu0 %v534, 126
      %v6695 = vpop.permute.xlu0 %6694
      %6696 = vrot.lane.b32.xlu0 %v535, 126
      %v6697 = vpop.permute.xlu0 %6696
      %6698 = vrot.lane.b32.xlu0 %v536, 126
      %v6699 = vpop.permute.xlu0 %6698
      %6700 = vrot.lane.b32.xlu0 %v537, 126
      %v6701 = vpop.permute.xlu0 %6700
      %6702 = vrot.lane.b32.xlu0 %v538, 126
      %v6703 = vpop.permute.xlu0 %6702
      %6704 = vrot.lane.b32.xlu0 %v539, 126
      %v6705 = vpop.permute.xlu0 %6704
      %6706 = vrot.lane.b32.xlu0 %v540, 126
      %v6707 = vpop.permute.xlu0 %6706
      %6708 = vrot.lane.b32.xlu0 %v541, 126
      %v6709 = vpop.permute.xlu0 %6708
      %6710 = vrot.lane.b32.xlu0 %v542, 126
      %v6711 = vpop.permute.xlu0 %6710
      %6712 = vrot.lane.b32.xlu0 %v543, 126
      %v6713 = vpop.permute.xlu0 %6712
      %6714 = vrot.lane.b32.xlu0 %v544, 126
      %v6715 = vpop.permute.xlu0 %6714
      %6716 = vrot.lane.b32.xlu0 %v545, 126
      %v6717 = vpop.permute.xlu0 %6716
      %6718 = vrot.lane.b32.xlu0 %v546, 126
      %v6719 = vpop.permute.xlu0 %6718
      %6720 = vrot.lane.b32.xlu0 %v547, 126
      %v6721 = vpop.permute.xlu0 %6720
      %6722 = vrot.lane.b32.xlu0 %v548, 126
      %v6723 = vpop.permute.xlu0 %6722
      %6724 = vrot.lane.b32.xlu0 %v549, 126
      %v6725 = vpop.permute.xlu0 %6724
      %6726 = vrot.lane.b32.xlu0 %v550, 126
      %v6727 = vpop.permute.xlu0 %6726
      %6728 = vrot.lane.b32.xlu0 %v551, 126
      %v6729 = vpop.permute.xlu0 %6728
      %6730 = vrot.lane.b32.xlu0 %v552, 126
      %v6731 = vpop.permute.xlu0 %6730
      %6732 = vrot.lane.b32.xlu0 %v553, 126
      %v6733 = vpop.permute.xlu0 %6732
      %6734 = vrot.lane.b32.xlu0 %v554, 126
      %v6735 = vpop.permute.xlu0 %6734
      %6736 = vrot.lane.b32.xlu0 %v555, 126
      %v6737 = vpop.permute.xlu0 %6736
      %6738 = vrot.lane.b32.xlu0 %v556, 126
      %v6739 = vpop.permute.xlu0 %6738
      %6740 = vrot.lane.b32.xlu0 %v557, 126
      %v6741 = vpop.permute.xlu0 %6740
      %6742 = vrot.lane.b32.xlu0 %v558, 126
      %v6743 = vpop.permute.xlu0 %6742
      %6744 = vrot.lane.b32.xlu0 %v559, 126
      %v6745 = vpop.permute.xlu0 %6744
      %6746 = vrot.lane.b32.xlu0 %v560, 126
      %v6747 = vpop.permute.xlu0 %6746
      %6748 = vrot.lane.b32.xlu0 %v561, 126
      %v6749 = vpop.permute.xlu0 %6748
      %6750 = vrot.lane.b32.xlu0 %v562, 126
      %v6751 = vpop.permute.xlu0 %6750
      %6752 = vrot.lane.b32.xlu0 %v563, 126
      %v6753 = vpop.permute.xlu0 %6752
      %6754 = vrot.lane.b32.xlu0 %v564, 126
      %v6755 = vpop.permute.xlu0 %6754
      %6756 = vrot.lane.b32.xlu0 %v565, 126
      %v6757 = vpop.permute.xlu0 %6756
      %6758 = vrot.lane.b32.xlu0 %v566, 126
      %v6759 = vpop.permute.xlu0 %6758
      %6760 = vrot.lane.b32.xlu0 %v567, 126
      %v6761 = vpop.permute.xlu0 %6760
      %6762 = vrot.lane.b32.xlu0 %v568, 126
      %v6763 = vpop.permute.xlu0 %6762
      %6764 = vrot.lane.b32.xlu0 %v569, 126
      %v6765 = vpop.permute.xlu0 %6764
      %6766 = vrot.lane.b32.xlu0 %v570, 126
      %v6767 = vpop.permute.xlu0 %6766
      %6768 = vrot.lane.b32.xlu0 %v571, 126
      %v6769 = vpop.permute.xlu0 %6768
      %6770 = vrot.lane.b32.xlu0 %v572, 126
      %v6771 = vpop.permute.xlu0 %6770
      %6772 = vrot.lane.b32.xlu0 %v573, 126
      %v6773 = vpop.permute.xlu0 %6772
      %6774 = vrot.lane.b32.xlu0 %v574, 126
      %v6775 = vpop.permute.xlu0 %6774
      %6776 = vrot.lane.b32.xlu0 %v575, 126
      %v6777 = vpop.permute.xlu0 %6776
      %6778 = vrot.lane.b32.xlu0 %v576, 126
      %v6779 = vpop.permute.xlu0 %6778
      %6780 = vrot.lane.b32.xlu0 %v577, 126
      %v6781 = vpop.permute.xlu0 %6780
      %6782 = vrot.lane.b32.xlu0 %v578, 126
      %v6783 = vpop.permute.xlu0 %6782
      %6784 = vrot.lane.b32.xlu0 %v579, 126
      %v6785 = vpop.permute.xlu0 %6784
      %6786 = vrot.lane.b32.xlu0 %v580, 126
      %v6787 = vpop.permute.xlu0 %6786
      %6788 = vrot.lane.b32.xlu0 %v581, 126
      %v6789 = vpop.permute.xlu0 %6788
      %6790 = vrot.lane.b32.xlu0 %v582, 126
      %v6791 = vpop.permute.xlu0 %6790
      %6792 = vrot.lane.b32.xlu0 %v583, 126
      %v6793 = vpop.permute.xlu0 %6792
      %6794 = vrot.lane.b32.xlu0 %v584, 126
      %v6795 = vpop.permute.xlu0 %6794
      %6796 = vrot.lane.b32.xlu0 %v585, 126
      %v6797 = vpop.permute.xlu0 %6796
      %6798 = vrot.lane.b32.xlu0 %v586, 126
      %v6799 = vpop.permute.xlu0 %6798
      %6800 = vrot.lane.b32.xlu0 %v587, 126
      %v6801 = vpop.permute.xlu0 %6800
      %6802 = vrot.lane.b32.xlu0 %v588, 126
      %v6803 = vpop.permute.xlu0 %6802
      %6804 = vrot.lane.b32.xlu0 %v589, 126
      %v6805 = vpop.permute.xlu0 %6804
      %6806 = vrot.lane.b32.xlu0 %v590, 126
      %v6807 = vpop.permute.xlu0 %6806
      %6808 = vrot.lane.b32.xlu0 %v591, 126
      %v6809 = vpop.permute.xlu0 %6808
      %6810 = vrot.lane.b32.xlu0 %v592, 126
      %v6811 = vpop.permute.xlu0 %6810
      %6812 = vrot.lane.b32.xlu0 %v593, 126
      %v6813 = vpop.permute.xlu0 %6812
      %6814 = vrot.lane.b32.xlu0 %v594, 126
      %v6815 = vpop.permute.xlu0 %6814
      %6816 = vrot.lane.b32.xlu0 %v595, 126
      %v6817 = vpop.permute.xlu0 %6816
      %6818 = vrot.lane.b32.xlu0 %v596, 126
      %v6819 = vpop.permute.xlu0 %6818
      %6820 = vrot.lane.b32.xlu0 %v597, 126
      %v6821 = vpop.permute.xlu0 %6820
      %6822 = vrot.lane.b32.xlu0 %v598, 126
      %v6823 = vpop.permute.xlu0 %6822
      %6824 = vrot.lane.b32.xlu0 %v599, 126
      %v6825 = vpop.permute.xlu0 %6824
      %6826 = vrot.lane.b32.xlu0 %v600, 126
      %v6827 = vpop.permute.xlu0 %6826
      %6828 = vrot.lane.b32.xlu0 %v601, 126
      %v6829 = vpop.permute.xlu0 %6828
      %6830 = vrot.lane.b32.xlu0 %v602, 126
      %v6831 = vpop.permute.xlu0 %6830
      %6832 = vrot.lane.b32.xlu0 %v603, 126
      %v6833 = vpop.permute.xlu0 %6832
      %6834 = vrot.lane.b32.xlu0 %v604, 126
      %v6835 = vpop.permute.xlu0 %6834
      %6836 = vrot.lane.b32.xlu0 %v605, 126
      %v6837 = vpop.permute.xlu0 %6836
      %6838 = vrot.lane.b32.xlu0 %v606, 126
      %v6839 = vpop.permute.xlu0 %6838
      %6840 = vrot.lane.b32.xlu0 %v607, 126
      %v6841 = vpop.permute.xlu0 %6840
      %6842 = vrot.lane.b32.xlu0 %v608, 126
      %v6843 = vpop.permute.xlu0 %6842
      %6844 = vrot.lane.b32.xlu0 %v609, 126
      %v6845 = vpop.permute.xlu0 %6844
      %6846 = vrot.lane.b32.xlu0 %v610, 126
      %v6847 = vpop.permute.xlu0 %6846
      %6848 = vrot.lane.b32.xlu0 %v611, 126
      %v6849 = vpop.permute.xlu0 %6848
      %6850 = vrot.lane.b32.xlu0 %v612, 126
      %v6851 = vpop.permute.xlu0 %6850
      %6852 = vrot.lane.b32.xlu0 %v613, 126
      %v6853 = vpop.permute.xlu0 %6852
      %6854 = vrot.lane.b32.xlu0 %v614, 126
      %v6855 = vpop.permute.xlu0 %6854
      %6856 = vrot.lane.b32.xlu0 %v615, 126
      %v6857 = vpop.permute.xlu0 %6856
      %6858 = vrot.lane.b32.xlu0 %v616, 126
      %v6859 = vpop.permute.xlu0 %6858
      %6860 = vrot.lane.b32.xlu0 %v617, 126
      %v6861 = vpop.permute.xlu0 %6860
      %6862 = vrot.lane.b32.xlu0 %v618, 126
      %v6863 = vpop.permute.xlu0 %6862
      %6864 = vrot.lane.b32.xlu0 %v619, 126
      %v6865 = vpop.permute.xlu0 %6864
      %6866 = vrot.lane.b32.xlu0 %v620, 126
      %v6867 = vpop.permute.xlu0 %6866
      %6868 = vrot.lane.b32.xlu0 %v621, 126
      %v6869 = vpop.permute.xlu0 %6868
      %6870 = vrot.lane.b32.xlu0 %v622, 126
      %v6871 = vpop.permute.xlu0 %6870
      %6872 = vrot.lane.b32.xlu0 %v623, 126
      %v6873 = vpop.permute.xlu0 %6872
      %6874 = vrot.lane.b32.xlu0 %v624, 126
      %v6875 = vpop.permute.xlu0 %6874
      %6876 = vrot.lane.b32.xlu0 %v625, 126
      %v6877 = vpop.permute.xlu0 %6876
      %6878 = vrot.lane.b32.xlu0 %v626, 126
      %v6879 = vpop.permute.xlu0 %6878
      %6880 = vrot.lane.b32.xlu0 %v627, 126
      %v6881 = vpop.permute.xlu0 %6880
      %6882 = vrot.lane.b32.xlu0 %v628, 126
      %v6883 = vpop.permute.xlu0 %6882
      %6884 = vrot.lane.b32.xlu0 %v629, 126
      %v6885 = vpop.permute.xlu0 %6884
      %6886 = vrot.lane.b32.xlu0 %v630, 126
      %v6887 = vpop.permute.xlu0 %6886
      %6888 = vrot.lane.b32.xlu0 %v631, 126
      %v6889 = vpop.permute.xlu0 %6888
      %6890 = vrot.lane.b32.xlu0 %v632, 126
      %v6891 = vpop.permute.xlu0 %6890
      %6892 = vrot.lane.b32.xlu0 %v633, 126
      %v6893 = vpop.permute.xlu0 %6892
      %6894 = vrot.lane.b32.xlu0 %v634, 126
      %v6895 = vpop.permute.xlu0 %6894
      %6896 = vrot.lane.b32.xlu0 %v635, 126
      %v6897 = vpop.permute.xlu0 %6896
      %6898 = vrot.lane.b32.xlu0 %v636, 126
      %v6899 = vpop.permute.xlu0 %6898
      %6900 = vrot.lane.b32.xlu0 %v637, 126
      %v6901 = vpop.permute.xlu0 %6900
      %6902 = vrot.lane.b32.xlu0 %v638, 126
      %v6903 = vpop.permute.xlu0 %6902
      %6904 = vrot.lane.b32.xlu0 %v639, 126
      %v6905 = vpop.permute.xlu0 %6904
      %6906 = vrot.lane.b32.xlu0 %v640, 126
      %v6907 = vpop.permute.xlu0 %6906
      %6908 = vrot.lane.b32.xlu0 %v641, 126
      %v6909 = vpop.permute.xlu0 %6908
      %6910 = vrot.lane.b32.xlu0 %v642, 126
      %v6911 = vpop.permute.xlu0 %6910
      %6912 = vrot.lane.b32.xlu0 %v643, 126
      %v6913 = vpop.permute.xlu0 %6912
      %6914 = vrot.lane.b32.xlu0 %v644, 126
      %v6915 = vpop.permute.xlu0 %6914
      %6916 = vrot.lane.b32.xlu0 %v645, 126
      %v6917 = vpop.permute.xlu0 %6916
      %6918 = vrot.lane.b32.xlu0 %v646, 126
      %v6919 = vpop.permute.xlu0 %6918
      %6920 = vrot.lane.b32.xlu0 %v647, 126
      %v6921 = vpop.permute.xlu0 %6920
      %6922 = vrot.lane.b32.xlu0 %v648, 126
      %v6923 = vpop.permute.xlu0 %6922
      %6924 = vrot.lane.b32.xlu0 %v649, 126
      %v6925 = vpop.permute.xlu0 %6924
      %6926 = vrot.lane.b32.xlu0 %v650, 126
      %v6927 = vpop.permute.xlu0 %6926
      %6928 = vrot.lane.b32.xlu0 %v651, 126
      %v6929 = vpop.permute.xlu0 %6928
      %6930 = vrot.lane.b32.xlu0 %v652, 126
      %v6931 = vpop.permute.xlu0 %6930
      %6932 = vrot.lane.b32.xlu0 %v653, 126
      %v6933 = vpop.permute.xlu0 %6932
      %6934 = vrot.lane.b32.xlu0 %v654, 126
      %v6935 = vpop.permute.xlu0 %6934
      %6936 = vrot.lane.b32.xlu0 %v655, 126
      %v6937 = vpop.permute.xlu0 %6936
      %v7066 = vmul.f32 %v6554, %v6683
      %v7067 = vmul.f32 %v6555, %v6685
      %v7068 = vmul.f32 %v6556, %v6687
      %v7069 = vmul.f32 %v6557, %v6689
      %v7070 = vmul.f32 %v6558, %v6691
      %v7071 = vmul.f32 %v6559, %v6693
      %v7072 = vmul.f32 %v6560, %v6695
      %v7073 = vmul.f32 %v6561, %v6697
      %v7074 = vmul.f32 %v6562, %v6699
      %v7075 = vmul.f32 %v6563, %v6701
      %v7076 = vmul.f32 %v6564, %v6703
      %v7077 = vmul.f32 %v6565, %v6705
      %v7078 = vmul.f32 %v6566, %v6707
      %v7079 = vmul.f32 %v6567, %v6709
      %v7080 = vmul.f32 %v6568, %v6711
      %v7081 = vmul.f32 %v6569, %v6713
      %v7082 = vmul.f32 %v6570, %v6715
      %v7083 = vmul.f32 %v6571, %v6717
      %v7084 = vmul.f32 %v6572, %v6719
      %v7085 = vmul.f32 %v6573, %v6721
      %v7086 = vmul.f32 %v6574, %v6723
      %v7087 = vmul.f32 %v6575, %v6725
      %v7088 = vmul.f32 %v6576, %v6727
      %v7089 = vmul.f32 %v6577, %v6729
      %v7090 = vmul.f32 %v6578, %v6731
      %v7091 = vmul.f32 %v6579, %v6733
      %v7092 = vmul.f32 %v6580, %v6735
      %v7093 = vmul.f32 %v6581, %v6737
      %v7094 = vmul.f32 %v6582, %v6739
      %v7095 = vmul.f32 %v6583, %v6741
      %v7096 = vmul.f32 %v6584, %v6743
      %v7097 = vmul.f32 %v6585, %v6745
      %v7098 = vmul.f32 %v6586, %v6747
      %v7099 = vmul.f32 %v6587, %v6749
      %v7100 = vmul.f32 %v6588, %v6751
      %v7101 = vmul.f32 %v6589, %v6753
      %v7102 = vmul.f32 %v6590, %v6755
      %v7103 = vmul.f32 %v6591, %v6757
      %v7104 = vmul.f32 %v6592, %v6759
      %v7105 = vmul.f32 %v6593, %v6761
      %v7106 = vmul.f32 %v6594, %v6763
      %v7107 = vmul.f32 %v6595, %v6765
      %v7108 = vmul.f32 %v6596, %v6767
      %v7109 = vmul.f32 %v6597, %v6769
      %v7110 = vmul.f32 %v6598, %v6771
      %v7111 = vmul.f32 %v6599, %v6773
      %v7112 = vmul.f32 %v6600, %v6775
      %v7113 = vmul.f32 %v6601, %v6777
      %v7114 = vmul.f32 %v6602, %v6779
      %v7115 = vmul.f32 %v6603, %v6781
      %v7116 = vmul.f32 %v6604, %v6783
      %v7117 = vmul.f32 %v6605, %v6785
      %v7118 = vmul.f32 %v6606, %v6787
      %v7119 = vmul.f32 %v6607, %v6789
      %v7120 = vmul.f32 %v6608, %v6791
      %v7121 = vmul.f32 %v6609, %v6793
      %v7122 = vmul.f32 %v6610, %v6795
      %v7123 = vmul.f32 %v6611, %v6797
      %v7124 = vmul.f32 %v6612, %v6799
      %v7125 = vmul.f32 %v6613, %v6801
      %v7126 = vmul.f32 %v6614, %v6803
      %v7127 = vmul.f32 %v6615, %v6805
      %v7128 = vmul.f32 %v6616, %v6807
      %v7129 = vmul.f32 %v6617, %v6809
      %v7130 = vmul.f32 %v6618, %v6811
      %v7131 = vmul.f32 %v6619, %v6813
      %v7132 = vmul.f32 %v6620, %v6815
      %v7133 = vmul.f32 %v6621, %v6817
      %v7134 = vmul.f32 %v6622, %v6819
      %v7135 = vmul.f32 %v6623, %v6821
      %v7136 = vmul.f32 %v6624, %v6823
      %v7137 = vmul.f32 %v6625, %v6825
      %v7138 = vmul.f32 %v6626, %v6827
      %v7139 = vmul.f32 %v6627, %v6829
      %v7140 = vmul.f32 %v6628, %v6831
      %v7141 = vmul.f32 %v6629, %v6833
      %v7142 = vmul.f32 %v6630, %v6835
      %v7143 = vmul.f32 %v6631, %v6837
      %v7144 = vmul.f32 %v6632, %v6839
      %v7145 = vmul.f32 %v6633, %v6841
      %v7146 = vmul.f32 %v6634, %v6843
      %v7147 = vmul.f32 %v6635, %v6845
      %v7148 = vmul.f32 %v6636, %v6847
      %v7149 = vmul.f32 %v6637, %v6849
      %v7150 = vmul.f32 %v6638, %v6851
      %v7151 = vmul.f32 %v6639, %v6853
      %v7152 = vmul.f32 %v6640, %v6855
      %v7153 = vmul.f32 %v6641, %v6857
      %v7154 = vmul.f32 %v6642, %v6859
      %v7155 = vmul.f32 %v6643, %v6861
      %v7156 = vmul.f32 %v6644, %v6863
      %v7157 = vmul.f32 %v6645, %v6865
      %v7158 = vmul.f32 %v6646, %v6867
      %v7159 = vmul.f32 %v6647, %v6869
      %v7160 = vmul.f32 %v6648, %v6871
      %v7161 = vmul.f32 %v6649, %v6873
      %v7162 = vmul.f32 %v6650, %v6875
      %v7163 = vmul.f32 %v6651, %v6877
      %v7164 = vmul.f32 %v6652, %v6879
      %v7165 = vmul.f32 %v6653, %v6881
      %v7166 = vmul.f32 %v6654, %v6883
      %v7167 = vmul.f32 %v6655, %v6885
      %v7168 = vmul.f32 %v6656, %v6887
      %v7169 = vmul.f32 %v6657, %v6889
      %v7170 = vmul.f32 %v6658, %v6891
      %v7171 = vmul.f32 %v6659, %v6893
      %v7172 = vmul.f32 %v6660, %v6895
      %v7173 = vmul.f32 %v6661, %v6897
      %v7174 = vmul.f32 %v6662, %v6899
      %v7175 = vmul.f32 %v6663, %v6901
      %v7176 = vmul.f32 %v6664, %v6903
      %v7177 = vmul.f32 %v6665, %v6905
      %v7178 = vmul.f32 %v6666, %v6907
      %v7179 = vmul.f32 %v6667, %v6909
      %v7180 = vmul.f32 %v6668, %v6911
      %v7181 = vmul.f32 %v6669, %v6913
      %v7182 = vmul.f32 %v6670, %v6915
      %v7183 = vmul.f32 %v6671, %v6917
      %v7184 = vmul.f32 %v6672, %v6919
      %v7185 = vmul.f32 %v6673, %v6921
      %v7186 = vmul.f32 %v6674, %v6923
      %v7187 = vmul.f32 %v6675, %v6925
      %v7188 = vmul.f32 %v6676, %v6927
      %v7189 = vmul.f32 %v6677, %v6929
      %v7190 = vmul.f32 %v6678, %v6931
      %v7191 = vmul.f32 %v6679, %v6933
      %v7192 = vmul.f32 %v6680, %v6935
      %v7193 = vmul.f32 %v6681, %v6937
      %v7194 = vlaneseq
      %v7195 = vshrl.u32 %v7194, 7
      %v7196 = vadd.s32 %v7195, 8
      %v7197 = vadd.s32 %v7195, 16
      %v7198 = vadd.s32 %v7195, 24
      %v7199 = vadd.s32 %v7195, 32
      %v7200 = vadd.s32 %v7195, 40
      %v7201 = vadd.s32 %v7195, 48
      %v7202 = vadd.s32 %v7195, 56
      %v7203 = vadd.s32 %v7195, 64
      %v7204 = vadd.s32 %v7195, 72
      %v7205 = vadd.s32 %v7195, 80
      %v7206 = vadd.s32 %v7195, 88
      %v7207 = vadd.s32 %v7195, 96
      %v7208 = vadd.s32 %v7195, 104
      %v7209 = vadd.s32 %v7195, 112
      %v7210 = vadd.s32 %v7195, 120
      %v7211 = vadd.s32 %v7195, 128
      %v7212 = vadd.s32 %v7195, 136
      %v7213 = vadd.s32 %v7195, 144
      %v7214 = vadd.s32 %v7195, 152
      %v7215 = vadd.s32 %v7195, 160
      %v7216 = vadd.s32 %v7195, 168
      %v7217 = vadd.s32 %v7195, 176
      %v7218 = vadd.s32 %v7195, 184
      %v7219 = vadd.s32 %v7195, 192
      %v7220 = vadd.s32 %v7195, 200
      %v7221 = vadd.s32 %v7195, 208
      %v7222 = vadd.s32 %v7195, 216
      %v7223 = vadd.s32 %v7195, 224
      %v7224 = vadd.s32 %v7195, 232
      %v7225 = vadd.s32 %v7195, 240
      %v7226 = vadd.s32 %v7195, 248
      %v7227 = vadd.s32 %v7195, 256
      %v7228 = vadd.s32 %v7195, 264
      %v7229 = vadd.s32 %v7195, 272
      %v7230 = vadd.s32 %v7195, 280
      %v7231 = vadd.s32 %v7195, 288
      %v7232 = vadd.s32 %v7195, 296
      %v7233 = vadd.s32 %v7195, 304
      %v7234 = vadd.s32 %v7195, 312
      %v7235 = vadd.s32 %v7195, 320
      %v7236 = vadd.s32 %v7195, 328
      %v7237 = vadd.s32 %v7195, 336
      %v7238 = vadd.s32 %v7195, 344
      %v7239 = vadd.s32 %v7195, 352
      %v7240 = vadd.s32 %v7195, 360
      %v7241 = vadd.s32 %v7195, 368
      %v7242 = vadd.s32 %v7195, 376
      %v7243 = vadd.s32 %v7195, 384
      %v7244 = vadd.s32 %v7195, 392
      %v7245 = vadd.s32 %v7195, 400
      %v7246 = vadd.s32 %v7195, 408
      %v7247 = vadd.s32 %v7195, 416
      %v7248 = vadd.s32 %v7195, 424
      %v7249 = vadd.s32 %v7195, 432
      %v7250 = vadd.s32 %v7195, 440
      %v7251 = vadd.s32 %v7195, 448
      %v7252 = vadd.s32 %v7195, 456
      %v7253 = vadd.s32 %v7195, 464
      %v7254 = vadd.s32 %v7195, 472
      %v7255 = vadd.s32 %v7195, 480
      %v7256 = vadd.s32 %v7195, 488
      %v7257 = vadd.s32 %v7195, 496
      %v7258 = vadd.s32 %v7195, 504
      %v7259 = vadd.s32 %v7195, 512
      %v7260 = vadd.s32 %v7195, 520
      %v7261 = vadd.s32 %v7195, 528
      %v7262 = vadd.s32 %v7195, 536
      %v7263 = vadd.s32 %v7195, 544
      %v7264 = vadd.s32 %v7195, 552
      %v7265 = vadd.s32 %v7195, 560
      %v7266 = vadd.s32 %v7195, 568
      %v7267 = vadd.s32 %v7195, 576
      %v7268 = vadd.s32 %v7195, 584
      %v7269 = vadd.s32 %v7195, 592
      %v7270 = vadd.s32 %v7195, 600
      %v7271 = vadd.s32 %v7195, 608
      %v7272 = vadd.s32 %v7195, 616
      %v7273 = vadd.s32 %v7195, 624
      %v7274 = vadd.s32 %v7195, 632
      %v7275 = vadd.s32 %v7195, 640
      %v7276 = vadd.s32 %v7195, 648
      %v7277 = vadd.s32 %v7195, 656
      %v7278 = vadd.s32 %v7195, 664
      %v7279 = vadd.s32 %v7195, 672
      %v7280 = vadd.s32 %v7195, 680
      %v7281 = vadd.s32 %v7195, 688
      %v7282 = vadd.s32 %v7195, 696
      %v7283 = vadd.s32 %v7195, 704
      %v7284 = vadd.s32 %v7195, 712
      %v7285 = vadd.s32 %v7195, 720
      %v7286 = vadd.s32 %v7195, 728
      %v7287 = vadd.s32 %v7195, 736
      %v7288 = vadd.s32 %v7195, 744
      %v7289 = vadd.s32 %v7195, 752
      %v7290 = vadd.s32 %v7195, 760
      %v7291 = vadd.s32 %v7195, 768
      %v7292 = vadd.s32 %v7195, 776
      %v7293 = vadd.s32 %v7195, 784
      %v7294 = vadd.s32 %v7195, 792
      %v7295 = vadd.s32 %v7195, 800
      %v7296 = vadd.s32 %v7195, 808
      %v7297 = vadd.s32 %v7195, 816
      %v7298 = vadd.s32 %v7195, 824
      %v7299 = vadd.s32 %v7195, 832
      %v7300 = vadd.s32 %v7195, 840
      %v7301 = vadd.s32 %v7195, 848
      %v7302 = vadd.s32 %v7195, 856
      %v7303 = vadd.s32 %v7195, 864
      %v7304 = vadd.s32 %v7195, 872
      %v7305 = vadd.s32 %v7195, 880
      %v7306 = vadd.s32 %v7195, 888
      %v7307 = vadd.s32 %v7195, 896
      %v7308 = vadd.s32 %v7195, 904
      %v7309 = vadd.s32 %v7195, 912
      %v7310 = vadd.s32 %v7195, 920
      %v7311 = vadd.s32 %v7195, 928
      %v7312 = vadd.s32 %v7195, 936
      %v7313 = vadd.s32 %v7195, 944
      %v7314 = vadd.s32 %v7195, 952
      %v7315 = vadd.s32 %v7195, 960
      %v7316 = vadd.s32 %v7195, 968
      %v7317 = vadd.s32 %v7195, 976
      %v7318 = vadd.s32 %v7195, 984
      %v7319 = vadd.s32 %v7195, 992
      %v7320 = vadd.s32 %v7195, 1000
      %v7321 = vadd.s32 %v7195, 1008
      %v7322 = vadd.s32 %v7195, 1016
      %v7323 = vlaneseq
      %v7324 = vand.u32 %v7323, 127
      %v7325 = vshra.s32 %v7195, 5
      %v7326 = vshra.s32 %v7196, 5
      %v7327 = vshra.s32 %v7197, 5
      %v7328 = vshra.s32 %v7198, 5
      %v7329 = vshra.s32 %v7199, 5
      %v7330 = vshra.s32 %v7200, 5
      %v7331 = vshra.s32 %v7201, 5
      %v7332 = vshra.s32 %v7202, 5
      %v7333 = vshra.s32 %v7203, 5
      %v7334 = vshra.s32 %v7204, 5
      %v7335 = vshra.s32 %v7205, 5
      %v7336 = vshra.s32 %v7206, 5
      %v7337 = vshra.s32 %v7207, 5
      %v7338 = vshra.s32 %v7208, 5
      %v7339 = vshra.s32 %v7209, 5
      %v7340 = vshra.s32 %v7210, 5
      %v7341 = vshra.s32 %v7211, 5
      %v7342 = vshra.s32 %v7212, 5
      %v7343 = vshra.s32 %v7213, 5
      %v7344 = vshra.s32 %v7214, 5
      %v7345 = vshra.s32 %v7215, 5
      %v7346 = vshra.s32 %v7216, 5
      %v7347 = vshra.s32 %v7217, 5
      %v7348 = vshra.s32 %v7218, 5
      %v7349 = vshra.s32 %v7219, 5
      %v7350 = vshra.s32 %v7220, 5
      %v7351 = vshra.s32 %v7221, 5
      %v7352 = vshra.s32 %v7222, 5
      %v7353 = vshra.s32 %v7223, 5
      %v7354 = vshra.s32 %v7224, 5
      %v7355 = vshra.s32 %v7225, 5
      %v7356 = vshra.s32 %v7226, 5
      %v7357 = vshra.s32 %v7227, 5
      %v7358 = vshra.s32 %v7228, 5
      %v7359 = vshra.s32 %v7229, 5
      %v7360 = vshra.s32 %v7230, 5
      %v7361 = vshra.s32 %v7231, 5
      %v7362 = vshra.s32 %v7232, 5
      %v7363 = vshra.s32 %v7233, 5
      %v7364 = vshra.s32 %v7234, 5
      %v7365 = vshra.s32 %v7235, 5
      %v7366 = vshra.s32 %v7236, 5
      %v7367 = vshra.s32 %v7237, 5
      %v7368 = vshra.s32 %v7238, 5
      %v7369 = vshra.s32 %v7239, 5
      %v7370 = vshra.s32 %v7240, 5
      %v7371 = vshra.s32 %v7241, 5
      %v7372 = vshra.s32 %v7242, 5
      %v7373 = vshra.s32 %v7243, 5
      %v7374 = vshra.s32 %v7244, 5
      %v7375 = vshra.s32 %v7245, 5
      %v7376 = vshra.s32 %v7246, 5
      %v7377 = vshra.s32 %v7247, 5
      %v7378 = vshra.s32 %v7248, 5
      %v7379 = vshra.s32 %v7249, 5
      %v7380 = vshra.s32 %v7250, 5
      %v7381 = vshra.s32 %v7251, 5
      %v7382 = vshra.s32 %v7252, 5
      %v7383 = vshra.s32 %v7253, 5
      %v7384 = vshra.s32 %v7254, 5
      %v7385 = vshra.s32 %v7255, 5
      %v7386 = vshra.s32 %v7256, 5
      %v7387 = vshra.s32 %v7257, 5
      %v7388 = vshra.s32 %v7258, 5
      %v7389 = vshra.s32 %v7259, 5
      %v7390 = vshra.s32 %v7260, 5
      %v7391 = vshra.s32 %v7261, 5
      %v7392 = vshra.s32 %v7262, 5
      %v7393 = vshra.s32 %v7263, 5
      %v7394 = vshra.s32 %v7264, 5
      %v7395 = vshra.s32 %v7265, 5
      %v7396 = vshra.s32 %v7266, 5
      %v7397 = vshra.s32 %v7267, 5
      %v7398 = vshra.s32 %v7268, 5
      %v7399 = vshra.s32 %v7269, 5
      %v7400 = vshra.s32 %v7270, 5
      %v7401 = vshra.s32 %v7271, 5
      %v7402 = vshra.s32 %v7272, 5
      %v7403 = vshra.s32 %v7273, 5
      %v7404 = vshra.s32 %v7274, 5
      %v7405 = vshra.s32 %v7275, 5
      %v7406 = vshra.s32 %v7276, 5
      %v7407 = vshra.s32 %v7277, 5
      %v7408 = vshra.s32 %v7278, 5
      %v7409 = vshra.s32 %v7279, 5
      %v7410 = vshra.s32 %v7280, 5
      %v7411 = vshra.s32 %v7281, 5
      %v7412 = vshra.s32 %v7282, 5
      %v7413 = vshra.s32 %v7283, 5
      %v7414 = vshra.s32 %v7284, 5
      %v7415 = vshra.s32 %v7285, 5
      %v7416 = vshra.s32 %v7286, 5
      %v7417 = vshra.s32 %v7287, 5
      %v7418 = vshra.s32 %v7288, 5
      %v7419 = vshra.s32 %v7289, 5
      %v7420 = vshra.s32 %v7290, 5
      %v7421 = vshra.s32 %v7291, 5
      %v7422 = vshra.s32 %v7292, 5
      %v7423 = vshra.s32 %v7293, 5
      %v7424 = vshra.s32 %v7294, 5
      %v7425 = vshra.s32 %v7295, 5
      %v7426 = vshra.s32 %v7296, 5
      %v7427 = vshra.s32 %v7297, 5
      %v7428 = vshra.s32 %v7298, 5
      %v7429 = vshra.s32 %v7299, 5
      %v7430 = vshra.s32 %v7300, 5
      %v7431 = vshra.s32 %v7301, 5
      %v7432 = vshra.s32 %v7302, 5
      %v7433 = vshra.s32 %v7303, 5
      %v7434 = vshra.s32 %v7304, 5
      %v7435 = vshra.s32 %v7305, 5
      %v7436 = vshra.s32 %v7306, 5
      %v7437 = vshra.s32 %v7307, 5
      %v7438 = vshra.s32 %v7308, 5
      %v7439 = vshra.s32 %v7309, 5
      %v7440 = vshra.s32 %v7310, 5
      %v7441 = vshra.s32 %v7311, 5
      %v7442 = vshra.s32 %v7312, 5
      %v7443 = vshra.s32 %v7313, 5
      %v7444 = vshra.s32 %v7314, 5
      %v7445 = vshra.s32 %v7315, 5
      %v7446 = vshra.s32 %v7316, 5
      %v7447 = vshra.s32 %v7317, 5
      %v7448 = vshra.s32 %v7318, 5
      %v7449 = vshra.s32 %v7319, 5
      %v7450 = vshra.s32 %v7320, 5
      %v7451 = vshra.s32 %v7321, 5
      %v7452 = vshra.s32 %v7322, 5
      %v7453 = vand.u32 %v7324, 31
      %vm7454 = vcmp.eq.s32.totalorder %v7325, %v7453
      %vm7455 = vcmp.eq.s32.totalorder %v7326, %v7453
      %vm7456 = vcmp.eq.s32.totalorder %v7327, %v7453
      %vm7457 = vcmp.eq.s32.totalorder %v7328, %v7453
      %vm7458 = vcmp.eq.s32.totalorder %v7329, %v7453
      %vm7459 = vcmp.eq.s32.totalorder %v7330, %v7453
      %vm7460 = vcmp.eq.s32.totalorder %v7331, %v7453
      %vm7461 = vcmp.eq.s32.totalorder %v7332, %v7453
      %vm7462 = vcmp.eq.s32.totalorder %v7333, %v7453
      %vm7463 = vcmp.eq.s32.totalorder %v7334, %v7453
      %vm7464 = vcmp.eq.s32.totalorder %v7335, %v7453
      %vm7465 = vcmp.eq.s32.totalorder %v7336, %v7453
      %vm7466 = vcmp.eq.s32.totalorder %v7337, %v7453
      %vm7467 = vcmp.eq.s32.totalorder %v7338, %v7453
      %vm7468 = vcmp.eq.s32.totalorder %v7339, %v7453
      %vm7469 = vcmp.eq.s32.totalorder %v7340, %v7453
      %vm7470 = vcmp.eq.s32.totalorder %v7341, %v7453
      %vm7471 = vcmp.eq.s32.totalorder %v7342, %v7453
      %vm7472 = vcmp.eq.s32.totalorder %v7343, %v7453
      %vm7473 = vcmp.eq.s32.totalorder %v7344, %v7453
      %vm7474 = vcmp.eq.s32.totalorder %v7345, %v7453
      %vm7475 = vcmp.eq.s32.totalorder %v7346, %v7453
      %vm7476 = vcmp.eq.s32.totalorder %v7347, %v7453
      %vm7477 = vcmp.eq.s32.totalorder %v7348, %v7453
      %vm7478 = vcmp.eq.s32.totalorder %v7349, %v7453
      %vm7479 = vcmp.eq.s32.totalorder %v7350, %v7453
      %vm7480 = vcmp.eq.s32.totalorder %v7351, %v7453
      %vm7481 = vcmp.eq.s32.totalorder %v7352, %v7453
      %vm7482 = vcmp.eq.s32.totalorder %v7353, %v7453
      %vm7483 = vcmp.eq.s32.totalorder %v7354, %v7453
      %vm7484 = vcmp.eq.s32.totalorder %v7355, %v7453
      %vm7485 = vcmp.eq.s32.totalorder %v7356, %v7453
      %vm7486 = vcmp.eq.s32.totalorder %v7357, %v7453
      %vm7487 = vcmp.eq.s32.totalorder %v7358, %v7453
      %vm7488 = vcmp.eq.s32.totalorder %v7359, %v7453
      %vm7489 = vcmp.eq.s32.totalorder %v7360, %v7453
      %vm7490 = vcmp.eq.s32.totalorder %v7361, %v7453
      %vm7491 = vcmp.eq.s32.totalorder %v7362, %v7453
      %vm7492 = vcmp.eq.s32.totalorder %v7363, %v7453
      %vm7493 = vcmp.eq.s32.totalorder %v7364, %v7453
      %vm7494 = vcmp.eq.s32.totalorder %v7365, %v7453
      %vm7495 = vcmp.eq.s32.totalorder %v7366, %v7453
      %vm7496 = vcmp.eq.s32.totalorder %v7367, %v7453
      %vm7497 = vcmp.eq.s32.totalorder %v7368, %v7453
      %vm7498 = vcmp.eq.s32.totalorder %v7369, %v7453
      %vm7499 = vcmp.eq.s32.totalorder %v7370, %v7453
      %vm7500 = vcmp.eq.s32.totalorder %v7371, %v7453
      %vm7501 = vcmp.eq.s32.totalorder %v7372, %v7453
      %vm7502 = vcmp.eq.s32.totalorder %v7373, %v7453
      %vm7503 = vcmp.eq.s32.totalorder %v7374, %v7453
      %vm7504 = vcmp.eq.s32.totalorder %v7375, %v7453
      %vm7505 = vcmp.eq.s32.totalorder %v7376, %v7453
      %vm7506 = vcmp.eq.s32.totalorder %v7377, %v7453
      %vm7507 = vcmp.eq.s32.totalorder %v7378, %v7453
      %vm7508 = vcmp.eq.s32.totalorder %v7379, %v7453
      %vm7509 = vcmp.eq.s32.totalorder %v7380, %v7453
      %vm7510 = vcmp.eq.s32.totalorder %v7381, %v7453
      %vm7511 = vcmp.eq.s32.totalorder %v7382, %v7453
      %vm7512 = vcmp.eq.s32.totalorder %v7383, %v7453
      %vm7513 = vcmp.eq.s32.totalorder %v7384, %v7453
      %vm7514 = vcmp.eq.s32.totalorder %v7385, %v7453
      %vm7515 = vcmp.eq.s32.totalorder %v7386, %v7453
      %vm7516 = vcmp.eq.s32.totalorder %v7387, %v7453
      %vm7517 = vcmp.eq.s32.totalorder %v7388, %v7453
      %vm7518 = vcmp.eq.s32.totalorder %v7389, %v7453
      %vm7519 = vcmp.eq.s32.totalorder %v7390, %v7453
      %vm7520 = vcmp.eq.s32.totalorder %v7391, %v7453
      %vm7521 = vcmp.eq.s32.totalorder %v7392, %v7453
      %vm7522 = vcmp.eq.s32.totalorder %v7393, %v7453
      %vm7523 = vcmp.eq.s32.totalorder %v7394, %v7453
      %vm7524 = vcmp.eq.s32.totalorder %v7395, %v7453
      %vm7525 = vcmp.eq.s32.totalorder %v7396, %v7453
      %vm7526 = vcmp.eq.s32.totalorder %v7397, %v7453
      %vm7527 = vcmp.eq.s32.totalorder %v7398, %v7453
      %vm7528 = vcmp.eq.s32.totalorder %v7399, %v7453
      %vm7529 = vcmp.eq.s32.totalorder %v7400, %v7453
      %vm7530 = vcmp.eq.s32.totalorder %v7401, %v7453
      %vm7531 = vcmp.eq.s32.totalorder %v7402, %v7453
      %vm7532 = vcmp.eq.s32.totalorder %v7403, %v7453
      %vm7533 = vcmp.eq.s32.totalorder %v7404, %v7453
      %vm7534 = vcmp.eq.s32.totalorder %v7405, %v7453
      %vm7535 = vcmp.eq.s32.totalorder %v7406, %v7453
      %vm7536 = vcmp.eq.s32.totalorder %v7407, %v7453
      %vm7537 = vcmp.eq.s32.totalorder %v7408, %v7453
      %vm7538 = vcmp.eq.s32.totalorder %v7409, %v7453
      %vm7539 = vcmp.eq.s32.totalorder %v7410, %v7453
      %vm7540 = vcmp.eq.s32.totalorder %v7411, %v7453
      %vm7541 = vcmp.eq.s32.totalorder %v7412, %v7453
      %vm7542 = vcmp.eq.s32.totalorder %v7413, %v7453
      %vm7543 = vcmp.eq.s32.totalorder %v7414, %v7453
      %vm7544 = vcmp.eq.s32.totalorder %v7415, %v7453
      %vm7545 = vcmp.eq.s32.totalorder %v7416, %v7453
      %vm7546 = vcmp.eq.s32.totalorder %v7417, %v7453
      %vm7547 = vcmp.eq.s32.totalorder %v7418, %v7453
      %vm7548 = vcmp.eq.s32.totalorder %v7419, %v7453
      %vm7549 = vcmp.eq.s32.totalorder %v7420, %v7453
      %vm7550 = vcmp.eq.s32.totalorder %v7421, %v7453
      %vm7551 = vcmp.eq.s32.totalorder %v7422, %v7453
      %vm7552 = vcmp.eq.s32.totalorder %v7423, %v7453
      %vm7553 = vcmp.eq.s32.totalorder %v7424, %v7453
      %vm7554 = vcmp.eq.s32.totalorder %v7425, %v7453
      %vm7555 = vcmp.eq.s32.totalorder %v7426, %v7453
      %vm7556 = vcmp.eq.s32.totalorder %v7427, %v7453
      %vm7557 = vcmp.eq.s32.totalorder %v7428, %v7453
      %vm7558 = vcmp.eq.s32.totalorder %v7429, %v7453
      %vm7559 = vcmp.eq.s32.totalorder %v7430, %v7453
      %vm7560 = vcmp.eq.s32.totalorder %v7431, %v7453
      %vm7561 = vcmp.eq.s32.totalorder %v7432, %v7453
      %vm7562 = vcmp.eq.s32.totalorder %v7433, %v7453
      %vm7563 = vcmp.eq.s32.totalorder %v7434, %v7453
      %vm7564 = vcmp.eq.s32.totalorder %v7435, %v7453
      %vm7565 = vcmp.eq.s32.totalorder %v7436, %v7453
      %vm7566 = vcmp.eq.s32.totalorder %v7437, %v7453
      %vm7567 = vcmp.eq.s32.totalorder %v7438, %v7453
      %vm7568 = vcmp.eq.s32.totalorder %v7439, %v7453
      %vm7569 = vcmp.eq.s32.totalorder %v7440, %v7453
      %vm7570 = vcmp.eq.s32.totalorder %v7441, %v7453
      %vm7571 = vcmp.eq.s32.totalorder %v7442, %v7453
      %vm7572 = vcmp.eq.s32.totalorder %v7443, %v7453
      %vm7573 = vcmp.eq.s32.totalorder %v7444, %v7453
      %vm7574 = vcmp.eq.s32.totalorder %v7445, %v7453
      %vm7575 = vcmp.eq.s32.totalorder %v7446, %v7453
      %vm7576 = vcmp.eq.s32.totalorder %v7447, %v7453
      %vm7577 = vcmp.eq.s32.totalorder %v7448, %v7453
      %vm7578 = vcmp.eq.s32.totalorder %v7449, %v7453
      %vm7579 = vcmp.eq.s32.totalorder %v7450, %v7453
      %vm7580 = vcmp.eq.s32.totalorder %v7451, %v7453
      %vm7581 = vcmp.eq.s32.totalorder %v7452, %v7453
      %v7582 = vshra.s32 %v7324, 5
      %v7583 = vcvt.s32.f32 %v7582
      %7584 = vset.pattern.permute.xlu0 15
      %7585 = vperm.xlu0 %7584, %v528
      %v7586 = vpop.permute.xlu0 %7585
      %7588 = vset.pattern.permute.xlu0 15
      %7589 = vperm.xlu0 %7588, %v529
      %v7590 = vpop.permute.xlu0 %7589
      %7592 = vset.pattern.permute.xlu0 15
      %7593 = vperm.xlu0 %7592, %v530
      %v7594 = vpop.permute.xlu0 %7593
      %7596 = vset.pattern.permute.xlu0 15
      %7597 = vperm.xlu0 %7596, %v531
      %v7598 = vpop.permute.xlu0 %7597
      %7600 = vset.pattern.permute.xlu0 15
      %7601 = vperm.xlu0 %7600, %v532
      %v7602 = vpop.permute.xlu0 %7601
      %7604 = vset.pattern.permute.xlu0 15
      %7605 = vperm.xlu0 %7604, %v533
      %v7606 = vpop.permute.xlu0 %7605
      %7608 = vset.pattern.permute.xlu0 15
      %7609 = vperm.xlu0 %7608, %v534
      %v7610 = vpop.permute.xlu0 %7609
      %7612 = vset.pattern.permute.xlu0 15
      %7613 = vperm.xlu0 %7612, %v535
      %v7614 = vpop.permute.xlu0 %7613
      %7616 = vset.pattern.permute.xlu0 15
      %7617 = vperm.xlu0 %7616, %v536
      %v7618 = vpop.permute.xlu0 %7617
      %7620 = vset.pattern.permute.xlu0 15
      %7621 = vperm.xlu0 %7620, %v537
      %v7622 = vpop.permute.xlu0 %7621
      %7624 = vset.pattern.permute.xlu0 15
      %7625 = vperm.xlu0 %7624, %v538
      %v7626 = vpop.permute.xlu0 %7625
      %7628 = vset.pattern.permute.xlu0 15
      %7629 = vperm.xlu0 %7628, %v539
      %v7630 = vpop.permute.xlu0 %7629
      %7632 = vset.pattern.permute.xlu0 15
      %7633 = vperm.xlu0 %7632, %v540
      %v7634 = vpop.permute.xlu0 %7633
      %7636 = vset.pattern.permute.xlu0 15
      %7637 = vperm.xlu0 %7636, %v541
      %v7638 = vpop.permute.xlu0 %7637
      %7640 = vset.pattern.permute.xlu0 15
      %7641 = vperm.xlu0 %7640, %v542
      %v7642 = vpop.permute.xlu0 %7641
      %7644 = vset.pattern.permute.xlu0 15
      %7645 = vperm.xlu0 %7644, %v543
      %v7646 = vpop.permute.xlu0 %7645
      %7648 = vset.pattern.permute.xlu0 15
      %7649 = vperm.xlu0 %7648, %v544
      %v7650 = vpop.permute.xlu0 %7649
      %7652 = vset.pattern.permute.xlu0 15
      %7653 = vperm.xlu0 %7652, %v545
      %v7654 = vpop.permute.xlu0 %7653
      %7656 = vset.pattern.permute.xlu0 15
      %7657 = vperm.xlu0 %7656, %v546
      %v7658 = vpop.permute.xlu0 %7657
      %7660 = vset.pattern.permute.xlu0 15
      %7661 = vperm.xlu0 %7660, %v547
      %v7662 = vpop.permute.xlu0 %7661
      %7664 = vset.pattern.permute.xlu0 15
      %7665 = vperm.xlu0 %7664, %v548
      %v7666 = vpop.permute.xlu0 %7665
      %7668 = vset.pattern.permute.xlu0 15
      %7669 = vperm.xlu0 %7668, %v549
      %v7670 = vpop.permute.xlu0 %7669
      %7672 = vset.pattern.permute.xlu0 15
      %7673 = vperm.xlu0 %7672, %v550
      %v7674 = vpop.permute.xlu0 %7673
      %7676 = vset.pattern.permute.xlu0 15
      %7677 = vperm.xlu0 %7676, %v551
      %v7678 = vpop.permute.xlu0 %7677
      %7680 = vset.pattern.permute.xlu0 15
      %7681 = vperm.xlu0 %7680, %v552
      %v7682 = vpop.permute.xlu0 %7681
      %7684 = vset.pattern.permute.xlu0 15
      %7685 = vperm.xlu0 %7684, %v553
      %v7686 = vpop.permute.xlu0 %7685
      %7688 = vset.pattern.permute.xlu0 15
      %7689 = vperm.xlu0 %7688, %v554
      %v7690 = vpop.permute.xlu0 %7689
      %7692 = vset.pattern.permute.xlu0 15
      %7693 = vperm.xlu0 %7692, %v555
      %v7694 = vpop.permute.xlu0 %7693
      %7696 = vset.pattern.permute.xlu0 15
      %7697 = vperm.xlu0 %7696, %v556
      %v7698 = vpop.permute.xlu0 %7697
      %7700 = vset.pattern.permute.xlu0 15
      %7701 = vperm.xlu0 %7700, %v557
      %v7702 = vpop.permute.xlu0 %7701
      %7704 = vset.pattern.permute.xlu0 15
      %7705 = vperm.xlu0 %7704, %v558
      %v7706 = vpop.permute.xlu0 %7705
      %7708 = vset.pattern.permute.xlu0 15
      %7709 = vperm.xlu0 %7708, %v559
      %v7710 = vpop.permute.xlu0 %7709
      %7712 = vset.pattern.permute.xlu0 15
      %7713 = vperm.xlu0 %7712, %v560
      %v7714 = vpop.permute.xlu0 %7713
      %7716 = vset.pattern.permute.xlu0 15
      %7717 = vperm.xlu0 %7716, %v561
      %v7718 = vpop.permute.xlu0 %7717
      %7720 = vset.pattern.permute.xlu0 15
      %7721 = vperm.xlu0 %7720, %v562
      %v7722 = vpop.permute.xlu0 %7721
      %7724 = vset.pattern.permute.xlu0 15
      %7725 = vperm.xlu0 %7724, %v563
      %v7726 = vpop.permute.xlu0 %7725
      %7728 = vset.pattern.permute.xlu0 15
      %7729 = vperm.xlu0 %7728, %v564
      %v7730 = vpop.permute.xlu0 %7729
      %7732 = vset.pattern.permute.xlu0 15
      %7733 = vperm.xlu0 %7732, %v565
      %v7734 = vpop.permute.xlu0 %7733
      %7736 = vset.pattern.permute.xlu0 15
      %7737 = vperm.xlu0 %7736, %v566
      %v7738 = vpop.permute.xlu0 %7737
      %7740 = vset.pattern.permute.xlu0 15
      %7741 = vperm.xlu0 %7740, %v567
      %v7742 = vpop.permute.xlu0 %7741
      %7744 = vset.pattern.permute.xlu0 15
      %7745 = vperm.xlu0 %7744, %v568
      %v7746 = vpop.permute.xlu0 %7745
      %7748 = vset.pattern.permute.xlu0 15
      %7749 = vperm.xlu0 %7748, %v569
      %v7750 = vpop.permute.xlu0 %7749
      %7752 = vset.pattern.permute.xlu0 15
      %7753 = vperm.xlu0 %7752, %v570
      %v7754 = vpop.permute.xlu0 %7753
      %7756 = vset.pattern.permute.xlu0 15
      %7757 = vperm.xlu0 %7756, %v571
      %v7758 = vpop.permute.xlu0 %7757
      %7760 = vset.pattern.permute.xlu0 15
      %7761 = vperm.xlu0 %7760, %v572
      %v7762 = vpop.permute.xlu0 %7761
      %7764 = vset.pattern.permute.xlu0 15
      %7765 = vperm.xlu0 %7764, %v573
      %v7766 = vpop.permute.xlu0 %7765
      %7768 = vset.pattern.permute.xlu0 15
      %7769 = vperm.xlu0 %7768, %v574
      %v7770 = vpop.permute.xlu0 %7769
      %7772 = vset.pattern.permute.xlu0 15
      %7773 = vperm.xlu0 %7772, %v575
      %v7774 = vpop.permute.xlu0 %7773
      %7776 = vset.pattern.permute.xlu0 15
      %7777 = vperm.xlu0 %7776, %v576
      %v7778 = vpop.permute.xlu0 %7777
      %7780 = vset.pattern.permute.xlu0 15
      %7781 = vperm.xlu0 %7780, %v577
      %v7782 = vpop.permute.xlu0 %7781
      %7784 = vset.pattern.permute.xlu0 15
      %7785 = vperm.xlu0 %7784, %v578
      %v7786 = vpop.permute.xlu0 %7785
      %7788 = vset.pattern.permute.xlu0 15
      %7789 = vperm.xlu0 %7788, %v579
      %v7790 = vpop.permute.xlu0 %7789
      %7792 = vset.pattern.permute.xlu0 15
      %7793 = vperm.xlu0 %7792, %v580
      %v7794 = vpop.permute.xlu0 %7793
      %7796 = vset.pattern.permute.xlu0 15
      %7797 = vperm.xlu0 %7796, %v581
      %v7798 = vpop.permute.xlu0 %7797
      %7800 = vset.pattern.permute.xlu0 15
      %7801 = vperm.xlu0 %7800, %v582
      %v7802 = vpop.permute.xlu0 %7801
      %7804 = vset.pattern.permute.xlu0 15
      %7805 = vperm.xlu0 %7804, %v583
      %v7806 = vpop.permute.xlu0 %7805
      %7808 = vset.pattern.permute.xlu0 15
      %7809 = vperm.xlu0 %7808, %v584
      %v7810 = vpop.permute.xlu0 %7809
      %7812 = vset.pattern.permute.xlu0 15
      %7813 = vperm.xlu0 %7812, %v585
      %v7814 = vpop.permute.xlu0 %7813
      %7816 = vset.pattern.permute.xlu0 15
      %7817 = vperm.xlu0 %7816, %v586
      %v7818 = vpop.permute.xlu0 %7817
      %7820 = vset.pattern.permute.xlu0 15
      %7821 = vperm.xlu0 %7820, %v587
      %v7822 = vpop.permute.xlu0 %7821
      %7824 = vset.pattern.permute.xlu0 15
      %7825 = vperm.xlu0 %7824, %v588
      %v7826 = vpop.permute.xlu0 %7825
      %7828 = vset.pattern.permute.xlu0 15
      %7829 = vperm.xlu0 %7828, %v589
      %v7830 = vpop.permute.xlu0 %7829
      %7832 = vset.pattern.permute.xlu0 15
      %7833 = vperm.xlu0 %7832, %v590
      %v7834 = vpop.permute.xlu0 %7833
      %7836 = vset.pattern.permute.xlu0 15
      %7837 = vperm.xlu0 %7836, %v591
      %v7838 = vpop.permute.xlu0 %7837
      %7840 = vset.pattern.permute.xlu0 15
      %7841 = vperm.xlu0 %7840, %v592
      %v7842 = vpop.permute.xlu0 %7841
      %7844 = vset.pattern.permute.xlu0 15
      %7845 = vperm.xlu0 %7844, %v593
      %v7846 = vpop.permute.xlu0 %7845
      %7848 = vset.pattern.permute.xlu0 15
      %7849 = vperm.xlu0 %7848, %v594
      %v7850 = vpop.permute.xlu0 %7849
      %7852 = vset.pattern.permute.xlu0 15
      %7853 = vperm.xlu0 %7852, %v595
      %v7854 = vpop.permute.xlu0 %7853
      %7856 = vset.pattern.permute.xlu0 15
      %7857 = vperm.xlu0 %7856, %v596
      %v7858 = vpop.permute.xlu0 %7857
      %7860 = vset.pattern.permute.xlu0 15
      %7861 = vperm.xlu0 %7860, %v597
      %v7862 = vpop.permute.xlu0 %7861
      %7864 = vset.pattern.permute.xlu0 15
      %7865 = vperm.xlu0 %7864, %v598
      %v7866 = vpop.permute.xlu0 %7865
      %7868 = vset.pattern.permute.xlu0 15
      %7869 = vperm.xlu0 %7868, %v599
      %v7870 = vpop.permute.xlu0 %7869
      %7872 = vset.pattern.permute.xlu0 15
      %7873 = vperm.xlu0 %7872, %v600
      %v7874 = vpop.permute.xlu0 %7873
      %7876 = vset.pattern.permute.xlu0 15
      %7877 = vperm.xlu0 %7876, %v601
      %v7878 = vpop.permute.xlu0 %7877
      %7880 = vset.pattern.permute.xlu0 15
      %7881 = vperm.xlu0 %7880, %v602
      %v7882 = vpop.permute.xlu0 %7881
      %7884 = vset.pattern.permute.xlu0 15
      %7885 = vperm.xlu0 %7884, %v603
      %v7886 = vpop.permute.xlu0 %7885
      %7888 = vset.pattern.permute.xlu0 15
      %7889 = vperm.xlu0 %7888, %v604
      %v7890 = vpop.permute.xlu0 %7889
      %7892 = vset.pattern.permute.xlu0 15
      %7893 = vperm.xlu0 %7892, %v605
      %v7894 = vpop.permute.xlu0 %7893
      %7896 = vset.pattern.permute.xlu0 15
      %7897 = vperm.xlu0 %7896, %v606
      %v7898 = vpop.permute.xlu0 %7897
      %7900 = vset.pattern.permute.xlu0 15
      %7901 = vperm.xlu0 %7900, %v607
      %v7902 = vpop.permute.xlu0 %7901
      %7904 = vset.pattern.permute.xlu0 15
      %7905 = vperm.xlu0 %7904, %v608
      %v7906 = vpop.permute.xlu0 %7905
      %7908 = vset.pattern.permute.xlu0 15
      %7909 = vperm.xlu0 %7908, %v609
      %v7910 = vpop.permute.xlu0 %7909
      %7912 = vset.pattern.permute.xlu0 15
      %7913 = vperm.xlu0 %7912, %v610
      %v7914 = vpop.permute.xlu0 %7913
      %7916 = vset.pattern.permute.xlu0 15
      %7917 = vperm.xlu0 %7916, %v611
      %v7918 = vpop.permute.xlu0 %7917
      %7920 = vset.pattern.permute.xlu0 15
      %7921 = vperm.xlu0 %7920, %v612
      %v7922 = vpop.permute.xlu0 %7921
      %7924 = vset.pattern.permute.xlu0 15
      %7925 = vperm.xlu0 %7924, %v613
      %v7926 = vpop.permute.xlu0 %7925
      %7928 = vset.pattern.permute.xlu0 15
      %7929 = vperm.xlu0 %7928, %v614
      %v7930 = vpop.permute.xlu0 %7929
      %7932 = vset.pattern.permute.xlu0 15
      %7933 = vperm.xlu0 %7932, %v615
      %v7934 = vpop.permute.xlu0 %7933
      %7936 = vset.pattern.permute.xlu0 15
      %7937 = vperm.xlu0 %7936, %v616
      %v7938 = vpop.permute.xlu0 %7937
      %7940 = vset.pattern.permute.xlu0 15
      %7941 = vperm.xlu0 %7940, %v617
      %v7942 = vpop.permute.xlu0 %7941
      %7944 = vset.pattern.permute.xlu0 15
      %7945 = vperm.xlu0 %7944, %v618
      %v7946 = vpop.permute.xlu0 %7945
      %7948 = vset.pattern.permute.xlu0 15
      %7949 = vperm.xlu0 %7948, %v619
      %v7950 = vpop.permute.xlu0 %7949
      %7952 = vset.pattern.permute.xlu0 15
      %7953 = vperm.xlu0 %7952, %v620
      %v7954 = vpop.permute.xlu0 %7953
      %7956 = vset.pattern.permute.xlu0 15
      %7957 = vperm.xlu0 %7956, %v621
      %v7958 = vpop.permute.xlu0 %7957
      %7960 = vset.pattern.permute.xlu0 15
      %7961 = vperm.xlu0 %7960, %v622
      %v7962 = vpop.permute.xlu0 %7961
      %7964 = vset.pattern.permute.xlu0 15
      %7965 = vperm.xlu0 %7964, %v623
      %v7966 = vpop.permute.xlu0 %7965
      %7968 = vset.pattern.permute.xlu0 15
      %7969 = vperm.xlu0 %7968, %v624
      %v7970 = vpop.permute.xlu0 %7969
      %7972 = vset.pattern.permute.xlu0 15
      %7973 = vperm.xlu0 %7972, %v625
      %v7974 = vpop.permute.xlu0 %7973
      %7976 = vset.pattern.permute.xlu0 15
      %7977 = vperm.xlu0 %7976, %v626
      %v7978 = vpop.permute.xlu0 %7977
      %7980 = vset.pattern.permute.xlu0 15
      %7981 = vperm.xlu0 %7980, %v627
      %v7982 = vpop.permute.xlu0 %7981
      %7984 = vset.pattern.permute.xlu0 15
      %7985 = vperm.xlu0 %7984, %v628
      %v7986 = vpop.permute.xlu0 %7985
      %7988 = vset.pattern.permute.xlu0 15
      %7989 = vperm.xlu0 %7988, %v629
      %v7990 = vpop.permute.xlu0 %7989
      %7992 = vset.pattern.permute.xlu0 15
      %7993 = vperm.xlu0 %7992, %v630
      %v7994 = vpop.permute.xlu0 %7993
      %7996 = vset.pattern.permute.xlu0 15
      %7997 = vperm.xlu0 %7996, %v631
      %v7998 = vpop.permute.xlu0 %7997
      %8000 = vset.pattern.permute.xlu0 15
      %8001 = vperm.xlu0 %8000, %v632
      %v8002 = vpop.permute.xlu0 %8001
      %8004 = vset.pattern.permute.xlu0 15
      %8005 = vperm.xlu0 %8004, %v633
      %v8006 = vpop.permute.xlu0 %8005
      %8008 = vset.pattern.permute.xlu0 15
      %8009 = vperm.xlu0 %8008, %v634
      %v8010 = vpop.permute.xlu0 %8009
      %8012 = vset.pattern.permute.xlu0 15
      %8013 = vperm.xlu0 %8012, %v635
      %v8014 = vpop.permute.xlu0 %8013
      %8016 = vset.pattern.permute.xlu0 15
      %8017 = vperm.xlu0 %8016, %v636
      %v8018 = vpop.permute.xlu0 %8017
      %8020 = vset.pattern.permute.xlu0 15
      %8021 = vperm.xlu0 %8020, %v637
      %v8022 = vpop.permute.xlu0 %8021
      %8024 = vset.pattern.permute.xlu0 15
      %8025 = vperm.xlu0 %8024, %v638
      %v8026 = vpop.permute.xlu0 %8025
      %8028 = vset.pattern.permute.xlu0 15
      %8029 = vperm.xlu0 %8028, %v639
      %v8030 = vpop.permute.xlu0 %8029
      %8032 = vset.pattern.permute.xlu0 15
      %8033 = vperm.xlu0 %8032, %v640
      %v8034 = vpop.permute.xlu0 %8033
      %8036 = vset.pattern.permute.xlu0 15
      %8037 = vperm.xlu0 %8036, %v641
      %v8038 = vpop.permute.xlu0 %8037
      %8040 = vset.pattern.permute.xlu0 15
      %8041 = vperm.xlu0 %8040, %v642
      %v8042 = vpop.permute.xlu0 %8041
      %8044 = vset.pattern.permute.xlu0 15
      %8045 = vperm.xlu0 %8044, %v643
      %v8046 = vpop.permute.xlu0 %8045
      %8048 = vset.pattern.permute.xlu0 15
      %8049 = vperm.xlu0 %8048, %v644
      %v8050 = vpop.permute.xlu0 %8049
      %8052 = vset.pattern.permute.xlu0 15
      %8053 = vperm.xlu0 %8052, %v645
      %v8054 = vpop.permute.xlu0 %8053
      %8056 = vset.pattern.permute.xlu0 15
      %8057 = vperm.xlu0 %8056, %v646
      %v8058 = vpop.permute.xlu0 %8057
      %8060 = vset.pattern.permute.xlu0 15
      %8061 = vperm.xlu0 %8060, %v647
      %v8062 = vpop.permute.xlu0 %8061
      %8064 = vset.pattern.permute.xlu0 15
      %8065 = vperm.xlu0 %8064, %v648
      %v8066 = vpop.permute.xlu0 %8065
      %8068 = vset.pattern.permute.xlu0 15
      %8069 = vperm.xlu0 %8068, %v649
      %v8070 = vpop.permute.xlu0 %8069
      %8072 = vset.pattern.permute.xlu0 15
      %8073 = vperm.xlu0 %8072, %v650
      %v8074 = vpop.permute.xlu0 %8073
      %8076 = vset.pattern.permute.xlu0 15
      %8077 = vperm.xlu0 %8076, %v651
      %v8078 = vpop.permute.xlu0 %8077
      %8080 = vset.pattern.permute.xlu0 15
      %8081 = vperm.xlu0 %8080, %v652
      %v8082 = vpop.permute.xlu0 %8081
      %8084 = vset.pattern.permute.xlu0 15
      %8085 = vperm.xlu0 %8084, %v653
      %v8086 = vpop.permute.xlu0 %8085
      %8088 = vset.pattern.permute.xlu0 15
      %8089 = vperm.xlu0 %8088, %v654
      %v8090 = vpop.permute.xlu0 %8089
      %8092 = vset.pattern.permute.xlu0 15
      %8093 = vperm.xlu0 %8092, %v655
      %v8094 = vpop.permute.xlu0 %8093
      %vm8096 = vcmp.eq.f32.partialorder %v7586, %v7583
      %vm8097 = vcmp.eq.f32.partialorder %v7590, %v7583
      %vm8098 = vcmp.eq.f32.partialorder %v7594, %v7583
      %vm8099 = vcmp.eq.f32.partialorder %v7598, %v7583
      %vm8100 = vcmp.eq.f32.partialorder %v7602, %v7583
      %vm8101 = vcmp.eq.f32.partialorder %v7606, %v7583
      %vm8102 = vcmp.eq.f32.partialorder %v7610, %v7583
      %vm8103 = vcmp.eq.f32.partialorder %v7614, %v7583
      %vm8104 = vcmp.eq.f32.partialorder %v7618, %v7583
      %vm8105 = vcmp.eq.f32.partialorder %v7622, %v7583
      %vm8106 = vcmp.eq.f32.partialorder %v7626, %v7583
      %vm8107 = vcmp.eq.f32.partialorder %v7630, %v7583
      %vm8108 = vcmp.eq.f32.partialorder %v7634, %v7583
      %vm8109 = vcmp.eq.f32.partialorder %v7638, %v7583
      %vm8110 = vcmp.eq.f32.partialorder %v7642, %v7583
      %vm8111 = vcmp.eq.f32.partialorder %v7646, %v7583
      %vm8112 = vcmp.eq.f32.partialorder %v7650, %v7583
      %vm8113 = vcmp.eq.f32.partialorder %v7654, %v7583
      %vm8114 = vcmp.eq.f32.partialorder %v7658, %v7583
      %vm8115 = vcmp.eq.f32.partialorder %v7662, %v7583
      %vm8116 = vcmp.eq.f32.partialorder %v7666, %v7583
      %vm8117 = vcmp.eq.f32.partialorder %v7670, %v7583
      %vm8118 = vcmp.eq.f32.partialorder %v7674, %v7583
      %vm8119 = vcmp.eq.f32.partialorder %v7678, %v7583
      %vm8120 = vcmp.eq.f32.partialorder %v7682, %v7583
      %vm8121 = vcmp.eq.f32.partialorder %v7686, %v7583
      %vm8122 = vcmp.eq.f32.partialorder %v7690, %v7583
      %vm8123 = vcmp.eq.f32.partialorder %v7694, %v7583
      %vm8124 = vcmp.eq.f32.partialorder %v7698, %v7583
      %vm8125 = vcmp.eq.f32.partialorder %v7702, %v7583
      %vm8126 = vcmp.eq.f32.partialorder %v7706, %v7583
      %vm8127 = vcmp.eq.f32.partialorder %v7710, %v7583
      %vm8128 = vcmp.eq.f32.partialorder %v7714, %v7583
      %vm8129 = vcmp.eq.f32.partialorder %v7718, %v7583
      %vm8130 = vcmp.eq.f32.partialorder %v7722, %v7583
      %vm8131 = vcmp.eq.f32.partialorder %v7726, %v7583
      %vm8132 = vcmp.eq.f32.partialorder %v7730, %v7583
      %vm8133 = vcmp.eq.f32.partialorder %v7734, %v7583
      %vm8134 = vcmp.eq.f32.partialorder %v7738, %v7583
      %vm8135 = vcmp.eq.f32.partialorder %v7742, %v7583
      %vm8136 = vcmp.eq.f32.partialorder %v7746, %v7583
      %vm8137 = vcmp.eq.f32.partialorder %v7750, %v7583
      %vm8138 = vcmp.eq.f32.partialorder %v7754, %v7583
      %vm8139 = vcmp.eq.f32.partialorder %v7758, %v7583
      %vm8140 = vcmp.eq.f32.partialorder %v7762, %v7583
      %vm8141 = vcmp.eq.f32.partialorder %v7766, %v7583
      %vm8142 = vcmp.eq.f32.partialorder %v7770, %v7583
      %vm8143 = vcmp.eq.f32.partialorder %v7774, %v7583
      %vm8144 = vcmp.eq.f32.partialorder %v7778, %v7583
      %vm8145 = vcmp.eq.f32.partialorder %v7782, %v7583
      %vm8146 = vcmp.eq.f32.partialorder %v7786, %v7583
      %vm8147 = vcmp.eq.f32.partialorder %v7790, %v7583
      %vm8148 = vcmp.eq.f32.partialorder %v7794, %v7583
      %vm8149 = vcmp.eq.f32.partialorder %v7798, %v7583
      %vm8150 = vcmp.eq.f32.partialorder %v7802, %v7583
      %vm8151 = vcmp.eq.f32.partialorder %v7806, %v7583
      %vm8152 = vcmp.eq.f32.partialorder %v7810, %v7583
      %vm8153 = vcmp.eq.f32.partialorder %v7814, %v7583
      %vm8154 = vcmp.eq.f32.partialorder %v7818, %v7583
      %vm8155 = vcmp.eq.f32.partialorder %v7822, %v7583
      %vm8156 = vcmp.eq.f32.partialorder %v7826, %v7583
      %vm8157 = vcmp.eq.f32.partialorder %v7830, %v7583
      %vm8158 = vcmp.eq.f32.partialorder %v7834, %v7583
      %vm8159 = vcmp.eq.f32.partialorder %v7838, %v7583
      %vm8160 = vcmp.eq.f32.partialorder %v7842, %v7583
      %vm8161 = vcmp.eq.f32.partialorder %v7846, %v7583
      %vm8162 = vcmp.eq.f32.partialorder %v7850, %v7583
      %vm8163 = vcmp.eq.f32.partialorder %v7854, %v7583
      %vm8164 = vcmp.eq.f32.partialorder %v7858, %v7583
      %vm8165 = vcmp.eq.f32.partialorder %v7862, %v7583
      %vm8166 = vcmp.eq.f32.partialorder %v7866, %v7583
      %vm8167 = vcmp.eq.f32.partialorder %v7870, %v7583
      %vm8168 = vcmp.eq.f32.partialorder %v7874, %v7583
      %vm8169 = vcmp.eq.f32.partialorder %v7878, %v7583
      %vm8170 = vcmp.eq.f32.partialorder %v7882, %v7583
      %vm8171 = vcmp.eq.f32.partialorder %v7886, %v7583
      %vm8172 = vcmp.eq.f32.partialorder %v7890, %v7583
      %vm8173 = vcmp.eq.f32.partialorder %v7894, %v7583
      %vm8174 = vcmp.eq.f32.partialorder %v7898, %v7583
      %vm8175 = vcmp.eq.f32.partialorder %v7902, %v7583
      %vm8176 = vcmp.eq.f32.partialorder %v7906, %v7583
      %vm8177 = vcmp.eq.f32.partialorder %v7910, %v7583
      %vm8178 = vcmp.eq.f32.partialorder %v7914, %v7583
      %vm8179 = vcmp.eq.f32.partialorder %v7918, %v7583
      %vm8180 = vcmp.eq.f32.partialorder %v7922, %v7583
      %vm8181 = vcmp.eq.f32.partialorder %v7926, %v7583
      %vm8182 = vcmp.eq.f32.partialorder %v7930, %v7583
      %vm8183 = vcmp.eq.f32.partialorder %v7934, %v7583
      %vm8184 = vcmp.eq.f32.partialorder %v7938, %v7583
      %vm8185 = vcmp.eq.f32.partialorder %v7942, %v7583
      %vm8186 = vcmp.eq.f32.partialorder %v7946, %v7583
      %vm8187 = vcmp.eq.f32.partialorder %v7950, %v7583
      %vm8188 = vcmp.eq.f32.partialorder %v7954, %v7583
      %vm8189 = vcmp.eq.f32.partialorder %v7958, %v7583
      %vm8190 = vcmp.eq.f32.partialorder %v7962, %v7583
      %vm8191 = vcmp.eq.f32.partialorder %v7966, %v7583
      %vm8192 = vcmp.eq.f32.partialorder %v7970, %v7583
      %vm8193 = vcmp.eq.f32.partialorder %v7974, %v7583
      %vm8194 = vcmp.eq.f32.partialorder %v7978, %v7583
      %vm8195 = vcmp.eq.f32.partialorder %v7982, %v7583
      %vm8196 = vcmp.eq.f32.partialorder %v7986, %v7583
      %vm8197 = vcmp.eq.f32.partialorder %v7990, %v7583
      %vm8198 = vcmp.eq.f32.partialorder %v7994, %v7583
      %vm8199 = vcmp.eq.f32.partialorder %v7998, %v7583
      %vm8200 = vcmp.eq.f32.partialorder %v8002, %v7583
      %vm8201 = vcmp.eq.f32.partialorder %v8006, %v7583
      %vm8202 = vcmp.eq.f32.partialorder %v8010, %v7583
      %vm8203 = vcmp.eq.f32.partialorder %v8014, %v7583
      %vm8204 = vcmp.eq.f32.partialorder %v8018, %v7583
      %vm8205 = vcmp.eq.f32.partialorder %v8022, %v7583
      %vm8206 = vcmp.eq.f32.partialorder %v8026, %v7583
      %vm8207 = vcmp.eq.f32.partialorder %v8030, %v7583
      %vm8208 = vcmp.eq.f32.partialorder %v8034, %v7583
      %vm8209 = vcmp.eq.f32.partialorder %v8038, %v7583
      %vm8210 = vcmp.eq.f32.partialorder %v8042, %v7583
      %vm8211 = vcmp.eq.f32.partialorder %v8046, %v7583
      %vm8212 = vcmp.eq.f32.partialorder %v8050, %v7583
      %vm8213 = vcmp.eq.f32.partialorder %v8054, %v7583
      %vm8214 = vcmp.eq.f32.partialorder %v8058, %v7583
      %vm8215 = vcmp.eq.f32.partialorder %v8062, %v7583
      %vm8216 = vcmp.eq.f32.partialorder %v8066, %v7583
      %vm8217 = vcmp.eq.f32.partialorder %v8070, %v7583
      %vm8218 = vcmp.eq.f32.partialorder %v8074, %v7583
      %vm8219 = vcmp.eq.f32.partialorder %v8078, %v7583
      %vm8220 = vcmp.eq.f32.partialorder %v8082, %v7583
      %vm8221 = vcmp.eq.f32.partialorder %v8086, %v7583
      %vm8222 = vcmp.eq.f32.partialorder %v8090, %v7583
      %vm8223 = vcmp.eq.f32.partialorder %v8094, %v7583
      %vm8224 = vmand %vm7454, %vm8096
      %vm8225 = vmand %vm7455, %vm8097
      %vm8226 = vmand %vm7456, %vm8098
      %vm8227 = vmand %vm7457, %vm8099
      %vm8228 = vmand %vm7458, %vm8100
      %vm8229 = vmand %vm7459, %vm8101
      %vm8230 = vmand %vm7460, %vm8102
      %vm8231 = vmand %vm7461, %vm8103
      %vm8232 = vmand %vm7462, %vm8104
      %vm8233 = vmand %vm7463, %vm8105
      %vm8234 = vmand %vm7464, %vm8106
      %vm8235 = vmand %vm7465, %vm8107
      %vm8236 = vmand %vm7466, %vm8108
      %vm8237 = vmand %vm7467, %vm8109
      %vm8238 = vmand %vm7468, %vm8110
      %vm8239 = vmand %vm7469, %vm8111
      %vm8240 = vmand %vm7470, %vm8112
      %vm8241 = vmand %vm7471, %vm8113
      %vm8242 = vmand %vm7472, %vm8114
      %vm8243 = vmand %vm7473, %vm8115
      %vm8244 = vmand %vm7474, %vm8116
      %vm8245 = vmand %vm7475, %vm8117
      %vm8246 = vmand %vm7476, %vm8118
      %vm8247 = vmand %vm7477, %vm8119
      %vm8248 = vmand %vm7478, %vm8120
      %vm8249 = vmand %vm7479, %vm8121
      %vm8250 = vmand %vm7480, %vm8122
      %vm8251 = vmand %vm7481, %vm8123
      %vm8252 = vmand %vm7482, %vm8124
      %vm8253 = vmand %vm7483, %vm8125
      %vm8254 = vmand %vm7484, %vm8126
      %vm8255 = vmand %vm7485, %vm8127
      %vm8256 = vmand %vm7486, %vm8128
      %vm8257 = vmand %vm7487, %vm8129
      %vm8258 = vmand %vm7488, %vm8130
      %vm8259 = vmand %vm7489, %vm8131
      %vm8260 = vmand %vm7490, %vm8132
      %vm8261 = vmand %vm7491, %vm8133
      %vm8262 = vmand %vm7492, %vm8134
      %vm8263 = vmand %vm7493, %vm8135
      %vm8264 = vmand %vm7494, %vm8136
      %vm8265 = vmand %vm7495, %vm8137
      %vm8266 = vmand %vm7496, %vm8138
      %vm8267 = vmand %vm7497, %vm8139
      %vm8268 = vmand %vm7498, %vm8140
      %vm8269 = vmand %vm7499, %vm8141
      %vm8270 = vmand %vm7500, %vm8142
      %vm8271 = vmand %vm7501, %vm8143
      %vm8272 = vmand %vm7502, %vm8144
      %vm8273 = vmand %vm7503, %vm8145
      %vm8274 = vmand %vm7504, %vm8146
      %vm8275 = vmand %vm7505, %vm8147
      %vm8276 = vmand %vm7506, %vm8148
      %vm8277 = vmand %vm7507, %vm8149
      %vm8278 = vmand %vm7508, %vm8150
      %vm8279 = vmand %vm7509, %vm8151
      %vm8280 = vmand %vm7510, %vm8152
      %vm8281 = vmand %vm7511, %vm8153
      %vm8282 = vmand %vm7512, %vm8154
      %vm8283 = vmand %vm7513, %vm8155
      %vm8284 = vmand %vm7514, %vm8156
      %vm8285 = vmand %vm7515, %vm8157
      %vm8286 = vmand %vm7516, %vm8158
      %vm8287 = vmand %vm7517, %vm8159
      %vm8288 = vmand %vm7518, %vm8160
      %vm8289 = vmand %vm7519, %vm8161
      %vm8290 = vmand %vm7520, %vm8162
      %vm8291 = vmand %vm7521, %vm8163
      %vm8292 = vmand %vm7522, %vm8164
      %vm8293 = vmand %vm7523, %vm8165
      %vm8294 = vmand %vm7524, %vm8166
      %vm8295 = vmand %vm7525, %vm8167
      %vm8296 = vmand %vm7526, %vm8168
      %vm8297 = vmand %vm7527, %vm8169
      %vm8298 = vmand %vm7528, %vm8170
      %vm8299 = vmand %vm7529, %vm8171
      %vm8300 = vmand %vm7530, %vm8172
      %vm8301 = vmand %vm7531, %vm8173
      %vm8302 = vmand %vm7532, %vm8174
      %vm8303 = vmand %vm7533, %vm8175
      %vm8304 = vmand %vm7534, %vm8176
      %vm8305 = vmand %vm7535, %vm8177
      %vm8306 = vmand %vm7536, %vm8178
      %vm8307 = vmand %vm7537, %vm8179
      %vm8308 = vmand %vm7538, %vm8180
      %vm8309 = vmand %vm7539, %vm8181
      %vm8310 = vmand %vm7540, %vm8182
      %vm8311 = vmand %vm7541, %vm8183
      %vm8312 = vmand %vm7542, %vm8184
      %vm8313 = vmand %vm7543, %vm8185
      %vm8314 = vmand %vm7544, %vm8186
      %vm8315 = vmand %vm7545, %vm8187
      %vm8316 = vmand %vm7546, %vm8188
      %vm8317 = vmand %vm7547, %vm8189
      %vm8318 = vmand %vm7548, %vm8190
      %vm8319 = vmand %vm7549, %vm8191
      %vm8320 = vmand %vm7550, %vm8192
      %vm8321 = vmand %vm7551, %vm8193
      %vm8322 = vmand %vm7552, %vm8194
      %vm8323 = vmand %vm7553, %vm8195
      %vm8324 = vmand %vm7554, %vm8196
      %vm8325 = vmand %vm7555, %vm8197
      %vm8326 = vmand %vm7556, %vm8198
      %vm8327 = vmand %vm7557, %vm8199
      %vm8328 = vmand %vm7558, %vm8200
      %vm8329 = vmand %vm7559, %vm8201
      %vm8330 = vmand %vm7560, %vm8202
      %vm8331 = vmand %vm7561, %vm8203
      %vm8332 = vmand %vm7562, %vm8204
      %vm8333 = vmand %vm7563, %vm8205
      %vm8334 = vmand %vm7564, %vm8206
      %vm8335 = vmand %vm7565, %vm8207
      %vm8336 = vmand %vm7566, %vm8208
      %vm8337 = vmand %vm7567, %vm8209
      %vm8338 = vmand %vm7568, %vm8210
      %vm8339 = vmand %vm7569, %vm8211
      %vm8340 = vmand %vm7570, %vm8212
      %vm8341 = vmand %vm7571, %vm8213
      %vm8342 = vmand %vm7572, %vm8214
      %vm8343 = vmand %vm7573, %vm8215
      %vm8344 = vmand %vm7574, %vm8216
      %vm8345 = vmand %vm7575, %vm8217
      %vm8346 = vmand %vm7576, %vm8218
      %vm8347 = vmand %vm7577, %vm8219
      %vm8348 = vmand %vm7578, %vm8220
      %vm8349 = vmand %vm7579, %vm8221
      %vm8350 = vmand %vm7580, %vm8222
      %vm8351 = vmand %vm7581, %vm8223
      %v8352 = vsel %vm8224, 1.0, 0.0
      %v8353 = vsel %vm8225, 1.0, 0.0
      %v8354 = vsel %vm8226, 1.0, 0.0
      %v8355 = vsel %vm8227, 1.0, 0.0
      %v8356 = vsel %vm8228, 1.0, 0.0
      %v8357 = vsel %vm8229, 1.0, 0.0
      %v8358 = vsel %vm8230, 1.0, 0.0
      %v8359 = vsel %vm8231, 1.0, 0.0
      %v8360 = vsel %vm8232, 1.0, 0.0
      %v8361 = vsel %vm8233, 1.0, 0.0
      %v8362 = vsel %vm8234, 1.0, 0.0
      %v8363 = vsel %vm8235, 1.0, 0.0
      %v8364 = vsel %vm8236, 1.0, 0.0
      %v8365 = vsel %vm8237, 1.0, 0.0
      %v8366 = vsel %vm8238, 1.0, 0.0
      %v8367 = vsel %vm8239, 1.0, 0.0
      %v8368 = vsel %vm8240, 1.0, 0.0
      %v8369 = vsel %vm8241, 1.0, 0.0
      %v8370 = vsel %vm8242, 1.0, 0.0
      %v8371 = vsel %vm8243, 1.0, 0.0
      %v8372 = vsel %vm8244, 1.0, 0.0
      %v8373 = vsel %vm8245, 1.0, 0.0
      %v8374 = vsel %vm8246, 1.0, 0.0
      %v8375 = vsel %vm8247, 1.0, 0.0
      %v8376 = vsel %vm8248, 1.0, 0.0
      %v8377 = vsel %vm8249, 1.0, 0.0
      %v8378 = vsel %vm8250, 1.0, 0.0
      %v8379 = vsel %vm8251, 1.0, 0.0
      %v8380 = vsel %vm8252, 1.0, 0.0
      %v8381 = vsel %vm8253, 1.0, 0.0
      %v8382 = vsel %vm8254, 1.0, 0.0
      %v8383 = vsel %vm8255, 1.0, 0.0
      %v8384 = vsel %vm8256, 1.0, 0.0
      %v8385 = vsel %vm8257, 1.0, 0.0
      %v8386 = vsel %vm8258, 1.0, 0.0
      %v8387 = vsel %vm8259, 1.0, 0.0
      %v8388 = vsel %vm8260, 1.0, 0.0
      %v8389 = vsel %vm8261, 1.0, 0.0
      %v8390 = vsel %vm8262, 1.0, 0.0
      %v8391 = vsel %vm8263, 1.0, 0.0
      %v8392 = vsel %vm8264, 1.0, 0.0
      %v8393 = vsel %vm8265, 1.0, 0.0
      %v8394 = vsel %vm8266, 1.0, 0.0
      %v8395 = vsel %vm8267, 1.0, 0.0
      %v8396 = vsel %vm8268, 1.0, 0.0
      %v8397 = vsel %vm8269, 1.0, 0.0
      %v8398 = vsel %vm8270, 1.0, 0.0
      %v8399 = vsel %vm8271, 1.0, 0.0
      %v8400 = vsel %vm8272, 1.0, 0.0
      %v8401 = vsel %vm8273, 1.0, 0.0
      %v8402 = vsel %vm8274, 1.0, 0.0
      %v8403 = vsel %vm8275, 1.0, 0.0
      %v8404 = vsel %vm8276, 1.0, 0.0
      %v8405 = vsel %vm8277, 1.0, 0.0
      %v8406 = vsel %vm8278, 1.0, 0.0
      %v8407 = vsel %vm8279, 1.0, 0.0
      %v8408 = vsel %vm8280, 1.0, 0.0
      %v8409 = vsel %vm8281, 1.0, 0.0
      %v8410 = vsel %vm8282, 1.0, 0.0
      %v8411 = vsel %vm8283, 1.0, 0.0
      %v8412 = vsel %vm8284, 1.0, 0.0
      %v8413 = vsel %vm8285, 1.0, 0.0
      %v8414 = vsel %vm8286, 1.0, 0.0
      %v8415 = vsel %vm8287, 1.0, 0.0
      %v8416 = vsel %vm8288, 1.0, 0.0
      %v8417 = vsel %vm8289, 1.0, 0.0
      %v8418 = vsel %vm8290, 1.0, 0.0
      %v8419 = vsel %vm8291, 1.0, 0.0
      %v8420 = vsel %vm8292, 1.0, 0.0
      %v8421 = vsel %vm8293, 1.0, 0.0
      %v8422 = vsel %vm8294, 1.0, 0.0
      %v8423 = vsel %vm8295, 1.0, 0.0
      %v8424 = vsel %vm8296, 1.0, 0.0
      %v8425 = vsel %vm8297, 1.0, 0.0
      %v8426 = vsel %vm8298, 1.0, 0.0
      %v8427 = vsel %vm8299, 1.0, 0.0
      %v8428 = vsel %vm8300, 1.0, 0.0
      %v8429 = vsel %vm8301, 1.0, 0.0
      %v8430 = vsel %vm8302, 1.0, 0.0
      %v8431 = vsel %vm8303, 1.0, 0.0
      %v8432 = vsel %vm8304, 1.0, 0.0
      %v8433 = vsel %vm8305, 1.0, 0.0
      %v8434 = vsel %vm8306, 1.0, 0.0
      %v8435 = vsel %vm8307, 1.0, 0.0
      %v8436 = vsel %vm8308, 1.0, 0.0
      %v8437 = vsel %vm8309, 1.0, 0.0
      %v8438 = vsel %vm8310, 1.0, 0.0
      %v8439 = vsel %vm8311, 1.0, 0.0
      %v8440 = vsel %vm8312, 1.0, 0.0
      %v8441 = vsel %vm8313, 1.0, 0.0
      %v8442 = vsel %vm8314, 1.0, 0.0
      %v8443 = vsel %vm8315, 1.0, 0.0
      %v8444 = vsel %vm8316, 1.0, 0.0
      %v8445 = vsel %vm8317, 1.0, 0.0
      %v8446 = vsel %vm8318, 1.0, 0.0
      %v8447 = vsel %vm8319, 1.0, 0.0
      %v8448 = vsel %vm8320, 1.0, 0.0
      %v8449 = vsel %vm8321, 1.0, 0.0
      %v8450 = vsel %vm8322, 1.0, 0.0
      %v8451 = vsel %vm8323, 1.0, 0.0
      %v8452 = vsel %vm8324, 1.0, 0.0
      %v8453 = vsel %vm8325, 1.0, 0.0
      %v8454 = vsel %vm8326, 1.0, 0.0
      %v8455 = vsel %vm8327, 1.0, 0.0
      %v8456 = vsel %vm8328, 1.0, 0.0
      %v8457 = vsel %vm8329, 1.0, 0.0
      %v8458 = vsel %vm8330, 1.0, 0.0
      %v8459 = vsel %vm8331, 1.0, 0.0
      %v8460 = vsel %vm8332, 1.0, 0.0
      %v8461 = vsel %vm8333, 1.0, 0.0
      %v8462 = vsel %vm8334, 1.0, 0.0
      %v8463 = vsel %vm8335, 1.0, 0.0
      %v8464 = vsel %vm8336, 1.0, 0.0
      %v8465 = vsel %vm8337, 1.0, 0.0
      %v8466 = vsel %vm8338, 1.0, 0.0
      %v8467 = vsel %vm8339, 1.0, 0.0
      %v8468 = vsel %vm8340, 1.0, 0.0
      %v8469 = vsel %vm8341, 1.0, 0.0
      %v8470 = vsel %vm8342, 1.0, 0.0
      %v8471 = vsel %vm8343, 1.0, 0.0
      %v8472 = vsel %vm8344, 1.0, 0.0
      %v8473 = vsel %vm8345, 1.0, 0.0
      %v8474 = vsel %vm8346, 1.0, 0.0
      %v8475 = vsel %vm8347, 1.0, 0.0
      %v8476 = vsel %vm8348, 1.0, 0.0
      %v8477 = vsel %vm8349, 1.0, 0.0
      %v8478 = vsel %vm8350, 1.0, 0.0
      %v8479 = vsel %vm8351, 1.0, 0.0
      %8481 = vset.pattern.permute.xlu0 12
      %8482 = vperm.xlu0 %8481, %v7066
      %v8483 = vpop.permute.xlu0 %8482
      %8486 = vset.pattern.permute.xlu0 12
      %8487 = vperm.xlu0 %8486, %v7067
      %v8488 = vpop.permute.xlu0 %8487
      %8491 = vset.pattern.permute.xlu0 12
      %8492 = vperm.xlu0 %8491, %v7068
      %v8493 = vpop.permute.xlu0 %8492
      %8496 = vset.pattern.permute.xlu0 12
      %8497 = vperm.xlu0 %8496, %v7069
      %v8498 = vpop.permute.xlu0 %8497
      %8501 = vset.pattern.permute.xlu0 12
      %8502 = vperm.xlu0 %8501, %v7070
      %v8503 = vpop.permute.xlu0 %8502
      %8506 = vset.pattern.permute.xlu0 12
      %8507 = vperm.xlu0 %8506, %v7071
      %v8508 = vpop.permute.xlu0 %8507
      %8511 = vset.pattern.permute.xlu0 12
      %8512 = vperm.xlu0 %8511, %v7072
      %v8513 = vpop.permute.xlu0 %8512
      %8516 = vset.pattern.permute.xlu0 12
      %8517 = vperm.xlu0 %8516, %v7073
      %v8518 = vpop.permute.xlu0 %8517
      %8521 = vset.pattern.permute.xlu0 12
      %8522 = vperm.xlu0 %8521, %v7074
      %v8523 = vpop.permute.xlu0 %8522
      %8526 = vset.pattern.permute.xlu0 12
      %8527 = vperm.xlu0 %8526, %v7075
      %v8528 = vpop.permute.xlu0 %8527
      %8531 = vset.pattern.permute.xlu0 12
      %8532 = vperm.xlu0 %8531, %v7076
      %v8533 = vpop.permute.xlu0 %8532
      %8536 = vset.pattern.permute.xlu0 12
      %8537 = vperm.xlu0 %8536, %v7077
      %v8538 = vpop.permute.xlu0 %8537
      %8541 = vset.pattern.permute.xlu0 12
      %8542 = vperm.xlu0 %8541, %v7078
      %v8543 = vpop.permute.xlu0 %8542
      %8546 = vset.pattern.permute.xlu0 12
      %8547 = vperm.xlu0 %8546, %v7079
      %v8548 = vpop.permute.xlu0 %8547
      %8551 = vset.pattern.permute.xlu0 12
      %8552 = vperm.xlu0 %8551, %v7080
      %v8553 = vpop.permute.xlu0 %8552
      %8556 = vset.pattern.permute.xlu0 12
      %8557 = vperm.xlu0 %8556, %v7081
      %v8558 = vpop.permute.xlu0 %8557
      %8561 = vset.pattern.permute.xlu0 12
      %8562 = vperm.xlu0 %8561, %v7082
      %v8563 = vpop.permute.xlu0 %8562
      %8566 = vset.pattern.permute.xlu0 12
      %8567 = vperm.xlu0 %8566, %v7083
      %v8568 = vpop.permute.xlu0 %8567
      %8571 = vset.pattern.permute.xlu0 12
      %8572 = vperm.xlu0 %8571, %v7084
      %v8573 = vpop.permute.xlu0 %8572
      %8576 = vset.pattern.permute.xlu0 12
      %8577 = vperm.xlu0 %8576, %v7085
      %v8578 = vpop.permute.xlu0 %8577
      %8581 = vset.pattern.permute.xlu0 12
      %8582 = vperm.xlu0 %8581, %v7086
      %v8583 = vpop.permute.xlu0 %8582
      %8586 = vset.pattern.permute.xlu0 12
      %8587 = vperm.xlu0 %8586, %v7087
      %v8588 = vpop.permute.xlu0 %8587
      %8591 = vset.pattern.permute.xlu0 12
      %8592 = vperm.xlu0 %8591, %v7088
      %v8593 = vpop.permute.xlu0 %8592
      %8596 = vset.pattern.permute.xlu0 12
      %8597 = vperm.xlu0 %8596, %v7089
      %v8598 = vpop.permute.xlu0 %8597
      %8601 = vset.pattern.permute.xlu0 12
      %8602 = vperm.xlu0 %8601, %v7090
      %v8603 = vpop.permute.xlu0 %8602
      %8606 = vset.pattern.permute.xlu0 12
      %8607 = vperm.xlu0 %8606, %v7091
      %v8608 = vpop.permute.xlu0 %8607
      %8611 = vset.pattern.permute.xlu0 12
      %8612 = vperm.xlu0 %8611, %v7092
      %v8613 = vpop.permute.xlu0 %8612
      %8616 = vset.pattern.permute.xlu0 12
      %8617 = vperm.xlu0 %8616, %v7093
      %v8618 = vpop.permute.xlu0 %8617
      %8621 = vset.pattern.permute.xlu0 12
      %8622 = vperm.xlu0 %8621, %v7094
      %v8623 = vpop.permute.xlu0 %8622
      %8626 = vset.pattern.permute.xlu0 12
      %8627 = vperm.xlu0 %8626, %v7095
      %v8628 = vpop.permute.xlu0 %8627
      %8631 = vset.pattern.permute.xlu0 12
      %8632 = vperm.xlu0 %8631, %v7096
      %v8633 = vpop.permute.xlu0 %8632
      %8636 = vset.pattern.permute.xlu0 12
      %8637 = vperm.xlu0 %8636, %v7097
      %v8638 = vpop.permute.xlu0 %8637
      %8641 = vset.pattern.permute.xlu0 12
      %8642 = vperm.xlu0 %8641, %v7098
      %v8643 = vpop.permute.xlu0 %8642
      %8646 = vset.pattern.permute.xlu0 12
      %8647 = vperm.xlu0 %8646, %v7099
      %v8648 = vpop.permute.xlu0 %8647
      %8651 = vset.pattern.permute.xlu0 12
      %8652 = vperm.xlu0 %8651, %v7100
      %v8653 = vpop.permute.xlu0 %8652
      %8656 = vset.pattern.permute.xlu0 12
      %8657 = vperm.xlu0 %8656, %v7101
      %v8658 = vpop.permute.xlu0 %8657
      %8661 = vset.pattern.permute.xlu0 12
      %8662 = vperm.xlu0 %8661, %v7102
      %v8663 = vpop.permute.xlu0 %8662
      %8666 = vset.pattern.permute.xlu0 12
      %8667 = vperm.xlu0 %8666, %v7103
      %v8668 = vpop.permute.xlu0 %8667
      %8671 = vset.pattern.permute.xlu0 12
      %8672 = vperm.xlu0 %8671, %v7104
      %v8673 = vpop.permute.xlu0 %8672
      %8676 = vset.pattern.permute.xlu0 12
      %8677 = vperm.xlu0 %8676, %v7105
      %v8678 = vpop.permute.xlu0 %8677
      %8681 = vset.pattern.permute.xlu0 12
      %8682 = vperm.xlu0 %8681, %v7106
      %v8683 = vpop.permute.xlu0 %8682
      %8686 = vset.pattern.permute.xlu0 12
      %8687 = vperm.xlu0 %8686, %v7107
      %v8688 = vpop.permute.xlu0 %8687
      %8691 = vset.pattern.permute.xlu0 12
      %8692 = vperm.xlu0 %8691, %v7108
      %v8693 = vpop.permute.xlu0 %8692
      %8696 = vset.pattern.permute.xlu0 12
      %8697 = vperm.xlu0 %8696, %v7109
      %v8698 = vpop.permute.xlu0 %8697
      %8701 = vset.pattern.permute.xlu0 12
      %8702 = vperm.xlu0 %8701, %v7110
      %v8703 = vpop.permute.xlu0 %8702
      %8706 = vset.pattern.permute.xlu0 12
      %8707 = vperm.xlu0 %8706, %v7111
      %v8708 = vpop.permute.xlu0 %8707
      %8711 = vset.pattern.permute.xlu0 12
      %8712 = vperm.xlu0 %8711, %v7112
      %v8713 = vpop.permute.xlu0 %8712
      %8716 = vset.pattern.permute.xlu0 12
      %8717 = vperm.xlu0 %8716, %v7113
      %v8718 = vpop.permute.xlu0 %8717
      %8721 = vset.pattern.permute.xlu0 12
      %8722 = vperm.xlu0 %8721, %v7114
      %v8723 = vpop.permute.xlu0 %8722
      %8726 = vset.pattern.permute.xlu0 12
      %8727 = vperm.xlu0 %8726, %v7115
      %v8728 = vpop.permute.xlu0 %8727
      %8731 = vset.pattern.permute.xlu0 12
      %8732 = vperm.xlu0 %8731, %v7116
      %v8733 = vpop.permute.xlu0 %8732
      %8736 = vset.pattern.permute.xlu0 12
      %8737 = vperm.xlu0 %8736, %v7117
      %v8738 = vpop.permute.xlu0 %8737
      %8741 = vset.pattern.permute.xlu0 12
      %8742 = vperm.xlu0 %8741, %v7118
      %v8743 = vpop.permute.xlu0 %8742
      %8746 = vset.pattern.permute.xlu0 12
      %8747 = vperm.xlu0 %8746, %v7119
      %v8748 = vpop.permute.xlu0 %8747
      %8751 = vset.pattern.permute.xlu0 12
      %8752 = vperm.xlu0 %8751, %v7120
      %v8753 = vpop.permute.xlu0 %8752
      %8756 = vset.pattern.permute.xlu0 12
      %8757 = vperm.xlu0 %8756, %v7121
      %v8758 = vpop.permute.xlu0 %8757
      %8761 = vset.pattern.permute.xlu0 12
      %8762 = vperm.xlu0 %8761, %v7122
      %v8763 = vpop.permute.xlu0 %8762
      %8766 = vset.pattern.permute.xlu0 12
      %8767 = vperm.xlu0 %8766, %v7123
      %v8768 = vpop.permute.xlu0 %8767
      %8771 = vset.pattern.permute.xlu0 12
      %8772 = vperm.xlu0 %8771, %v7124
      %v8773 = vpop.permute.xlu0 %8772
      %8776 = vset.pattern.permute.xlu0 12
      %8777 = vperm.xlu0 %8776, %v7125
      %v8778 = vpop.permute.xlu0 %8777
      %8781 = vset.pattern.permute.xlu0 12
      %8782 = vperm.xlu0 %8781, %v7126
      %v8783 = vpop.permute.xlu0 %8782
      %8786 = vset.pattern.permute.xlu0 12
      %8787 = vperm.xlu0 %8786, %v7127
      %v8788 = vpop.permute.xlu0 %8787
      %8791 = vset.pattern.permute.xlu0 12
      %8792 = vperm.xlu0 %8791, %v7128
      %v8793 = vpop.permute.xlu0 %8792
      %8796 = vset.pattern.permute.xlu0 12
      %8797 = vperm.xlu0 %8796, %v7129
      %v8798 = vpop.permute.xlu0 %8797
      %8801 = vset.pattern.permute.xlu0 12
      %8802 = vperm.xlu0 %8801, %v7130
      %v8803 = vpop.permute.xlu0 %8802
      %8806 = vset.pattern.permute.xlu0 12
      %8807 = vperm.xlu0 %8806, %v7131
      %v8808 = vpop.permute.xlu0 %8807
      %8811 = vset.pattern.permute.xlu0 12
      %8812 = vperm.xlu0 %8811, %v7132
      %v8813 = vpop.permute.xlu0 %8812
      %8816 = vset.pattern.permute.xlu0 12
      %8817 = vperm.xlu0 %8816, %v7133
      %v8818 = vpop.permute.xlu0 %8817
      %8821 = vset.pattern.permute.xlu0 12
      %8822 = vperm.xlu0 %8821, %v7134
      %v8823 = vpop.permute.xlu0 %8822
      %8826 = vset.pattern.permute.xlu0 12
      %8827 = vperm.xlu0 %8826, %v7135
      %v8828 = vpop.permute.xlu0 %8827
      %8831 = vset.pattern.permute.xlu0 12
      %8832 = vperm.xlu0 %8831, %v7136
      %v8833 = vpop.permute.xlu0 %8832
      %8836 = vset.pattern.permute.xlu0 12
      %8837 = vperm.xlu0 %8836, %v7137
      %v8838 = vpop.permute.xlu0 %8837
      %8841 = vset.pattern.permute.xlu0 12
      %8842 = vperm.xlu0 %8841, %v7138
      %v8843 = vpop.permute.xlu0 %8842
      %8846 = vset.pattern.permute.xlu0 12
      %8847 = vperm.xlu0 %8846, %v7139
      %v8848 = vpop.permute.xlu0 %8847
      %8851 = vset.pattern.permute.xlu0 12
      %8852 = vperm.xlu0 %8851, %v7140
      %v8853 = vpop.permute.xlu0 %8852
      %8856 = vset.pattern.permute.xlu0 12
      %8857 = vperm.xlu0 %8856, %v7141
      %v8858 = vpop.permute.xlu0 %8857
      %8861 = vset.pattern.permute.xlu0 12
      %8862 = vperm.xlu0 %8861, %v7142
      %v8863 = vpop.permute.xlu0 %8862
      %8866 = vset.pattern.permute.xlu0 12
      %8867 = vperm.xlu0 %8866, %v7143
      %v8868 = vpop.permute.xlu0 %8867
      %8871 = vset.pattern.permute.xlu0 12
      %8872 = vperm.xlu0 %8871, %v7144
      %v8873 = vpop.permute.xlu0 %8872
      %8876 = vset.pattern.permute.xlu0 12
      %8877 = vperm.xlu0 %8876, %v7145
      %v8878 = vpop.permute.xlu0 %8877
      %8881 = vset.pattern.permute.xlu0 12
      %8882 = vperm.xlu0 %8881, %v7146
      %v8883 = vpop.permute.xlu0 %8882
      %8886 = vset.pattern.permute.xlu0 12
      %8887 = vperm.xlu0 %8886, %v7147
      %v8888 = vpop.permute.xlu0 %8887
      %8891 = vset.pattern.permute.xlu0 12
      %8892 = vperm.xlu0 %8891, %v7148
      %v8893 = vpop.permute.xlu0 %8892
      %8896 = vset.pattern.permute.xlu0 12
      %8897 = vperm.xlu0 %8896, %v7149
      %v8898 = vpop.permute.xlu0 %8897
      %8901 = vset.pattern.permute.xlu0 12
      %8902 = vperm.xlu0 %8901, %v7150
      %v8903 = vpop.permute.xlu0 %8902
      %8906 = vset.pattern.permute.xlu0 12
      %8907 = vperm.xlu0 %8906, %v7151
      %v8908 = vpop.permute.xlu0 %8907
      %8911 = vset.pattern.permute.xlu0 12
      %8912 = vperm.xlu0 %8911, %v7152
      %v8913 = vpop.permute.xlu0 %8912
      %8916 = vset.pattern.permute.xlu0 12
      %8917 = vperm.xlu0 %8916, %v7153
      %v8918 = vpop.permute.xlu0 %8917
      %8921 = vset.pattern.permute.xlu0 12
      %8922 = vperm.xlu0 %8921, %v7154
      %v8923 = vpop.permute.xlu0 %8922
      %8926 = vset.pattern.permute.xlu0 12
      %8927 = vperm.xlu0 %8926, %v7155
      %v8928 = vpop.permute.xlu0 %8927
      %8931 = vset.pattern.permute.xlu0 12
      %8932 = vperm.xlu0 %8931, %v7156
      %v8933 = vpop.permute.xlu0 %8932
      %8936 = vset.pattern.permute.xlu0 12
      %8937 = vperm.xlu0 %8936, %v7157
      %v8938 = vpop.permute.xlu0 %8937
      %8941 = vset.pattern.permute.xlu0 12
      %8942 = vperm.xlu0 %8941, %v7158
      %v8943 = vpop.permute.xlu0 %8942
      %8946 = vset.pattern.permute.xlu0 12
      %8947 = vperm.xlu0 %8946, %v7159
      %v8948 = vpop.permute.xlu0 %8947
      %8951 = vset.pattern.permute.xlu0 12
      %8952 = vperm.xlu0 %8951, %v7160
      %v8953 = vpop.permute.xlu0 %8952
      %8956 = vset.pattern.permute.xlu0 12
      %8957 = vperm.xlu0 %8956, %v7161
      %v8958 = vpop.permute.xlu0 %8957
      %8961 = vset.pattern.permute.xlu0 12
      %8962 = vperm.xlu0 %8961, %v7162
      %v8963 = vpop.permute.xlu0 %8962
      %8966 = vset.pattern.permute.xlu0 12
      %8967 = vperm.xlu0 %8966, %v7163
      %v8968 = vpop.permute.xlu0 %8967
      %8971 = vset.pattern.permute.xlu0 12
      %8972 = vperm.xlu0 %8971, %v7164
      %v8973 = vpop.permute.xlu0 %8972
      %8976 = vset.pattern.permute.xlu0 12
      %8977 = vperm.xlu0 %8976, %v7165
      %v8978 = vpop.permute.xlu0 %8977
      %8981 = vset.pattern.permute.xlu0 12
      %8982 = vperm.xlu0 %8981, %v7166
      %v8983 = vpop.permute.xlu0 %8982
      %8986 = vset.pattern.permute.xlu0 12
      %8987 = vperm.xlu0 %8986, %v7167
      %v8988 = vpop.permute.xlu0 %8987
      %8991 = vset.pattern.permute.xlu0 12
      %8992 = vperm.xlu0 %8991, %v7168
      %v8993 = vpop.permute.xlu0 %8992
      %8996 = vset.pattern.permute.xlu0 12
      %8997 = vperm.xlu0 %8996, %v7169
      %v8998 = vpop.permute.xlu0 %8997
      %9001 = vset.pattern.permute.xlu0 12
      %9002 = vperm.xlu0 %9001, %v7170
      %v9003 = vpop.permute.xlu0 %9002
      %9006 = vset.pattern.permute.xlu0 12
      %9007 = vperm.xlu0 %9006, %v7171
      %v9008 = vpop.permute.xlu0 %9007
      %9011 = vset.pattern.permute.xlu0 12
      %9012 = vperm.xlu0 %9011, %v7172
      %v9013 = vpop.permute.xlu0 %9012
      %9016 = vset.pattern.permute.xlu0 12
      %9017 = vperm.xlu0 %9016, %v7173
      %v9018 = vpop.permute.xlu0 %9017
      %9021 = vset.pattern.permute.xlu0 12
      %9022 = vperm.xlu0 %9021, %v7174
      %v9023 = vpop.permute.xlu0 %9022
      %9026 = vset.pattern.permute.xlu0 12
      %9027 = vperm.xlu0 %9026, %v7175
      %v9028 = vpop.permute.xlu0 %9027
      %9031 = vset.pattern.permute.xlu0 12
      %9032 = vperm.xlu0 %9031, %v7176
      %v9033 = vpop.permute.xlu0 %9032
      %9036 = vset.pattern.permute.xlu0 12
      %9037 = vperm.xlu0 %9036, %v7177
      %v9038 = vpop.permute.xlu0 %9037
      %9041 = vset.pattern.permute.xlu0 12
      %9042 = vperm.xlu0 %9041, %v7178
      %v9043 = vpop.permute.xlu0 %9042
      %9046 = vset.pattern.permute.xlu0 12
      %9047 = vperm.xlu0 %9046, %v7179
      %v9048 = vpop.permute.xlu0 %9047
      %9051 = vset.pattern.permute.xlu0 12
      %9052 = vperm.xlu0 %9051, %v7180
      %v9053 = vpop.permute.xlu0 %9052
      %9056 = vset.pattern.permute.xlu0 12
      %9057 = vperm.xlu0 %9056, %v7181
      %v9058 = vpop.permute.xlu0 %9057
      %9061 = vset.pattern.permute.xlu0 12
      %9062 = vperm.xlu0 %9061, %v7182
      %v9063 = vpop.permute.xlu0 %9062
      %9066 = vset.pattern.permute.xlu0 12
      %9067 = vperm.xlu0 %9066, %v7183
      %v9068 = vpop.permute.xlu0 %9067
      %9071 = vset.pattern.permute.xlu0 12
      %9072 = vperm.xlu0 %9071, %v7184
      %v9073 = vpop.permute.xlu0 %9072
      %9076 = vset.pattern.permute.xlu0 12
      %9077 = vperm.xlu0 %9076, %v7185
      %v9078 = vpop.permute.xlu0 %9077
      %9081 = vset.pattern.permute.xlu0 12
      %9082 = vperm.xlu0 %9081, %v7186
      %v9083 = vpop.permute.xlu0 %9082
      %9086 = vset.pattern.permute.xlu0 12
      %9087 = vperm.xlu0 %9086, %v7187
      %v9088 = vpop.permute.xlu0 %9087
      %9091 = vset.pattern.permute.xlu0 12
      %9092 = vperm.xlu0 %9091, %v7188
      %v9093 = vpop.permute.xlu0 %9092
      %9096 = vset.pattern.permute.xlu0 12
      %9097 = vperm.xlu0 %9096, %v7189
      %v9098 = vpop.permute.xlu0 %9097
      %9101 = vset.pattern.permute.xlu0 12
      %9102 = vperm.xlu0 %9101, %v7190
      %v9103 = vpop.permute.xlu0 %9102
      %9106 = vset.pattern.permute.xlu0 12
      %9107 = vperm.xlu0 %9106, %v7191
      %v9108 = vpop.permute.xlu0 %9107
      %9111 = vset.pattern.permute.xlu0 12
      %9112 = vperm.xlu0 %9111, %v7192
      %v9113 = vpop.permute.xlu0 %9112
      %9116 = vset.pattern.permute.xlu0 12
      %9117 = vperm.xlu0 %9116, %v7193
      %v9118 = vpop.permute.xlu0 %9117
      %v9120 = vmul.f32 %v8483, %v8352
      %v9121 = vmul.f32 %v8488, %v8353
      %v9122 = vmul.f32 %v8493, %v8354
      %v9123 = vmul.f32 %v8498, %v8355
      %v9124 = vmul.f32 %v8503, %v8356
      %v9125 = vmul.f32 %v8508, %v8357
      %v9126 = vmul.f32 %v8513, %v8358
      %v9127 = vmul.f32 %v8518, %v8359
      %v9128 = vmul.f32 %v8523, %v8360
      %v9129 = vmul.f32 %v8528, %v8361
      %v9130 = vmul.f32 %v8533, %v8362
      %v9131 = vmul.f32 %v8538, %v8363
      %v9132 = vmul.f32 %v8543, %v8364
      %v9133 = vmul.f32 %v8548, %v8365
      %v9134 = vmul.f32 %v8553, %v8366
      %v9135 = vmul.f32 %v8558, %v8367
      %v9136 = vmul.f32 %v8563, %v8368
      %v9137 = vmul.f32 %v8568, %v8369
      %v9138 = vmul.f32 %v8573, %v8370
      %v9139 = vmul.f32 %v8578, %v8371
      %v9140 = vmul.f32 %v8583, %v8372
      %v9141 = vmul.f32 %v8588, %v8373
      %v9142 = vmul.f32 %v8593, %v8374
      %v9143 = vmul.f32 %v8598, %v8375
      %v9144 = vmul.f32 %v8603, %v8376
      %v9145 = vmul.f32 %v8608, %v8377
      %v9146 = vmul.f32 %v8613, %v8378
      %v9147 = vmul.f32 %v8618, %v8379
      %v9148 = vmul.f32 %v8623, %v8380
      %v9149 = vmul.f32 %v8628, %v8381
      %v9150 = vmul.f32 %v8633, %v8382
      %v9151 = vmul.f32 %v8638, %v8383
      %v9152 = vmul.f32 %v8643, %v8384
      %v9153 = vmul.f32 %v8648, %v8385
      %v9154 = vmul.f32 %v8653, %v8386
      %v9155 = vmul.f32 %v8658, %v8387
      %v9156 = vmul.f32 %v8663, %v8388
      %v9157 = vmul.f32 %v8668, %v8389
      %v9158 = vmul.f32 %v8673, %v8390
      %v9159 = vmul.f32 %v8678, %v8391
      %v9160 = vmul.f32 %v8683, %v8392
      %v9161 = vmul.f32 %v8688, %v8393
      %v9162 = vmul.f32 %v8693, %v8394
      %v9163 = vmul.f32 %v8698, %v8395
      %v9164 = vmul.f32 %v8703, %v8396
      %v9165 = vmul.f32 %v8708, %v8397
      %v9166 = vmul.f32 %v8713, %v8398
      %v9167 = vmul.f32 %v8718, %v8399
      %v9168 = vmul.f32 %v8723, %v8400
      %v9169 = vmul.f32 %v8728, %v8401
      %v9170 = vmul.f32 %v8733, %v8402
      %v9171 = vmul.f32 %v8738, %v8403
      %v9172 = vmul.f32 %v8743, %v8404
      %v9173 = vmul.f32 %v8748, %v8405
      %v9174 = vmul.f32 %v8753, %v8406
      %v9175 = vmul.f32 %v8758, %v8407
      %v9176 = vmul.f32 %v8763, %v8408
      %v9177 = vmul.f32 %v8768, %v8409
      %v9178 = vmul.f32 %v8773, %v8410
      %v9179 = vmul.f32 %v8778, %v8411
      %v9180 = vmul.f32 %v8783, %v8412
      %v9181 = vmul.f32 %v8788, %v8413
      %v9182 = vmul.f32 %v8793, %v8414
      %v9183 = vmul.f32 %v8798, %v8415
      %v9184 = vmul.f32 %v8803, %v8416
      %v9185 = vmul.f32 %v8808, %v8417
      %v9186 = vmul.f32 %v8813, %v8418
      %v9187 = vmul.f32 %v8818, %v8419
      %v9188 = vmul.f32 %v8823, %v8420
      %v9189 = vmul.f32 %v8828, %v8421
      %v9190 = vmul.f32 %v8833, %v8422
      %v9191 = vmul.f32 %v8838, %v8423
      %v9192 = vmul.f32 %v8843, %v8424
      %v9193 = vmul.f32 %v8848, %v8425
      %v9194 = vmul.f32 %v8853, %v8426
      %v9195 = vmul.f32 %v8858, %v8427
      %v9196 = vmul.f32 %v8863, %v8428
      %v9197 = vmul.f32 %v8868, %v8429
      %v9198 = vmul.f32 %v8873, %v8430
      %v9199 = vmul.f32 %v8878, %v8431
      %v9200 = vmul.f32 %v8883, %v8432
      %v9201 = vmul.f32 %v8888, %v8433
      %v9202 = vmul.f32 %v8893, %v8434
      %v9203 = vmul.f32 %v8898, %v8435
      %v9204 = vmul.f32 %v8903, %v8436
      %v9205 = vmul.f32 %v8908, %v8437
      %v9206 = vmul.f32 %v8913, %v8438
      %v9207 = vmul.f32 %v8918, %v8439
      %v9208 = vmul.f32 %v8923, %v8440
      %v9209 = vmul.f32 %v8928, %v8441
      %v9210 = vmul.f32 %v8933, %v8442
      %v9211 = vmul.f32 %v8938, %v8443
      %v9212 = vmul.f32 %v8943, %v8444
      %v9213 = vmul.f32 %v8948, %v8445
      %v9214 = vmul.f32 %v8953, %v8446
      %v9215 = vmul.f32 %v8958, %v8447
      %v9216 = vmul.f32 %v8963, %v8448
      %v9217 = vmul.f32 %v8968, %v8449
      %v9218 = vmul.f32 %v8973, %v8450
      %v9219 = vmul.f32 %v8978, %v8451
      %v9220 = vmul.f32 %v8983, %v8452
      %v9221 = vmul.f32 %v8988, %v8453
      %v9222 = vmul.f32 %v8993, %v8454
      %v9223 = vmul.f32 %v8998, %v8455
      %v9224 = vmul.f32 %v9003, %v8456
      %v9225 = vmul.f32 %v9008, %v8457
      %v9226 = vmul.f32 %v9013, %v8458
      %v9227 = vmul.f32 %v9018, %v8459
      %v9228 = vmul.f32 %v9023, %v8460
      %v9229 = vmul.f32 %v9028, %v8461
      %v9230 = vmul.f32 %v9033, %v8462
      %v9231 = vmul.f32 %v9038, %v8463
      %v9232 = vmul.f32 %v9043, %v8464
      %v9233 = vmul.f32 %v9048, %v8465
      %v9234 = vmul.f32 %v9053, %v8466
      %v9235 = vmul.f32 %v9058, %v8467
      %v9236 = vmul.f32 %v9063, %v8468
      %v9237 = vmul.f32 %v9068, %v8469
      %v9238 = vmul.f32 %v9073, %v8470
      %v9239 = vmul.f32 %v9078, %v8471
      %v9240 = vmul.f32 %v9083, %v8472
      %v9241 = vmul.f32 %v9088, %v8473
      %v9242 = vmul.f32 %v9093, %v8474
      %v9243 = vmul.f32 %v9098, %v8475
      %v9244 = vmul.f32 %v9103, %v8476
      %v9245 = vmul.f32 %v9108, %v8477
      %v9246 = vmul.f32 %v9113, %v8478
      %v9247 = vmul.f32 %v9118, %v8479
      %vm9248 = vcmask 785408
      %v9249 = vsel %vm9248, %v9120, 0.0
      %v9250 = vsel %vm9248, %v9121, 0.0
      %v9251 = vadd.f32 %v9249, %v9250
      %v9252 = vsel %vm9248, %v9122, 0.0
      %v9253 = vadd.f32 %v9251, %v9252
      %v9254 = vsel %vm9248, %v9123, 0.0
      %v9255 = vadd.f32 %v9253, %v9254
      %v9256 = vsel %vm9248, %v9124, 0.0
      %v9257 = vadd.f32 %v9255, %v9256
      %v9258 = vsel %vm9248, %v9125, 0.0
      %v9259 = vadd.f32 %v9257, %v9258
      %v9260 = vsel %vm9248, %v9126, 0.0
      %v9261 = vadd.f32 %v9259, %v9260
      %v9262 = vsel %vm9248, %v9127, 0.0
      %v9263 = vadd.f32 %v9261, %v9262
      %v9264 = vsel %vm9248, %v9128, 0.0
      %v9265 = vadd.f32 %v9263, %v9264
      %v9266 = vsel %vm9248, %v9129, 0.0
      %v9267 = vadd.f32 %v9265, %v9266
      %v9268 = vsel %vm9248, %v9130, 0.0
      %v9269 = vadd.f32 %v9267, %v9268
      %v9270 = vsel %vm9248, %v9131, 0.0
      %v9271 = vadd.f32 %v9269, %v9270
      %v9272 = vsel %vm9248, %v9132, 0.0
      %v9273 = vadd.f32 %v9271, %v9272
      %v9274 = vsel %vm9248, %v9133, 0.0
      %v9275 = vadd.f32 %v9273, %v9274
      %v9276 = vsel %vm9248, %v9134, 0.0
      %v9277 = vadd.f32 %v9275, %v9276
      %v9278 = vsel %vm9248, %v9135, 0.0
      %v9279 = vadd.f32 %v9277, %v9278
      %v9280 = vsel %vm9248, %v9136, 0.0
      %v9281 = vadd.f32 %v9279, %v9280
      %v9282 = vsel %vm9248, %v9137, 0.0
      %v9283 = vadd.f32 %v9281, %v9282
      %v9284 = vsel %vm9248, %v9138, 0.0
      %v9285 = vadd.f32 %v9283, %v9284
      %v9286 = vsel %vm9248, %v9139, 0.0
      %v9287 = vadd.f32 %v9285, %v9286
      %v9288 = vsel %vm9248, %v9140, 0.0
      %v9289 = vadd.f32 %v9287, %v9288
      %v9290 = vsel %vm9248, %v9141, 0.0
      %v9291 = vadd.f32 %v9289, %v9290
      %v9292 = vsel %vm9248, %v9142, 0.0
      %v9293 = vadd.f32 %v9291, %v9292
      %v9294 = vsel %vm9248, %v9143, 0.0
      %v9295 = vadd.f32 %v9293, %v9294
      %v9296 = vsel %vm9248, %v9144, 0.0
      %v9297 = vadd.f32 %v9295, %v9296
      %v9298 = vsel %vm9248, %v9145, 0.0
      %v9299 = vadd.f32 %v9297, %v9298
      %v9300 = vsel %vm9248, %v9146, 0.0
      %v9301 = vadd.f32 %v9299, %v9300
      %v9302 = vsel %vm9248, %v9147, 0.0
      %v9303 = vadd.f32 %v9301, %v9302
      %v9304 = vsel %vm9248, %v9148, 0.0
      %v9305 = vadd.f32 %v9303, %v9304
      %v9306 = vsel %vm9248, %v9149, 0.0
      %v9307 = vadd.f32 %v9305, %v9306
      %v9308 = vsel %vm9248, %v9150, 0.0
      %v9309 = vadd.f32 %v9307, %v9308
      %v9310 = vsel %vm9248, %v9151, 0.0
      %v9311 = vadd.f32 %v9309, %v9310
      %v9312 = vsel %vm9248, %v9152, 0.0
      %v9313 = vadd.f32 %v9311, %v9312
      %v9314 = vsel %vm9248, %v9153, 0.0
      %v9315 = vadd.f32 %v9313, %v9314
      %v9316 = vsel %vm9248, %v9154, 0.0
      %v9317 = vadd.f32 %v9315, %v9316
      %v9318 = vsel %vm9248, %v9155, 0.0
      %v9319 = vadd.f32 %v9317, %v9318
      %v9320 = vsel %vm9248, %v9156, 0.0
      %v9321 = vadd.f32 %v9319, %v9320
      %v9322 = vsel %vm9248, %v9157, 0.0
      %v9323 = vadd.f32 %v9321, %v9322
      %v9324 = vsel %vm9248, %v9158, 0.0
      %v9325 = vadd.f32 %v9323, %v9324
      %v9326 = vsel %vm9248, %v9159, 0.0
      %v9327 = vadd.f32 %v9325, %v9326
      %v9328 = vsel %vm9248, %v9160, 0.0
      %v9329 = vadd.f32 %v9327, %v9328
      %v9330 = vsel %vm9248, %v9161, 0.0
      %v9331 = vadd.f32 %v9329, %v9330
      %v9332 = vsel %vm9248, %v9162, 0.0
      %v9333 = vadd.f32 %v9331, %v9332
      %v9334 = vsel %vm9248, %v9163, 0.0
      %v9335 = vadd.f32 %v9333, %v9334
      %v9336 = vsel %vm9248, %v9164, 0.0
      %v9337 = vadd.f32 %v9335, %v9336
      %v9338 = vsel %vm9248, %v9165, 0.0
      %v9339 = vadd.f32 %v9337, %v9338
      %v9340 = vsel %vm9248, %v9166, 0.0
      %v9341 = vadd.f32 %v9339, %v9340
      %v9342 = vsel %vm9248, %v9167, 0.0
      %v9343 = vadd.f32 %v9341, %v9342
      %v9344 = vsel %vm9248, %v9168, 0.0
      %v9345 = vadd.f32 %v9343, %v9344
      %v9346 = vsel %vm9248, %v9169, 0.0
      %v9347 = vadd.f32 %v9345, %v9346
      %v9348 = vsel %vm9248, %v9170, 0.0
      %v9349 = vadd.f32 %v9347, %v9348
      %v9350 = vsel %vm9248, %v9171, 0.0
      %v9351 = vadd.f32 %v9349, %v9350
      %v9352 = vsel %vm9248, %v9172, 0.0
      %v9353 = vadd.f32 %v9351, %v9352
      %v9354 = vsel %vm9248, %v9173, 0.0
      %v9355 = vadd.f32 %v9353, %v9354
      %v9356 = vsel %vm9248, %v9174, 0.0
      %v9357 = vadd.f32 %v9355, %v9356
      %v9358 = vsel %vm9248, %v9175, 0.0
      %v9359 = vadd.f32 %v9357, %v9358
      %v9360 = vsel %vm9248, %v9176, 0.0
      %v9361 = vadd.f32 %v9359, %v9360
      %v9362 = vsel %vm9248, %v9177, 0.0
      %v9363 = vadd.f32 %v9361, %v9362
      %v9364 = vsel %vm9248, %v9178, 0.0
      %v9365 = vadd.f32 %v9363, %v9364
      %v9366 = vsel %vm9248, %v9179, 0.0
      %v9367 = vadd.f32 %v9365, %v9366
      %v9368 = vsel %vm9248, %v9180, 0.0
      %v9369 = vadd.f32 %v9367, %v9368
      %v9370 = vsel %vm9248, %v9181, 0.0
      %v9371 = vadd.f32 %v9369, %v9370
      %v9372 = vsel %vm9248, %v9182, 0.0
      %v9373 = vadd.f32 %v9371, %v9372
      %v9374 = vsel %vm9248, %v9183, 0.0
      %v9375 = vadd.f32 %v9373, %v9374
      %v9376 = vsel %vm9248, %v9184, 0.0
      %v9377 = vadd.f32 %v9375, %v9376
      %v9378 = vsel %vm9248, %v9185, 0.0
      %v9379 = vadd.f32 %v9377, %v9378
      %v9380 = vsel %vm9248, %v9186, 0.0
      %v9381 = vadd.f32 %v9379, %v9380
      %v9382 = vsel %vm9248, %v9187, 0.0
      %v9383 = vadd.f32 %v9381, %v9382
      %v9384 = vsel %vm9248, %v9188, 0.0
      %v9385 = vadd.f32 %v9383, %v9384
      %v9386 = vsel %vm9248, %v9189, 0.0
      %v9387 = vadd.f32 %v9385, %v9386
      %v9388 = vsel %vm9248, %v9190, 0.0
      %v9389 = vadd.f32 %v9387, %v9388
      %v9390 = vsel %vm9248, %v9191, 0.0
      %v9391 = vadd.f32 %v9389, %v9390
      %v9392 = vsel %vm9248, %v9192, 0.0
      %v9393 = vadd.f32 %v9391, %v9392
      %v9394 = vsel %vm9248, %v9193, 0.0
      %v9395 = vadd.f32 %v9393, %v9394
      %v9396 = vsel %vm9248, %v9194, 0.0
      %v9397 = vadd.f32 %v9395, %v9396
      %v9398 = vsel %vm9248, %v9195, 0.0
      %v9399 = vadd.f32 %v9397, %v9398
      %v9400 = vsel %vm9248, %v9196, 0.0
      %v9401 = vadd.f32 %v9399, %v9400
      %v9402 = vsel %vm9248, %v9197, 0.0
      %v9403 = vadd.f32 %v9401, %v9402
      %v9404 = vsel %vm9248, %v9198, 0.0
      %v9405 = vadd.f32 %v9403, %v9404
      %v9406 = vsel %vm9248, %v9199, 0.0
      %v9407 = vadd.f32 %v9405, %v9406
      %v9408 = vsel %vm9248, %v9200, 0.0
      %v9409 = vadd.f32 %v9407, %v9408
      %v9410 = vsel %vm9248, %v9201, 0.0
      %v9411 = vadd.f32 %v9409, %v9410
      %v9412 = vsel %vm9248, %v9202, 0.0
      %v9413 = vadd.f32 %v9411, %v9412
      %v9414 = vsel %vm9248, %v9203, 0.0
      %v9415 = vadd.f32 %v9413, %v9414
      %v9416 = vsel %vm9248, %v9204, 0.0
      %v9417 = vadd.f32 %v9415, %v9416
      %v9418 = vsel %vm9248, %v9205, 0.0
      %v9419 = vadd.f32 %v9417, %v9418
      %v9420 = vsel %vm9248, %v9206, 0.0
      %v9421 = vadd.f32 %v9419, %v9420
      %v9422 = vsel %vm9248, %v9207, 0.0
      %v9423 = vadd.f32 %v9421, %v9422
      %v9424 = vsel %vm9248, %v9208, 0.0
      %v9425 = vadd.f32 %v9423, %v9424
      %v9426 = vsel %vm9248, %v9209, 0.0
      %v9427 = vadd.f32 %v9425, %v9426
      %v9428 = vsel %vm9248, %v9210, 0.0
      %v9429 = vadd.f32 %v9427, %v9428
      %v9430 = vsel %vm9248, %v9211, 0.0
      %v9431 = vadd.f32 %v9429, %v9430
      %v9432 = vsel %vm9248, %v9212, 0.0
      %v9433 = vadd.f32 %v9431, %v9432
      %v9434 = vsel %vm9248, %v9213, 0.0
      %v9435 = vadd.f32 %v9433, %v9434
      %v9436 = vsel %vm9248, %v9214, 0.0
      %v9437 = vadd.f32 %v9435, %v9436
      %v9438 = vsel %vm9248, %v9215, 0.0
      %v9439 = vadd.f32 %v9437, %v9438
      %v9440 = vsel %vm9248, %v9216, 0.0
      %v9441 = vadd.f32 %v9439, %v9440
      %v9442 = vsel %vm9248, %v9217, 0.0
      %v9443 = vadd.f32 %v9441, %v9442
      %v9444 = vsel %vm9248, %v9218, 0.0
      %v9445 = vadd.f32 %v9443, %v9444
      %v9446 = vsel %vm9248, %v9219, 0.0
      %v9447 = vadd.f32 %v9445, %v9446
      %v9448 = vsel %vm9248, %v9220, 0.0
      %v9449 = vadd.f32 %v9447, %v9448
      %v9450 = vsel %vm9248, %v9221, 0.0
      %v9451 = vadd.f32 %v9449, %v9450
      %v9452 = vsel %vm9248, %v9222, 0.0
      %v9453 = vadd.f32 %v9451, %v9452
      %v9454 = vsel %vm9248, %v9223, 0.0
      %v9455 = vadd.f32 %v9453, %v9454
      %v9456 = vsel %vm9248, %v9224, 0.0
      %v9457 = vadd.f32 %v9455, %v9456
      %v9458 = vsel %vm9248, %v9225, 0.0
      %v9459 = vadd.f32 %v9457, %v9458
      %v9460 = vsel %vm9248, %v9226, 0.0
      %v9461 = vadd.f32 %v9459, %v9460
      %v9462 = vsel %vm9248, %v9227, 0.0
      %v9463 = vadd.f32 %v9461, %v9462
      %v9464 = vsel %vm9248, %v9228, 0.0
      %v9465 = vadd.f32 %v9463, %v9464
      %v9466 = vsel %vm9248, %v9229, 0.0
      %v9467 = vadd.f32 %v9465, %v9466
      %v9468 = vsel %vm9248, %v9230, 0.0
      %v9469 = vadd.f32 %v9467, %v9468
      %v9470 = vsel %vm9248, %v9231, 0.0
      %v9471 = vadd.f32 %v9469, %v9470
      %v9472 = vsel %vm9248, %v9232, 0.0
      %v9473 = vadd.f32 %v9471, %v9472
      %v9474 = vsel %vm9248, %v9233, 0.0
      %v9475 = vadd.f32 %v9473, %v9474
      %v9476 = vsel %vm9248, %v9234, 0.0
      %v9477 = vadd.f32 %v9475, %v9476
      %v9478 = vsel %vm9248, %v9235, 0.0
      %v9479 = vadd.f32 %v9477, %v9478
      %v9480 = vsel %vm9248, %v9236, 0.0
      %v9481 = vadd.f32 %v9479, %v9480
      %v9482 = vsel %vm9248, %v9237, 0.0
      %v9483 = vadd.f32 %v9481, %v9482
      %v9484 = vsel %vm9248, %v9238, 0.0
      %v9485 = vadd.f32 %v9483, %v9484
      %v9486 = vsel %vm9248, %v9239, 0.0
      %v9487 = vadd.f32 %v9485, %v9486
      %v9488 = vsel %vm9248, %v9240, 0.0
      %v9489 = vadd.f32 %v9487, %v9488
      %v9490 = vsel %vm9248, %v9241, 0.0
      %v9491 = vadd.f32 %v9489, %v9490
      %v9492 = vsel %vm9248, %v9242, 0.0
      %v9493 = vadd.f32 %v9491, %v9492
      %v9494 = vsel %vm9248, %v9243, 0.0
      %v9495 = vadd.f32 %v9493, %v9494
      %v9496 = vsel %vm9248, %v9244, 0.0
      %v9497 = vadd.f32 %v9495, %v9496
      %v9498 = vsel %vm9248, %v9245, 0.0
      %v9499 = vadd.f32 %v9497, %v9498
      %v9500 = vsel %vm9248, %v9246, 0.0
      %v9501 = vadd.f32 %v9499, %v9500
      %v9502 = vsel %vm9248, %v9247, 0.0
      %v9503 = vadd.f32 %v9501, %v9502
      %v9504 = vrot.slane %v9503, 4
      %v9505 = vadd.f32 %v9503, %v9504
      %v9506 = vrot.slane %v9505, 2
      %v9507 = vadd.f32 %v9505, %v9506
      %v9508 = vrot.slane %v9507, 1
      %v9509 = vadd.f32 %v9507, %v9508
      %9510 = vrot.lane.b32.xlu0 %v528, 127
      %v9511 = vpop.permute.xlu0 %9510
      %9512 = vrot.lane.b32.xlu0 %v529, 127
      %v9513 = vpop.permute.xlu0 %9512
      %9514 = vrot.lane.b32.xlu0 %v530, 127
      %v9515 = vpop.permute.xlu0 %9514
      %9516 = vrot.lane.b32.xlu0 %v531, 127
      %v9517 = vpop.permute.xlu0 %9516
      %9518 = vrot.lane.b32.xlu0 %v532, 127
      %v9519 = vpop.permute.xlu0 %9518
      %9520 = vrot.lane.b32.xlu0 %v533, 127
      %v9521 = vpop.permute.xlu0 %9520
      %9522 = vrot.lane.b32.xlu0 %v534, 127
      %v9523 = vpop.permute.xlu0 %9522
      %9524 = vrot.lane.b32.xlu0 %v535, 127
      %v9525 = vpop.permute.xlu0 %9524
      %9526 = vrot.lane.b32.xlu0 %v536, 127
      %v9527 = vpop.permute.xlu0 %9526
      %9528 = vrot.lane.b32.xlu0 %v537, 127
      %v9529 = vpop.permute.xlu0 %9528
      %9530 = vrot.lane.b32.xlu0 %v538, 127
      %v9531 = vpop.permute.xlu0 %9530
      %9532 = vrot.lane.b32.xlu0 %v539, 127
      %v9533 = vpop.permute.xlu0 %9532
      %9534 = vrot.lane.b32.xlu0 %v540, 127
      %v9535 = vpop.permute.xlu0 %9534
      %9536 = vrot.lane.b32.xlu0 %v541, 127
      %v9537 = vpop.permute.xlu0 %9536
      %9538 = vrot.lane.b32.xlu0 %v542, 127
      %v9539 = vpop.permute.xlu0 %9538
      %9540 = vrot.lane.b32.xlu0 %v543, 127
      %v9541 = vpop.permute.xlu0 %9540
      %9542 = vrot.lane.b32.xlu0 %v544, 127
      %v9543 = vpop.permute.xlu0 %9542
      %9544 = vrot.lane.b32.xlu0 %v545, 127
      %v9545 = vpop.permute.xlu0 %9544
      %9546 = vrot.lane.b32.xlu0 %v546, 127
      %v9547 = vpop.permute.xlu0 %9546
      %9548 = vrot.lane.b32.xlu0 %v547, 127
      %v9549 = vpop.permute.xlu0 %9548
      %9550 = vrot.lane.b32.xlu0 %v548, 127
      %v9551 = vpop.permute.xlu0 %9550
      %9552 = vrot.lane.b32.xlu0 %v549, 127
      %v9553 = vpop.permute.xlu0 %9552
      %9554 = vrot.lane.b32.xlu0 %v550, 127
      %v9555 = vpop.permute.xlu0 %9554
      %9556 = vrot.lane.b32.xlu0 %v551, 127
      %v9557 = vpop.permute.xlu0 %9556
      %9558 = vrot.lane.b32.xlu0 %v552, 127
      %v9559 = vpop.permute.xlu0 %9558
      %9560 = vrot.lane.b32.xlu0 %v553, 127
      %v9561 = vpop.permute.xlu0 %9560
      %9562 = vrot.lane.b32.xlu0 %v554, 127
      %v9563 = vpop.permute.xlu0 %9562
      %9564 = vrot.lane.b32.xlu0 %v555, 127
      %v9565 = vpop.permute.xlu0 %9564
      %9566 = vrot.lane.b32.xlu0 %v556, 127
      %v9567 = vpop.permute.xlu0 %9566
      %9568 = vrot.lane.b32.xlu0 %v557, 127
      %v9569 = vpop.permute.xlu0 %9568
      %9570 = vrot.lane.b32.xlu0 %v558, 127
      %v9571 = vpop.permute.xlu0 %9570
      %9572 = vrot.lane.b32.xlu0 %v559, 127
      %v9573 = vpop.permute.xlu0 %9572
      %9574 = vrot.lane.b32.xlu0 %v560, 127
      %v9575 = vpop.permute.xlu0 %9574
      %9576 = vrot.lane.b32.xlu0 %v561, 127
      %v9577 = vpop.permute.xlu0 %9576
      %9578 = vrot.lane.b32.xlu0 %v562, 127
      %v9579 = vpop.permute.xlu0 %9578
      %9580 = vrot.lane.b32.xlu0 %v563, 127
      %v9581 = vpop.permute.xlu0 %9580
      %9582 = vrot.lane.b32.xlu0 %v564, 127
      %v9583 = vpop.permute.xlu0 %9582
      %9584 = vrot.lane.b32.xlu0 %v565, 127
      %v9585 = vpop.permute.xlu0 %9584
      %9586 = vrot.lane.b32.xlu0 %v566, 127
      %v9587 = vpop.permute.xlu0 %9586
      %9588 = vrot.lane.b32.xlu0 %v567, 127
      %v9589 = vpop.permute.xlu0 %9588
      %9590 = vrot.lane.b32.xlu0 %v568, 127
      %v9591 = vpop.permute.xlu0 %9590
      %9592 = vrot.lane.b32.xlu0 %v569, 127
      %v9593 = vpop.permute.xlu0 %9592
      %9594 = vrot.lane.b32.xlu0 %v570, 127
      %v9595 = vpop.permute.xlu0 %9594
      %9596 = vrot.lane.b32.xlu0 %v571, 127
      %v9597 = vpop.permute.xlu0 %9596
      %9598 = vrot.lane.b32.xlu0 %v572, 127
      %v9599 = vpop.permute.xlu0 %9598
      %9600 = vrot.lane.b32.xlu0 %v573, 127
      %v9601 = vpop.permute.xlu0 %9600
      %9602 = vrot.lane.b32.xlu0 %v574, 127
      %v9603 = vpop.permute.xlu0 %9602
      %9604 = vrot.lane.b32.xlu0 %v575, 127
      %v9605 = vpop.permute.xlu0 %9604
      %9606 = vrot.lane.b32.xlu0 %v576, 127
      %v9607 = vpop.permute.xlu0 %9606
      %9608 = vrot.lane.b32.xlu0 %v577, 127
      %v9609 = vpop.permute.xlu0 %9608
      %9610 = vrot.lane.b32.xlu0 %v578, 127
      %v9611 = vpop.permute.xlu0 %9610
      %9612 = vrot.lane.b32.xlu0 %v579, 127
      %v9613 = vpop.permute.xlu0 %9612
      %9614 = vrot.lane.b32.xlu0 %v580, 127
      %v9615 = vpop.permute.xlu0 %9614
      %9616 = vrot.lane.b32.xlu0 %v581, 127
      %v9617 = vpop.permute.xlu0 %9616
      %9618 = vrot.lane.b32.xlu0 %v582, 127
      %v9619 = vpop.permute.xlu0 %9618
      %9620 = vrot.lane.b32.xlu0 %v583, 127
      %v9621 = vpop.permute.xlu0 %9620
      %9622 = vrot.lane.b32.xlu0 %v584, 127
      %v9623 = vpop.permute.xlu0 %9622
      %9624 = vrot.lane.b32.xlu0 %v585, 127
      %v9625 = vpop.permute.xlu0 %9624
      %9626 = vrot.lane.b32.xlu0 %v586, 127
      %v9627 = vpop.permute.xlu0 %9626
      %9628 = vrot.lane.b32.xlu0 %v587, 127
      %v9629 = vpop.permute.xlu0 %9628
      %9630 = vrot.lane.b32.xlu0 %v588, 127
      %v9631 = vpop.permute.xlu0 %9630
      %9632 = vrot.lane.b32.xlu0 %v589, 127
      %v9633 = vpop.permute.xlu0 %9632
      %9634 = vrot.lane.b32.xlu0 %v590, 127
      %v9635 = vpop.permute.xlu0 %9634
      %9636 = vrot.lane.b32.xlu0 %v591, 127
      %v9637 = vpop.permute.xlu0 %9636
      %9638 = vrot.lane.b32.xlu0 %v592, 127
      %v9639 = vpop.permute.xlu0 %9638
      %9640 = vrot.lane.b32.xlu0 %v593, 127
      %v9641 = vpop.permute.xlu0 %9640
      %9642 = vrot.lane.b32.xlu0 %v594, 127
      %v9643 = vpop.permute.xlu0 %9642
      %9644 = vrot.lane.b32.xlu0 %v595, 127
      %v9645 = vpop.permute.xlu0 %9644
      %9646 = vrot.lane.b32.xlu0 %v596, 127
      %v9647 = vpop.permute.xlu0 %9646
      %9648 = vrot.lane.b32.xlu0 %v597, 127
      %v9649 = vpop.permute.xlu0 %9648
      %9650 = vrot.lane.b32.xlu0 %v598, 127
      %v9651 = vpop.permute.xlu0 %9650
      %9652 = vrot.lane.b32.xlu0 %v599, 127
      %v9653 = vpop.permute.xlu0 %9652
      %9654 = vrot.lane.b32.xlu0 %v600, 127
      %v9655 = vpop.permute.xlu0 %9654
      %9656 = vrot.lane.b32.xlu0 %v601, 127
      %v9657 = vpop.permute.xlu0 %9656
      %9658 = vrot.lane.b32.xlu0 %v602, 127
      %v9659 = vpop.permute.xlu0 %9658
      %9660 = vrot.lane.b32.xlu0 %v603, 127
      %v9661 = vpop.permute.xlu0 %9660
      %9662 = vrot.lane.b32.xlu0 %v604, 127
      %v9663 = vpop.permute.xlu0 %9662
      %9664 = vrot.lane.b32.xlu0 %v605, 127
      %v9665 = vpop.permute.xlu0 %9664
      %9666 = vrot.lane.b32.xlu0 %v606, 127
      %v9667 = vpop.permute.xlu0 %9666
      %9668 = vrot.lane.b32.xlu0 %v607, 127
      %v9669 = vpop.permute.xlu0 %9668
      %9670 = vrot.lane.b32.xlu0 %v608, 127
      %v9671 = vpop.permute.xlu0 %9670
      %9672 = vrot.lane.b32.xlu0 %v609, 127
      %v9673 = vpop.permute.xlu0 %9672
      %9674 = vrot.lane.b32.xlu0 %v610, 127
      %v9675 = vpop.permute.xlu0 %9674
      %9676 = vrot.lane.b32.xlu0 %v611, 127
      %v9677 = vpop.permute.xlu0 %9676
      %9678 = vrot.lane.b32.xlu0 %v612, 127
      %v9679 = vpop.permute.xlu0 %9678
      %9680 = vrot.lane.b32.xlu0 %v613, 127
      %v9681 = vpop.permute.xlu0 %9680
      %9682 = vrot.lane.b32.xlu0 %v614, 127
      %v9683 = vpop.permute.xlu0 %9682
      %9684 = vrot.lane.b32.xlu0 %v615, 127
      %v9685 = vpop.permute.xlu0 %9684
      %9686 = vrot.lane.b32.xlu0 %v616, 127
      %v9687 = vpop.permute.xlu0 %9686
      %9688 = vrot.lane.b32.xlu0 %v617, 127
      %v9689 = vpop.permute.xlu0 %9688
      %9690 = vrot.lane.b32.xlu0 %v618, 127
      %v9691 = vpop.permute.xlu0 %9690
      %9692 = vrot.lane.b32.xlu0 %v619, 127
      %v9693 = vpop.permute.xlu0 %9692
      %9694 = vrot.lane.b32.xlu0 %v620, 127
      %v9695 = vpop.permute.xlu0 %9694
      %9696 = vrot.lane.b32.xlu0 %v621, 127
      %v9697 = vpop.permute.xlu0 %9696
      %9698 = vrot.lane.b32.xlu0 %v622, 127
      %v9699 = vpop.permute.xlu0 %9698
      %9700 = vrot.lane.b32.xlu0 %v623, 127
      %v9701 = vpop.permute.xlu0 %9700
      %9702 = vrot.lane.b32.xlu0 %v624, 127
      %v9703 = vpop.permute.xlu0 %9702
      %9704 = vrot.lane.b32.xlu0 %v625, 127
      %v9705 = vpop.permute.xlu0 %9704
      %9706 = vrot.lane.b32.xlu0 %v626, 127
      %v9707 = vpop.permute.xlu0 %9706
      %9708 = vrot.lane.b32.xlu0 %v627, 127
      %v9709 = vpop.permute.xlu0 %9708
      %9710 = vrot.lane.b32.xlu0 %v628, 127
      %v9711 = vpop.permute.xlu0 %9710
      %9712 = vrot.lane.b32.xlu0 %v629, 127
      %v9713 = vpop.permute.xlu0 %9712
      %9714 = vrot.lane.b32.xlu0 %v630, 127
      %v9715 = vpop.permute.xlu0 %9714
      %9716 = vrot.lane.b32.xlu0 %v631, 127
      %v9717 = vpop.permute.xlu0 %9716
      %9718 = vrot.lane.b32.xlu0 %v632, 127
      %v9719 = vpop.permute.xlu0 %9718
      %9720 = vrot.lane.b32.xlu0 %v633, 127
      %v9721 = vpop.permute.xlu0 %9720
      %9722 = vrot.lane.b32.xlu0 %v634, 127
      %v9723 = vpop.permute.xlu0 %9722
      %9724 = vrot.lane.b32.xlu0 %v635, 127
      %v9725 = vpop.permute.xlu0 %9724
      %9726 = vrot.lane.b32.xlu0 %v636, 127
      %v9727 = vpop.permute.xlu0 %9726
      %9728 = vrot.lane.b32.xlu0 %v637, 127
      %v9729 = vpop.permute.xlu0 %9728
      %9730 = vrot.lane.b32.xlu0 %v638, 127
      %v9731 = vpop.permute.xlu0 %9730
      %9732 = vrot.lane.b32.xlu0 %v639, 127
      %v9733 = vpop.permute.xlu0 %9732
      %9734 = vrot.lane.b32.xlu0 %v640, 127
      %v9735 = vpop.permute.xlu0 %9734
      %9736 = vrot.lane.b32.xlu0 %v641, 127
      %v9737 = vpop.permute.xlu0 %9736
      %9738 = vrot.lane.b32.xlu0 %v642, 127
      %v9739 = vpop.permute.xlu0 %9738
      %9740 = vrot.lane.b32.xlu0 %v643, 127
      %v9741 = vpop.permute.xlu0 %9740
      %9742 = vrot.lane.b32.xlu0 %v644, 127
      %v9743 = vpop.permute.xlu0 %9742
      %9744 = vrot.lane.b32.xlu0 %v645, 127
      %v9745 = vpop.permute.xlu0 %9744
      %9746 = vrot.lane.b32.xlu0 %v646, 127
      %v9747 = vpop.permute.xlu0 %9746
      %9748 = vrot.lane.b32.xlu0 %v647, 127
      %v9749 = vpop.permute.xlu0 %9748
      %9750 = vrot.lane.b32.xlu0 %v648, 127
      %v9751 = vpop.permute.xlu0 %9750
      %9752 = vrot.lane.b32.xlu0 %v649, 127
      %v9753 = vpop.permute.xlu0 %9752
      %9754 = vrot.lane.b32.xlu0 %v650, 127
      %v9755 = vpop.permute.xlu0 %9754
      %9756 = vrot.lane.b32.xlu0 %v651, 127
      %v9757 = vpop.permute.xlu0 %9756
      %9758 = vrot.lane.b32.xlu0 %v652, 127
      %v9759 = vpop.permute.xlu0 %9758
      %9760 = vrot.lane.b32.xlu0 %v653, 127
      %v9761 = vpop.permute.xlu0 %9760
      %9762 = vrot.lane.b32.xlu0 %v654, 127
      %v9763 = vpop.permute.xlu0 %9762
      %9764 = vrot.lane.b32.xlu0 %v655, 127
      %v9765 = vpop.permute.xlu0 %9764
      %v9894 = vmul.f32 %v528, %v9511
      %v9895 = vmul.f32 %v529, %v9513
      %v9896 = vmul.f32 %v530, %v9515
      %v9897 = vmul.f32 %v531, %v9517
      %v9898 = vmul.f32 %v532, %v9519
      %v9899 = vmul.f32 %v533, %v9521
      %v9900 = vmul.f32 %v534, %v9523
      %v9901 = vmul.f32 %v535, %v9525
      %v9902 = vmul.f32 %v536, %v9527
      %v9903 = vmul.f32 %v537, %v9529
      %v9904 = vmul.f32 %v538, %v9531
      %v9905 = vmul.f32 %v539, %v9533
      %v9906 = vmul.f32 %v540, %v9535
      %v9907 = vmul.f32 %v541, %v9537
      %v9908 = vmul.f32 %v542, %v9539
      %v9909 = vmul.f32 %v543, %v9541
      %v9910 = vmul.f32 %v544, %v9543
      %v9911 = vmul.f32 %v545, %v9545
      %v9912 = vmul.f32 %v546, %v9547
      %v9913 = vmul.f32 %v547, %v9549
      %v9914 = vmul.f32 %v548, %v9551
      %v9915 = vmul.f32 %v549, %v9553
      %v9916 = vmul.f32 %v550, %v9555
      %v9917 = vmul.f32 %v551, %v9557
      %v9918 = vmul.f32 %v552, %v9559
      %v9919 = vmul.f32 %v553, %v9561
      %v9920 = vmul.f32 %v554, %v9563
      %v9921 = vmul.f32 %v555, %v9565
      %v9922 = vmul.f32 %v556, %v9567
      %v9923 = vmul.f32 %v557, %v9569
      %v9924 = vmul.f32 %v558, %v9571
      %v9925 = vmul.f32 %v559, %v9573
      %v9926 = vmul.f32 %v560, %v9575
      %v9927 = vmul.f32 %v561, %v9577
      %v9928 = vmul.f32 %v562, %v9579
      %v9929 = vmul.f32 %v563, %v9581
      %v9930 = vmul.f32 %v564, %v9583
      %v9931 = vmul.f32 %v565, %v9585
      %v9932 = vmul.f32 %v566, %v9587
      %v9933 = vmul.f32 %v567, %v9589
      %v9934 = vmul.f32 %v568, %v9591
      %v9935 = vmul.f32 %v569, %v9593
      %v9936 = vmul.f32 %v570, %v9595
      %v9937 = vmul.f32 %v571, %v9597
      %v9938 = vmul.f32 %v572, %v9599
      %v9939 = vmul.f32 %v573, %v9601
      %v9940 = vmul.f32 %v574, %v9603
      %v9941 = vmul.f32 %v575, %v9605
      %v9942 = vmul.f32 %v576, %v9607
      %v9943 = vmul.f32 %v577, %v9609
      %v9944 = vmul.f32 %v578, %v9611
      %v9945 = vmul.f32 %v579, %v9613
      %v9946 = vmul.f32 %v580, %v9615
      %v9947 = vmul.f32 %v581, %v9617
      %v9948 = vmul.f32 %v582, %v9619
      %v9949 = vmul.f32 %v583, %v9621
      %v9950 = vmul.f32 %v584, %v9623
      %v9951 = vmul.f32 %v585, %v9625
      %v9952 = vmul.f32 %v586, %v9627
      %v9953 = vmul.f32 %v587, %v9629
      %v9954 = vmul.f32 %v588, %v9631
      %v9955 = vmul.f32 %v589, %v9633
      %v9956 = vmul.f32 %v590, %v9635
      %v9957 = vmul.f32 %v591, %v9637
      %v9958 = vmul.f32 %v592, %v9639
      %v9959 = vmul.f32 %v593, %v9641
      %v9960 = vmul.f32 %v594, %v9643
      %v9961 = vmul.f32 %v595, %v9645
      %v9962 = vmul.f32 %v596, %v9647
      %v9963 = vmul.f32 %v597, %v9649
      %v9964 = vmul.f32 %v598, %v9651
      %v9965 = vmul.f32 %v599, %v9653
      %v9966 = vmul.f32 %v600, %v9655
      %v9967 = vmul.f32 %v601, %v9657
      %v9968 = vmul.f32 %v602, %v9659
      %v9969 = vmul.f32 %v603, %v9661
      %v9970 = vmul.f32 %v604, %v9663
      %v9971 = vmul.f32 %v605, %v9665
      %v9972 = vmul.f32 %v606, %v9667
      %v9973 = vmul.f32 %v607, %v9669
      %v9974 = vmul.f32 %v608, %v9671
      %v9975 = vmul.f32 %v609, %v9673
      %v9976 = vmul.f32 %v610, %v9675
      %v9977 = vmul.f32 %v611, %v9677
      %v9978 = vmul.f32 %v612, %v9679
      %v9979 = vmul.f32 %v613, %v9681
      %v9980 = vmul.f32 %v614, %v9683
      %v9981 = vmul.f32 %v615, %v9685
      %v9982 = vmul.f32 %v616, %v9687
      %v9983 = vmul.f32 %v617, %v9689
      %v9984 = vmul.f32 %v618, %v9691
      %v9985 = vmul.f32 %v619, %v9693
      %v9986 = vmul.f32 %v620, %v9695
      %v9987 = vmul.f32 %v621, %v9697
      %v9988 = vmul.f32 %v622, %v9699
      %v9989 = vmul.f32 %v623, %v9701
      %v9990 = vmul.f32 %v624, %v9703
      %v9991 = vmul.f32 %v625, %v9705
      %v9992 = vmul.f32 %v626, %v9707
      %v9993 = vmul.f32 %v627, %v9709
      %v9994 = vmul.f32 %v628, %v9711
      %v9995 = vmul.f32 %v629, %v9713
      %v9996 = vmul.f32 %v630, %v9715
      %v9997 = vmul.f32 %v631, %v9717
      %v9998 = vmul.f32 %v632, %v9719
      %v9999 = vmul.f32 %v633, %v9721
      %v10000 = vmul.f32 %v634, %v9723
      %v10001 = vmul.f32 %v635, %v9725
      %v10002 = vmul.f32 %v636, %v9727
      %v10003 = vmul.f32 %v637, %v9729
      %v10004 = vmul.f32 %v638, %v9731
      %v10005 = vmul.f32 %v639, %v9733
      %v10006 = vmul.f32 %v640, %v9735
      %v10007 = vmul.f32 %v641, %v9737
      %v10008 = vmul.f32 %v642, %v9739
      %v10009 = vmul.f32 %v643, %v9741
      %v10010 = vmul.f32 %v644, %v9743
      %v10011 = vmul.f32 %v645, %v9745
      %v10012 = vmul.f32 %v646, %v9747
      %v10013 = vmul.f32 %v647, %v9749
      %v10014 = vmul.f32 %v648, %v9751
      %v10015 = vmul.f32 %v649, %v9753
      %v10016 = vmul.f32 %v650, %v9755
      %v10017 = vmul.f32 %v651, %v9757
      %v10018 = vmul.f32 %v652, %v9759
      %v10019 = vmul.f32 %v653, %v9761
      %v10020 = vmul.f32 %v654, %v9763
      %v10021 = vmul.f32 %v655, %v9765
      %10023 = vset.pattern.permute.xlu0 13
      %10024 = vperm.xlu0 %10023, %v9894
      %v10025 = vpop.permute.xlu0 %10024
      %10028 = vset.pattern.permute.xlu0 13
      %10029 = vperm.xlu0 %10028, %v9895
      %v10030 = vpop.permute.xlu0 %10029
      %10033 = vset.pattern.permute.xlu0 13
      %10034 = vperm.xlu0 %10033, %v9896
      %v10035 = vpop.permute.xlu0 %10034
      %10038 = vset.pattern.permute.xlu0 13
      %10039 = vperm.xlu0 %10038, %v9897
      %v10040 = vpop.permute.xlu0 %10039
      %10043 = vset.pattern.permute.xlu0 13
      %10044 = vperm.xlu0 %10043, %v9898
      %v10045 = vpop.permute.xlu0 %10044
      %10048 = vset.pattern.permute.xlu0 13
      %10049 = vperm.xlu0 %10048, %v9899
      %v10050 = vpop.permute.xlu0 %10049
      %10053 = vset.pattern.permute.xlu0 13
      %10054 = vperm.xlu0 %10053, %v9900
      %v10055 = vpop.permute.xlu0 %10054
      %10058 = vset.pattern.permute.xlu0 13
      %10059 = vperm.xlu0 %10058, %v9901
      %v10060 = vpop.permute.xlu0 %10059
      %10063 = vset.pattern.permute.xlu0 13
      %10064 = vperm.xlu0 %10063, %v9902
      %v10065 = vpop.permute.xlu0 %10064
      %10068 = vset.pattern.permute.xlu0 13
      %10069 = vperm.xlu0 %10068, %v9903
      %v10070 = vpop.permute.xlu0 %10069
      %10073 = vset.pattern.permute.xlu0 13
      %10074 = vperm.xlu0 %10073, %v9904
      %v10075 = vpop.permute.xlu0 %10074
      %10078 = vset.pattern.permute.xlu0 13
      %10079 = vperm.xlu0 %10078, %v9905
      %v10080 = vpop.permute.xlu0 %10079
      %10083 = vset.pattern.permute.xlu0 13
      %10084 = vperm.xlu0 %10083, %v9906
      %v10085 = vpop.permute.xlu0 %10084
      %10088 = vset.pattern.permute.xlu0 13
      %10089 = vperm.xlu0 %10088, %v9907
      %v10090 = vpop.permute.xlu0 %10089
      %10093 = vset.pattern.permute.xlu0 13
      %10094 = vperm.xlu0 %10093, %v9908
      %v10095 = vpop.permute.xlu0 %10094
      %10098 = vset.pattern.permute.xlu0 13
      %10099 = vperm.xlu0 %10098, %v9909
      %v10100 = vpop.permute.xlu0 %10099
      %10103 = vset.pattern.permute.xlu0 13
      %10104 = vperm.xlu0 %10103, %v9910
      %v10105 = vpop.permute.xlu0 %10104
      %10108 = vset.pattern.permute.xlu0 13
      %10109 = vperm.xlu0 %10108, %v9911
      %v10110 = vpop.permute.xlu0 %10109
      %10113 = vset.pattern.permute.xlu0 13
      %10114 = vperm.xlu0 %10113, %v9912
      %v10115 = vpop.permute.xlu0 %10114
      %10118 = vset.pattern.permute.xlu0 13
      %10119 = vperm.xlu0 %10118, %v9913
      %v10120 = vpop.permute.xlu0 %10119
      %10123 = vset.pattern.permute.xlu0 13
      %10124 = vperm.xlu0 %10123, %v9914
      %v10125 = vpop.permute.xlu0 %10124
      %10128 = vset.pattern.permute.xlu0 13
      %10129 = vperm.xlu0 %10128, %v9915
      %v10130 = vpop.permute.xlu0 %10129
      %10133 = vset.pattern.permute.xlu0 13
      %10134 = vperm.xlu0 %10133, %v9916
      %v10135 = vpop.permute.xlu0 %10134
      %10138 = vset.pattern.permute.xlu0 13
      %10139 = vperm.xlu0 %10138, %v9917
      %v10140 = vpop.permute.xlu0 %10139
      %10143 = vset.pattern.permute.xlu0 13
      %10144 = vperm.xlu0 %10143, %v9918
      %v10145 = vpop.permute.xlu0 %10144
      %10148 = vset.pattern.permute.xlu0 13
      %10149 = vperm.xlu0 %10148, %v9919
      %v10150 = vpop.permute.xlu0 %10149
      %10153 = vset.pattern.permute.xlu0 13
      %10154 = vperm.xlu0 %10153, %v9920
      %v10155 = vpop.permute.xlu0 %10154
      %10158 = vset.pattern.permute.xlu0 13
      %10159 = vperm.xlu0 %10158, %v9921
      %v10160 = vpop.permute.xlu0 %10159
      %10163 = vset.pattern.permute.xlu0 13
      %10164 = vperm.xlu0 %10163, %v9922
      %v10165 = vpop.permute.xlu0 %10164
      %10168 = vset.pattern.permute.xlu0 13
      %10169 = vperm.xlu0 %10168, %v9923
      %v10170 = vpop.permute.xlu0 %10169
      %10173 = vset.pattern.permute.xlu0 13
      %10174 = vperm.xlu0 %10173, %v9924
      %v10175 = vpop.permute.xlu0 %10174
      %10178 = vset.pattern.permute.xlu0 13
      %10179 = vperm.xlu0 %10178, %v9925
      %v10180 = vpop.permute.xlu0 %10179
      %10183 = vset.pattern.permute.xlu0 13
      %10184 = vperm.xlu0 %10183, %v9926
      %v10185 = vpop.permute.xlu0 %10184
      %10188 = vset.pattern.permute.xlu0 13
      %10189 = vperm.xlu0 %10188, %v9927
      %v10190 = vpop.permute.xlu0 %10189
      %10193 = vset.pattern.permute.xlu0 13
      %10194 = vperm.xlu0 %10193, %v9928
      %v10195 = vpop.permute.xlu0 %10194
      %10198 = vset.pattern.permute.xlu0 13
      %10199 = vperm.xlu0 %10198, %v9929
      %v10200 = vpop.permute.xlu0 %10199
      %10203 = vset.pattern.permute.xlu0 13
      %10204 = vperm.xlu0 %10203, %v9930
      %v10205 = vpop.permute.xlu0 %10204
      %10208 = vset.pattern.permute.xlu0 13
      %10209 = vperm.xlu0 %10208, %v9931
      %v10210 = vpop.permute.xlu0 %10209
      %10213 = vset.pattern.permute.xlu0 13
      %10214 = vperm.xlu0 %10213, %v9932
      %v10215 = vpop.permute.xlu0 %10214
      %10218 = vset.pattern.permute.xlu0 13
      %10219 = vperm.xlu0 %10218, %v9933
      %v10220 = vpop.permute.xlu0 %10219
      %10223 = vset.pattern.permute.xlu0 13
      %10224 = vperm.xlu0 %10223, %v9934
      %v10225 = vpop.permute.xlu0 %10224
      %10228 = vset.pattern.permute.xlu0 13
      %10229 = vperm.xlu0 %10228, %v9935
      %v10230 = vpop.permute.xlu0 %10229
      %10233 = vset.pattern.permute.xlu0 13
      %10234 = vperm.xlu0 %10233, %v9936
      %v10235 = vpop.permute.xlu0 %10234
      %10238 = vset.pattern.permute.xlu0 13
      %10239 = vperm.xlu0 %10238, %v9937
      %v10240 = vpop.permute.xlu0 %10239
      %10243 = vset.pattern.permute.xlu0 13
      %10244 = vperm.xlu0 %10243, %v9938
      %v10245 = vpop.permute.xlu0 %10244
      %10248 = vset.pattern.permute.xlu0 13
      %10249 = vperm.xlu0 %10248, %v9939
      %v10250 = vpop.permute.xlu0 %10249
      %10253 = vset.pattern.permute.xlu0 13
      %10254 = vperm.xlu0 %10253, %v9940
      %v10255 = vpop.permute.xlu0 %10254
      %10258 = vset.pattern.permute.xlu0 13
      %10259 = vperm.xlu0 %10258, %v9941
      %v10260 = vpop.permute.xlu0 %10259
      %10263 = vset.pattern.permute.xlu0 13
      %10264 = vperm.xlu0 %10263, %v9942
      %v10265 = vpop.permute.xlu0 %10264
      %10268 = vset.pattern.permute.xlu0 13
      %10269 = vperm.xlu0 %10268, %v9943
      %v10270 = vpop.permute.xlu0 %10269
      %10273 = vset.pattern.permute.xlu0 13
      %10274 = vperm.xlu0 %10273, %v9944
      %v10275 = vpop.permute.xlu0 %10274
      %10278 = vset.pattern.permute.xlu0 13
      %10279 = vperm.xlu0 %10278, %v9945
      %v10280 = vpop.permute.xlu0 %10279
      %10283 = vset.pattern.permute.xlu0 13
      %10284 = vperm.xlu0 %10283, %v9946
      %v10285 = vpop.permute.xlu0 %10284
      %10288 = vset.pattern.permute.xlu0 13
      %10289 = vperm.xlu0 %10288, %v9947
      %v10290 = vpop.permute.xlu0 %10289
      %10293 = vset.pattern.permute.xlu0 13
      %10294 = vperm.xlu0 %10293, %v9948
      %v10295 = vpop.permute.xlu0 %10294
      %10298 = vset.pattern.permute.xlu0 13
      %10299 = vperm.xlu0 %10298, %v9949
      %v10300 = vpop.permute.xlu0 %10299
      %10303 = vset.pattern.permute.xlu0 13
      %10304 = vperm.xlu0 %10303, %v9950
      %v10305 = vpop.permute.xlu0 %10304
      %10308 = vset.pattern.permute.xlu0 13
      %10309 = vperm.xlu0 %10308, %v9951
      %v10310 = vpop.permute.xlu0 %10309
      %10313 = vset.pattern.permute.xlu0 13
      %10314 = vperm.xlu0 %10313, %v9952
      %v10315 = vpop.permute.xlu0 %10314
      %10318 = vset.pattern.permute.xlu0 13
      %10319 = vperm.xlu0 %10318, %v9953
      %v10320 = vpop.permute.xlu0 %10319
      %10323 = vset.pattern.permute.xlu0 13
      %10324 = vperm.xlu0 %10323, %v9954
      %v10325 = vpop.permute.xlu0 %10324
      %10328 = vset.pattern.permute.xlu0 13
      %10329 = vperm.xlu0 %10328, %v9955
      %v10330 = vpop.permute.xlu0 %10329
      %10333 = vset.pattern.permute.xlu0 13
      %10334 = vperm.xlu0 %10333, %v9956
      %v10335 = vpop.permute.xlu0 %10334
      %10338 = vset.pattern.permute.xlu0 13
      %10339 = vperm.xlu0 %10338, %v9957
      %v10340 = vpop.permute.xlu0 %10339
      %10343 = vset.pattern.permute.xlu0 13
      %10344 = vperm.xlu0 %10343, %v9958
      %v10345 = vpop.permute.xlu0 %10344
      %10348 = vset.pattern.permute.xlu0 13
      %10349 = vperm.xlu0 %10348, %v9959
      %v10350 = vpop.permute.xlu0 %10349
      %10353 = vset.pattern.permute.xlu0 13
      %10354 = vperm.xlu0 %10353, %v9960
      %v10355 = vpop.permute.xlu0 %10354
      %10358 = vset.pattern.permute.xlu0 13
      %10359 = vperm.xlu0 %10358, %v9961
      %v10360 = vpop.permute.xlu0 %10359
      %10363 = vset.pattern.permute.xlu0 13
      %10364 = vperm.xlu0 %10363, %v9962
      %v10365 = vpop.permute.xlu0 %10364
      %10368 = vset.pattern.permute.xlu0 13
      %10369 = vperm.xlu0 %10368, %v9963
      %v10370 = vpop.permute.xlu0 %10369
      %10373 = vset.pattern.permute.xlu0 13
      %10374 = vperm.xlu0 %10373, %v9964
      %v10375 = vpop.permute.xlu0 %10374
      %10378 = vset.pattern.permute.xlu0 13
      %10379 = vperm.xlu0 %10378, %v9965
      %v10380 = vpop.permute.xlu0 %10379
      %10383 = vset.pattern.permute.xlu0 13
      %10384 = vperm.xlu0 %10383, %v9966
      %v10385 = vpop.permute.xlu0 %10384
      %10388 = vset.pattern.permute.xlu0 13
      %10389 = vperm.xlu0 %10388, %v9967
      %v10390 = vpop.permute.xlu0 %10389
      %10393 = vset.pattern.permute.xlu0 13
      %10394 = vperm.xlu0 %10393, %v9968
      %v10395 = vpop.permute.xlu0 %10394
      %10398 = vset.pattern.permute.xlu0 13
      %10399 = vperm.xlu0 %10398, %v9969
      %v10400 = vpop.permute.xlu0 %10399
      %10403 = vset.pattern.permute.xlu0 13
      %10404 = vperm.xlu0 %10403, %v9970
      %v10405 = vpop.permute.xlu0 %10404
      %10408 = vset.pattern.permute.xlu0 13
      %10409 = vperm.xlu0 %10408, %v9971
      %v10410 = vpop.permute.xlu0 %10409
      %10413 = vset.pattern.permute.xlu0 13
      %10414 = vperm.xlu0 %10413, %v9972
      %v10415 = vpop.permute.xlu0 %10414
      %10418 = vset.pattern.permute.xlu0 13
      %10419 = vperm.xlu0 %10418, %v9973
      %v10420 = vpop.permute.xlu0 %10419
      %10423 = vset.pattern.permute.xlu0 13
      %10424 = vperm.xlu0 %10423, %v9974
      %v10425 = vpop.permute.xlu0 %10424
      %10428 = vset.pattern.permute.xlu0 13
      %10429 = vperm.xlu0 %10428, %v9975
      %v10430 = vpop.permute.xlu0 %10429
      %10433 = vset.pattern.permute.xlu0 13
      %10434 = vperm.xlu0 %10433, %v9976
      %v10435 = vpop.permute.xlu0 %10434
      %10438 = vset.pattern.permute.xlu0 13
      %10439 = vperm.xlu0 %10438, %v9977
      %v10440 = vpop.permute.xlu0 %10439
      %10443 = vset.pattern.permute.xlu0 13
      %10444 = vperm.xlu0 %10443, %v9978
      %v10445 = vpop.permute.xlu0 %10444
      %10448 = vset.pattern.permute.xlu0 13
      %10449 = vperm.xlu0 %10448, %v9979
      %v10450 = vpop.permute.xlu0 %10449
      %10453 = vset.pattern.permute.xlu0 13
      %10454 = vperm.xlu0 %10453, %v9980
      %v10455 = vpop.permute.xlu0 %10454
      %10458 = vset.pattern.permute.xlu0 13
      %10459 = vperm.xlu0 %10458, %v9981
      %v10460 = vpop.permute.xlu0 %10459
      %10463 = vset.pattern.permute.xlu0 13
      %10464 = vperm.xlu0 %10463, %v9982
      %v10465 = vpop.permute.xlu0 %10464
      %10468 = vset.pattern.permute.xlu0 13
      %10469 = vperm.xlu0 %10468, %v9983
      %v10470 = vpop.permute.xlu0 %10469
      %10473 = vset.pattern.permute.xlu0 13
      %10474 = vperm.xlu0 %10473, %v9984
      %v10475 = vpop.permute.xlu0 %10474
      %10478 = vset.pattern.permute.xlu0 13
      %10479 = vperm.xlu0 %10478, %v9985
      %v10480 = vpop.permute.xlu0 %10479
      %10483 = vset.pattern.permute.xlu0 13
      %10484 = vperm.xlu0 %10483, %v9986
      %v10485 = vpop.permute.xlu0 %10484
      %10488 = vset.pattern.permute.xlu0 13
      %10489 = vperm.xlu0 %10488, %v9987
      %v10490 = vpop.permute.xlu0 %10489
      %10493 = vset.pattern.permute.xlu0 13
      %10494 = vperm.xlu0 %10493, %v9988
      %v10495 = vpop.permute.xlu0 %10494
      %10498 = vset.pattern.permute.xlu0 13
      %10499 = vperm.xlu0 %10498, %v9989
      %v10500 = vpop.permute.xlu0 %10499
      %10503 = vset.pattern.permute.xlu0 13
      %10504 = vperm.xlu0 %10503, %v9990
      %v10505 = vpop.permute.xlu0 %10504
      %10508 = vset.pattern.permute.xlu0 13
      %10509 = vperm.xlu0 %10508, %v9991
      %v10510 = vpop.permute.xlu0 %10509
      %10513 = vset.pattern.permute.xlu0 13
      %10514 = vperm.xlu0 %10513, %v9992
      %v10515 = vpop.permute.xlu0 %10514
      %10518 = vset.pattern.permute.xlu0 13
      %10519 = vperm.xlu0 %10518, %v9993
      %v10520 = vpop.permute.xlu0 %10519
      %10523 = vset.pattern.permute.xlu0 13
      %10524 = vperm.xlu0 %10523, %v9994
      %v10525 = vpop.permute.xlu0 %10524
      %10528 = vset.pattern.permute.xlu0 13
      %10529 = vperm.xlu0 %10528, %v9995
      %v10530 = vpop.permute.xlu0 %10529
      %10533 = vset.pattern.permute.xlu0 13
      %10534 = vperm.xlu0 %10533, %v9996
      %v10535 = vpop.permute.xlu0 %10534
      %10538 = vset.pattern.permute.xlu0 13
      %10539 = vperm.xlu0 %10538, %v9997
      %v10540 = vpop.permute.xlu0 %10539
      %10543 = vset.pattern.permute.xlu0 13
      %10544 = vperm.xlu0 %10543, %v9998
      %v10545 = vpop.permute.xlu0 %10544
      %10548 = vset.pattern.permute.xlu0 13
      %10549 = vperm.xlu0 %10548, %v9999
      %v10550 = vpop.permute.xlu0 %10549
      %10553 = vset.pattern.permute.xlu0 13
      %10554 = vperm.xlu0 %10553, %v10000
      %v10555 = vpop.permute.xlu0 %10554
      %10558 = vset.pattern.permute.xlu0 13
      %10559 = vperm.xlu0 %10558, %v10001
      %v10560 = vpop.permute.xlu0 %10559
      %10563 = vset.pattern.permute.xlu0 13
      %10564 = vperm.xlu0 %10563, %v10002
      %v10565 = vpop.permute.xlu0 %10564
      %10568 = vset.pattern.permute.xlu0 13
      %10569 = vperm.xlu0 %10568, %v10003
      %v10570 = vpop.permute.xlu0 %10569
      %10573 = vset.pattern.permute.xlu0 13
      %10574 = vperm.xlu0 %10573, %v10004
      %v10575 = vpop.permute.xlu0 %10574
      %10578 = vset.pattern.permute.xlu0 13
      %10579 = vperm.xlu0 %10578, %v10005
      %v10580 = vpop.permute.xlu0 %10579
      %10583 = vset.pattern.permute.xlu0 13
      %10584 = vperm.xlu0 %10583, %v10006
      %v10585 = vpop.permute.xlu0 %10584
      %10588 = vset.pattern.permute.xlu0 13
      %10589 = vperm.xlu0 %10588, %v10007
      %v10590 = vpop.permute.xlu0 %10589
      %10593 = vset.pattern.permute.xlu0 13
      %10594 = vperm.xlu0 %10593, %v10008
      %v10595 = vpop.permute.xlu0 %10594
      %10598 = vset.pattern.permute.xlu0 13
      %10599 = vperm.xlu0 %10598, %v10009
      %v10600 = vpop.permute.xlu0 %10599
      %10603 = vset.pattern.permute.xlu0 13
      %10604 = vperm.xlu0 %10603, %v10010
      %v10605 = vpop.permute.xlu0 %10604
      %10608 = vset.pattern.permute.xlu0 13
      %10609 = vperm.xlu0 %10608, %v10011
      %v10610 = vpop.permute.xlu0 %10609
      %10613 = vset.pattern.permute.xlu0 13
      %10614 = vperm.xlu0 %10613, %v10012
      %v10615 = vpop.permute.xlu0 %10614
      %10618 = vset.pattern.permute.xlu0 13
      %10619 = vperm.xlu0 %10618, %v10013
      %v10620 = vpop.permute.xlu0 %10619
      %10623 = vset.pattern.permute.xlu0 13
      %10624 = vperm.xlu0 %10623, %v10014
      %v10625 = vpop.permute.xlu0 %10624
      %10628 = vset.pattern.permute.xlu0 13
      %10629 = vperm.xlu0 %10628, %v10015
      %v10630 = vpop.permute.xlu0 %10629
      %10633 = vset.pattern.permute.xlu0 13
      %10634 = vperm.xlu0 %10633, %v10016
      %v10635 = vpop.permute.xlu0 %10634
      %10638 = vset.pattern.permute.xlu0 13
      %10639 = vperm.xlu0 %10638, %v10017
      %v10640 = vpop.permute.xlu0 %10639
      %10643 = vset.pattern.permute.xlu0 13
      %10644 = vperm.xlu0 %10643, %v10018
      %v10645 = vpop.permute.xlu0 %10644
      %10648 = vset.pattern.permute.xlu0 13
      %10649 = vperm.xlu0 %10648, %v10019
      %v10650 = vpop.permute.xlu0 %10649
      %10653 = vset.pattern.permute.xlu0 13
      %10654 = vperm.xlu0 %10653, %v10020
      %v10655 = vpop.permute.xlu0 %10654
      %10658 = vset.pattern.permute.xlu0 13
      %10659 = vperm.xlu0 %10658, %v10021
      %v10660 = vpop.permute.xlu0 %10659
      %v10662 = vmul.f32 %v10025, %v8352
      %v10663 = vmul.f32 %v10030, %v8353
      %v10664 = vmul.f32 %v10035, %v8354
      %v10665 = vmul.f32 %v10040, %v8355
      %v10666 = vmul.f32 %v10045, %v8356
      %v10667 = vmul.f32 %v10050, %v8357
      %v10668 = vmul.f32 %v10055, %v8358
      %v10669 = vmul.f32 %v10060, %v8359
      %v10670 = vmul.f32 %v10065, %v8360
      %v10671 = vmul.f32 %v10070, %v8361
      %v10672 = vmul.f32 %v10075, %v8362
      %v10673 = vmul.f32 %v10080, %v8363
      %v10674 = vmul.f32 %v10085, %v8364
      %v10675 = vmul.f32 %v10090, %v8365
      %v10676 = vmul.f32 %v10095, %v8366
      %v10677 = vmul.f32 %v10100, %v8367
      %v10678 = vmul.f32 %v10105, %v8368
      %v10679 = vmul.f32 %v10110, %v8369
      %v10680 = vmul.f32 %v10115, %v8370
      %v10681 = vmul.f32 %v10120, %v8371
      %v10682 = vmul.f32 %v10125, %v8372
      %v10683 = vmul.f32 %v10130, %v8373
      %v10684 = vmul.f32 %v10135, %v8374
      %v10685 = vmul.f32 %v10140, %v8375
      %v10686 = vmul.f32 %v10145, %v8376
      %v10687 = vmul.f32 %v10150, %v8377
      %v10688 = vmul.f32 %v10155, %v8378
      %v10689 = vmul.f32 %v10160, %v8379
      %v10690 = vmul.f32 %v10165, %v8380
      %v10691 = vmul.f32 %v10170, %v8381
      %v10692 = vmul.f32 %v10175, %v8382
      %v10693 = vmul.f32 %v10180, %v8383
      %v10694 = vmul.f32 %v10185, %v8384
      %v10695 = vmul.f32 %v10190, %v8385
      %v10696 = vmul.f32 %v10195, %v8386
      %v10697 = vmul.f32 %v10200, %v8387
      %v10698 = vmul.f32 %v10205, %v8388
      %v10699 = vmul.f32 %v10210, %v8389
      %v10700 = vmul.f32 %v10215, %v8390
      %v10701 = vmul.f32 %v10220, %v8391
      %v10702 = vmul.f32 %v10225, %v8392
      %v10703 = vmul.f32 %v10230, %v8393
      %v10704 = vmul.f32 %v10235, %v8394
      %v10705 = vmul.f32 %v10240, %v8395
      %v10706 = vmul.f32 %v10245, %v8396
      %v10707 = vmul.f32 %v10250, %v8397
      %v10708 = vmul.f32 %v10255, %v8398
      %v10709 = vmul.f32 %v10260, %v8399
      %v10710 = vmul.f32 %v10265, %v8400
      %v10711 = vmul.f32 %v10270, %v8401
      %v10712 = vmul.f32 %v10275, %v8402
      %v10713 = vmul.f32 %v10280, %v8403
      %v10714 = vmul.f32 %v10285, %v8404
      %v10715 = vmul.f32 %v10290, %v8405
      %v10716 = vmul.f32 %v10295, %v8406
      %v10717 = vmul.f32 %v10300, %v8407
      %v10718 = vmul.f32 %v10305, %v8408
      %v10719 = vmul.f32 %v10310, %v8409
      %v10720 = vmul.f32 %v10315, %v8410
      %v10721 = vmul.f32 %v10320, %v8411
      %v10722 = vmul.f32 %v10325, %v8412
      %v10723 = vmul.f32 %v10330, %v8413
      %v10724 = vmul.f32 %v10335, %v8414
      %v10725 = vmul.f32 %v10340, %v8415
      %v10726 = vmul.f32 %v10345, %v8416
      %v10727 = vmul.f32 %v10350, %v8417
      %v10728 = vmul.f32 %v10355, %v8418
      %v10729 = vmul.f32 %v10360, %v8419
      %v10730 = vmul.f32 %v10365, %v8420
      %v10731 = vmul.f32 %v10370, %v8421
      %v10732 = vmul.f32 %v10375, %v8422
      %v10733 = vmul.f32 %v10380, %v8423
      %v10734 = vmul.f32 %v10385, %v8424
      %v10735 = vmul.f32 %v10390, %v8425
      %v10736 = vmul.f32 %v10395, %v8426
      %v10737 = vmul.f32 %v10400, %v8427
      %v10738 = vmul.f32 %v10405, %v8428
      %v10739 = vmul.f32 %v10410, %v8429
      %v10740 = vmul.f32 %v10415, %v8430
      %v10741 = vmul.f32 %v10420, %v8431
      %v10742 = vmul.f32 %v10425, %v8432
      %v10743 = vmul.f32 %v10430, %v8433
      %v10744 = vmul.f32 %v10435, %v8434
      %v10745 = vmul.f32 %v10440, %v8435
      %v10746 = vmul.f32 %v10445, %v8436
      %v10747 = vmul.f32 %v10450, %v8437
      %v10748 = vmul.f32 %v10455, %v8438
      %v10749 = vmul.f32 %v10460, %v8439
      %v10750 = vmul.f32 %v10465, %v8440
      %v10751 = vmul.f32 %v10470, %v8441
      %v10752 = vmul.f32 %v10475, %v8442
      %v10753 = vmul.f32 %v10480, %v8443
      %v10754 = vmul.f32 %v10485, %v8444
      %v10755 = vmul.f32 %v10490, %v8445
      %v10756 = vmul.f32 %v10495, %v8446
      %v10757 = vmul.f32 %v10500, %v8447
      %v10758 = vmul.f32 %v10505, %v8448
      %v10759 = vmul.f32 %v10510, %v8449
      %v10760 = vmul.f32 %v10515, %v8450
      %v10761 = vmul.f32 %v10520, %v8451
      %v10762 = vmul.f32 %v10525, %v8452
      %v10763 = vmul.f32 %v10530, %v8453
      %v10764 = vmul.f32 %v10535, %v8454
      %v10765 = vmul.f32 %v10540, %v8455
      %v10766 = vmul.f32 %v10545, %v8456
      %v10767 = vmul.f32 %v10550, %v8457
      %v10768 = vmul.f32 %v10555, %v8458
      %v10769 = vmul.f32 %v10560, %v8459
      %v10770 = vmul.f32 %v10565, %v8460
      %v10771 = vmul.f32 %v10570, %v8461
      %v10772 = vmul.f32 %v10575, %v8462
      %v10773 = vmul.f32 %v10580, %v8463
      %v10774 = vmul.f32 %v10585, %v8464
      %v10775 = vmul.f32 %v10590, %v8465
      %v10776 = vmul.f32 %v10595, %v8466
      %v10777 = vmul.f32 %v10600, %v8467
      %v10778 = vmul.f32 %v10605, %v8468
      %v10779 = vmul.f32 %v10610, %v8469
      %v10780 = vmul.f32 %v10615, %v8470
      %v10781 = vmul.f32 %v10620, %v8471
      %v10782 = vmul.f32 %v10625, %v8472
      %v10783 = vmul.f32 %v10630, %v8473
      %v10784 = vmul.f32 %v10635, %v8474
      %v10785 = vmul.f32 %v10640, %v8475
      %v10786 = vmul.f32 %v10645, %v8476
      %v10787 = vmul.f32 %v10650, %v8477
      %v10788 = vmul.f32 %v10655, %v8478
      %v10789 = vmul.f32 %v10660, %v8479
      %v10790 = vsel %vm9248, %v10662, 0.0
      %v10791 = vsel %vm9248, %v10663, 0.0
      %v10792 = vadd.f32 %v10790, %v10791
      %v10793 = vsel %vm9248, %v10664, 0.0
      %v10794 = vadd.f32 %v10792, %v10793
      %v10795 = vsel %vm9248, %v10665, 0.0
      %v10796 = vadd.f32 %v10794, %v10795
      %v10797 = vsel %vm9248, %v10666, 0.0
      %v10798 = vadd.f32 %v10796, %v10797
      %v10799 = vsel %vm9248, %v10667, 0.0
      %v10800 = vadd.f32 %v10798, %v10799
      %v10801 = vsel %vm9248, %v10668, 0.0
      %v10802 = vadd.f32 %v10800, %v10801
      %v10803 = vsel %vm9248, %v10669, 0.0
      %v10804 = vadd.f32 %v10802, %v10803
      %v10805 = vsel %vm9248, %v10670, 0.0
      %v10806 = vadd.f32 %v10804, %v10805
      %v10807 = vsel %vm9248, %v10671, 0.0
      %v10808 = vadd.f32 %v10806, %v10807
      %v10809 = vsel %vm9248, %v10672, 0.0
      %v10810 = vadd.f32 %v10808, %v10809
      %v10811 = vsel %vm9248, %v10673, 0.0
      %v10812 = vadd.f32 %v10810, %v10811
      %v10813 = vsel %vm9248, %v10674, 0.0
      %v10814 = vadd.f32 %v10812, %v10813
      %v10815 = vsel %vm9248, %v10675, 0.0
      %v10816 = vadd.f32 %v10814, %v10815
      %v10817 = vsel %vm9248, %v10676, 0.0
      %v10818 = vadd.f32 %v10816, %v10817
      %v10819 = vsel %vm9248, %v10677, 0.0
      %v10820 = vadd.f32 %v10818, %v10819
      %v10821 = vsel %vm9248, %v10678, 0.0
      %v10822 = vadd.f32 %v10820, %v10821
      %v10823 = vsel %vm9248, %v10679, 0.0
      %v10824 = vadd.f32 %v10822, %v10823
      %v10825 = vsel %vm9248, %v10680, 0.0
      %v10826 = vadd.f32 %v10824, %v10825
      %v10827 = vsel %vm9248, %v10681, 0.0
      %v10828 = vadd.f32 %v10826, %v10827
      %v10829 = vsel %vm9248, %v10682, 0.0
      %v10830 = vadd.f32 %v10828, %v10829
      %v10831 = vsel %vm9248, %v10683, 0.0
      %v10832 = vadd.f32 %v10830, %v10831
      %v10833 = vsel %vm9248, %v10684, 0.0
      %v10834 = vadd.f32 %v10832, %v10833
      %v10835 = vsel %vm9248, %v10685, 0.0
      %v10836 = vadd.f32 %v10834, %v10835
      %v10837 = vsel %vm9248, %v10686, 0.0
      %v10838 = vadd.f32 %v10836, %v10837
      %v10839 = vsel %vm9248, %v10687, 0.0
      %v10840 = vadd.f32 %v10838, %v10839
      %v10841 = vsel %vm9248, %v10688, 0.0
      %v10842 = vadd.f32 %v10840, %v10841
      %v10843 = vsel %vm9248, %v10689, 0.0
      %v10844 = vadd.f32 %v10842, %v10843
      %v10845 = vsel %vm9248, %v10690, 0.0
      %v10846 = vadd.f32 %v10844, %v10845
      %v10847 = vsel %vm9248, %v10691, 0.0
      %v10848 = vadd.f32 %v10846, %v10847
      %v10849 = vsel %vm9248, %v10692, 0.0
      %v10850 = vadd.f32 %v10848, %v10849
      %v10851 = vsel %vm9248, %v10693, 0.0
      %v10852 = vadd.f32 %v10850, %v10851
      %v10853 = vsel %vm9248, %v10694, 0.0
      %v10854 = vadd.f32 %v10852, %v10853
      %v10855 = vsel %vm9248, %v10695, 0.0
      %v10856 = vadd.f32 %v10854, %v10855
      %v10857 = vsel %vm9248, %v10696, 0.0
      %v10858 = vadd.f32 %v10856, %v10857
      %v10859 = vsel %vm9248, %v10697, 0.0
      %v10860 = vadd.f32 %v10858, %v10859
      %v10861 = vsel %vm9248, %v10698, 0.0
      %v10862 = vadd.f32 %v10860, %v10861
      %v10863 = vsel %vm9248, %v10699, 0.0
      %v10864 = vadd.f32 %v10862, %v10863
      %v10865 = vsel %vm9248, %v10700, 0.0
      %v10866 = vadd.f32 %v10864, %v10865
      %v10867 = vsel %vm9248, %v10701, 0.0
      %v10868 = vadd.f32 %v10866, %v10867
      %v10869 = vsel %vm9248, %v10702, 0.0
      %v10870 = vadd.f32 %v10868, %v10869
      %v10871 = vsel %vm9248, %v10703, 0.0
      %v10872 = vadd.f32 %v10870, %v10871
      %v10873 = vsel %vm9248, %v10704, 0.0
      %v10874 = vadd.f32 %v10872, %v10873
      %v10875 = vsel %vm9248, %v10705, 0.0
      %v10876 = vadd.f32 %v10874, %v10875
      %v10877 = vsel %vm9248, %v10706, 0.0
      %v10878 = vadd.f32 %v10876, %v10877
      %v10879 = vsel %vm9248, %v10707, 0.0
      %v10880 = vadd.f32 %v10878, %v10879
      %v10881 = vsel %vm9248, %v10708, 0.0
      %v10882 = vadd.f32 %v10880, %v10881
      %v10883 = vsel %vm9248, %v10709, 0.0
      %v10884 = vadd.f32 %v10882, %v10883
      %v10885 = vsel %vm9248, %v10710, 0.0
      %v10886 = vadd.f32 %v10884, %v10885
      %v10887 = vsel %vm9248, %v10711, 0.0
      %v10888 = vadd.f32 %v10886, %v10887
      %v10889 = vsel %vm9248, %v10712, 0.0
      %v10890 = vadd.f32 %v10888, %v10889
      %v10891 = vsel %vm9248, %v10713, 0.0
      %v10892 = vadd.f32 %v10890, %v10891
      %v10893 = vsel %vm9248, %v10714, 0.0
      %v10894 = vadd.f32 %v10892, %v10893
      %v10895 = vsel %vm9248, %v10715, 0.0
      %v10896 = vadd.f32 %v10894, %v10895
      %v10897 = vsel %vm9248, %v10716, 0.0
      %v10898 = vadd.f32 %v10896, %v10897
      %v10899 = vsel %vm9248, %v10717, 0.0
      %v10900 = vadd.f32 %v10898, %v10899
      %v10901 = vsel %vm9248, %v10718, 0.0
      %v10902 = vadd.f32 %v10900, %v10901
      %v10903 = vsel %vm9248, %v10719, 0.0
      %v10904 = vadd.f32 %v10902, %v10903
      %v10905 = vsel %vm9248, %v10720, 0.0
      %v10906 = vadd.f32 %v10904, %v10905
      %v10907 = vsel %vm9248, %v10721, 0.0
      %v10908 = vadd.f32 %v10906, %v10907
      %v10909 = vsel %vm9248, %v10722, 0.0
      %v10910 = vadd.f32 %v10908, %v10909
      %v10911 = vsel %vm9248, %v10723, 0.0
      %v10912 = vadd.f32 %v10910, %v10911
      %v10913 = vsel %vm9248, %v10724, 0.0
      %v10914 = vadd.f32 %v10912, %v10913
      %v10915 = vsel %vm9248, %v10725, 0.0
      %v10916 = vadd.f32 %v10914, %v10915
      %v10917 = vsel %vm9248, %v10726, 0.0
      %v10918 = vadd.f32 %v10916, %v10917
      %v10919 = vsel %vm9248, %v10727, 0.0
      %v10920 = vadd.f32 %v10918, %v10919
      %v10921 = vsel %vm9248, %v10728, 0.0
      %v10922 = vadd.f32 %v10920, %v10921
      %v10923 = vsel %vm9248, %v10729, 0.0
      %v10924 = vadd.f32 %v10922, %v10923
      %v10925 = vsel %vm9248, %v10730, 0.0
      %v10926 = vadd.f32 %v10924, %v10925
      %v10927 = vsel %vm9248, %v10731, 0.0
      %v10928 = vadd.f32 %v10926, %v10927
      %v10929 = vsel %vm9248, %v10732, 0.0
      %v10930 = vadd.f32 %v10928, %v10929
      %v10931 = vsel %vm9248, %v10733, 0.0
      %v10932 = vadd.f32 %v10930, %v10931
      %v10933 = vsel %vm9248, %v10734, 0.0
      %v10934 = vadd.f32 %v10932, %v10933
      %v10935 = vsel %vm9248, %v10735, 0.0
      %v10936 = vadd.f32 %v10934, %v10935
      %v10937 = vsel %vm9248, %v10736, 0.0
      %v10938 = vadd.f32 %v10936, %v10937
      %v10939 = vsel %vm9248, %v10737, 0.0
      %v10940 = vadd.f32 %v10938, %v10939
      %v10941 = vsel %vm9248, %v10738, 0.0
      %v10942 = vadd.f32 %v10940, %v10941
      %v10943 = vsel %vm9248, %v10739, 0.0
      %v10944 = vadd.f32 %v10942, %v10943
      %v10945 = vsel %vm9248, %v10740, 0.0
      %v10946 = vadd.f32 %v10944, %v10945
      %v10947 = vsel %vm9248, %v10741, 0.0
      %v10948 = vadd.f32 %v10946, %v10947
      %v10949 = vsel %vm9248, %v10742, 0.0
      %v10950 = vadd.f32 %v10948, %v10949
      %v10951 = vsel %vm9248, %v10743, 0.0
      %v10952 = vadd.f32 %v10950, %v10951
      %v10953 = vsel %vm9248, %v10744, 0.0
      %v10954 = vadd.f32 %v10952, %v10953
      %v10955 = vsel %vm9248, %v10745, 0.0
      %v10956 = vadd.f32 %v10954, %v10955
      %v10957 = vsel %vm9248, %v10746, 0.0
      %v10958 = vadd.f32 %v10956, %v10957
      %v10959 = vsel %vm9248, %v10747, 0.0
      %v10960 = vadd.f32 %v10958, %v10959
      %v10961 = vsel %vm9248, %v10748, 0.0
      %v10962 = vadd.f32 %v10960, %v10961
      %v10963 = vsel %vm9248, %v10749, 0.0
      %v10964 = vadd.f32 %v10962, %v10963
      %v10965 = vsel %vm9248, %v10750, 0.0
      %v10966 = vadd.f32 %v10964, %v10965
      %v10967 = vsel %vm9248, %v10751, 0.0
      %v10968 = vadd.f32 %v10966, %v10967
      %v10969 = vsel %vm9248, %v10752, 0.0
      %v10970 = vadd.f32 %v10968, %v10969
      %v10971 = vsel %vm9248, %v10753, 0.0
      %v10972 = vadd.f32 %v10970, %v10971
      %v10973 = vsel %vm9248, %v10754, 0.0
      %v10974 = vadd.f32 %v10972, %v10973
      %v10975 = vsel %vm9248, %v10755, 0.0
      %v10976 = vadd.f32 %v10974, %v10975
      %v10977 = vsel %vm9248, %v10756, 0.0
      %v10978 = vadd.f32 %v10976, %v10977
      %v10979 = vsel %vm9248, %v10757, 0.0
      %v10980 = vadd.f32 %v10978, %v10979
      %v10981 = vsel %vm9248, %v10758, 0.0
      %v10982 = vadd.f32 %v10980, %v10981
      %v10983 = vsel %vm9248, %v10759, 0.0
      %v10984 = vadd.f32 %v10982, %v10983
      %v10985 = vsel %vm9248, %v10760, 0.0
      %v10986 = vadd.f32 %v10984, %v10985
      %v10987 = vsel %vm9248, %v10761, 0.0
      %v10988 = vadd.f32 %v10986, %v10987
      %v10989 = vsel %vm9248, %v10762, 0.0
      %v10990 = vadd.f32 %v10988, %v10989
      %v10991 = vsel %vm9248, %v10763, 0.0
      %v10992 = vadd.f32 %v10990, %v10991
      %v10993 = vsel %vm9248, %v10764, 0.0
      %v10994 = vadd.f32 %v10992, %v10993
      %v10995 = vsel %vm9248, %v10765, 0.0
      %v10996 = vadd.f32 %v10994, %v10995
      %v10997 = vsel %vm9248, %v10766, 0.0
      %v10998 = vadd.f32 %v10996, %v10997
      %v10999 = vsel %vm9248, %v10767, 0.0
      %v11000 = vadd.f32 %v10998, %v10999
      %v11001 = vsel %vm9248, %v10768, 0.0
      %v11002 = vadd.f32 %v11000, %v11001
      %v11003 = vsel %vm9248, %v10769, 0.0
      %v11004 = vadd.f32 %v11002, %v11003
      %v11005 = vsel %vm9248, %v10770, 0.0
      %v11006 = vadd.f32 %v11004, %v11005
      %v11007 = vsel %vm9248, %v10771, 0.0
      %v11008 = vadd.f32 %v11006, %v11007
      %v11009 = vsel %vm9248, %v10772, 0.0
      %v11010 = vadd.f32 %v11008, %v11009
      %v11011 = vsel %vm9248, %v10773, 0.0
      %v11012 = vadd.f32 %v11010, %v11011
      %v11013 = vsel %vm9248, %v10774, 0.0
      %v11014 = vadd.f32 %v11012, %v11013
      %v11015 = vsel %vm9248, %v10775, 0.0
      %v11016 = vadd.f32 %v11014, %v11015
      %v11017 = vsel %vm9248, %v10776, 0.0
      %v11018 = vadd.f32 %v11016, %v11017
      %v11019 = vsel %vm9248, %v10777, 0.0
      %v11020 = vadd.f32 %v11018, %v11019
      %v11021 = vsel %vm9248, %v10778, 0.0
      %v11022 = vadd.f32 %v11020, %v11021
      %v11023 = vsel %vm9248, %v10779, 0.0
      %v11024 = vadd.f32 %v11022, %v11023
      %v11025 = vsel %vm9248, %v10780, 0.0
      %v11026 = vadd.f32 %v11024, %v11025
      %v11027 = vsel %vm9248, %v10781, 0.0
      %v11028 = vadd.f32 %v11026, %v11027
      %v11029 = vsel %vm9248, %v10782, 0.0
      %v11030 = vadd.f32 %v11028, %v11029
      %v11031 = vsel %vm9248, %v10783, 0.0
      %v11032 = vadd.f32 %v11030, %v11031
      %v11033 = vsel %vm9248, %v10784, 0.0
      %v11034 = vadd.f32 %v11032, %v11033
      %v11035 = vsel %vm9248, %v10785, 0.0
      %v11036 = vadd.f32 %v11034, %v11035
      %v11037 = vsel %vm9248, %v10786, 0.0
      %v11038 = vadd.f32 %v11036, %v11037
      %v11039 = vsel %vm9248, %v10787, 0.0
      %v11040 = vadd.f32 %v11038, %v11039
      %v11041 = vsel %vm9248, %v10788, 0.0
      %v11042 = vadd.f32 %v11040, %v11041
      %v11043 = vsel %vm9248, %v10789, 0.0
      %v11044 = vadd.f32 %v11042, %v11043
      %v11045 = vrot.slane %v11044, 4
      %v11046 = vadd.f32 %v11044, %v11045
      %v11047 = vrot.slane %v11046, 2
      %v11048 = vadd.f32 %v11046, %v11047
      %v11049 = vrot.slane %v11048, 1
      %v11050 = vadd.f32 %v11048, %v11049
      %vm11051 = vcmp.lt.s32.totalorder %v7324, 32
      %v11052 = vsub.f32 0.0, %v9509
      %v11053 = vsel %vm11051, %v9509, %v11052
      %v11054 = vand.u32 2147483647, %v11053
      %v11055 = vsub.f32 0.0, %v11054
      %v11056 = vmul.f32 %v11055, 1.442695
      %v11057 = vpow.pop %v11056
      %v11058 = vadd.f32 %v11057, 1.0
      %v11059 = vrcp.pop %v11058
      %v11060 = vmul.f32 1.0, %v11059
      %vm11061 = vcmp.ge.f32.partialorder %v11053, 0.0
      %v11062 = vmul.f32 %v11057, %v11060
      %v11063 = vsel %vm11061, %v11060, %v11062
      %v11064 = vadd.f32 %v11063, 1e-06
      %v11065 = vlog2.pop %v11064
      %v11066 = vmul.f32 %v11065, 0.6931472
      %v11067 = vmul.f32 %v11050, %v11066
      %vm11068 = vcmp.eq.s32.totalorder %v7195, %v7453
      %vm11069 = vcmp.eq.s32.totalorder %v7196, %v7453
      %vm11070 = vcmp.eq.s32.totalorder %v7197, %v7453
      %vm11071 = vcmp.eq.s32.totalorder %v7198, %v7453
      %v11072 = vsel %vm11068, 1.0, 0.0
      %v11073 = vsel %vm11069, 1.0, 0.0
      %v11074 = vsel %vm11070, 1.0, 0.0
      %v11075 = vsel %vm11071, 1.0, 0.0
      %v11076 = vmul.f32 %v11072, %v11067
      %v11077 = vmul.f32 %v11073, %v11067
      %v11078 = vmul.f32 %v11074, %v11067
      %v11079 = vmul.f32 %v11075, %v11067
      %v11080 = vsel %vm9248, %v11076, 0.0
      %11081 = vadd.xlane.f32.xlu0 %v11080
      %v11082 = vpop.xlane.xlu0 %11081
      %v11083 = vsel %vm9248, %v11077, 0.0
      %11084 = vadd.xlane.f32.xlu0 %v11083
      %v11085 = vpop.xlane.xlu0 %11084
      %v11086 = vsel %vm9248, %v11078, 0.0
      %11087 = vadd.xlane.f32.xlu0 %v11086
      %v11088 = vpop.xlane.xlu0 %11087
      %v11089 = vsel %vm9248, %v11079, 0.0
      %11090 = vadd.xlane.f32.xlu0 %v11089
      %v11091 = vpop.xlane.xlu0 %11090
      %v11092 = vsub.f32 0.0, %v11082
      %v11093 = vsub.f32 0.0, %v11085
      %v11094 = vsub.f32 0.0, %v11088
      %v11095 = vsub.f32 0.0, %v11091
      %11096 = vst [vmem:[%s270] sm:$0xff] %v11092
      %11097 = vst [vmem:[%s270 + $0x8] sm:$0xff] %v11093
      %11098 = vst [vmem:[%s270 + $0x10] sm:$0xff] %v11094
      %11099 = vst [vmem:[%s270 + $0x18] sm:$0xff] %v11095
      %s11100 = smul.u32 4, %s16
      %p11101 = scmp.lt.s32.totalorder %s11100, 31
      %s11102 = scalar_select %p11101, %s11100, 31
      %s11103 = smul.addr %s11102, 8
      %s11104 = scalar_lea.vmem %s5, %s11103
      // Predicated region
      $region41: #{mtne_loss_pallas.1} parent=39 // pred_check
        %p11105 = pneg %p154
      $region42: #{mtne_loss_pallas.1} parent=39 // pred_check_branch
        %11107 = sbr.rel (%p11105) target = $region44
      $region43: #{mtne_loss_pallas.1} parent=39 // pred_region
        %s11108 = smul.u32 4, %s16
      $region44: #{mtne_loss_pallas.1} parent=39 // pred_fallthru
        _
    $region40: #{mtne_loss_pallas.1} parent=5 // pred_fallthru
      _
    %p11109 = scmp.le.s32.totalorder 2, %s11
    // Predicated region
    $region45: #{mtne_loss_pallas.1} parent=5 // pred_check
      %p11110 = pneg %p11109
    $region46: #{mtne_loss_pallas.1} parent=5 // pred_check_branch
      %11112 = sbr.rel (%p11110) target = $region48
    $region47: #{mtne_loss_pallas.1} parent=5 // pred_region
      %s11113 = ssub.s32 %s11, 2
      // Predicated region
      $region49: #{mtne_loss_pallas.1} parent=47 // pred_check
        %p11114 = pneg %p160
      $region50: #{mtne_loss_pallas.1} parent=47 // pred_check_branch
        %11116 = sbr.rel (%p11114) target = $region52
      $region51: #{mtne_loss_pallas.1} parent=47 // pred_region
        %s11117 = smul.u32 4, %s17
        %p11118 = scmp.lt.s32.totalorder %s11117, 31
        %s11119 = scalar_select %p11118, %s11117, 31
        %s11120 = smul.addr %s11119, 8
        %s11121 = scalar_lea.vmem %s5, %s11120
      $region52: #{mtne_loss_pallas.1} parent=47 // pred_fallthru
        _
    $region48: #{mtne_loss_pallas.1} parent=5 // pred_fallthru
      _
  $region6: #{mtne_loss_pallas.1} parent=0 // loop_footer
    %s15 = sadd.s32 1, %s11
  $region7: #{mtne_loss_pallas.1} parent=0 // loop_footer_branch
    %10 = sbr.rel target = $region3
  $region8: #{mtne_loss_pallas.1} parent=0 // loop_exit
    _

</llo_original>
